<compile_context>
chip_gen: v6e
topology: v6e:2x2x1
jax: 0.10.0
libtpu: 0.0.40
codegen_flags: <defaults>
</compile_context>

<pallas_src>
import functools

import jax
import jax.numpy as jnp
from jax import lax
from jax.experimental import pallas as pl
from jax.experimental.pallas import tpu as pltpu

LANE = 128
SUBLANE = 8


def _round_up(x, m):
    return (x + m - 1) // m * m


def _vmem_limit_bytes():
    try:
        cap = pltpu.get_tpu_info().vmem_capacity_bytes
    except Exception:
        cap = 64 * 1024 * 1024
    return int(min(100 * 1024 * 1024, cap * 3 // 4))


def _pick_images_per_block(n, hw, cio_p, target_rows=512, max_block_bytes=4 << 20):
    """Largest divisor of n such that rows = b*hw stays sublane-aligned, fits a
    per-block byte budget, and reaches ~target_rows to fill the MXU M dim."""
    row_cap = max(hw, max_block_bytes // (cio_p * 4))
    divisors = [b for b in range(1, n + 1) if n % b == 0]
    aligned = [b for b in divisors if (b * hw) % SUBLANE == 0]
    candidates = aligned if aligned else [n]   # fallback: one block + row padding
    best = candidates[0]
    for b in candidates:
        if b * hw <= row_cap:
            best = b
        if b * hw >= target_rows:
            break
    return best


# ------------------------------ Pallas kernel ------------------------------- #

def _bottleneck_kernel(W, x_ref, mask_ref, w1_ref, b1_ref, w2_ref, b2_ref,
                       w3_ref, b3_ref, o_ref):
    """Fused bottleneck on a flattened (M, C) slab of B_blk whole images.

    Channel dims are padded to 128 lanes; BN scales are pre-folded into the
    weight matrices so only per-channel bias adds remain in-kernel.  The 3x3
    conv is 9 pltpu.roll-shifted taps of the flat spatial axis; `mask_ref`
    holds one 0/1 column per tap zeroing padding / wrap / image-boundary rows.
    """
    M = x_ref.shape[0]
    cdt = x_ref.dtype

    x2d = x_ref[...]                                        # (M, Cio_p)

    # conv1 (1x1) + BN1 (folded) + ReLU  -> (M, Pp), f32
    y1 = jnp.dot(x2d, w1_ref[...], preferred_element_type=jnp.float32)
    y1 = jnp.maximum(y1 + b1_ref[...], 0.0)

    # conv2 (3x3, padding=1, stride=1) as 9 shifted matmuls on the flat slab.
    tap_masks = mask_ref[...]                               # (M, 9) f32 0/1
    acc = None
    for dh in (-1, 0, 1):
        for dw in (-1, 0, 1):
            tap = (dh + 1) * 3 + (dw + 1)
            d = dh * W + dw
            # shifted[m] = y1[m + d]  (XLU roll; wrap positions are masked off)
            t = y1 if d == 0 else pltpu.roll(y1, shift=(-d) % M, axis=0)
            if (dh, dw) != (0, 0):
                t = t * tap_masks[:, tap:tap + 1]
            p = jnp.dot(t.astype(cdt), w2_ref[tap],
                        preferred_element_type=jnp.float32)
            acc = p if acc is None else acc + p
    y2 = jnp.maximum(acc + b2_ref[...], 0.0)

    # conv3 (1x1) + BN3 (folded) + identity residual + ReLU.
    y3 = jnp.dot(y2.astype(cdt), w3_ref[...], preferred_element_type=jnp.float32)
    y3 = y3 + b3_ref[...] + x2d.astype(jnp.float32)
    o_ref[...] = jnp.maximum(y3, 0.0).astype(o_ref.dtype)


# ------------------------------- JAX wrapper -------------------------------- #

def _fold_bn(gamma, beta, mean, var, eps=1e-5):
    scale = gamma / jnp.sqrt(var + eps)
    bias = beta - mean * scale
    return scale, bias


def _conv2_tap_masks(images_per_block, H, W, rows):
    """(rows, 9) f32 0/1 validity mask per conv2 tap, tiled per image."""
    row = jnp.arange(H, dtype=jnp.int32)[:, None]
    col = jnp.arange(W, dtype=jnp.int32)[None, :]
    cols9 = []
    for dh in (-1, 0, 1):
        for dw in (-1, 0, 1):
            ok = jnp.ones((H, W), dtype=bool)
            if dh == -1:
                ok = ok & (row >= 1)
            if dh == 1:
                ok = ok & (row <= H - 2)
            if dw == -1:
                ok = ok & (col >= 1)
            if dw == 1:
                ok = ok & (col <= W - 2)
            cols9.append(ok)
    m = jnp.stack(cols9, axis=-1).reshape(H * W, 9).astype(jnp.float32)
    m = jnp.tile(m, (images_per_block, 1))
    if m.shape[0] != rows:
        m = jnp.pad(m, ((0, rows - m.shape[0]), (0, 0)))
    return m


def bottleneck_forward(x_nchw, params, stride=1, eps=1e-5,
                       compute_dtype=jnp.float32):
    """Bottleneck forward (downsample=None), PyTorch eval-mode semantics.

    compute_dtype=jnp.bfloat16 enables the fast MXU path on v6e/v7x (matmul
    operands bf16, accumulation/bias/residual in f32); default f32.
    """
    if stride != 1:
        raise NotImplementedError("stride != 1 requires downsample (projection residual)")

    x = jnp.transpose(x_nchw, (0, 2, 3, 1)).astype(jnp.float32)   # NCHW -> NHWC
    N, H, W, cin = x.shape

    w1 = params["conv1_w"]                                # (planes, inplanes, 1, 1)
    w2 = params["conv2_w"]                                # (planes, planes, 3, 3)
    w3 = params["conv3_w"]                                # (4*planes, planes, 1, 1)
    planes = w1.shape[0]
    cout = w3.shape[0]
    assert cin == cout, "downsample=None requires identity residual (cin == 4*planes)"

    Pp = _round_up(planes, LANE)
    Cio_p = _round_up(max(cin, cout), LANE)

    s1, b1 = _fold_bn(params["bn1_gamma"], params["bn1_beta"],
                      params["bn1_mean"], params["bn1_var"], eps)
    s2, b2 = _fold_bn(params["bn2_gamma"], params["bn2_beta"],
                      params["bn2_mean"], params["bn2_var"], eps)
    s3, b3 = _fold_bn(params["bn3_gamma"], params["bn3_beta"],
                      params["bn3_mean"], params["bn3_var"], eps)

    # Fold BN scale into weight columns; zero-pad channels to 128 lanes.
    w1m = jnp.transpose(w1[:, :, 0, 0], (1, 0)) * s1[None, :]          # (cin, p)
    w1p = jnp.pad(w1m, ((0, Cio_p - cin), (0, Pp - planes))).astype(compute_dtype)
    b1p = jnp.pad(b1, (0, Pp - planes))[None, :]

    w2m = jnp.transpose(w2, (2, 3, 1, 0)).reshape(9, planes, planes) * s2[None, None, :]
    w2p = jnp.pad(w2m, ((0, 0), (0, Pp - planes), (0, Pp - planes))).astype(compute_dtype)
    b2p = jnp.pad(b2, (0, Pp - planes))[None, :]

    w3m = jnp.transpose(w3[:, :, 0, 0], (1, 0)) * s3[None, :]          # (p, 4p)
    w3p = jnp.pad(w3m, ((0, Pp - planes), (0, Cio_p - cout))).astype(compute_dtype)
    b3p = jnp.pad(b3, (0, Cio_p - cout))[None, :]

    # Flatten spatial in the wrapper (free) and batch images per grid step.
    B_blk = _pick_images_per_block(N, H * W, Cio_p)
    G = N // B_blk
    M = B_blk * H * W
    M_pad = _round_up(M, SUBLANE) if G == 1 else M   # pad rows only when grid==1
    rows = G * M_pad

    xp = jnp.pad(x, ((0, 0), (0, 0), (0, 0), (0, Cio_p - cin)))
    x2d = xp.reshape(N * H * W, Cio_p)
    if rows != N * H * W:
        x2d = jnp.pad(x2d, ((0, rows - N * H * W), (0, 0)))
    x2d = x2d.astype(compute_dtype)

    mask = _conv2_tap_masks(B_blk, H, W, M_pad)

    kernel = functools.partial(_bottleneck_kernel, W)

    out2d = pl.pallas_call(
        kernel,
        out_shape=jax.ShapeDtypeStruct((rows, Cio_p), jnp.float32),
        grid=(G,),
        in_specs=[
            pl.BlockSpec((M_pad, Cio_p), lambda n: (n, 0)),   # x (flat, lane-padded)
            pl.BlockSpec((M_pad, 9), lambda n: (0, 0)),       # conv2 tap masks
            pl.BlockSpec((Cio_p, Pp), lambda n: (0, 0)),      # w1 (BN folded)
            pl.BlockSpec((1, Pp), lambda n: (0, 0)),          # b1
            pl.BlockSpec((9, Pp, Pp), lambda n: (0, 0, 0)),   # w2 taps (BN folded)
            pl.BlockSpec((1, Pp), lambda n: (0, 0)),          # b2
            pl.BlockSpec((Pp, Cio_p), lambda n: (0, 0)),      # w3 (BN folded)
            pl.BlockSpec((1, Cio_p), lambda n: (0, 0)),       # b3
        ],
        out_specs=pl.BlockSpec((M_pad, Cio_p), lambda n: (n, 0)),
        compiler_params=pltpu.CompilerParams(
            dimension_semantics=("parallel",),
            vmem_limit_bytes=_vmem_limit_bytes(),
        ),
    )(x2d, mask, w1p, b1p, w2p, b2p, w3p, b3p)

    out = out2d[:N * H * W, :cout].reshape(N, H, W, cout)
    return jnp.transpose(out, (0, 3, 1, 2))                           # NHWC -> NCHW


# ---------------------------- pure-JAX reference ----------------------------- #

def _ref_forward(x_nchw, params, stride=1, eps=1e-5):
    dn = ("NHWC", "HWIO", "NHWC")

    def bn(y, g, b, m, v):
        return (y - m) / jnp.sqrt(v + eps) * g + b

    x = jnp.transpose(x_nchw, (0, 2, 3, 1))
    w1 = jnp.transpose(params["conv1_w"], (2, 3, 1, 0))
    o = lax.conv_general_dilated(x, w1, (1, 1), "VALID", dimension_numbers=dn)
    o = jnp.maximum(bn(o, params["bn1_gamma"], params["bn1_beta"],
                       params["bn1_mean"], params["bn1_var"]), 0.0)
    w2 = jnp.transpose(params["conv2_w"], (2, 3, 1, 0))
    o = lax.conv_general_dilated(o, w2, (stride, stride), [(1, 1), (1, 1)],
                                 dimension_numbers=dn)
    o = jnp.maximum(bn(o, params["bn2_gamma"], params["bn2_beta"],
                       params["bn2_mean"], params["bn2_var"]), 0.0)
    w3 = jnp.transpose(params["conv3_w"], (2, 3, 1, 0))
    o = lax.conv_general_dilated(o, w3, (1, 1), "VALID", dimension_numbers=dn)
    o = bn(o, params["bn3_gamma"], params["bn3_beta"],
           params["bn3_mean"], params["bn3_var"])
    o = jnp.maximum(o + x, 0.0)
    return jnp.transpose(o, (0, 3, 1, 2))


# ----------------------------------- main ------------------------------------ #

if __name__ == "__main__":
    # Module-consistent small shapes: inplanes = planes * expansion so the
    # identity residual (downsample=None) is well-defined.  batch=16 so the
    # wrapper batches 8 images per grid step (M=512) and runs a 2-step
    # "parallel" grid, exercising the inter-image boundary masks.
    batch, inplanes, planes, H, W = 16, 16, 4, 8, 8
    expansion = 4
    assert inplanes == planes * expansion

    key = jax.random.PRNGKey(0)
    ks = jax.random.split(key, 16)
    f32 = jnp.float32

    params = {
        "conv1_w": 0.1 * jax.random.normal(ks[0], (planes, inplanes, 1, 1), f32),
        "conv2_w": 0.1 * jax.random.normal(ks[1], (planes, planes, 3, 3), f32),
        "conv3_w": 0.1 * jax.random.normal(ks[2], (planes * 4, planes, 1, 1), f32),
        "bn1_gamma": 1.0 + 0.1 * jax.random.normal(ks[3], (planes,), f32),
        "bn1_beta": 0.1 * jax.random.normal(ks[4], (planes,), f32),
        "bn1_mean": 0.1 * jax.random.normal(ks[5], (planes,), f32),
        "bn1_var": 0.5 + jnp.abs(jax.random.normal(ks[6], (planes,), f32)),
        "bn2_gamma": 1.0 + 0.1 * jax.random.normal(ks[7], (planes,), f32),
        "bn2_beta": 0.1 * jax.random.normal(ks[8], (planes,), f32),
        "bn2_mean": 0.1 * jax.random.normal(ks[9], (planes,), f32),
        "bn2_var": 0.5 + jnp.abs(jax.random.normal(ks[10], (planes,), f32)),
        "bn3_gamma": 1.0 + 0.1 * jax.random.normal(ks[11], (planes * 4,), f32),
        "bn3_beta": 0.1 * jax.random.normal(ks[12], (planes * 4,), f32),
        "bn3_mean": 0.1 * jax.random.normal(ks[13], (planes * 4,), f32),
        "bn3_var": 0.5 + jnp.abs(jax.random.normal(ks[14], (planes * 4,), f32)),
    }

    x = jax.random.normal(ks[15], (batch, inplanes, H, W), f32)  # NCHW like PyTorch

    out = jax.block_until_ready(bottleneck_forward(x, params, stride=1))
    ref = jax.block_until_ready(_ref_forward(x, params, stride=1))

    assert out.shape == (batch, planes * 4, H, W), out.shape
    assert jnp.allclose(out, ref, atol=1e-4, rtol=1e-4), \
        float(jnp.max(jnp.abs(out - ref)))

    print("KERNEL_OK")
</pallas_src>

<mosaic_0001>
module attributes {stable_mosaic.version = 11 : i64} {
  func.func @_bottleneck_kernel(%arg0: i32, %arg1: memref<512x128xf32, #tpu.memory_space<vmem>>, %arg2: memref<512x9xf32, #tpu.memory_space<vmem>>, %arg3: memref<128x128xf32, #tpu.memory_space<vmem>>, %arg4: memref<1x128xf32, #tpu.memory_space<vmem>>, %arg5: memref<9x128x128xf32, #tpu.memory_space<vmem>>, %arg6: memref<1x128xf32, #tpu.memory_space<vmem>>, %arg7: memref<128x128xf32, #tpu.memory_space<vmem>>, %arg8: memref<1x128xf32, #tpu.memory_space<vmem>>, %arg9: memref<512x128xf32, #tpu.memory_space<vmem>>) attributes {dimension_semantics = [#tpu.dimension_semantics<parallel>], iteration_bounds = array<i64: 2>, scalar_prefetch = 0 : i64, scratch_operands = 0 : i64, tpu.core_type = #tpu.core_type<tc>, window_params = [{transform_indices = @transform_0, window_bounds = array<i64: 512, 128>}, {pipeline_mode = #tpu.pipeline_mode<synchronous>, transform_indices = @transform_1, window_bounds = array<i64: 512, 9>}, {pipeline_mode = #tpu.pipeline_mode<synchronous>, transform_indices = @transform_2, window_bounds = array<i64: 128, 128>}, {pipeline_mode = #tpu.pipeline_mode<synchronous>, transform_indices = @transform_3, window_bounds = array<i64: 1, 128>}, {pipeline_mode = #tpu.pipeline_mode<synchronous>, transform_indices = @transform_4, window_bounds = array<i64: 9, 128, 128>}, {pipeline_mode = #tpu.pipeline_mode<synchronous>, transform_indices = @transform_5, window_bounds = array<i64: 1, 128>}, {pipeline_mode = #tpu.pipeline_mode<synchronous>, transform_indices = @transform_6, window_bounds = array<i64: 128, 128>}, {pipeline_mode = #tpu.pipeline_mode<synchronous>, transform_indices = @transform_7, window_bounds = array<i64: 1, 128>}, {transform_indices = @transform_8, window_bounds = array<i64: 512, 128>}]} {
    %c0 = arith.constant 0 : index
    %c0_0 = arith.constant 0 : index
    %0 = vector.load %arg1[%c0, %c0_0] : memref<512x128xf32, #tpu.memory_space<vmem>>, vector<512x128xf32>
    %c0_1 = arith.constant 0 : index
    %c0_2 = arith.constant 0 : index
    %1 = vector.load %arg3[%c0_1, %c0_2] : memref<128x128xf32, #tpu.memory_space<vmem>>, vector<128x128xf32>
    %cst = arith.constant dense<0.000000e+00> : vector<512x128xf32>
    %2 = tpu.matmul %0, %1, %cst {dimension_numbers = #tpu.dot_dimension_numbers<[1], [0], [0], [1], [0, 0, 1, 1], [], []>} : vector<512x128xf32>, vector<128x128xf32>, vector<512x128xf32> -> vector<512x128xf32>
    %c0_3 = arith.constant 0 : index
    %c0_4 = arith.constant 0 : index
    %3 = vector.load %arg4[%c0_3, %c0_4] : memref<1x128xf32, #tpu.memory_space<vmem>>, vector<1x128xf32>
    %4 = vector.broadcast %3 : vector<1x128xf32> to vector<512x128xf32>
    %5 = arith.addf %2, %4 : vector<512x128xf32>
    %cst_5 = arith.constant 0.000000e+00 : f32
    %6 = vector.broadcast %cst_5 : f32 to vector<512x128xf32>
    %7 = arith.maximumf %5, %6 : vector<512x128xf32>
    %c0_6 = arith.constant 0 : index
    %c0_7 = arith.constant 0 : index
    %8 = vector.load %arg2[%c0_6, %c0_7] : memref<512x9xf32, #tpu.memory_space<vmem>>, vector<512x9xf32>
    %c9_i32 = arith.constant 9 : i32
    %9 = tpu.dynamic_rotate %7 by %c9_i32 dim 0 : vector<512x128xf32>, i32 -> vector<512x128xf32>
    %10 = vector.extract_strided_slice %8 {offsets = [0, 0], sizes = [512, 1], strides = [1, 1]} : vector<512x9xf32> to vector<512x1xf32>
    %11 = vector.broadcast %10 : vector<512x1xf32> to vector<512x128xf32>
    %12 = arith.mulf %9, %11 : vector<512x128xf32>
    %c0_8 = arith.constant 0 : index
    %c0_9 = arith.constant 0 : index
    %c0_10 = arith.constant 0 : index
    %13 = vector.load %arg5[%c0_8, %c0_9, %c0_10] : memref<9x128x128xf32, #tpu.memory_space<vmem>>, vector<1x128x128xf32>
    %14 = vector.shape_cast %13 : vector<1x128x128xf32> to vector<128x128xf32>
    %cst_11 = arith.constant dense<0.000000e+00> : vector<512x128xf32>
    %15 = tpu.matmul %12, %14, %cst_11 {dimension_numbers = #tpu.dot_dimension_numbers<[1], [0], [0], [1], [0, 0, 1, 1], [], []>} : vector<512x128xf32>, vector<128x128xf32>, vector<512x128xf32> -> vector<512x128xf32>
    %c8_i32 = arith.constant 8 : i32
    %16 = tpu.dynamic_rotate %7 by %c8_i32 dim 0 : vector<512x128xf32>, i32 -> vector<512x128xf32>
    %17 = vector.extract_strided_slice %8 {offsets = [0, 1], sizes = [512, 1], strides = [1, 1]} : vector<512x9xf32> to vector<512x1xf32>
    %18 = vector.broadcast %17 : vector<512x1xf32> to vector<512x128xf32>
    %19 = arith.mulf %16, %18 : vector<512x128xf32>
    %c1 = arith.constant 1 : index
    %c0_12 = arith.constant 0 : index
    %c0_13 = arith.constant 0 : index
    %20 = vector.load %arg5[%c1, %c0_12, %c0_13] : memref<9x128x128xf32, #tpu.memory_space<vmem>>, vector<1x128x128xf32>
    %21 = vector.shape_cast %20 : vector<1x128x128xf32> to vector<128x128xf32>
    %cst_14 = arith.constant dense<0.000000e+00> : vector<512x128xf32>
    %22 = tpu.matmul %19, %21, %cst_14 {dimension_numbers = #tpu.dot_dimension_numbers<[1], [0], [0], [1], [0, 0, 1, 1], [], []>} : vector<512x128xf32>, vector<128x128xf32>, vector<512x128xf32> -> vector<512x128xf32>
    %23 = arith.addf %15, %22 : vector<512x128xf32>
    %c7_i32 = arith.constant 7 : i32
    %24 = tpu.dynamic_rotate %7 by %c7_i32 dim 0 : vector<512x128xf32>, i32 -> vector<512x128xf32>
    %25 = vector.extract_strided_slice %8 {offsets = [0, 2], sizes = [512, 1], strides = [1, 1]} : vector<512x9xf32> to vector<512x1xf32>
    %26 = vector.broadcast %25 : vector<512x1xf32> to vector<512x128xf32>
    %27 = arith.mulf %24, %26 : vector<512x128xf32>
    %c2 = arith.constant 2 : index
    %c0_15 = arith.constant 0 : index
    %c0_16 = arith.constant 0 : index
    %28 = vector.load %arg5[%c2, %c0_15, %c0_16] : memref<9x128x128xf32, #tpu.memory_space<vmem>>, vector<1x128x128xf32>
    %29 = vector.shape_cast %28 : vector<1x128x128xf32> to vector<128x128xf32>
    %cst_17 = arith.constant dense<0.000000e+00> : vector<512x128xf32>
    %30 = tpu.matmul %27, %29, %cst_17 {dimension_numbers = #tpu.dot_dimension_numbers<[1], [0], [0], [1], [0, 0, 1, 1], [], []>} : vector<512x128xf32>, vector<128x128xf32>, vector<512x128xf32> -> vector<512x128xf32>
    %31 = arith.addf %23, %30 : vector<512x128xf32>
    %c1_i32 = arith.constant 1 : i32
    %32 = tpu.dynamic_rotate %7 by %c1_i32 dim 0 : vector<512x128xf32>, i32 -> vector<512x128xf32>
    %33 = vector.extract_strided_slice %8 {offsets = [0, 3], sizes = [512, 1], strides = [1, 1]} : vector<512x9xf32> to vector<512x1xf32>
    %34 = vector.broadcast %33 : vector<512x1xf32> to vector<512x128xf32>
    %35 = arith.mulf %32, %34 : vector<512x128xf32>
    %c3 = arith.constant 3 : index
    %c0_18 = arith.constant 0 : index
    %c0_19 = arith.constant 0 : index
    %36 = vector.load %arg5[%c3, %c0_18, %c0_19] : memref<9x128x128xf32, #tpu.memory_space<vmem>>, vector<1x128x128xf32>
    %37 = vector.shape_cast %36 : vector<1x128x128xf32> to vector<128x128xf32>
    %cst_20 = arith.constant dense<0.000000e+00> : vector<512x128xf32>
    %38 = tpu.matmul %35, %37, %cst_20 {dimension_numbers = #tpu.dot_dimension_numbers<[1], [0], [0], [1], [0, 0, 1, 1], [], []>} : vector<512x128xf32>, vector<128x128xf32>, vector<512x128xf32> -> vector<512x128xf32>
    %39 = arith.addf %31, %38 : vector<512x128xf32>
    %c4 = arith.constant 4 : index
    %c0_21 = arith.constant 0 : index
    %c0_22 = arith.constant 0 : index
    %40 = vector.load %arg5[%c4, %c0_21, %c0_22] : memref<9x128x128xf32, #tpu.memory_space<vmem>>, vector<1x128x128xf32>
    %41 = vector.shape_cast %40 : vector<1x128x128xf32> to vector<128x128xf32>
    %cst_23 = arith.constant dense<0.000000e+00> : vector<512x128xf32>
    %42 = tpu.matmul %7, %41, %cst_23 {dimension_numbers = #tpu.dot_dimension_numbers<[1], [0], [0], [1], [0, 0, 1, 1], [], []>} : vector<512x128xf32>, vector<128x128xf32>, vector<512x128xf32> -> vector<512x128xf32>
    %43 = arith.addf %39, %42 : vector<512x128xf32>
    %c511_i32 = arith.constant 511 : i32
    %44 = tpu.dynamic_rotate %7 by %c511_i32 dim 0 : vector<512x128xf32>, i32 -> vector<512x128xf32>
    %45 = vector.extract_strided_slice %8 {offsets = [0, 5], sizes = [512, 1], strides = [1, 1]} : vector<512x9xf32> to vector<512x1xf32>
    %46 = vector.broadcast %45 : vector<512x1xf32> to vector<512x128xf32>
    %47 = arith.mulf %44, %46 : vector<512x128xf32>
    %c5 = arith.constant 5 : index
    %c0_24 = arith.constant 0 : index
    %c0_25 = arith.constant 0 : index
    %48 = vector.load %arg5[%c5, %c0_24, %c0_25] : memref<9x128x128xf32, #tpu.memory_space<vmem>>, vector<1x128x128xf32>
    %49 = vector.shape_cast %48 : vector<1x128x128xf32> to vector<128x128xf32>
    %cst_26 = arith.constant dense<0.000000e+00> : vector<512x128xf32>
    %50 = tpu.matmul %47, %49, %cst_26 {dimension_numbers = #tpu.dot_dimension_numbers<[1], [0], [0], [1], [0, 0, 1, 1], [], []>} : vector<512x128xf32>, vector<128x128xf32>, vector<512x128xf32> -> vector<512x128xf32>
    %51 = arith.addf %43, %50 : vector<512x128xf32>
    %c505_i32 = arith.constant 505 : i32
    %52 = tpu.dynamic_rotate %7 by %c505_i32 dim 0 : vector<512x128xf32>, i32 -> vector<512x128xf32>
    %53 = vector.extract_strided_slice %8 {offsets = [0, 6], sizes = [512, 1], strides = [1, 1]} : vector<512x9xf32> to vector<512x1xf32>
    %54 = vector.broadcast %53 : vector<512x1xf32> to vector<512x128xf32>
    %55 = arith.mulf %52, %54 : vector<512x128xf32>
    %c6 = arith.constant 6 : index
    %c0_27 = arith.constant 0 : index
    %c0_28 = arith.constant 0 : index
    %56 = vector.load %arg5[%c6, %c0_27, %c0_28] : memref<9x128x128xf32, #tpu.memory_space<vmem>>, vector<1x128x128xf32>
    %57 = vector.shape_cast %56 : vector<1x128x128xf32> to vector<128x128xf32>
    %cst_29 = arith.constant dense<0.000000e+00> : vector<512x128xf32>
    %58 = tpu.matmul %55, %57, %cst_29 {dimension_numbers = #tpu.dot_dimension_numbers<[1], [0], [0], [1], [0, 0, 1, 1], [], []>} : vector<512x128xf32>, vector<128x128xf32>, vector<512x128xf32> -> vector<512x128xf32>
    %59 = arith.addf %51, %58 : vector<512x128xf32>
    %c504_i32 = arith.constant 504 : i32
    %60 = tpu.dynamic_rotate %7 by %c504_i32 dim 0 : vector<512x128xf32>, i32 -> vector<512x128xf32>
    %61 = vector.extract_strided_slice %8 {offsets = [0, 7], sizes = [512, 1], strides = [1, 1]} : vector<512x9xf32> to vector<512x1xf32>
    %62 = vector.broadcast %61 : vector<512x1xf32> to vector<512x128xf32>
    %63 = arith.mulf %60, %62 : vector<512x128xf32>
    %c7 = arith.constant 7 : index
    %c0_30 = arith.constant 0 : index
    %c0_31 = arith.constant 0 : index
    %64 = vector.load %arg5[%c7, %c0_30, %c0_31] : memref<9x128x128xf32, #tpu.memory_space<vmem>>, vector<1x128x128xf32>
    %65 = vector.shape_cast %64 : vector<1x128x128xf32> to vector<128x128xf32>
    %cst_32 = arith.constant dense<0.000000e+00> : vector<512x128xf32>
    %66 = tpu.matmul %63, %65, %cst_32 {dimension_numbers = #tpu.dot_dimension_numbers<[1], [0], [0], [1], [0, 0, 1, 1], [], []>} : vector<512x128xf32>, vector<128x128xf32>, vector<512x128xf32> -> vector<512x128xf32>
    %67 = arith.addf %59, %66 : vector<512x128xf32>
    %c503_i32 = arith.constant 503 : i32
    %68 = tpu.dynamic_rotate %7 by %c503_i32 dim 0 : vector<512x128xf32>, i32 -> vector<512x128xf32>
    %69 = vector.extract_strided_slice %8 {offsets = [0, 8], sizes = [512, 1], strides = [1, 1]} : vector<512x9xf32> to vector<512x1xf32>
    %70 = vector.broadcast %69 : vector<512x1xf32> to vector<512x128xf32>
    %71 = arith.mulf %68, %70 : vector<512x128xf32>
    %c8 = arith.constant 8 : index
    %c0_33 = arith.constant 0 : index
    %c0_34 = arith.constant 0 : index
    %72 = vector.load %arg5[%c8, %c0_33, %c0_34] : memref<9x128x128xf32, #tpu.memory_space<vmem>>, vector<1x128x128xf32>
    %73 = vector.shape_cast %72 : vector<1x128x128xf32> to vector<128x128xf32>
    %cst_35 = arith.constant dense<0.000000e+00> : vector<512x128xf32>
    %74 = tpu.matmul %71, %73, %cst_35 {dimension_numbers = #tpu.dot_dimension_numbers<[1], [0], [0], [1], [0, 0, 1, 1], [], []>} : vector<512x128xf32>, vector<128x128xf32>, vector<512x128xf32> -> vector<512x128xf32>
    %75 = arith.addf %67, %74 : vector<512x128xf32>
    %c0_36 = arith.constant 0 : index
    %c0_37 = arith.constant 0 : index
    %76 = vector.load %arg6[%c0_36, %c0_37] : memref<1x128xf32, #tpu.memory_space<vmem>>, vector<1x128xf32>
    %77 = vector.broadcast %76 : vector<1x128xf32> to vector<512x128xf32>
    %78 = arith.addf %75, %77 : vector<512x128xf32>
    %cst_38 = arith.constant 0.000000e+00 : f32
    %79 = vector.broadcast %cst_38 : f32 to vector<512x128xf32>
    %80 = arith.maximumf %78, %79 : vector<512x128xf32>
    %c0_39 = arith.constant 0 : index
    %c0_40 = arith.constant 0 : index
    %81 = vector.load %arg7[%c0_39, %c0_40] : memref<128x128xf32, #tpu.memory_space<vmem>>, vector<128x128xf32>
    %cst_41 = arith.constant dense<0.000000e+00> : vector<512x128xf32>
    %82 = tpu.matmul %80, %81, %cst_41 {dimension_numbers = #tpu.dot_dimension_numbers<[1], [0], [0], [1], [0, 0, 1, 1], [], []>} : vector<512x128xf32>, vector<128x128xf32>, vector<512x128xf32> -> vector<512x128xf32>
    %c0_42 = arith.constant 0 : index
    %c0_43 = arith.constant 0 : index
    %83 = vector.load %arg8[%c0_42, %c0_43] : memref<1x128xf32, #tpu.memory_space<vmem>>, vector<1x128xf32>
    %84 = vector.broadcast %83 : vector<1x128xf32> to vector<512x128xf32>
    %85 = arith.addf %82, %84 : vector<512x128xf32>
    %86 = arith.addf %85, %0 : vector<512x128xf32>
    %cst_44 = arith.constant 0.000000e+00 : f32
    %87 = vector.broadcast %cst_44 : f32 to vector<512x128xf32>
    %88 = arith.maximumf %86, %87 : vector<512x128xf32>
    %c0_45 = arith.constant 0 : index
    %c0_46 = arith.constant 0 : index
    %89 = vector.load %arg9[%c0_45, %c0_46] : memref<512x128xf32, #tpu.memory_space<vmem>>, vector<512x128xf32>
    tpu.vector_store %arg9[%c0_45, %c0_46], %88 {strides = array<i32>} : memref<512x128xf32, #tpu.memory_space<vmem>>, vector<512x128xf32>,
    return
  }
  func.func @transform_0(%arg0: i32) -> (i32, i32) {
    %c0_i32 = arith.constant 0 : i32
    %c0_i32_0 = arith.constant 0 : i32
    return %arg0, %c0_i32 : i32, i32
  }
  func.func @transform_1(%arg0: i32) -> (i32, i32) {
    %c0_i32 = arith.constant 0 : i32
    %c0_i32_0 = arith.constant 0 : i32
    %c0_i32_1 = arith.constant 0 : i32
    return %c0_i32, %c0_i32_0 : i32, i32
  }
  func.func @transform_2(%arg0: i32) -> (i32, i32) {
    %c0_i32 = arith.constant 0 : i32
    %c0_i32_0 = arith.constant 0 : i32
    %c0_i32_1 = arith.constant 0 : i32
    return %c0_i32, %c0_i32_0 : i32, i32
  }
  func.func @transform_3(%arg0: i32) -> (i32, i32) {
    %c0_i32 = arith.constant 0 : i32
    %c0_i32_0 = arith.constant 0 : i32
    %c0_i32_1 = arith.constant 0 : i32
    return %c0_i32, %c0_i32_0 : i32, i32
  }
  func.func @transform_4(%arg0: i32) -> (i32, i32, i32) {
    %c0_i32 = arith.constant 0 : i32
    %c0_i32_0 = arith.constant 0 : i32
    %c0_i32_1 = arith.constant 0 : i32
    %c0_i32_2 = arith.constant 0 : i32
    return %c0_i32, %c0_i32_0, %c0_i32_1 : i32, i32, i32
  }
  func.func @transform_5(%arg0: i32) -> (i32, i32) {
    %c0_i32 = arith.constant 0 : i32
    %c0_i32_0 = arith.constant 0 : i32
    %c0_i32_1 = arith.constant 0 : i32
    return %c0_i32, %c0_i32_0 : i32, i32
  }
  func.func @transform_6(%arg0: i32) -> (i32, i32) {
    %c0_i32 = arith.constant 0 : i32
    %c0_i32_0 = arith.constant 0 : i32
    %c0_i32_1 = arith.constant 0 : i32
    return %c0_i32, %c0_i32_0 : i32, i32
  }
  func.func @transform_7(%arg0: i32) -> (i32, i32) {
    %c0_i32 = arith.constant 0 : i32
    %c0_i32_0 = arith.constant 0 : i32
    %c0_i32_1 = arith.constant 0 : i32
    return %c0_i32, %c0_i32_0 : i32, i32
  }
  func.func @transform_8(%arg0: i32) -> (i32, i32) {
    %c0_i32 = arith.constant 0 : i32
    %c0_i32_0 = arith.constant 0 : i32
    return %arg0, %c0_i32 : i32, i32
  }
}

</mosaic_0001>

<llo_original>
// kernel: tpu_custom_call.1
$region0: #{tpu_custom_call.1}
  #allocation0 [shape = 'u32[]', space=smem, size = 0x4, offset = 0x4, fixed_abs, tag = 'smem constant byte address 0x4 - core index']
  #allocation1 [shape = 'u32[144,128]{1,0:T(1,128)}', space=vmem, size = 0x12000, scoped, tag = 'internal scratch']
  %s0 = inlined_call_operand.hbm [shape: f32[1024,128], index: 0, kind: input, shape index: {}]
  %s1 = inlined_call_operand.vmem [shape: f32[512,9], index: 1, kind: input, shape index: {}]
  %s2 = inlined_call_operand.vmem [shape: f32[128,128], index: 2, kind: input, shape index: {}]
  %s3 = inlined_call_operand.vmem [shape: f32[1,128], index: 3, kind: input, shape index: {}]
  %s4 = inlined_call_operand.hbm [shape: f32[9,128,128], index: 4, kind: input, shape index: {}]
  %s5 = inlined_call_operand.vmem [shape: f32[1,128], index: 5, kind: input, shape index: {}]
  %s6 = inlined_call_operand.vmem [shape: f32[128,128], index: 6, kind: input, shape index: {}]
  %s7 = inlined_call_operand.vmem [shape: f32[1,128], index: 7, kind: input, shape index: {}]
  %s8 = inlined_call_operand.hbm [shape: f32[1024,128], index: 8, kind: output, shape index: {}]
  %s9 = sld [smem:[#allocation0]]
  $region73: #{tpu_custom_call.1} parent=0
    _
  %s11 = ssub.s32 1, %s9
  %s12 = scalar_select 0, %s11, %s9
  $region1: #{tpu_custom_call.1} parent=0
    #allocation2 [shape = 'u8[524288]{0}', space=vmem, size = 0x80000, scoped, tag = 'input window, operand 0']
    #allocation3 [shape = 's32[2]{0}', space=sflag, size = 0x8, scoped, tag = 'scoped memory for tpu_custom_call.1']
    #allocation4 [shape = 's32[2]{0}', space=sflag, size = 0x8, scoped, tag = 'scoped memory for tpu_custom_call.1']
    #allocation5 [shape = 'u8[589824]{0}', space=vmem, size = 0x90000, scoped, tag = 'input window, operand 4, single buffered']
    #allocation6 [shape = 's32[1]{0}', space=sflag, size = 0x4, scoped, tag = 'scoped memory for tpu_custom_call.1']
    #allocation7 [shape = 'u8[524288]{0}', space=vmem, size = 0x80000, scoped, tag = 'output window, operand 0']
    %13 = vsyncpa [#allocation3], 0
    %s14 = scalar_lea.sflag [#allocation3], 1
    %15 = vsyncpa %s14, 0
    %16 = vsyncpa [#allocation6], 0
    %17 = vsyncpa [#allocation4], 0
    %s18 = scalar_lea.sflag [#allocation4], 1
    %19 = vsyncpa %s18, 0
    loop: start=0, step=1, limit=4
    $region2: #{tpu_custom_call.1} parent=1 // loop_pre_header
      _
    $region3: #{tpu_custom_call.1} parent=1 // loop_header
      %s21 = sphi 0, %s25
      %p22 = scmp.ge.s32.totalorder %s21, 4
      %s31 = sphi 0, %s33
      %s34 = sphi 0, %s31
      %s35 = sphi 0, %s34
      %s51 = sphi 0, %s35
      %s55 = sphi 0, %s55
      %s57 = sphi 0, %s55
      %s58 = sphi 0, %s57
      %s72 = sphi 0, %s58
      %s76 = sphi 0, %s76
      %s78 = sphi 0, %s76
      %s79 = sphi 0, %s78
      %s93 = sphi 0, %s79
      %s97 = sphi 0, %s97
      %s99 = sphi 0, %s97
      %s100 = sphi 0, %s99
      %s114 = sphi 0, %s100
      %s118 = sphi 0, %s118
      %s120 = sphi 0, %s118
      %s121 = sphi 0, %s120
      %s135 = sphi 0, %s121
      %s139 = sphi 0, %s139
      %s141 = sphi 0, %s139
      %s142 = sphi 0, %s141
      %s156 = sphi 0, %s142
      %s160 = sphi 0, %s160
      %s162 = sphi 0, %s160
      %s163 = sphi 0, %s162
      %s177 = sphi 0, %s163
      %s181 = sphi 0, %s181
      %s183 = sphi 0, %s181
      %s184 = sphi 0, %s183
      %s198 = sphi 0, %s184
      %s204 = sphi 0, %s206
      %s207 = sphi 0, %s204
      %s208 = sphi 0, %s207
      %s224 = sphi 0, %s208
    $region4: #{tpu_custom_call.1} parent=1 // loop_header_branch
      %24 = sbr.rel (%p22) target = $region8
    $region5: #{tpu_custom_call.1} parent=1 // loop_body
      %s26 = ssub.s32 %s21, 1
      %s27 = ssub.s32 %s21, 2
      %s28 = sadd.s32 %s21, 1
      %s29 = ssub.s32 %s21, %s28
      %p30 = scmp.eq.s32.totalorder %s29, 0
      %s32 = sadd.s32 %s31, 1
      %s33 = scalar_select %p30, %s31, %s32
      %p36 = pneg %p30
      %p37 = scmp.eq.s32.totalorder %s21, 1
      %p38 = por %p36, %p37
      %p39 = scmp.ne.s32.totalorder %s31, %s34
      %p40 = scmp.eq.s32.totalorder %s21, 0
      %p41 = por %p39, %p40
      %p42 = scmp.ne.s32.totalorder %s31, %s34
      %p43 = scmp.eq.s32.totalorder %s26, 1
      %p44 = por %p42, %p43
      %p45 = scmp.ne.s32.totalorder %s34, %s35
      %p46 = scmp.eq.s32.totalorder %s26, 0
      %p47 = por %p45, %p46
      %p48 = scmp.ne.s32.totalorder %s34, %s35
      %p49 = scmp.eq.s32.totalorder %s27, 1
      %p50 = por %p48, %p49
      %p52 = scmp.ne.s32.totalorder %s35, %s51
      %p53 = scmp.eq.s32.totalorder %s27, 0
      %p54 = por %p52, %p53
      %s56 = sadd.s32 %s55, 1
      %p59 = scmp.eq.s32.totalorder %s21, 1
      %p60 = scmp.ne.s32.totalorder %s55, %s57
      %p61 = scmp.eq.s32.totalorder %s21, 0
      %p62 = por %p60, %p61
      %p63 = scmp.ne.s32.totalorder %s55, %s57
      %p64 = scmp.eq.s32.totalorder %s26, 1
      %p65 = por %p63, %p64
      %p66 = scmp.ne.s32.totalorder %s57, %s58
      %p67 = scmp.eq.s32.totalorder %s26, 0
      %p68 = por %p66, %p67
      %p69 = scmp.ne.s32.totalorder %s57, %s58
      %p70 = scmp.eq.s32.totalorder %s27, 1
      %p71 = por %p69, %p70
      %p73 = scmp.ne.s32.totalorder %s58, %s72
      %p74 = scmp.eq.s32.totalorder %s27, 0
      %p75 = por %p73, %p74
      %s77 = sadd.s32 %s76, 1
      %p80 = scmp.eq.s32.totalorder %s21, 1
      %p81 = scmp.ne.s32.totalorder %s76, %s78
      %p82 = scmp.eq.s32.totalorder %s21, 0
      %p83 = por %p81, %p82
      %p84 = scmp.ne.s32.totalorder %s76, %s78
      %p85 = scmp.eq.s32.totalorder %s26, 1
      %p86 = por %p84, %p85
      %p87 = scmp.ne.s32.totalorder %s78, %s79
      %p88 = scmp.eq.s32.totalorder %s26, 0
      %p89 = por %p87, %p88
      %p90 = scmp.ne.s32.totalorder %s78, %s79
      %p91 = scmp.eq.s32.totalorder %s27, 1
      %p92 = por %p90, %p91
      %p94 = scmp.ne.s32.totalorder %s79, %s93
      %p95 = scmp.eq.s32.totalorder %s27, 0
      %p96 = por %p94, %p95
      %s98 = sadd.s32 %s97, 1
      %p101 = scmp.eq.s32.totalorder %s21, 1
      %p102 = scmp.ne.s32.totalorder %s97, %s99
      %p103 = scmp.eq.s32.totalorder %s21, 0
      %p104 = por %p102, %p103
      %p105 = scmp.ne.s32.totalorder %s97, %s99
      %p106 = scmp.eq.s32.totalorder %s26, 1
      %p107 = por %p105, %p106
      %p108 = scmp.ne.s32.totalorder %s99, %s100
      %p109 = scmp.eq.s32.totalorder %s26, 0
      %p110 = por %p108, %p109
      %p111 = scmp.ne.s32.totalorder %s99, %s100
      %p112 = scmp.eq.s32.totalorder %s27, 1
      %p113 = por %p111, %p112
      %p115 = scmp.ne.s32.totalorder %s100, %s114
      %p116 = scmp.eq.s32.totalorder %s27, 0
      %p117 = por %p115, %p116
      %s119 = sadd.s32 %s118, 1
      %p122 = scmp.eq.s32.totalorder %s21, 1
      %p123 = scmp.ne.s32.totalorder %s118, %s120
      %p124 = scmp.eq.s32.totalorder %s21, 0
      %p125 = por %p123, %p124
      %p126 = scmp.ne.s32.totalorder %s118, %s120
      %p127 = scmp.eq.s32.totalorder %s26, 1
      %p128 = por %p126, %p127
      %p129 = scmp.ne.s32.totalorder %s120, %s121
      %p130 = scmp.eq.s32.totalorder %s26, 0
      %p131 = por %p129, %p130
      %p132 = scmp.ne.s32.totalorder %s120, %s121
      %p133 = scmp.eq.s32.totalorder %s27, 1
      %p134 = por %p132, %p133
      %p136 = scmp.ne.s32.totalorder %s121, %s135
      %p137 = scmp.eq.s32.totalorder %s27, 0
      %p138 = por %p136, %p137
      %s140 = sadd.s32 %s139, 1
      %p143 = scmp.eq.s32.totalorder %s21, 1
      %p144 = scmp.ne.s32.totalorder %s139, %s141
      %p145 = scmp.eq.s32.totalorder %s21, 0
      %p146 = por %p144, %p145
      %p147 = scmp.ne.s32.totalorder %s139, %s141
      %p148 = scmp.eq.s32.totalorder %s26, 1
      %p149 = por %p147, %p148
      %p150 = scmp.ne.s32.totalorder %s141, %s142
      %p151 = scmp.eq.s32.totalorder %s26, 0
      %p152 = por %p150, %p151
      %p153 = scmp.ne.s32.totalorder %s141, %s142
      %p154 = scmp.eq.s32.totalorder %s27, 1
      %p155 = por %p153, %p154
      %p157 = scmp.ne.s32.totalorder %s142, %s156
      %p158 = scmp.eq.s32.totalorder %s27, 0
      %p159 = por %p157, %p158
      %s161 = sadd.s32 %s160, 1
      %p164 = scmp.eq.s32.totalorder %s21, 1
      %p165 = scmp.ne.s32.totalorder %s160, %s162
      %p166 = scmp.eq.s32.totalorder %s21, 0
      %p167 = por %p165, %p166
      %p168 = scmp.ne.s32.totalorder %s160, %s162
      %p169 = scmp.eq.s32.totalorder %s26, 1
      %p170 = por %p168, %p169
      %p171 = scmp.ne.s32.totalorder %s162, %s163
      %p172 = scmp.eq.s32.totalorder %s26, 0
      %p173 = por %p171, %p172
      %p174 = scmp.ne.s32.totalorder %s162, %s163
      %p175 = scmp.eq.s32.totalorder %s27, 1
      %p176 = por %p174, %p175
      %p178 = scmp.ne.s32.totalorder %s163, %s177
      %p179 = scmp.eq.s32.totalorder %s27, 0
      %p180 = por %p178, %p179
      %s182 = sadd.s32 %s181, 1
      %p185 = scmp.eq.s32.totalorder %s21, 1
      %p186 = scmp.ne.s32.totalorder %s181, %s183
      %p187 = scmp.eq.s32.totalorder %s21, 0
      %p188 = por %p186, %p187
      %p189 = scmp.ne.s32.totalorder %s181, %s183
      %p190 = scmp.eq.s32.totalorder %s26, 1
      %p191 = por %p189, %p190
      %p192 = scmp.ne.s32.totalorder %s183, %s184
      %p193 = scmp.eq.s32.totalorder %s26, 0
      %p194 = por %p192, %p193
      %p195 = scmp.ne.s32.totalorder %s183, %s184
      %p196 = scmp.eq.s32.totalorder %s27, 1
      %p197 = por %p195, %p196
      %p199 = scmp.ne.s32.totalorder %s184, %s198
      %p200 = scmp.eq.s32.totalorder %s27, 0
      %p201 = por %p199, %p200
      %s202 = ssub.s32 %s21, %s28
      %p203 = scmp.eq.s32.totalorder %s202, 0
      %s205 = sadd.s32 %s204, 1
      %s206 = scalar_select %p203, %s204, %s205
      %p209 = pneg %p203
      %p210 = scmp.eq.s32.totalorder %s21, 1
      %p211 = por %p209, %p210
      %p212 = scmp.ne.s32.totalorder %s204, %s207
      %p213 = scmp.eq.s32.totalorder %s21, 0
      %p214 = por %p212, %p213
      %p215 = scmp.ne.s32.totalorder %s204, %s207
      %p216 = scmp.eq.s32.totalorder %s26, 1
      %p217 = por %p215, %p216
      %p218 = scmp.ne.s32.totalorder %s207, %s208
      %p219 = scmp.eq.s32.totalorder %s26, 0
      %p220 = por %p218, %p219
      %p221 = scmp.ne.s32.totalorder %s207, %s208
      %p222 = scmp.eq.s32.totalorder %s27, 1
      %p223 = por %p221, %p222
      %p225 = scmp.ne.s32.totalorder %s208, %s224
      %p226 = scmp.eq.s32.totalorder %s27, 0
      %p227 = por %p225, %p226
      %p228 = scmp.le.s32.totalorder 1, %s21
      %p229 = scmp.lt.s32.totalorder %s21, 3
      %p230 = pnand %p228, %p229
      %p231 = pneg %p230
      // Predicated region
      $region9: #{tpu_custom_call.1} parent=5 // pred_check
        _
      $region10: #{tpu_custom_call.1} parent=5 // pred_check_branch
        %233 = sbr.rel (%p230) target = $region12
      $region11: #{tpu_custom_call.1} parent=5 // pred_region
        %s234 = ssub.s32 %s21, 1
        // Predicated region
        $region13: #{tpu_custom_call.1} parent=11 // pred_check
          %p235 = pneg %p68
        $region14: #{tpu_custom_call.1} parent=11 // pred_check_branch
          %237 = sbr.rel (%p235) target = $region16
        $region15: #{tpu_custom_call.1} parent=11 // pred_region
          _
        $region16: #{tpu_custom_call.1} parent=11 // pred_fallthru
          _
        // Predicated region
        $region17: #{tpu_custom_call.1} parent=11 // pred_check
          %p238 = pneg %p89
        $region18: #{tpu_custom_call.1} parent=11 // pred_check_branch
          %240 = sbr.rel (%p238) target = $region20
        $region19: #{tpu_custom_call.1} parent=11 // pred_region
          _
        $region20: #{tpu_custom_call.1} parent=11 // pred_fallthru
          _
        // Predicated region
        $region21: #{tpu_custom_call.1} parent=11 // pred_check
          %p241 = pneg %p110
        $region22: #{tpu_custom_call.1} parent=11 // pred_check_branch
          %243 = sbr.rel (%p241) target = $region24
        $region23: #{tpu_custom_call.1} parent=11 // pred_region
          _
        $region24: #{tpu_custom_call.1} parent=11 // pred_fallthru
          _
        // Predicated region
        $region25: #{tpu_custom_call.1} parent=11 // pred_check
          %p244 = pneg %p131
        $region26: #{tpu_custom_call.1} parent=11 // pred_check_branch
          %246 = sbr.rel (%p244) target = $region28
        $region27: #{tpu_custom_call.1} parent=11 // pred_region
          %s248 = ssub.s32 18432, 18432
          %249 = vsyncadd [#allocation6], %s248
          %s250 = sshll.u32 [#allocation5], 4
          %s251 = int_to_ptr.vmem [resolvable:$true] %s250
          %256 = dma.hbm_to_vmem [thread:$0]  %s4, 18432, %s251, [#allocation6], 128, 128, 8
        $region28: #{tpu_custom_call.1} parent=11 // pred_fallthru
          _
        // Predicated region
        $region29: #{tpu_custom_call.1} parent=11 // pred_check
          %p257 = pneg %p152
        $region30: #{tpu_custom_call.1} parent=11 // pred_check_branch
          %259 = sbr.rel (%p257) target = $region32
        $region31: #{tpu_custom_call.1} parent=11 // pred_region
          _
        $region32: #{tpu_custom_call.1} parent=11 // pred_fallthru
          _
        // Predicated region
        $region33: #{tpu_custom_call.1} parent=11 // pred_check
          %p260 = pneg %p173
        $region34: #{tpu_custom_call.1} parent=11 // pred_check_branch
          %262 = sbr.rel (%p260) target = $region36
        $region35: #{tpu_custom_call.1} parent=11 // pred_region
          _
        $region36: #{tpu_custom_call.1} parent=11 // pred_fallthru
          _
        // Predicated region
        $region37: #{tpu_custom_call.1} parent=11 // pred_check
          %p263 = pneg %p194
        $region38: #{tpu_custom_call.1} parent=11 // pred_check_branch
          %265 = sbr.rel (%p263) target = $region40
        $region39: #{tpu_custom_call.1} parent=11 // pred_region
          _
        $region40: #{tpu_custom_call.1} parent=11 // pred_fallthru
          _
      $region12: #{tpu_custom_call.1} parent=5 // pred_fallthru
        _
      %p266 = scmp.lt.s32.totalorder %s21, 2
      // Predicated region
      $region41: #{tpu_custom_call.1} parent=5 // pred_check
        %p267 = pneg %p266
      $region42: #{tpu_custom_call.1} parent=5 // pred_check_branch
        %269 = sbr.rel (%p267) target = $region44
      $region43: #{tpu_custom_call.1} parent=5 // pred_region
        // Predicated region
        $region45: #{tpu_custom_call.1} parent=43 // pred_check
          %p270 = pneg %p41
        $region46: #{tpu_custom_call.1} parent=43 // pred_check_branch
          %272 = sbr.rel (%p270) target = $region48
        $region47: #{tpu_custom_call.1} parent=43 // pred_region
          %s273 = sand.u32 %s31, 1
          %s274 = scalar_lea.sflag [#allocation3], %s273
          %s275 = sand.u32 %s31, 1
          %s276 = smul.addr %s275, 512
          %s277 = scalar_lea.vmem [#allocation2], %s276
          %s278 = smul.u32 64, %s21
          %s280 = ssub.s32 8192, 8192
          %281 = vsyncadd %s274, %s280
          %s282 = smul.addr %s278, 128
          %s283 = scalar_lea.hbm %s0, %s282
          %s284 = sshll.u32 %s277, 4
          %s285 = int_to_ptr.vmem [resolvable:$true] %s284
          %290 = dma.hbm_to_vmem [thread:$0]  %s283, 8192, %s285, %s274, 128, 128, 8
        $region48: #{tpu_custom_call.1} parent=43 // pred_fallthru
          _
      $region44: #{tpu_custom_call.1} parent=5 // pred_fallthru
        _
      %p291 = scmp.le.s32.totalorder 1, %s21
      %p292 = scmp.lt.s32.totalorder %s21, 3
      %p293 = pnand %p291, %p292
      %p294 = pneg %p293
      // Predicated region
      $region49: #{tpu_custom_call.1} parent=5 // pred_check
        _
      $region50: #{tpu_custom_call.1} parent=5 // pred_check_branch
        %296 = sbr.rel (%p293) target = $region52
      $region51: #{tpu_custom_call.1} parent=5 // pred_region
        %s297 = ssub.s32 %s21, 1
        %s298 = sand.u32 %s34, 1
        %s299 = scalar_lea.sflag [#allocation3], %s298
        %s300 = sand.u32 %s34, 1
        %s301 = smul.addr %s300, 512
        %s302 = scalar_lea.vmem [#allocation2], %s301
        // Predicated region
        $region53: #{tpu_custom_call.1} parent=51 // pred_check
          %p303 = pneg %p47
        $region54: #{tpu_custom_call.1} parent=51 // pred_check_branch
          %305 = sbr.rel (%p303) target = $region56
        $region55: #{tpu_custom_call.1} parent=51 // pred_region
          %306 = dma.done %s299, 8192
        $region56: #{tpu_custom_call.1} parent=51 // pred_fallthru
          _
        // Predicated region
        $region57: #{tpu_custom_call.1} parent=51 // pred_check
          %p307 = pneg %p131
        $region58: #{tpu_custom_call.1} parent=51 // pred_check_branch
          %309 = sbr.rel (%p307) target = $region60
        $region59: #{tpu_custom_call.1} parent=51 // pred_region
          %310 = dma.done [#allocation6], 18432
        $region60: #{tpu_custom_call.1} parent=51 // pred_fallthru
          _
        %s311 = sand.u32 %s34, 1
        %s312 = scalar_lea.sflag [#allocation3], %s311
        %s313 = sand.u32 %s34, 1
        %s314 = smul.addr %s313, 512
        %s315 = scalar_lea.vmem [#allocation2], %s314
        %p316 = pneg %p47
        %p317 = pneg %p44
        %p318 = pneg %p68
        %p319 = pneg %p65
        %p320 = pneg %p89
        %p321 = pneg %p86
        %p322 = pneg %p110
        %p323 = pneg %p107
        %p324 = pneg %p131
        %p325 = pneg %p128
        %p326 = pneg %p152
        %p327 = pneg %p149
        %p328 = pneg %p173
        %p329 = pneg %p170
        %p330 = pneg %p194
        %p331 = pneg %p191
        %p332 = pneg %p220
        %p333 = pneg %p217
        %s334 = sand.u32 %s207, 1
        %s335 = scalar_lea.sflag [#allocation4], %s334
        %s336 = sand.u32 %s207, 1
        %s337 = smul.addr %s336, 512
        %s338 = scalar_lea.vmem [#allocation7], %s337
        %s339 = smul.u32 64, %s26
        %s340 = smul.u32 64, %s26
        %v341 = vld [vmem:[%s302] sm:$0xff]
        %v342 = vld [vmem:[%s302 + $0x8] sm:$0xff]
        %v343 = vld [vmem:[%s302 + $0x10] sm:$0xff]
        %v344 = vld [vmem:[%s302 + $0x18] sm:$0xff]
        %v345 = vld [vmem:[%s302 + $0x20] sm:$0xff]
        %v346 = vld [vmem:[%s302 + $0x28] sm:$0xff]
        %v347 = vld [vmem:[%s302 + $0x30] sm:$0xff]
        %v348 = vld [vmem:[%s302 + $0x38] sm:$0xff]
        %v349 = vld [vmem:[%s302 + $0x40] sm:$0xff]
        %v350 = vld [vmem:[%s302 + $0x48] sm:$0xff]
        %v351 = vld [vmem:[%s302 + $0x50] sm:$0xff]
        %v352 = vld [vmem:[%s302 + $0x58] sm:$0xff]
        %v353 = vld [vmem:[%s302 + $0x60] sm:$0xff]
        %v354 = vld [vmem:[%s302 + $0x68] sm:$0xff]
        %v355 = vld [vmem:[%s302 + $0x70] sm:$0xff]
        %v356 = vld [vmem:[%s302 + $0x78] sm:$0xff]
        %v357 = vld [vmem:[%s302 + $0x80] sm:$0xff]
        %v358 = vld [vmem:[%s302 + $0x88] sm:$0xff]
        %v359 = vld [vmem:[%s302 + $0x90] sm:$0xff]
        %v360 = vld [vmem:[%s302 + $0x98] sm:$0xff]
        %v361 = vld [vmem:[%s302 + $0xa0] sm:$0xff]
        %v362 = vld [vmem:[%s302 + $0xa8] sm:$0xff]
        %v363 = vld [vmem:[%s302 + $0xb0] sm:$0xff]
        %v364 = vld [vmem:[%s302 + $0xb8] sm:$0xff]
        %v365 = vld [vmem:[%s302 + $0xc0] sm:$0xff]
        %v366 = vld [vmem:[%s302 + $0xc8] sm:$0xff]
        %v367 = vld [vmem:[%s302 + $0xd0] sm:$0xff]
        %v368 = vld [vmem:[%s302 + $0xd8] sm:$0xff]
        %v369 = vld [vmem:[%s302 + $0xe0] sm:$0xff]
        %v370 = vld [vmem:[%s302 + $0xe8] sm:$0xff]
        %v371 = vld [vmem:[%s302 + $0xf0] sm:$0xff]
        %v372 = vld [vmem:[%s302 + $0xf8] sm:$0xff]
        %v373 = vld [vmem:[%s302 + $0x100] sm:$0xff]
        %v374 = vld [vmem:[%s302 + $0x108] sm:$0xff]
        %v375 = vld [vmem:[%s302 + $0x110] sm:$0xff]
        %v376 = vld [vmem:[%s302 + $0x118] sm:$0xff]
        %v377 = vld [vmem:[%s302 + $0x120] sm:$0xff]
        %v378 = vld [vmem:[%s302 + $0x128] sm:$0xff]
        %v379 = vld [vmem:[%s302 + $0x130] sm:$0xff]
        %v380 = vld [vmem:[%s302 + $0x138] sm:$0xff]
        %v381 = vld [vmem:[%s302 + $0x140] sm:$0xff]
        %v382 = vld [vmem:[%s302 + $0x148] sm:$0xff]
        %v383 = vld [vmem:[%s302 + $0x150] sm:$0xff]
        %v384 = vld [vmem:[%s302 + $0x158] sm:$0xff]
        %v385 = vld [vmem:[%s302 + $0x160] sm:$0xff]
        %v386 = vld [vmem:[%s302 + $0x168] sm:$0xff]
        %v387 = vld [vmem:[%s302 + $0x170] sm:$0xff]
        %v388 = vld [vmem:[%s302 + $0x178] sm:$0xff]
        %v389 = vld [vmem:[%s302 + $0x180] sm:$0xff]
        %v390 = vld [vmem:[%s302 + $0x188] sm:$0xff]
        %v391 = vld [vmem:[%s302 + $0x190] sm:$0xff]
        %v392 = vld [vmem:[%s302 + $0x198] sm:$0xff]
        %v393 = vld [vmem:[%s302 + $0x1a0] sm:$0xff]
        %v394 = vld [vmem:[%s302 + $0x1a8] sm:$0xff]
        %v395 = vld [vmem:[%s302 + $0x1b0] sm:$0xff]
        %v396 = vld [vmem:[%s302 + $0x1b8] sm:$0xff]
        %v397 = vld [vmem:[%s302 + $0x1c0] sm:$0xff]
        %v398 = vld [vmem:[%s302 + $0x1c8] sm:$0xff]
        %v399 = vld [vmem:[%s302 + $0x1d0] sm:$0xff]
        %v400 = vld [vmem:[%s302 + $0x1d8] sm:$0xff]
        %v401 = vld [vmem:[%s302 + $0x1e0] sm:$0xff]
        %v402 = vld [vmem:[%s302 + $0x1e8] sm:$0xff]
        %v403 = vld [vmem:[%s302 + $0x1f0] sm:$0xff]
        %v404 = vld [vmem:[%s302 + $0x1f8] sm:$0xff]
        %v405 = vld [vmem:[%s2] sm:$0xff]
        %v406 = vld [vmem:[%s2 + $0x8] sm:$0xff]
        %v407 = vld [vmem:[%s2 + $0x10] sm:$0xff]
        %v408 = vld [vmem:[%s2 + $0x18] sm:$0xff]
        %v409 = vld [vmem:[%s2 + $0x20] sm:$0xff]
        %v410 = vld [vmem:[%s2 + $0x28] sm:$0xff]
        %v411 = vld [vmem:[%s2 + $0x30] sm:$0xff]
        %v412 = vld [vmem:[%s2 + $0x38] sm:$0xff]
        %v413 = vld [vmem:[%s2 + $0x40] sm:$0xff]
        %v414 = vld [vmem:[%s2 + $0x48] sm:$0xff]
        %v415 = vld [vmem:[%s2 + $0x50] sm:$0xff]
        %v416 = vld [vmem:[%s2 + $0x58] sm:$0xff]
        %v417 = vld [vmem:[%s2 + $0x60] sm:$0xff]
        %v418 = vld [vmem:[%s2 + $0x68] sm:$0xff]
        %v419 = vld [vmem:[%s2 + $0x70] sm:$0xff]
        %v420 = vld [vmem:[%s2 + $0x78] sm:$0xff]
        %v421 = vld [vmem:[%s3] sm:$0x1]
        %v423 = vlaneseq
        %v424 = vshrl.u32 %v423, 7
        %v425 = vsub.s32 0, %v424
        %v426 = vrot.slane %v421, %v425
        %428 = vmatprep.subr.mxu0 0.0
        %429 = vmatpush1.msra.mxu0 %v420
        %430 = vmatprep.subr.mxu0 0.0
        %431 = vmatpush1.msra.mxu0 %v419
        %432 = vmatprep.subr.mxu0 0.0
        %433 = vmatpush1.msra.mxu0 %v418
        %434 = vmatprep.subr.mxu0 0.0
        %435 = vmatpush1.msra.mxu0 %v417
        %436 = vmatprep.subr.mxu0 0.0
        %437 = vmatpush1.msra.mxu0 %v416
        %438 = vmatprep.subr.mxu0 0.0
        %439 = vmatpush1.msra.mxu0 %v415
        %440 = vmatprep.subr.mxu0 0.0
        %441 = vmatpush1.msra.mxu0 %v414
        %442 = vmatprep.subr.mxu0 0.0
        %443 = vmatpush1.msra.mxu0 %v413
        %444 = vmatprep.subr.mxu0 0.0
        %445 = vmatpush1.msra.mxu0 %v412
        %446 = vmatprep.subr.mxu0 0.0
        %447 = vmatpush1.msra.mxu0 %v411
        %448 = vmatprep.subr.mxu0 0.0
        %449 = vmatpush1.msra.mxu0 %v410
        %450 = vmatprep.subr.mxu0 0.0
        %451 = vmatpush1.msra.mxu0 %v409
        %452 = vmatprep.subr.mxu0 0.0
        %453 = vmatpush1.msra.mxu0 %v408
        %454 = vmatprep.subr.mxu0 0.0
        %455 = vmatpush1.msra.mxu0 %v407
        %456 = vmatprep.subr.mxu0 0.0
        %457 = vmatpush1.msra.mxu0 %v406
        %458 = vmatprep.subr.mxu0 0.0
        %459 = vmatpush1.msra.mxu0 %v405
        %460 = vmatprep.subr.mxu0 0.0
        %461 = vmatpush2.msra.mxu0 0.0
        %462 = vmatprep.subr.mxu0 0.0
        %463 = vmatpush2.msra.mxu0 0.0
        %464 = vmatprep.subr.mxu0 0.0
        %465 = vmatpush2.msra.mxu0 0.0
        %466 = vmatprep.subr.mxu0 0.0
        %467 = vmatpush2.msra.mxu0 0.0
        %468 = vmatprep.subr.mxu0 0.0
        %469 = vmatpush2.msra.mxu0 0.0
        %470 = vmatprep.subr.mxu0 0.0
        %471 = vmatpush2.msra.mxu0 0.0
        %472 = vmatprep.subr.mxu0 0.0
        %473 = vmatpush2.msra.mxu0 0.0
        %474 = vmatprep.subr.mxu0 0.0
        %475 = vmatpush2.msra.mxu0 0.0
        %476 = vmatprep.subr.mxu0 0.0
        %477 = vmatpush2.msra.mxu0 0.0
        %478 = vmatprep.subr.mxu0 0.0
        %479 = vmatpush2.msra.mxu0 0.0
        %480 = vmatprep.subr.mxu0 0.0
        %481 = vmatpush2.msra.mxu0 0.0
        %482 = vmatprep.subr.mxu0 0.0
        %483 = vmatpush2.msra.mxu0 0.0
        %484 = vmatprep.subr.mxu0 0.0
        %485 = vmatpush2.msra.mxu0 0.0
        %486 = vmatprep.subr.mxu0 0.0
        %487 = vmatpush2.msra.mxu0 0.0
        %488 = vmatprep.subr.mxu0 0.0
        %489 = vmatpush2.msra.mxu0 0.0
        %490 = vmatprep.subr.mxu0 0.0
        %491 = vmatpush2.msra.mxu0 0.0
        %492 = vmatprep.mubr.f32.mxu0 0.0
        %493 = vmatmul.mubr.f32.gmra.mxu0 %v341
        %v494 = vpop.f32.mrf.mxu0
        %v495 = vadd.f32 %v426, %v494
        %v496 = vpop.f32.mrf.mxu0
        %497 = vmatprep.mubr.f32.mxu0 0.0
        %498 = vmatmul.mubr.f32.gmra.mxu0 %v342
        %v499 = vpop.f32.mrf.mxu0
        %v500 = vadd.f32 %v426, %v499
        %v501 = vpop.f32.mrf.mxu0
        %502 = vmatprep.mubr.f32.mxu0 0.0
        %503 = vmatmul.mubr.f32.gmra.mxu0 %v343
        %v504 = vpop.f32.mrf.mxu0
        %v505 = vadd.f32 %v426, %v504
        %v506 = vpop.f32.mrf.mxu0
        %507 = vmatprep.mubr.f32.mxu0 0.0
        %508 = vmatmul.mubr.f32.gmra.mxu0 %v344
        %v509 = vpop.f32.mrf.mxu0
        %v510 = vadd.f32 %v426, %v509
        %v511 = vpop.f32.mrf.mxu0
        %512 = vmatprep.mubr.f32.mxu0 0.0
        %513 = vmatmul.mubr.f32.gmra.mxu0 %v345
        %v514 = vpop.f32.mrf.mxu0
        %v515 = vadd.f32 %v426, %v514
        %v516 = vpop.f32.mrf.mxu0
        %517 = vmatprep.mubr.f32.mxu0 0.0
        %518 = vmatmul.mubr.f32.gmra.mxu0 %v346
        %v519 = vpop.f32.mrf.mxu0
        %v520 = vadd.f32 %v426, %v519
        %v521 = vpop.f32.mrf.mxu0
        %522 = vmatprep.mubr.f32.mxu0 0.0
        %523 = vmatmul.mubr.f32.gmra.mxu0 %v347
        %v524 = vpop.f32.mrf.mxu0
        %v525 = vadd.f32 %v426, %v524
        %v526 = vpop.f32.mrf.mxu0
        %527 = vmatprep.mubr.f32.mxu0 0.0
        %528 = vmatmul.mubr.f32.gmra.mxu0 %v348
        %v529 = vpop.f32.mrf.mxu0
        %v530 = vadd.f32 %v426, %v529
        %v531 = vpop.f32.mrf.mxu0
        %532 = vmatprep.mubr.f32.mxu0 0.0
        %533 = vmatmul.mubr.f32.gmra.mxu0 %v349
        %v534 = vpop.f32.mrf.mxu0
        %v535 = vadd.f32 %v426, %v534
        %v536 = vpop.f32.mrf.mxu0
        %537 = vmatprep.mubr.f32.mxu0 0.0
        %538 = vmatmul.mubr.f32.gmra.mxu0 %v350
        %v539 = vpop.f32.mrf.mxu0
        %v540 = vadd.f32 %v426, %v539
        %v541 = vpop.f32.mrf.mxu0
        %542 = vmatprep.mubr.f32.mxu0 0.0
        %543 = vmatmul.mubr.f32.gmra.mxu0 %v351
        %v544 = vpop.f32.mrf.mxu0
        %v545 = vadd.f32 %v426, %v544
        %v546 = vpop.f32.mrf.mxu0
        %547 = vmatprep.mubr.f32.mxu0 0.0
        %548 = vmatmul.mubr.f32.gmra.mxu0 %v352
        %v549 = vpop.f32.mrf.mxu0
        %v550 = vadd.f32 %v426, %v549
        %v551 = vpop.f32.mrf.mxu0
        %552 = vmatprep.mubr.f32.mxu0 0.0
        %553 = vmatmul.mubr.f32.gmra.mxu0 %v353
        %v554 = vpop.f32.mrf.mxu0
        %v555 = vadd.f32 %v426, %v554
        %v556 = vpop.f32.mrf.mxu0
        %557 = vmatprep.mubr.f32.mxu0 0.0
        %558 = vmatmul.mubr.f32.gmra.mxu0 %v354
        %v559 = vpop.f32.mrf.mxu0
        %v560 = vadd.f32 %v426, %v559
        %v561 = vpop.f32.mrf.mxu0
        %562 = vmatprep.mubr.f32.mxu0 0.0
        %563 = vmatmul.mubr.f32.gmra.mxu0 %v355
        %v564 = vpop.f32.mrf.mxu0
        %v565 = vadd.f32 %v426, %v564
        %v566 = vpop.f32.mrf.mxu0
        %567 = vmatprep.mubr.f32.mxu0 0.0
        %568 = vmatmul.mubr.f32.gmra.mxu0 %v356
        %v569 = vpop.f32.mrf.mxu0
        %v570 = vadd.f32 %v426, %v569
        %v571 = vpop.f32.mrf.mxu0
        %572 = vmatprep.mubr.f32.mxu0 0.0
        %573 = vmatmul.mubr.f32.gmra.mxu0 %v357
        %v574 = vpop.f32.mrf.mxu0
        %v575 = vadd.f32 %v426, %v574
        %v576 = vpop.f32.mrf.mxu0
        %577 = vmatprep.mubr.f32.mxu0 0.0
        %578 = vmatmul.mubr.f32.gmra.mxu0 %v358
        %v579 = vpop.f32.mrf.mxu0
        %v580 = vadd.f32 %v426, %v579
        %v581 = vpop.f32.mrf.mxu0
        %582 = vmatprep.mubr.f32.mxu0 0.0
        %583 = vmatmul.mubr.f32.gmra.mxu0 %v359
        %v584 = vpop.f32.mrf.mxu0
        %v585 = vadd.f32 %v426, %v584
        %v586 = vpop.f32.mrf.mxu0
        %587 = vmatprep.mubr.f32.mxu0 0.0
        %588 = vmatmul.mubr.f32.gmra.mxu0 %v360
        %v589 = vpop.f32.mrf.mxu0
        %v590 = vadd.f32 %v426, %v589
        %v591 = vpop.f32.mrf.mxu0
        %592 = vmatprep.mubr.f32.mxu0 0.0
        %593 = vmatmul.mubr.f32.gmra.mxu0 %v361
        %v594 = vpop.f32.mrf.mxu0
        %v595 = vadd.f32 %v426, %v594
        %v596 = vpop.f32.mrf.mxu0
        %597 = vmatprep.mubr.f32.mxu0 0.0
        %598 = vmatmul.mubr.f32.gmra.mxu0 %v362
        %v599 = vpop.f32.mrf.mxu0
        %v600 = vadd.f32 %v426, %v599
        %v601 = vpop.f32.mrf.mxu0
        %602 = vmatprep.mubr.f32.mxu0 0.0
        %603 = vmatmul.mubr.f32.gmra.mxu0 %v363
        %v604 = vpop.f32.mrf.mxu0
        %v605 = vadd.f32 %v426, %v604
        %v606 = vpop.f32.mrf.mxu0
        %607 = vmatprep.mubr.f32.mxu0 0.0
        %608 = vmatmul.mubr.f32.gmra.mxu0 %v364
        %v609 = vpop.f32.mrf.mxu0
        %v610 = vadd.f32 %v426, %v609
        %v611 = vpop.f32.mrf.mxu0
        %612 = vmatprep.mubr.f32.mxu0 0.0
        %613 = vmatmul.mubr.f32.gmra.mxu0 %v365
        %v614 = vpop.f32.mrf.mxu0
        %v615 = vadd.f32 %v426, %v614
        %v616 = vpop.f32.mrf.mxu0
        %617 = vmatprep.mubr.f32.mxu0 0.0
        %618 = vmatmul.mubr.f32.gmra.mxu0 %v366
        %v619 = vpop.f32.mrf.mxu0
        %v620 = vadd.f32 %v426, %v619
        %v621 = vpop.f32.mrf.mxu0
        %622 = vmatprep.mubr.f32.mxu0 0.0
        %623 = vmatmul.mubr.f32.gmra.mxu0 %v367
        %v624 = vpop.f32.mrf.mxu0
        %v625 = vadd.f32 %v426, %v624
        %v626 = vpop.f32.mrf.mxu0
        %627 = vmatprep.mubr.f32.mxu0 0.0
        %628 = vmatmul.mubr.f32.gmra.mxu0 %v368
        %v629 = vpop.f32.mrf.mxu0
        %v630 = vadd.f32 %v426, %v629
        %v631 = vpop.f32.mrf.mxu0
        %632 = vmatprep.mubr.f32.mxu0 0.0
        %633 = vmatmul.mubr.f32.gmra.mxu0 %v369
        %v634 = vpop.f32.mrf.mxu0
        %v635 = vadd.f32 %v426, %v634
        %v636 = vpop.f32.mrf.mxu0
        %637 = vmatprep.mubr.f32.mxu0 0.0
        %638 = vmatmul.mubr.f32.gmra.mxu0 %v370
        %v639 = vpop.f32.mrf.mxu0
        %v640 = vadd.f32 %v426, %v639
        %v641 = vpop.f32.mrf.mxu0
        %642 = vmatprep.mubr.f32.mxu0 0.0
        %643 = vmatmul.mubr.f32.gmra.mxu0 %v371
        %v644 = vpop.f32.mrf.mxu0
        %v645 = vadd.f32 %v426, %v644
        %v646 = vpop.f32.mrf.mxu0
        %647 = vmatprep.mubr.f32.mxu0 0.0
        %648 = vmatmul.mubr.f32.gmra.mxu0 %v372
        %v649 = vpop.f32.mrf.mxu0
        %v650 = vadd.f32 %v426, %v649
        %v651 = vpop.f32.mrf.mxu0
        %652 = vmatprep.mubr.f32.mxu0 0.0
        %653 = vmatmul.mubr.f32.gmra.mxu0 %v373
        %v654 = vpop.f32.mrf.mxu0
        %v655 = vadd.f32 %v426, %v654
        %v656 = vpop.f32.mrf.mxu0
        %657 = vmatprep.mubr.f32.mxu0 0.0
        %658 = vmatmul.mubr.f32.gmra.mxu0 %v374
        %v659 = vpop.f32.mrf.mxu0
        %v660 = vadd.f32 %v426, %v659
        %v661 = vpop.f32.mrf.mxu0
        %662 = vmatprep.mubr.f32.mxu0 0.0
        %663 = vmatmul.mubr.f32.gmra.mxu0 %v375
        %v664 = vpop.f32.mrf.mxu0
        %v665 = vadd.f32 %v426, %v664
        %v666 = vpop.f32.mrf.mxu0
        %667 = vmatprep.mubr.f32.mxu0 0.0
        %668 = vmatmul.mubr.f32.gmra.mxu0 %v376
        %v669 = vpop.f32.mrf.mxu0
        %v670 = vadd.f32 %v426, %v669
        %v671 = vpop.f32.mrf.mxu0
        %672 = vmatprep.mubr.f32.mxu0 0.0
        %673 = vmatmul.mubr.f32.gmra.mxu0 %v377
        %v674 = vpop.f32.mrf.mxu0
        %v675 = vadd.f32 %v426, %v674
        %v676 = vpop.f32.mrf.mxu0
        %677 = vmatprep.mubr.f32.mxu0 0.0
        %678 = vmatmul.mubr.f32.gmra.mxu0 %v378
        %v679 = vpop.f32.mrf.mxu0
        %v680 = vadd.f32 %v426, %v679
        %v681 = vpop.f32.mrf.mxu0
        %682 = vmatprep.mubr.f32.mxu0 0.0
        %683 = vmatmul.mubr.f32.gmra.mxu0 %v379
        %v684 = vpop.f32.mrf.mxu0
        %v685 = vadd.f32 %v426, %v684
        %v686 = vpop.f32.mrf.mxu0
        %687 = vmatprep.mubr.f32.mxu0 0.0
        %688 = vmatmul.mubr.f32.gmra.mxu0 %v380
        %v689 = vpop.f32.mrf.mxu0
        %v690 = vadd.f32 %v426, %v689
        %v691 = vpop.f32.mrf.mxu0
        %692 = vmatprep.mubr.f32.mxu0 0.0
        %693 = vmatmul.mubr.f32.gmra.mxu0 %v381
        %v694 = vpop.f32.mrf.mxu0
        %v695 = vadd.f32 %v426, %v694
        %v696 = vpop.f32.mrf.mxu0
        %697 = vmatprep.mubr.f32.mxu0 0.0
        %698 = vmatmul.mubr.f32.gmra.mxu0 %v382
        %v699 = vpop.f32.mrf.mxu0
        %v700 = vadd.f32 %v426, %v699
        %v701 = vpop.f32.mrf.mxu0
        %702 = vmatprep.mubr.f32.mxu0 0.0
        %703 = vmatmul.mubr.f32.gmra.mxu0 %v383
        %v704 = vpop.f32.mrf.mxu0
        %v705 = vadd.f32 %v426, %v704
        %v706 = vpop.f32.mrf.mxu0
        %707 = vmatprep.mubr.f32.mxu0 0.0
        %708 = vmatmul.mubr.f32.gmra.mxu0 %v384
        %v709 = vpop.f32.mrf.mxu0
        %v710 = vadd.f32 %v426, %v709
        %v711 = vpop.f32.mrf.mxu0
        %712 = vmatprep.mubr.f32.mxu0 0.0
        %713 = vmatmul.mubr.f32.gmra.mxu0 %v385
        %v714 = vpop.f32.mrf.mxu0
        %v715 = vadd.f32 %v426, %v714
        %v716 = vpop.f32.mrf.mxu0
        %717 = vmatprep.mubr.f32.mxu0 0.0
        %718 = vmatmul.mubr.f32.gmra.mxu0 %v386
        %v719 = vpop.f32.mrf.mxu0
        %v720 = vadd.f32 %v426, %v719
        %v721 = vpop.f32.mrf.mxu0
        %722 = vmatprep.mubr.f32.mxu0 0.0
        %723 = vmatmul.mubr.f32.gmra.mxu0 %v387
        %v724 = vpop.f32.mrf.mxu0
        %v725 = vadd.f32 %v426, %v724
        %v726 = vpop.f32.mrf.mxu0
        %727 = vmatprep.mubr.f32.mxu0 0.0
        %728 = vmatmul.mubr.f32.gmra.mxu0 %v388
        %v729 = vpop.f32.mrf.mxu0
        %v730 = vadd.f32 %v426, %v729
        %v731 = vpop.f32.mrf.mxu0
        %732 = vmatprep.mubr.f32.mxu0 0.0
        %733 = vmatmul.mubr.f32.gmra.mxu0 %v389
        %v734 = vpop.f32.mrf.mxu0
        %v735 = vadd.f32 %v426, %v734
        %v736 = vpop.f32.mrf.mxu0
        %737 = vmatprep.mubr.f32.mxu0 0.0
        %738 = vmatmul.mubr.f32.gmra.mxu0 %v390
        %v739 = vpop.f32.mrf.mxu0
        %v740 = vadd.f32 %v426, %v739
        %v741 = vpop.f32.mrf.mxu0
        %742 = vmatprep.mubr.f32.mxu0 0.0
        %743 = vmatmul.mubr.f32.gmra.mxu0 %v391
        %v744 = vpop.f32.mrf.mxu0
        %v745 = vadd.f32 %v426, %v744
        %v746 = vpop.f32.mrf.mxu0
        %747 = vmatprep.mubr.f32.mxu0 0.0
        %748 = vmatmul.mubr.f32.gmra.mxu0 %v392
        %v749 = vpop.f32.mrf.mxu0
        %v750 = vadd.f32 %v426, %v749
        %v751 = vpop.f32.mrf.mxu0
        %752 = vmatprep.mubr.f32.mxu0 0.0
        %753 = vmatmul.mubr.f32.gmra.mxu0 %v393
        %v754 = vpop.f32.mrf.mxu0
        %v755 = vadd.f32 %v426, %v754
        %v756 = vpop.f32.mrf.mxu0
        %757 = vmatprep.mubr.f32.mxu0 0.0
        %758 = vmatmul.mubr.f32.gmra.mxu0 %v394
        %v759 = vpop.f32.mrf.mxu0
        %v760 = vadd.f32 %v426, %v759
        %v761 = vpop.f32.mrf.mxu0
        %762 = vmatprep.mubr.f32.mxu0 0.0
        %763 = vmatmul.mubr.f32.gmra.mxu0 %v395
        %v764 = vpop.f32.mrf.mxu0
        %v765 = vadd.f32 %v426, %v764
        %v766 = vpop.f32.mrf.mxu0
        %767 = vmatprep.mubr.f32.mxu0 0.0
        %768 = vmatmul.mubr.f32.gmra.mxu0 %v396
        %v769 = vpop.f32.mrf.mxu0
        %v770 = vadd.f32 %v426, %v769
        %v771 = vpop.f32.mrf.mxu0
        %772 = vmatprep.mubr.f32.mxu0 0.0
        %773 = vmatmul.mubr.f32.gmra.mxu0 %v397
        %v774 = vpop.f32.mrf.mxu0
        %v775 = vadd.f32 %v426, %v774
        %v776 = vpop.f32.mrf.mxu0
        %777 = vmatprep.mubr.f32.mxu0 0.0
        %778 = vmatmul.mubr.f32.gmra.mxu0 %v398
        %v779 = vpop.f32.mrf.mxu0
        %v780 = vadd.f32 %v426, %v779
        %v781 = vpop.f32.mrf.mxu0
        %782 = vmatprep.mubr.f32.mxu0 0.0
        %783 = vmatmul.mubr.f32.gmra.mxu0 %v399
        %v784 = vpop.f32.mrf.mxu0
        %v785 = vadd.f32 %v426, %v784
        %v786 = vpop.f32.mrf.mxu0
        %787 = vmatprep.mubr.f32.mxu0 0.0
        %788 = vmatmul.mubr.f32.gmra.mxu0 %v400
        %v789 = vpop.f32.mrf.mxu0
        %v790 = vadd.f32 %v426, %v789
        %v791 = vpop.f32.mrf.mxu0
        %792 = vmatprep.mubr.f32.mxu0 0.0
        %793 = vmatmul.mubr.f32.gmra.mxu0 %v401
        %v794 = vpop.f32.mrf.mxu0
        %v795 = vadd.f32 %v426, %v794
        %v796 = vpop.f32.mrf.mxu0
        %797 = vmatprep.mubr.f32.mxu0 0.0
        %798 = vmatmul.mubr.f32.gmra.mxu0 %v402
        %v799 = vpop.f32.mrf.mxu0
        %v800 = vadd.f32 %v426, %v799
        %v801 = vpop.f32.mrf.mxu0
        %802 = vmatprep.mubr.f32.mxu0 0.0
        %803 = vmatmul.mubr.f32.gmra.mxu0 %v403
        %v804 = vpop.f32.mrf.mxu0
        %v805 = vadd.f32 %v426, %v804
        %v806 = vpop.f32.mrf.mxu0
        %807 = vmatprep.mubr.f32.mxu0 0.0
        %808 = vmatmul.mubr.f32.gmra.mxu0 %v404
        %v809 = vpop.f32.mrf.mxu0
        %v810 = vadd.f32 %v426, %v809
        %v811 = vpop.f32.mrf.mxu0
        %812 = vdwg.mxu0
        %v813 = vmax.f32 %v495, 0.0
        %v814 = vmax.f32 %v500, 0.0
        %v815 = vmax.f32 %v505, 0.0
        %v816 = vmax.f32 %v510, 0.0
        %v817 = vmax.f32 %v515, 0.0
        %v818 = vmax.f32 %v520, 0.0
        %v819 = vmax.f32 %v525, 0.0
        %v820 = vmax.f32 %v530, 0.0
        %v821 = vmax.f32 %v535, 0.0
        %v822 = vmax.f32 %v540, 0.0
        %v823 = vmax.f32 %v545, 0.0
        %v824 = vmax.f32 %v550, 0.0
        %v825 = vmax.f32 %v555, 0.0
        %v826 = vmax.f32 %v560, 0.0
        %v827 = vmax.f32 %v565, 0.0
        %v828 = vmax.f32 %v570, 0.0
        %v829 = vmax.f32 %v575, 0.0
        %v830 = vmax.f32 %v580, 0.0
        %v831 = vmax.f32 %v585, 0.0
        %v832 = vmax.f32 %v590, 0.0
        %v833 = vmax.f32 %v595, 0.0
        %v834 = vmax.f32 %v600, 0.0
        %v835 = vmax.f32 %v605, 0.0
        %v836 = vmax.f32 %v610, 0.0
        %v837 = vmax.f32 %v615, 0.0
        %v838 = vmax.f32 %v620, 0.0
        %v839 = vmax.f32 %v625, 0.0
        %v840 = vmax.f32 %v630, 0.0
        %v841 = vmax.f32 %v635, 0.0
        %v842 = vmax.f32 %v640, 0.0
        %v843 = vmax.f32 %v645, 0.0
        %v844 = vmax.f32 %v650, 0.0
        %v845 = vmax.f32 %v655, 0.0
        %v846 = vmax.f32 %v660, 0.0
        %v847 = vmax.f32 %v665, 0.0
        %v848 = vmax.f32 %v670, 0.0
        %v849 = vmax.f32 %v675, 0.0
        %v850 = vmax.f32 %v680, 0.0
        %v851 = vmax.f32 %v685, 0.0
        %v852 = vmax.f32 %v690, 0.0
        %v853 = vmax.f32 %v695, 0.0
        %v854 = vmax.f32 %v700, 0.0
        %v855 = vmax.f32 %v705, 0.0
        %v856 = vmax.f32 %v710, 0.0
        %v857 = vmax.f32 %v715, 0.0
        %v858 = vmax.f32 %v720, 0.0
        %v859 = vmax.f32 %v725, 0.0
        %v860 = vmax.f32 %v730, 0.0
        %v861 = vmax.f32 %v735, 0.0
        %v862 = vmax.f32 %v740, 0.0
        %v863 = vmax.f32 %v745, 0.0
        %v864 = vmax.f32 %v750, 0.0
        %v865 = vmax.f32 %v755, 0.0
        %v866 = vmax.f32 %v760, 0.0
        %v867 = vmax.f32 %v765, 0.0
        %v868 = vmax.f32 %v770, 0.0
        %v869 = vmax.f32 %v775, 0.0
        %v870 = vmax.f32 %v780, 0.0
        %v871 = vmax.f32 %v785, 0.0
        %v872 = vmax.f32 %v790, 0.0
        %v873 = vmax.f32 %v795, 0.0
        %v874 = vmax.f32 %v800, 0.0
        %v875 = vmax.f32 %v805, 0.0
        %v876 = vmax.f32 %v810, 0.0
        %v877 = vld [vmem:[%s1] sm:$0xff]
        %v878 = vld [vmem:[%s1 + $0x8] sm:$0xff]
        %v879 = vld [vmem:[%s1 + $0x10] sm:$0xff]
        %v880 = vld [vmem:[%s1 + $0x18] sm:$0xff]
        %v881 = vld [vmem:[%s1 + $0x20] sm:$0xff]
        %v882 = vld [vmem:[%s1 + $0x28] sm:$0xff]
        %v883 = vld [vmem:[%s1 + $0x30] sm:$0xff]
        %v884 = vld [vmem:[%s1 + $0x38] sm:$0xff]
        %v885 = vld [vmem:[%s1 + $0x40] sm:$0xff]
        %v886 = vld [vmem:[%s1 + $0x48] sm:$0xff]
        %v887 = vld [vmem:[%s1 + $0x50] sm:$0xff]
        %v888 = vld [vmem:[%s1 + $0x58] sm:$0xff]
        %v889 = vld [vmem:[%s1 + $0x60] sm:$0xff]
        %v890 = vld [vmem:[%s1 + $0x68] sm:$0xff]
        %v891 = vld [vmem:[%s1 + $0x70] sm:$0xff]
        %v892 = vld [vmem:[%s1 + $0x78] sm:$0xff]
        %v893 = vld [vmem:[%s1 + $0x80] sm:$0xff]
        %v894 = vld [vmem:[%s1 + $0x88] sm:$0xff]
        %v895 = vld [vmem:[%s1 + $0x90] sm:$0xff]
        %v896 = vld [vmem:[%s1 + $0x98] sm:$0xff]
        %v897 = vld [vmem:[%s1 + $0xa0] sm:$0xff]
        %v898 = vld [vmem:[%s1 + $0xa8] sm:$0xff]
        %v899 = vld [vmem:[%s1 + $0xb0] sm:$0xff]
        %v900 = vld [vmem:[%s1 + $0xb8] sm:$0xff]
        %v901 = vld [vmem:[%s1 + $0xc0] sm:$0xff]
        %v902 = vld [vmem:[%s1 + $0xc8] sm:$0xff]
        %v903 = vld [vmem:[%s1 + $0xd0] sm:$0xff]
        %v904 = vld [vmem:[%s1 + $0xd8] sm:$0xff]
        %v905 = vld [vmem:[%s1 + $0xe0] sm:$0xff]
        %v906 = vld [vmem:[%s1 + $0xe8] sm:$0xff]
        %v907 = vld [vmem:[%s1 + $0xf0] sm:$0xff]
        %v908 = vld [vmem:[%s1 + $0xf8] sm:$0xff]
        %v909 = vld [vmem:[%s1 + $0x100] sm:$0xff]
        %v910 = vld [vmem:[%s1 + $0x108] sm:$0xff]
        %v911 = vld [vmem:[%s1 + $0x110] sm:$0xff]
        %v912 = vld [vmem:[%s1 + $0x118] sm:$0xff]
        %v913 = vld [vmem:[%s1 + $0x120] sm:$0xff]
        %v914 = vld [vmem:[%s1 + $0x128] sm:$0xff]
        %v915 = vld [vmem:[%s1 + $0x130] sm:$0xff]
        %v916 = vld [vmem:[%s1 + $0x138] sm:$0xff]
        %v917 = vld [vmem:[%s1 + $0x140] sm:$0xff]
        %v918 = vld [vmem:[%s1 + $0x148] sm:$0xff]
        %v919 = vld [vmem:[%s1 + $0x150] sm:$0xff]
        %v920 = vld [vmem:[%s1 + $0x158] sm:$0xff]
        %v921 = vld [vmem:[%s1 + $0x160] sm:$0xff]
        %v922 = vld [vmem:[%s1 + $0x168] sm:$0xff]
        %v923 = vld [vmem:[%s1 + $0x170] sm:$0xff]
        %v924 = vld [vmem:[%s1 + $0x178] sm:$0xff]
        %v925 = vld [vmem:[%s1 + $0x180] sm:$0xff]
        %v926 = vld [vmem:[%s1 + $0x188] sm:$0xff]
        %v927 = vld [vmem:[%s1 + $0x190] sm:$0xff]
        %v928 = vld [vmem:[%s1 + $0x198] sm:$0xff]
        %v929 = vld [vmem:[%s1 + $0x1a0] sm:$0xff]
        %v930 = vld [vmem:[%s1 + $0x1a8] sm:$0xff]
        %v931 = vld [vmem:[%s1 + $0x1b0] sm:$0xff]
        %v932 = vld [vmem:[%s1 + $0x1b8] sm:$0xff]
        %v933 = vld [vmem:[%s1 + $0x1c0] sm:$0xff]
        %v934 = vld [vmem:[%s1 + $0x1c8] sm:$0xff]
        %v935 = vld [vmem:[%s1 + $0x1d0] sm:$0xff]
        %v936 = vld [vmem:[%s1 + $0x1d8] sm:$0xff]
        %v937 = vld [vmem:[%s1 + $0x1e0] sm:$0xff]
        %v938 = vld [vmem:[%s1 + $0x1e8] sm:$0xff]
        %v939 = vld [vmem:[%s1 + $0x1f0] sm:$0xff]
        %v940 = vld [vmem:[%s1 + $0x1f8] sm:$0xff]
        %v941 = vrot.slane %v813, 7
        %v942 = vrot.slane %v814, 7
        %v943 = vrot.slane %v815, 7
        %v944 = vrot.slane %v816, 7
        %v945 = vrot.slane %v817, 7
        %v946 = vrot.slane %v818, 7
        %v947 = vrot.slane %v819, 7
        %v948 = vrot.slane %v820, 7
        %v949 = vrot.slane %v821, 7
        %v950 = vrot.slane %v822, 7
        %v951 = vrot.slane %v823, 7
        %v952 = vrot.slane %v824, 7
        %v953 = vrot.slane %v825, 7
        %v954 = vrot.slane %v826, 7
        %v955 = vrot.slane %v827, 7
        %v956 = vrot.slane %v828, 7
        %v957 = vrot.slane %v829, 7
        %v958 = vrot.slane %v830, 7
        %v959 = vrot.slane %v831, 7
        %v960 = vrot.slane %v832, 7
        %v961 = vrot.slane %v833, 7
        %v962 = vrot.slane %v834, 7
        %v963 = vrot.slane %v835, 7
        %v964 = vrot.slane %v836, 7
        %v965 = vrot.slane %v837, 7
        %v966 = vrot.slane %v838, 7
        %v967 = vrot.slane %v839, 7
        %v968 = vrot.slane %v840, 7
        %v969 = vrot.slane %v841, 7
        %v970 = vrot.slane %v842, 7
        %v971 = vrot.slane %v843, 7
        %v972 = vrot.slane %v844, 7
        %v973 = vrot.slane %v845, 7
        %v974 = vrot.slane %v846, 7
        %v975 = vrot.slane %v847, 7
        %v976 = vrot.slane %v848, 7
        %v977 = vrot.slane %v849, 7
        %v978 = vrot.slane %v850, 7
        %v979 = vrot.slane %v851, 7
        %v980 = vrot.slane %v852, 7
        %v981 = vrot.slane %v853, 7
        %v982 = vrot.slane %v854, 7
        %v983 = vrot.slane %v855, 7
        %v984 = vrot.slane %v856, 7
        %v985 = vrot.slane %v857, 7
        %v986 = vrot.slane %v858, 7
        %v987 = vrot.slane %v859, 7
        %v988 = vrot.slane %v860, 7
        %v989 = vrot.slane %v861, 7
        %v990 = vrot.slane %v862, 7
        %v991 = vrot.slane %v863, 7
        %v992 = vrot.slane %v864, 7
        %v993 = vrot.slane %v865, 7
        %v994 = vrot.slane %v866, 7
        %v995 = vrot.slane %v867, 7
        %v996 = vrot.slane %v868, 7
        %v997 = vrot.slane %v869, 7
        %v998 = vrot.slane %v870, 7
        %v999 = vrot.slane %v871, 7
        %v1000 = vrot.slane %v872, 7
        %v1001 = vrot.slane %v873, 7
        %v1002 = vrot.slane %v874, 7
        %v1003 = vrot.slane %v875, 7
        %v1004 = vrot.slane %v876, 7
        %v1005 = vlaneseq
        %v1006 = vshrl.u32 %v1005, 7
        %vm1007 = vcmp.lt.s32.totalorder %v1006, 1
        %v1008 = vsel %vm1007, %v1003, %v1004
        %v1009 = vsel %vm1007, %v1002, %v1003
        %v1010 = vsel %vm1007, %v1001, %v1002
        %v1011 = vsel %vm1007, %v1000, %v1001
        %v1012 = vsel %vm1007, %v999, %v1000
        %v1013 = vsel %vm1007, %v998, %v999
        %v1014 = vsel %vm1007, %v997, %v998
        %v1015 = vsel %vm1007, %v996, %v997
        %v1016 = vsel %vm1007, %v995, %v996
        %v1017 = vsel %vm1007, %v994, %v995
        %v1018 = vsel %vm1007, %v993, %v994
        %v1019 = vsel %vm1007, %v992, %v993
        %v1020 = vsel %vm1007, %v991, %v992
        %v1021 = vsel %vm1007, %v990, %v991
        %v1022 = vsel %vm1007, %v989, %v990
        %v1023 = vsel %vm1007, %v988, %v989
        %v1024 = vsel %vm1007, %v987, %v988
        %v1025 = vsel %vm1007, %v986, %v987
        %v1026 = vsel %vm1007, %v985, %v986
        %v1027 = vsel %vm1007, %v984, %v985
        %v1028 = vsel %vm1007, %v983, %v984
        %v1029 = vsel %vm1007, %v982, %v983
        %v1030 = vsel %vm1007, %v981, %v982
        %v1031 = vsel %vm1007, %v980, %v981
        %v1032 = vsel %vm1007, %v979, %v980
        %v1033 = vsel %vm1007, %v978, %v979
        %v1034 = vsel %vm1007, %v977, %v978
        %v1035 = vsel %vm1007, %v976, %v977
        %v1036 = vsel %vm1007, %v975, %v976
        %v1037 = vsel %vm1007, %v974, %v975
        %v1038 = vsel %vm1007, %v973, %v974
        %v1039 = vsel %vm1007, %v972, %v973
        %v1040 = vsel %vm1007, %v971, %v972
        %v1041 = vsel %vm1007, %v970, %v971
        %v1042 = vsel %vm1007, %v969, %v970
        %v1043 = vsel %vm1007, %v968, %v969
        %v1044 = vsel %vm1007, %v967, %v968
        %v1045 = vsel %vm1007, %v966, %v967
        %v1046 = vsel %vm1007, %v965, %v966
        %v1047 = vsel %vm1007, %v964, %v965
        %v1048 = vsel %vm1007, %v963, %v964
        %v1049 = vsel %vm1007, %v962, %v963
        %v1050 = vsel %vm1007, %v961, %v962
        %v1051 = vsel %vm1007, %v960, %v961
        %v1052 = vsel %vm1007, %v959, %v960
        %v1053 = vsel %vm1007, %v958, %v959
        %v1054 = vsel %vm1007, %v957, %v958
        %v1055 = vsel %vm1007, %v956, %v957
        %v1056 = vsel %vm1007, %v955, %v956
        %v1057 = vsel %vm1007, %v954, %v955
        %v1058 = vsel %vm1007, %v953, %v954
        %v1059 = vsel %vm1007, %v952, %v953
        %v1060 = vsel %vm1007, %v951, %v952
        %v1061 = vsel %vm1007, %v950, %v951
        %v1062 = vsel %vm1007, %v949, %v950
        %v1063 = vsel %vm1007, %v948, %v949
        %v1064 = vsel %vm1007, %v947, %v948
        %v1065 = vsel %vm1007, %v946, %v947
        %v1066 = vsel %vm1007, %v945, %v946
        %v1067 = vsel %vm1007, %v944, %v945
        %v1068 = vsel %vm1007, %v943, %v944
        %v1069 = vsel %vm1007, %v942, %v943
        %v1070 = vsel %vm1007, %v941, %v942
        %v1071 = vsel %vm1007, %v1004, %v941
        %1073 = vset.pattern.permute.xlu0 0
        %1074 = vperm.xlu0 %1073, %v877
        %v1075 = vpop.permute.xlu0 %1074
        %1078 = vset.pattern.permute.xlu0 0
        %1079 = vperm.xlu0 %1078, %v878
        %v1080 = vpop.permute.xlu0 %1079
        %1083 = vset.pattern.permute.xlu0 0
        %1084 = vperm.xlu0 %1083, %v879
        %v1085 = vpop.permute.xlu0 %1084
        %1088 = vset.pattern.permute.xlu0 0
        %1089 = vperm.xlu0 %1088, %v880
        %v1090 = vpop.permute.xlu0 %1089
        %1093 = vset.pattern.permute.xlu0 0
        %1094 = vperm.xlu0 %1093, %v881
        %v1095 = vpop.permute.xlu0 %1094
        %1098 = vset.pattern.permute.xlu0 0
        %1099 = vperm.xlu0 %1098, %v882
        %v1100 = vpop.permute.xlu0 %1099
        %1103 = vset.pattern.permute.xlu0 0
        %1104 = vperm.xlu0 %1103, %v883
        %v1105 = vpop.permute.xlu0 %1104
        %1108 = vset.pattern.permute.xlu0 0
        %1109 = vperm.xlu0 %1108, %v884
        %v1110 = vpop.permute.xlu0 %1109
        %1113 = vset.pattern.permute.xlu0 0
        %1114 = vperm.xlu0 %1113, %v885
        %v1115 = vpop.permute.xlu0 %1114
        %1118 = vset.pattern.permute.xlu0 0
        %1119 = vperm.xlu0 %1118, %v886
        %v1120 = vpop.permute.xlu0 %1119
        %1123 = vset.pattern.permute.xlu0 0
        %1124 = vperm.xlu0 %1123, %v887
        %v1125 = vpop.permute.xlu0 %1124
        %1128 = vset.pattern.permute.xlu0 0
        %1129 = vperm.xlu0 %1128, %v888
        %v1130 = vpop.permute.xlu0 %1129
        %1133 = vset.pattern.permute.xlu0 0
        %1134 = vperm.xlu0 %1133, %v889
        %v1135 = vpop.permute.xlu0 %1134
        %1138 = vset.pattern.permute.xlu0 0
        %1139 = vperm.xlu0 %1138, %v890
        %v1140 = vpop.permute.xlu0 %1139
        %1143 = vset.pattern.permute.xlu0 0
        %1144 = vperm.xlu0 %1143, %v891
        %v1145 = vpop.permute.xlu0 %1144
        %1148 = vset.pattern.permute.xlu0 0
        %1149 = vperm.xlu0 %1148, %v892
        %v1150 = vpop.permute.xlu0 %1149
        %1153 = vset.pattern.permute.xlu0 0
        %1154 = vperm.xlu0 %1153, %v893
        %v1155 = vpop.permute.xlu0 %1154
        %1158 = vset.pattern.permute.xlu0 0
        %1159 = vperm.xlu0 %1158, %v894
        %v1160 = vpop.permute.xlu0 %1159
        %1163 = vset.pattern.permute.xlu0 0
        %1164 = vperm.xlu0 %1163, %v895
        %v1165 = vpop.permute.xlu0 %1164
        %1168 = vset.pattern.permute.xlu0 0
        %1169 = vperm.xlu0 %1168, %v896
        %v1170 = vpop.permute.xlu0 %1169
        %1173 = vset.pattern.permute.xlu0 0
        %1174 = vperm.xlu0 %1173, %v897
        %v1175 = vpop.permute.xlu0 %1174
        %1178 = vset.pattern.permute.xlu0 0
        %1179 = vperm.xlu0 %1178, %v898
        %v1180 = vpop.permute.xlu0 %1179
        %1183 = vset.pattern.permute.xlu0 0
        %1184 = vperm.xlu0 %1183, %v899
        %v1185 = vpop.permute.xlu0 %1184
        %1188 = vset.pattern.permute.xlu0 0
        %1189 = vperm.xlu0 %1188, %v900
        %v1190 = vpop.permute.xlu0 %1189
        %1193 = vset.pattern.permute.xlu0 0
        %1194 = vperm.xlu0 %1193, %v901
        %v1195 = vpop.permute.xlu0 %1194
        %1198 = vset.pattern.permute.xlu0 0
        %1199 = vperm.xlu0 %1198, %v902
        %v1200 = vpop.permute.xlu0 %1199
        %1203 = vset.pattern.permute.xlu0 0
        %1204 = vperm.xlu0 %1203, %v903
        %v1205 = vpop.permute.xlu0 %1204
        %1208 = vset.pattern.permute.xlu0 0
        %1209 = vperm.xlu0 %1208, %v904
        %v1210 = vpop.permute.xlu0 %1209
        %1213 = vset.pattern.permute.xlu0 0
        %1214 = vperm.xlu0 %1213, %v905
        %v1215 = vpop.permute.xlu0 %1214
        %1218 = vset.pattern.permute.xlu0 0
        %1219 = vperm.xlu0 %1218, %v906
        %v1220 = vpop.permute.xlu0 %1219
        %1223 = vset.pattern.permute.xlu0 0
        %1224 = vperm.xlu0 %1223, %v907
        %v1225 = vpop.permute.xlu0 %1224
        %1228 = vset.pattern.permute.xlu0 0
        %1229 = vperm.xlu0 %1228, %v908
        %v1230 = vpop.permute.xlu0 %1229
        %1233 = vset.pattern.permute.xlu0 0
        %1234 = vperm.xlu0 %1233, %v909
        %v1235 = vpop.permute.xlu0 %1234
        %1238 = vset.pattern.permute.xlu0 0
        %1239 = vperm.xlu0 %1238, %v910
        %v1240 = vpop.permute.xlu0 %1239
        %1243 = vset.pattern.permute.xlu0 0
        %1244 = vperm.xlu0 %1243, %v911
        %v1245 = vpop.permute.xlu0 %1244
        %1248 = vset.pattern.permute.xlu0 0
        %1249 = vperm.xlu0 %1248, %v912
        %v1250 = vpop.permute.xlu0 %1249
        %1253 = vset.pattern.permute.xlu0 0
        %1254 = vperm.xlu0 %1253, %v913
        %v1255 = vpop.permute.xlu0 %1254
        %1258 = vset.pattern.permute.xlu0 0
        %1259 = vperm.xlu0 %1258, %v914
        %v1260 = vpop.permute.xlu0 %1259
        %1263 = vset.pattern.permute.xlu0 0
        %1264 = vperm.xlu0 %1263, %v915
        %v1265 = vpop.permute.xlu0 %1264
        %1268 = vset.pattern.permute.xlu0 0
        %1269 = vperm.xlu0 %1268, %v916
        %v1270 = vpop.permute.xlu0 %1269
        %1273 = vset.pattern.permute.xlu0 0
        %1274 = vperm.xlu0 %1273, %v917
        %v1275 = vpop.permute.xlu0 %1274
        %1278 = vset.pattern.permute.xlu0 0
        %1279 = vperm.xlu0 %1278, %v918
        %v1280 = vpop.permute.xlu0 %1279
        %1283 = vset.pattern.permute.xlu0 0
        %1284 = vperm.xlu0 %1283, %v919
        %v1285 = vpop.permute.xlu0 %1284
        %1288 = vset.pattern.permute.xlu0 0
        %1289 = vperm.xlu0 %1288, %v920
        %v1290 = vpop.permute.xlu0 %1289
        %1293 = vset.pattern.permute.xlu0 0
        %1294 = vperm.xlu0 %1293, %v921
        %v1295 = vpop.permute.xlu0 %1294
        %1298 = vset.pattern.permute.xlu0 0
        %1299 = vperm.xlu0 %1298, %v922
        %v1300 = vpop.permute.xlu0 %1299
        %1303 = vset.pattern.permute.xlu0 0
        %1304 = vperm.xlu0 %1303, %v923
        %v1305 = vpop.permute.xlu0 %1304
        %1308 = vset.pattern.permute.xlu0 0
        %1309 = vperm.xlu0 %1308, %v924
        %v1310 = vpop.permute.xlu0 %1309
        %1313 = vset.pattern.permute.xlu0 0
        %1314 = vperm.xlu0 %1313, %v925
        %v1315 = vpop.permute.xlu0 %1314
        %1318 = vset.pattern.permute.xlu0 0
        %1319 = vperm.xlu0 %1318, %v926
        %v1320 = vpop.permute.xlu0 %1319
        %1323 = vset.pattern.permute.xlu0 0
        %1324 = vperm.xlu0 %1323, %v927
        %v1325 = vpop.permute.xlu0 %1324
        %1328 = vset.pattern.permute.xlu0 0
        %1329 = vperm.xlu0 %1328, %v928
        %v1330 = vpop.permute.xlu0 %1329
        %1333 = vset.pattern.permute.xlu0 0
        %1334 = vperm.xlu0 %1333, %v929
        %v1335 = vpop.permute.xlu0 %1334
        %1338 = vset.pattern.permute.xlu0 0
        %1339 = vperm.xlu0 %1338, %v930
        %v1340 = vpop.permute.xlu0 %1339
        %1343 = vset.pattern.permute.xlu0 0
        %1344 = vperm.xlu0 %1343, %v931
        %v1345 = vpop.permute.xlu0 %1344
        %1348 = vset.pattern.permute.xlu0 0
        %1349 = vperm.xlu0 %1348, %v932
        %v1350 = vpop.permute.xlu0 %1349
        %1353 = vset.pattern.permute.xlu0 0
        %1354 = vperm.xlu0 %1353, %v933
        %v1355 = vpop.permute.xlu0 %1354
        %1358 = vset.pattern.permute.xlu0 0
        %1359 = vperm.xlu0 %1358, %v934
        %v1360 = vpop.permute.xlu0 %1359
        %1363 = vset.pattern.permute.xlu0 0
        %1364 = vperm.xlu0 %1363, %v935
        %v1365 = vpop.permute.xlu0 %1364
        %1368 = vset.pattern.permute.xlu0 0
        %1369 = vperm.xlu0 %1368, %v936
        %v1370 = vpop.permute.xlu0 %1369
        %1373 = vset.pattern.permute.xlu0 0
        %1374 = vperm.xlu0 %1373, %v937
        %v1375 = vpop.permute.xlu0 %1374
        %1378 = vset.pattern.permute.xlu0 0
        %1379 = vperm.xlu0 %1378, %v938
        %v1380 = vpop.permute.xlu0 %1379
        %1383 = vset.pattern.permute.xlu0 0
        %1384 = vperm.xlu0 %1383, %v939
        %v1385 = vpop.permute.xlu0 %1384
        %1388 = vset.pattern.permute.xlu0 0
        %1389 = vperm.xlu0 %1388, %v940
        %v1390 = vpop.permute.xlu0 %1389
        %v1392 = vmul.f32 %v1008, %v1075
        %v1393 = vmul.f32 %v1071, %v1080
        %v1394 = vmul.f32 %v1070, %v1085
        %v1395 = vmul.f32 %v1069, %v1090
        %v1396 = vmul.f32 %v1068, %v1095
        %v1397 = vmul.f32 %v1067, %v1100
        %v1398 = vmul.f32 %v1066, %v1105
        %v1399 = vmul.f32 %v1065, %v1110
        %v1400 = vmul.f32 %v1064, %v1115
        %v1401 = vmul.f32 %v1063, %v1120
        %v1402 = vmul.f32 %v1062, %v1125
        %v1403 = vmul.f32 %v1061, %v1130
        %v1404 = vmul.f32 %v1060, %v1135
        %v1405 = vmul.f32 %v1059, %v1140
        %v1406 = vmul.f32 %v1058, %v1145
        %v1407 = vmul.f32 %v1057, %v1150
        %v1408 = vmul.f32 %v1056, %v1155
        %v1409 = vmul.f32 %v1055, %v1160
        %v1410 = vmul.f32 %v1054, %v1165
        %v1411 = vmul.f32 %v1053, %v1170
        %v1412 = vmul.f32 %v1052, %v1175
        %v1413 = vmul.f32 %v1051, %v1180
        %v1414 = vmul.f32 %v1050, %v1185
        %v1415 = vmul.f32 %v1049, %v1190
        %v1416 = vmul.f32 %v1048, %v1195
        %v1417 = vmul.f32 %v1047, %v1200
        %v1418 = vmul.f32 %v1046, %v1205
        %v1419 = vmul.f32 %v1045, %v1210
        %v1420 = vmul.f32 %v1044, %v1215
        %v1421 = vmul.f32 %v1043, %v1220
        %v1422 = vmul.f32 %v1042, %v1225
        %v1423 = vmul.f32 %v1041, %v1230
        %v1424 = vmul.f32 %v1040, %v1235
        %v1425 = vmul.f32 %v1039, %v1240
        %v1426 = vmul.f32 %v1038, %v1245
        %v1427 = vmul.f32 %v1037, %v1250
        %v1428 = vmul.f32 %v1036, %v1255
        %v1429 = vmul.f32 %v1035, %v1260
        %v1430 = vmul.f32 %v1034, %v1265
        %v1431 = vmul.f32 %v1033, %v1270
        %v1432 = vmul.f32 %v1032, %v1275
        %v1433 = vmul.f32 %v1031, %v1280
        %v1434 = vmul.f32 %v1030, %v1285
        %v1435 = vmul.f32 %v1029, %v1290
        %v1436 = vmul.f32 %v1028, %v1295
        %v1437 = vmul.f32 %v1027, %v1300
        %v1438 = vmul.f32 %v1026, %v1305
        %v1439 = vmul.f32 %v1025, %v1310
        %v1440 = vmul.f32 %v1024, %v1315
        %v1441 = vmul.f32 %v1023, %v1320
        %v1442 = vmul.f32 %v1022, %v1325
        %v1443 = vmul.f32 %v1021, %v1330
        %v1444 = vmul.f32 %v1020, %v1335
        %v1445 = vmul.f32 %v1019, %v1340
        %v1446 = vmul.f32 %v1018, %v1345
        %v1447 = vmul.f32 %v1017, %v1350
        %v1448 = vmul.f32 %v1016, %v1355
        %v1449 = vmul.f32 %v1015, %v1360
        %v1450 = vmul.f32 %v1014, %v1365
        %v1451 = vmul.f32 %v1013, %v1370
        %v1452 = vmul.f32 %v1012, %v1375
        %v1453 = vmul.f32 %v1011, %v1380
        %v1454 = vmul.f32 %v1010, %v1385
        %v1455 = vmul.f32 %v1009, %v1390
        %v1456 = vld [vmem:[#allocation5] sm:$0xff]
        %v1457 = vld [vmem:[#allocation5 + $0x8] sm:$0xff]
        %v1458 = vld [vmem:[#allocation5 + $0x10] sm:$0xff]
        %v1459 = vld [vmem:[#allocation5 + $0x18] sm:$0xff]
        %v1460 = vld [vmem:[#allocation5 + $0x20] sm:$0xff]
        %v1461 = vld [vmem:[#allocation5 + $0x28] sm:$0xff]
        %v1462 = vld [vmem:[#allocation5 + $0x30] sm:$0xff]
        %v1463 = vld [vmem:[#allocation5 + $0x38] sm:$0xff]
        %v1464 = vld [vmem:[#allocation5 + $0x40] sm:$0xff]
        %v1465 = vld [vmem:[#allocation5 + $0x48] sm:$0xff]
        %v1466 = vld [vmem:[#allocation5 + $0x50] sm:$0xff]
        %v1467 = vld [vmem:[#allocation5 + $0x58] sm:$0xff]
        %v1468 = vld [vmem:[#allocation5 + $0x60] sm:$0xff]
        %v1469 = vld [vmem:[#allocation5 + $0x68] sm:$0xff]
        %v1470 = vld [vmem:[#allocation5 + $0x70] sm:$0xff]
        %v1471 = vld [vmem:[#allocation5 + $0x78] sm:$0xff]
        %1472 = vset.pattern.permute.xlu0 1
        %1473 = vperm.xlu0 %1472, %v877
        %v1474 = vpop.permute.xlu0 %1473
        %1476 = vset.pattern.permute.xlu0 1
        %1477 = vperm.xlu0 %1476, %v878
        %v1478 = vpop.permute.xlu0 %1477
        %1480 = vset.pattern.permute.xlu0 1
        %1481 = vperm.xlu0 %1480, %v879
        %v1482 = vpop.permute.xlu0 %1481
        %1484 = vset.pattern.permute.xlu0 1
        %1485 = vperm.xlu0 %1484, %v880
        %v1486 = vpop.permute.xlu0 %1485
        %1488 = vset.pattern.permute.xlu0 1
        %1489 = vperm.xlu0 %1488, %v881
        %v1490 = vpop.permute.xlu0 %1489
        %1492 = vset.pattern.permute.xlu0 1
        %1493 = vperm.xlu0 %1492, %v882
        %v1494 = vpop.permute.xlu0 %1493
        %1496 = vset.pattern.permute.xlu0 1
        %1497 = vperm.xlu0 %1496, %v883
        %v1498 = vpop.permute.xlu0 %1497
        %1500 = vset.pattern.permute.xlu0 1
        %1501 = vperm.xlu0 %1500, %v884
        %v1502 = vpop.permute.xlu0 %1501
        %1504 = vset.pattern.permute.xlu0 1
        %1505 = vperm.xlu0 %1504, %v885
        %v1506 = vpop.permute.xlu0 %1505
        %1508 = vset.pattern.permute.xlu0 1
        %1509 = vperm.xlu0 %1508, %v886
        %v1510 = vpop.permute.xlu0 %1509
        %1512 = vset.pattern.permute.xlu0 1
        %1513 = vperm.xlu0 %1512, %v887
        %v1514 = vpop.permute.xlu0 %1513
        %1516 = vset.pattern.permute.xlu0 1
        %1517 = vperm.xlu0 %1516, %v888
        %v1518 = vpop.permute.xlu0 %1517
        %1520 = vset.pattern.permute.xlu0 1
        %1521 = vperm.xlu0 %1520, %v889
        %v1522 = vpop.permute.xlu0 %1521
        %1524 = vset.pattern.permute.xlu0 1
        %1525 = vperm.xlu0 %1524, %v890
        %v1526 = vpop.permute.xlu0 %1525
        %1528 = vset.pattern.permute.xlu0 1
        %1529 = vperm.xlu0 %1528, %v891
        %v1530 = vpop.permute.xlu0 %1529
        %1532 = vset.pattern.permute.xlu0 1
        %1533 = vperm.xlu0 %1532, %v892
        %v1534 = vpop.permute.xlu0 %1533
        %1536 = vset.pattern.permute.xlu0 1
        %1537 = vperm.xlu0 %1536, %v893
        %v1538 = vpop.permute.xlu0 %1537
        %1540 = vset.pattern.permute.xlu0 1
        %1541 = vperm.xlu0 %1540, %v894
        %v1542 = vpop.permute.xlu0 %1541
        %1544 = vset.pattern.permute.xlu0 1
        %1545 = vperm.xlu0 %1544, %v895
        %v1546 = vpop.permute.xlu0 %1545
        %1548 = vset.pattern.permute.xlu0 1
        %1549 = vperm.xlu0 %1548, %v896
        %v1550 = vpop.permute.xlu0 %1549
        %1552 = vset.pattern.permute.xlu0 1
        %1553 = vperm.xlu0 %1552, %v897
        %v1554 = vpop.permute.xlu0 %1553
        %1556 = vset.pattern.permute.xlu0 1
        %1557 = vperm.xlu0 %1556, %v898
        %v1558 = vpop.permute.xlu0 %1557
        %1560 = vset.pattern.permute.xlu0 1
        %1561 = vperm.xlu0 %1560, %v899
        %v1562 = vpop.permute.xlu0 %1561
        %1564 = vset.pattern.permute.xlu0 1
        %1565 = vperm.xlu0 %1564, %v900
        %v1566 = vpop.permute.xlu0 %1565
        %1568 = vset.pattern.permute.xlu0 1
        %1569 = vperm.xlu0 %1568, %v901
        %v1570 = vpop.permute.xlu0 %1569
        %1572 = vset.pattern.permute.xlu0 1
        %1573 = vperm.xlu0 %1572, %v902
        %v1574 = vpop.permute.xlu0 %1573
        %1576 = vset.pattern.permute.xlu0 1
        %1577 = vperm.xlu0 %1576, %v903
        %v1578 = vpop.permute.xlu0 %1577
        %1580 = vset.pattern.permute.xlu0 1
        %1581 = vperm.xlu0 %1580, %v904
        %v1582 = vpop.permute.xlu0 %1581
        %1584 = vset.pattern.permute.xlu0 1
        %1585 = vperm.xlu0 %1584, %v905
        %v1586 = vpop.permute.xlu0 %1585
        %1588 = vset.pattern.permute.xlu0 1
        %1589 = vperm.xlu0 %1588, %v906
        %v1590 = vpop.permute.xlu0 %1589
        %1592 = vset.pattern.permute.xlu0 1
        %1593 = vperm.xlu0 %1592, %v907
        %v1594 = vpop.permute.xlu0 %1593
        %1596 = vset.pattern.permute.xlu0 1
        %1597 = vperm.xlu0 %1596, %v908
        %v1598 = vpop.permute.xlu0 %1597
        %1600 = vset.pattern.permute.xlu0 1
        %1601 = vperm.xlu0 %1600, %v909
        %v1602 = vpop.permute.xlu0 %1601
        %1604 = vset.pattern.permute.xlu0 1
        %1605 = vperm.xlu0 %1604, %v910
        %v1606 = vpop.permute.xlu0 %1605
        %1608 = vset.pattern.permute.xlu0 1
        %1609 = vperm.xlu0 %1608, %v911
        %v1610 = vpop.permute.xlu0 %1609
        %1612 = vset.pattern.permute.xlu0 1
        %1613 = vperm.xlu0 %1612, %v912
        %v1614 = vpop.permute.xlu0 %1613
        %1616 = vset.pattern.permute.xlu0 1
        %1617 = vperm.xlu0 %1616, %v913
        %v1618 = vpop.permute.xlu0 %1617
        %1620 = vset.pattern.permute.xlu0 1
        %1621 = vperm.xlu0 %1620, %v914
        %v1622 = vpop.permute.xlu0 %1621
        %1624 = vset.pattern.permute.xlu0 1
        %1625 = vperm.xlu0 %1624, %v915
        %v1626 = vpop.permute.xlu0 %1625
        %1628 = vset.pattern.permute.xlu0 1
        %1629 = vperm.xlu0 %1628, %v916
        %v1630 = vpop.permute.xlu0 %1629
        %1632 = vset.pattern.permute.xlu0 1
        %1633 = vperm.xlu0 %1632, %v917
        %v1634 = vpop.permute.xlu0 %1633
        %1636 = vset.pattern.permute.xlu0 1
        %1637 = vperm.xlu0 %1636, %v918
        %v1638 = vpop.permute.xlu0 %1637
        %1640 = vset.pattern.permute.xlu0 1
        %1641 = vperm.xlu0 %1640, %v919
        %v1642 = vpop.permute.xlu0 %1641
        %1644 = vset.pattern.permute.xlu0 1
        %1645 = vperm.xlu0 %1644, %v920
        %v1646 = vpop.permute.xlu0 %1645
        %1648 = vset.pattern.permute.xlu0 1
        %1649 = vperm.xlu0 %1648, %v921
        %v1650 = vpop.permute.xlu0 %1649
        %1652 = vset.pattern.permute.xlu0 1
        %1653 = vperm.xlu0 %1652, %v922
        %v1654 = vpop.permute.xlu0 %1653
        %1656 = vset.pattern.permute.xlu0 1
        %1657 = vperm.xlu0 %1656, %v923
        %v1658 = vpop.permute.xlu0 %1657
        %1660 = vset.pattern.permute.xlu0 1
        %1661 = vperm.xlu0 %1660, %v924
        %v1662 = vpop.permute.xlu0 %1661
        %1664 = vset.pattern.permute.xlu0 1
        %1665 = vperm.xlu0 %1664, %v925
        %v1666 = vpop.permute.xlu0 %1665
        %1668 = vset.pattern.permute.xlu0 1
        %1669 = vperm.xlu0 %1668, %v926
        %v1670 = vpop.permute.xlu0 %1669
        %1672 = vset.pattern.permute.xlu0 1
        %1673 = vperm.xlu0 %1672, %v927
        %v1674 = vpop.permute.xlu0 %1673
        %1676 = vset.pattern.permute.xlu0 1
        %1677 = vperm.xlu0 %1676, %v928
        %v1678 = vpop.permute.xlu0 %1677
        %1680 = vset.pattern.permute.xlu0 1
        %1681 = vperm.xlu0 %1680, %v929
        %v1682 = vpop.permute.xlu0 %1681
        %1684 = vset.pattern.permute.xlu0 1
        %1685 = vperm.xlu0 %1684, %v930
        %v1686 = vpop.permute.xlu0 %1685
        %1688 = vset.pattern.permute.xlu0 1
        %1689 = vperm.xlu0 %1688, %v931
        %v1690 = vpop.permute.xlu0 %1689
        %1692 = vset.pattern.permute.xlu0 1
        %1693 = vperm.xlu0 %1692, %v932
        %v1694 = vpop.permute.xlu0 %1693
        %1696 = vset.pattern.permute.xlu0 1
        %1697 = vperm.xlu0 %1696, %v933
        %v1698 = vpop.permute.xlu0 %1697
        %1700 = vset.pattern.permute.xlu0 1
        %1701 = vperm.xlu0 %1700, %v934
        %v1702 = vpop.permute.xlu0 %1701
        %1704 = vset.pattern.permute.xlu0 1
        %1705 = vperm.xlu0 %1704, %v935
        %v1706 = vpop.permute.xlu0 %1705
        %1708 = vset.pattern.permute.xlu0 1
        %1709 = vperm.xlu0 %1708, %v936
        %v1710 = vpop.permute.xlu0 %1709
        %1712 = vset.pattern.permute.xlu0 1
        %1713 = vperm.xlu0 %1712, %v937
        %v1714 = vpop.permute.xlu0 %1713
        %1716 = vset.pattern.permute.xlu0 1
        %1717 = vperm.xlu0 %1716, %v938
        %v1718 = vpop.permute.xlu0 %1717
        %1720 = vset.pattern.permute.xlu0 1
        %1721 = vperm.xlu0 %1720, %v939
        %v1722 = vpop.permute.xlu0 %1721
        %1724 = vset.pattern.permute.xlu0 1
        %1725 = vperm.xlu0 %1724, %v940
        %v1726 = vpop.permute.xlu0 %1725
        %v1728 = vmul.f32 %v876, %v1474
        %v1729 = vmul.f32 %v813, %v1478
        %v1730 = vmul.f32 %v814, %v1482
        %v1731 = vmul.f32 %v815, %v1486
        %v1732 = vmul.f32 %v816, %v1490
        %v1733 = vmul.f32 %v817, %v1494
        %v1734 = vmul.f32 %v818, %v1498
        %v1735 = vmul.f32 %v819, %v1502
        %v1736 = vmul.f32 %v820, %v1506
        %v1737 = vmul.f32 %v821, %v1510
        %v1738 = vmul.f32 %v822, %v1514
        %v1739 = vmul.f32 %v823, %v1518
        %v1740 = vmul.f32 %v824, %v1522
        %v1741 = vmul.f32 %v825, %v1526
        %v1742 = vmul.f32 %v826, %v1530
        %v1743 = vmul.f32 %v827, %v1534
        %v1744 = vmul.f32 %v828, %v1538
        %v1745 = vmul.f32 %v829, %v1542
        %v1746 = vmul.f32 %v830, %v1546
        %v1747 = vmul.f32 %v831, %v1550
        %v1748 = vmul.f32 %v832, %v1554
        %v1749 = vmul.f32 %v833, %v1558
        %v1750 = vmul.f32 %v834, %v1562
        %v1751 = vmul.f32 %v835, %v1566
        %v1752 = vmul.f32 %v836, %v1570
        %v1753 = vmul.f32 %v837, %v1574
        %v1754 = vmul.f32 %v838, %v1578
        %v1755 = vmul.f32 %v839, %v1582
        %v1756 = vmul.f32 %v840, %v1586
        %v1757 = vmul.f32 %v841, %v1590
        %v1758 = vmul.f32 %v842, %v1594
        %v1759 = vmul.f32 %v843, %v1598
        %v1760 = vmul.f32 %v844, %v1602
        %v1761 = vmul.f32 %v845, %v1606
        %v1762 = vmul.f32 %v846, %v1610
        %v1763 = vmul.f32 %v847, %v1614
        %v1764 = vmul.f32 %v848, %v1618
        %v1765 = vmul.f32 %v849, %v1622
        %v1766 = vmul.f32 %v850, %v1626
        %v1767 = vmul.f32 %v851, %v1630
        %v1768 = vmul.f32 %v852, %v1634
        %v1769 = vmul.f32 %v853, %v1638
        %v1770 = vmul.f32 %v854, %v1642
        %v1771 = vmul.f32 %v855, %v1646
        %v1772 = vmul.f32 %v856, %v1650
        %v1773 = vmul.f32 %v857, %v1654
        %v1774 = vmul.f32 %v858, %v1658
        %v1775 = vmul.f32 %v859, %v1662
        %v1776 = vmul.f32 %v860, %v1666
        %v1777 = vmul.f32 %v861, %v1670
        %v1778 = vmul.f32 %v862, %v1674
        %v1779 = vmul.f32 %v863, %v1678
        %v1780 = vmul.f32 %v864, %v1682
        %v1781 = vmul.f32 %v865, %v1686
        %v1782 = vmul.f32 %v866, %v1690
        %v1783 = vmul.f32 %v867, %v1694
        %v1784 = vmul.f32 %v868, %v1698
        %v1785 = vmul.f32 %v869, %v1702
        %v1786 = vmul.f32 %v870, %v1706
        %v1787 = vmul.f32 %v871, %v1710
        %v1788 = vmul.f32 %v872, %v1714
        %v1789 = vmul.f32 %v873, %v1718
        %v1790 = vmul.f32 %v874, %v1722
        %v1791 = vmul.f32 %v875, %v1726
        %s1792 = scalar_lea.vmem [#allocation5], 128
        %v1793 = vld [vmem:[%s1792] sm:$0xff]
        %v1794 = vld [vmem:[%s1792 + $0x8] sm:$0xff]
        %v1795 = vld [vmem:[%s1792 + $0x10] sm:$0xff]
        %v1796 = vld [vmem:[%s1792 + $0x18] sm:$0xff]
        %v1797 = vld [vmem:[%s1792 + $0x20] sm:$0xff]
        %v1798 = vld [vmem:[%s1792 + $0x28] sm:$0xff]
        %v1799 = vld [vmem:[%s1792 + $0x30] sm:$0xff]
        %v1800 = vld [vmem:[%s1792 + $0x38] sm:$0xff]
        %v1801 = vld [vmem:[%s1792 + $0x40] sm:$0xff]
        %v1802 = vld [vmem:[%s1792 + $0x48] sm:$0xff]
        %v1803 = vld [vmem:[%s1792 + $0x50] sm:$0xff]
        %v1804 = vld [vmem:[%s1792 + $0x58] sm:$0xff]
        %v1805 = vld [vmem:[%s1792 + $0x60] sm:$0xff]
        %v1806 = vld [vmem:[%s1792 + $0x68] sm:$0xff]
        %v1807 = vld [vmem:[%s1792 + $0x70] sm:$0xff]
        %v1808 = vld [vmem:[%s1792 + $0x78] sm:$0xff]
        %1809 = vmatprep.subr.mxu0 0.0
        %1810 = vmatpush1.msra.mxu0 %v1808
        %1811 = vmatprep.subr.mxu0 0.0
        %1812 = vmatpush1.msra.mxu0 %v1807
        %1813 = vmatprep.subr.mxu0 0.0
        %1814 = vmatpush1.msra.mxu0 %v1806
        %1815 = vmatprep.subr.mxu0 0.0
        %1816 = vmatpush1.msra.mxu0 %v1805
        %1817 = vmatprep.subr.mxu0 0.0
        %1818 = vmatpush1.msra.mxu0 %v1804
        %1819 = vmatprep.subr.mxu0 0.0
        %1820 = vmatpush1.msra.mxu0 %v1803
        %1821 = vmatprep.subr.mxu0 0.0
        %1822 = vmatpush1.msra.mxu0 %v1802
        %1823 = vmatprep.subr.mxu0 0.0
        %1824 = vmatpush1.msra.mxu0 %v1801
        %1825 = vmatprep.subr.mxu0 0.0
        %1826 = vmatpush1.msra.mxu0 %v1800
        %1827 = vmatprep.subr.mxu0 0.0
        %1828 = vmatpush1.msra.mxu0 %v1799
        %1829 = vmatprep.subr.mxu0 0.0
        %1830 = vmatpush1.msra.mxu0 %v1798
        %1831 = vmatprep.subr.mxu0 0.0
        %1832 = vmatpush1.msra.mxu0 %v1797
        %1833 = vmatprep.subr.mxu0 0.0
        %1834 = vmatpush1.msra.mxu0 %v1796
        %1835 = vmatprep.subr.mxu0 0.0
        %1836 = vmatpush1.msra.mxu0 %v1795
        %1837 = vmatprep.subr.mxu0 0.0
        %1838 = vmatpush1.msra.mxu0 %v1794
        %1839 = vmatprep.subr.mxu0 0.0
        %1840 = vmatpush1.msra.mxu0 %v1793
        %1841 = vmatprep.subr.mxu0 0.0
        %1842 = vmatpush2.msra.mxu0 0.0
        %1843 = vmatprep.subr.mxu0 0.0
        %1844 = vmatpush2.msra.mxu0 0.0
        %1845 = vmatprep.subr.mxu0 0.0
        %1846 = vmatpush2.msra.mxu0 0.0
        %1847 = vmatprep.subr.mxu0 0.0
        %1848 = vmatpush2.msra.mxu0 0.0
        %1849 = vmatprep.subr.mxu0 0.0
        %1850 = vmatpush2.msra.mxu0 0.0
        %1851 = vmatprep.subr.mxu0 0.0
        %1852 = vmatpush2.msra.mxu0 0.0
        %1853 = vmatprep.subr.mxu0 0.0
        %1854 = vmatpush2.msra.mxu0 0.0
        %1855 = vmatprep.subr.mxu0 0.0
        %1856 = vmatpush2.msra.mxu0 0.0
        %1857 = vmatprep.subr.mxu0 0.0
        %1858 = vmatpush2.msra.mxu0 0.0
        %1859 = vmatprep.subr.mxu0 0.0
        %1860 = vmatpush2.msra.mxu0 0.0
        %1861 = vmatprep.subr.mxu0 0.0
        %1862 = vmatpush2.msra.mxu0 0.0
        %1863 = vmatprep.subr.mxu0 0.0
        %1864 = vmatpush2.msra.mxu0 0.0
        %1865 = vmatprep.subr.mxu0 0.0
        %1866 = vmatpush2.msra.mxu0 0.0
        %1867 = vmatprep.subr.mxu0 0.0
        %1868 = vmatpush2.msra.mxu0 0.0
        %1869 = vmatprep.subr.mxu0 0.0
        %1870 = vmatpush2.msra.mxu0 0.0
        %1871 = vmatprep.subr.mxu0 0.0
        %1872 = vmatpush2.msra.mxu0 0.0
        %1873 = vmatprep.mubr.f32.mxu0 0.0
        %1874 = vmatmul.mubr.f32.gmra.mxu0 %v1728
        %v1875 = vpop.f32.mrf.mxu0
        %v1876 = vadd.f32 0.0, %v1875
        %v1877 = vpop.f32.mrf.mxu0
        %1878 = vmatprep.mubr.f32.mxu0 0.0
        %1879 = vmatmul.mubr.f32.gmra.mxu0 %v1729
        %v1880 = vpop.f32.mrf.mxu0
        %v1881 = vadd.f32 0.0, %v1880
        %v1882 = vpop.f32.mrf.mxu0
        %1883 = vmatprep.mubr.f32.mxu0 0.0
        %1884 = vmatmul.mubr.f32.gmra.mxu0 %v1730
        %v1885 = vpop.f32.mrf.mxu0
        %v1886 = vadd.f32 0.0, %v1885
        %v1887 = vpop.f32.mrf.mxu0
        %1888 = vmatprep.mubr.f32.mxu0 0.0
        %1889 = vmatmul.mubr.f32.gmra.mxu0 %v1731
        %v1890 = vpop.f32.mrf.mxu0
        %v1891 = vadd.f32 0.0, %v1890
        %v1892 = vpop.f32.mrf.mxu0
        %1893 = vmatprep.mubr.f32.mxu0 0.0
        %1894 = vmatmul.mubr.f32.gmra.mxu0 %v1732
        %v1895 = vpop.f32.mrf.mxu0
        %v1896 = vadd.f32 0.0, %v1895
        %v1897 = vpop.f32.mrf.mxu0
        %1898 = vmatprep.mubr.f32.mxu0 0.0
        %1899 = vmatmul.mubr.f32.gmra.mxu0 %v1733
        %v1900 = vpop.f32.mrf.mxu0
        %v1901 = vadd.f32 0.0, %v1900
        %v1902 = vpop.f32.mrf.mxu0
        %1903 = vmatprep.mubr.f32.mxu0 0.0
        %1904 = vmatmul.mubr.f32.gmra.mxu0 %v1734
        %v1905 = vpop.f32.mrf.mxu0
        %v1906 = vadd.f32 0.0, %v1905
        %v1907 = vpop.f32.mrf.mxu0
        %1908 = vmatprep.mubr.f32.mxu0 0.0
        %1909 = vmatmul.mubr.f32.gmra.mxu0 %v1735
        %v1910 = vpop.f32.mrf.mxu0
        %v1911 = vadd.f32 0.0, %v1910
        %v1912 = vpop.f32.mrf.mxu0
        %1913 = vmatprep.mubr.f32.mxu0 0.0
        %1914 = vmatmul.mubr.f32.gmra.mxu0 %v1736
        %v1915 = vpop.f32.mrf.mxu0
        %v1916 = vadd.f32 0.0, %v1915
        %v1917 = vpop.f32.mrf.mxu0
        %1918 = vmatprep.mubr.f32.mxu0 0.0
        %1919 = vmatmul.mubr.f32.gmra.mxu0 %v1737
        %v1920 = vpop.f32.mrf.mxu0
        %v1921 = vadd.f32 0.0, %v1920
        %v1922 = vpop.f32.mrf.mxu0
        %1923 = vmatprep.mubr.f32.mxu0 0.0
        %1924 = vmatmul.mubr.f32.gmra.mxu0 %v1738
        %v1925 = vpop.f32.mrf.mxu0
        %v1926 = vadd.f32 0.0, %v1925
        %v1927 = vpop.f32.mrf.mxu0
        %1928 = vmatprep.mubr.f32.mxu0 0.0
        %1929 = vmatmul.mubr.f32.gmra.mxu0 %v1739
        %v1930 = vpop.f32.mrf.mxu0
        %v1931 = vadd.f32 0.0, %v1930
        %v1932 = vpop.f32.mrf.mxu0
        %1933 = vmatprep.mubr.f32.mxu0 0.0
        %1934 = vmatmul.mubr.f32.gmra.mxu0 %v1740
        %v1935 = vpop.f32.mrf.mxu0
        %v1936 = vadd.f32 0.0, %v1935
        %v1937 = vpop.f32.mrf.mxu0
        %1938 = vmatprep.mubr.f32.mxu0 0.0
        %1939 = vmatmul.mubr.f32.gmra.mxu0 %v1741
        %v1940 = vpop.f32.mrf.mxu0
        %v1941 = vadd.f32 0.0, %v1940
        %v1942 = vpop.f32.mrf.mxu0
        %1943 = vmatprep.mubr.f32.mxu0 0.0
        %1944 = vmatmul.mubr.f32.gmra.mxu0 %v1742
        %v1945 = vpop.f32.mrf.mxu0
        %v1946 = vadd.f32 0.0, %v1945
        %v1947 = vpop.f32.mrf.mxu0
        %1948 = vmatprep.mubr.f32.mxu0 0.0
        %1949 = vmatmul.mubr.f32.gmra.mxu0 %v1743
        %v1950 = vpop.f32.mrf.mxu0
        %v1951 = vadd.f32 0.0, %v1950
        %v1952 = vpop.f32.mrf.mxu0
        %1953 = vmatprep.mubr.f32.mxu0 0.0
        %1954 = vmatmul.mubr.f32.gmra.mxu0 %v1744
        %v1955 = vpop.f32.mrf.mxu0
        %v1956 = vadd.f32 0.0, %v1955
        %v1957 = vpop.f32.mrf.mxu0
        %1958 = vmatprep.mubr.f32.mxu0 0.0
        %1959 = vmatmul.mubr.f32.gmra.mxu0 %v1745
        %v1960 = vpop.f32.mrf.mxu0
        %v1961 = vadd.f32 0.0, %v1960
        %v1962 = vpop.f32.mrf.mxu0
        %1963 = vmatprep.mubr.f32.mxu0 0.0
        %1964 = vmatmul.mubr.f32.gmra.mxu0 %v1746
        %v1965 = vpop.f32.mrf.mxu0
        %v1966 = vadd.f32 0.0, %v1965
        %v1967 = vpop.f32.mrf.mxu0
        %1968 = vmatprep.mubr.f32.mxu0 0.0
        %1969 = vmatmul.mubr.f32.gmra.mxu0 %v1747
        %v1970 = vpop.f32.mrf.mxu0
        %v1971 = vadd.f32 0.0, %v1970
        %v1972 = vpop.f32.mrf.mxu0
        %1973 = vmatprep.mubr.f32.mxu0 0.0
        %1974 = vmatmul.mubr.f32.gmra.mxu0 %v1748
        %v1975 = vpop.f32.mrf.mxu0
        %v1976 = vadd.f32 0.0, %v1975
        %v1977 = vpop.f32.mrf.mxu0
        %1978 = vmatprep.mubr.f32.mxu0 0.0
        %1979 = vmatmul.mubr.f32.gmra.mxu0 %v1749
        %v1980 = vpop.f32.mrf.mxu0
        %v1981 = vadd.f32 0.0, %v1980
        %v1982 = vpop.f32.mrf.mxu0
        %1983 = vmatprep.mubr.f32.mxu0 0.0
        %1984 = vmatmul.mubr.f32.gmra.mxu0 %v1750
        %v1985 = vpop.f32.mrf.mxu0
        %v1986 = vadd.f32 0.0, %v1985
        %v1987 = vpop.f32.mrf.mxu0
        %1988 = vmatprep.mubr.f32.mxu0 0.0
        %1989 = vmatmul.mubr.f32.gmra.mxu0 %v1751
        %v1990 = vpop.f32.mrf.mxu0
        %v1991 = vadd.f32 0.0, %v1990
        %v1992 = vpop.f32.mrf.mxu0
        %1993 = vmatprep.mubr.f32.mxu0 0.0
        %1994 = vmatmul.mubr.f32.gmra.mxu0 %v1752
        %v1995 = vpop.f32.mrf.mxu0
        %v1996 = vadd.f32 0.0, %v1995
        %v1997 = vpop.f32.mrf.mxu0
        %1998 = vmatprep.mubr.f32.mxu0 0.0
        %1999 = vmatmul.mubr.f32.gmra.mxu0 %v1753
        %v2000 = vpop.f32.mrf.mxu0
        %v2001 = vadd.f32 0.0, %v2000
        %v2002 = vpop.f32.mrf.mxu0
        %2003 = vmatprep.mubr.f32.mxu0 0.0
        %2004 = vmatmul.mubr.f32.gmra.mxu0 %v1754
        %v2005 = vpop.f32.mrf.mxu0
        %v2006 = vadd.f32 0.0, %v2005
        %v2007 = vpop.f32.mrf.mxu0
        %2008 = vmatprep.mubr.f32.mxu0 0.0
        %2009 = vmatmul.mubr.f32.gmra.mxu0 %v1755
        %v2010 = vpop.f32.mrf.mxu0
        %v2011 = vadd.f32 0.0, %v2010
        %v2012 = vpop.f32.mrf.mxu0
        %2013 = vmatprep.mubr.f32.mxu0 0.0
        %2014 = vmatmul.mubr.f32.gmra.mxu0 %v1756
        %v2015 = vpop.f32.mrf.mxu0
        %v2016 = vadd.f32 0.0, %v2015
        %v2017 = vpop.f32.mrf.mxu0
        %2018 = vmatprep.mubr.f32.mxu0 0.0
        %2019 = vmatmul.mubr.f32.gmra.mxu0 %v1757
        %v2020 = vpop.f32.mrf.mxu0
        %v2021 = vadd.f32 0.0, %v2020
        %v2022 = vpop.f32.mrf.mxu0
        %2023 = vmatprep.mubr.f32.mxu0 0.0
        %2024 = vmatmul.mubr.f32.gmra.mxu0 %v1758
        %v2025 = vpop.f32.mrf.mxu0
        %v2026 = vadd.f32 0.0, %v2025
        %v2027 = vpop.f32.mrf.mxu0
        %2028 = vmatprep.mubr.f32.mxu0 0.0
        %2029 = vmatmul.mubr.f32.gmra.mxu0 %v1759
        %v2030 = vpop.f32.mrf.mxu0
        %v2031 = vadd.f32 0.0, %v2030
        %v2032 = vpop.f32.mrf.mxu0
        %2033 = vmatprep.mubr.f32.mxu0 0.0
        %2034 = vmatmul.mubr.f32.gmra.mxu0 %v1760
        %v2035 = vpop.f32.mrf.mxu0
        %v2036 = vadd.f32 0.0, %v2035
        %v2037 = vpop.f32.mrf.mxu0
        %2038 = vmatprep.mubr.f32.mxu0 0.0
        %2039 = vmatmul.mubr.f32.gmra.mxu0 %v1761
        %v2040 = vpop.f32.mrf.mxu0
        %v2041 = vadd.f32 0.0, %v2040
        %v2042 = vpop.f32.mrf.mxu0
        %2043 = vmatprep.mubr.f32.mxu0 0.0
        %2044 = vmatmul.mubr.f32.gmra.mxu0 %v1762
        %v2045 = vpop.f32.mrf.mxu0
        %v2046 = vadd.f32 0.0, %v2045
        %v2047 = vpop.f32.mrf.mxu0
        %2048 = vmatprep.mubr.f32.mxu0 0.0
        %2049 = vmatmul.mubr.f32.gmra.mxu0 %v1763
        %v2050 = vpop.f32.mrf.mxu0
        %v2051 = vadd.f32 0.0, %v2050
        %v2052 = vpop.f32.mrf.mxu0
        %2053 = vmatprep.mubr.f32.mxu0 0.0
        %2054 = vmatmul.mubr.f32.gmra.mxu0 %v1764
        %v2055 = vpop.f32.mrf.mxu0
        %v2056 = vadd.f32 0.0, %v2055
        %v2057 = vpop.f32.mrf.mxu0
        %2058 = vmatprep.mubr.f32.mxu0 0.0
        %2059 = vmatmul.mubr.f32.gmra.mxu0 %v1765
        %v2060 = vpop.f32.mrf.mxu0
        %v2061 = vadd.f32 0.0, %v2060
        %v2062 = vpop.f32.mrf.mxu0
        %2063 = vmatprep.mubr.f32.mxu0 0.0
        %2064 = vmatmul.mubr.f32.gmra.mxu0 %v1766
        %v2065 = vpop.f32.mrf.mxu0
        %v2066 = vadd.f32 0.0, %v2065
        %v2067 = vpop.f32.mrf.mxu0
        %2068 = vmatprep.mubr.f32.mxu0 0.0
        %2069 = vmatmul.mubr.f32.gmra.mxu0 %v1767
        %v2070 = vpop.f32.mrf.mxu0
        %v2071 = vadd.f32 0.0, %v2070
        %v2072 = vpop.f32.mrf.mxu0
        %2073 = vmatprep.mubr.f32.mxu0 0.0
        %2074 = vmatmul.mubr.f32.gmra.mxu0 %v1768
        %v2075 = vpop.f32.mrf.mxu0
        %v2076 = vadd.f32 0.0, %v2075
        %v2077 = vpop.f32.mrf.mxu0
        %2078 = vmatprep.mubr.f32.mxu0 0.0
        %2079 = vmatmul.mubr.f32.gmra.mxu0 %v1769
        %v2080 = vpop.f32.mrf.mxu0
        %v2081 = vadd.f32 0.0, %v2080
        %v2082 = vpop.f32.mrf.mxu0
        %2083 = vmatprep.mubr.f32.mxu0 0.0
        %2084 = vmatmul.mubr.f32.gmra.mxu0 %v1770
        %v2085 = vpop.f32.mrf.mxu0
        %v2086 = vadd.f32 0.0, %v2085
        %v2087 = vpop.f32.mrf.mxu0
        %2088 = vmatprep.mubr.f32.mxu0 0.0
        %2089 = vmatmul.mubr.f32.gmra.mxu0 %v1771
        %v2090 = vpop.f32.mrf.mxu0
        %v2091 = vadd.f32 0.0, %v2090
        %v2092 = vpop.f32.mrf.mxu0
        %2093 = vmatprep.mubr.f32.mxu0 0.0
        %2094 = vmatmul.mubr.f32.gmra.mxu0 %v1772
        %v2095 = vpop.f32.mrf.mxu0
        %v2096 = vadd.f32 0.0, %v2095
        %v2097 = vpop.f32.mrf.mxu0
        %2098 = vmatprep.mubr.f32.mxu0 0.0
        %2099 = vmatmul.mubr.f32.gmra.mxu0 %v1773
        %v2100 = vpop.f32.mrf.mxu0
        %v2101 = vadd.f32 0.0, %v2100
        %v2102 = vpop.f32.mrf.mxu0
        %2103 = vmatprep.mubr.f32.mxu0 0.0
        %2104 = vmatmul.mubr.f32.gmra.mxu0 %v1774
        %v2105 = vpop.f32.mrf.mxu0
        %v2106 = vadd.f32 0.0, %v2105
        %v2107 = vpop.f32.mrf.mxu0
        %2108 = vmatprep.mubr.f32.mxu0 0.0
        %2109 = vmatmul.mubr.f32.gmra.mxu0 %v1775
        %v2110 = vpop.f32.mrf.mxu0
        %v2111 = vadd.f32 0.0, %v2110
        %v2112 = vpop.f32.mrf.mxu0
        %2113 = vmatprep.mubr.f32.mxu0 0.0
        %2114 = vmatmul.mubr.f32.gmra.mxu0 %v1776
        %v2115 = vpop.f32.mrf.mxu0
        %v2116 = vadd.f32 0.0, %v2115
        %v2117 = vpop.f32.mrf.mxu0
        %2118 = vmatprep.mubr.f32.mxu0 0.0
        %2119 = vmatmul.mubr.f32.gmra.mxu0 %v1777
        %v2120 = vpop.f32.mrf.mxu0
        %v2121 = vadd.f32 0.0, %v2120
        %v2122 = vpop.f32.mrf.mxu0
        %2123 = vmatprep.mubr.f32.mxu0 0.0
        %2124 = vmatmul.mubr.f32.gmra.mxu0 %v1778
        %v2125 = vpop.f32.mrf.mxu0
        %v2126 = vadd.f32 0.0, %v2125
        %v2127 = vpop.f32.mrf.mxu0
        %2128 = vmatprep.mubr.f32.mxu0 0.0
        %2129 = vmatmul.mubr.f32.gmra.mxu0 %v1779
        %v2130 = vpop.f32.mrf.mxu0
        %v2131 = vadd.f32 0.0, %v2130
        %v2132 = vpop.f32.mrf.mxu0
        %2133 = vmatprep.mubr.f32.mxu0 0.0
        %2134 = vmatmul.mubr.f32.gmra.mxu0 %v1780
        %v2135 = vpop.f32.mrf.mxu0
        %v2136 = vadd.f32 0.0, %v2135
        %v2137 = vpop.f32.mrf.mxu0
        %2138 = vmatprep.mubr.f32.mxu0 0.0
        %2139 = vmatmul.mubr.f32.gmra.mxu0 %v1781
        %v2140 = vpop.f32.mrf.mxu0
        %v2141 = vadd.f32 0.0, %v2140
        %v2142 = vpop.f32.mrf.mxu0
        %2143 = vmatprep.mubr.f32.mxu0 0.0
        %2144 = vmatmul.mubr.f32.gmra.mxu0 %v1782
        %v2145 = vpop.f32.mrf.mxu0
        %v2146 = vadd.f32 0.0, %v2145
        %v2147 = vpop.f32.mrf.mxu0
        %2148 = vmatprep.mubr.f32.mxu0 0.0
        %2149 = vmatmul.mubr.f32.gmra.mxu0 %v1783
        %v2150 = vpop.f32.mrf.mxu0
        %v2151 = vadd.f32 0.0, %v2150
        %v2152 = vpop.f32.mrf.mxu0
        %2153 = vmatprep.mubr.f32.mxu0 0.0
        %2154 = vmatmul.mubr.f32.gmra.mxu0 %v1784
        %v2155 = vpop.f32.mrf.mxu0
        %v2156 = vadd.f32 0.0, %v2155
        %v2157 = vpop.f32.mrf.mxu0
        %2158 = vmatprep.mubr.f32.mxu0 0.0
        %2159 = vmatmul.mubr.f32.gmra.mxu0 %v1785
        %v2160 = vpop.f32.mrf.mxu0
        %v2161 = vadd.f32 0.0, %v2160
        %v2162 = vpop.f32.mrf.mxu0
        %2163 = vmatprep.mubr.f32.mxu0 0.0
        %2164 = vmatmul.mubr.f32.gmra.mxu0 %v1786
        %v2165 = vpop.f32.mrf.mxu0
        %v2166 = vadd.f32 0.0, %v2165
        %v2167 = vpop.f32.mrf.mxu0
        %2168 = vmatprep.mubr.f32.mxu0 0.0
        %2169 = vmatmul.mubr.f32.gmra.mxu0 %v1787
        %v2170 = vpop.f32.mrf.mxu0
        %v2171 = vadd.f32 0.0, %v2170
        %v2172 = vpop.f32.mrf.mxu0
        %2173 = vmatprep.mubr.f32.mxu0 0.0
        %2174 = vmatmul.mubr.f32.gmra.mxu0 %v1788
        %v2175 = vpop.f32.mrf.mxu0
        %v2176 = vadd.f32 0.0, %v2175
        %v2177 = vpop.f32.mrf.mxu0
        %2178 = vmatprep.mubr.f32.mxu0 0.0
        %2179 = vmatmul.mubr.f32.gmra.mxu0 %v1789
        %v2180 = vpop.f32.mrf.mxu0
        %v2181 = vadd.f32 0.0, %v2180
        %v2182 = vpop.f32.mrf.mxu0
        %2183 = vmatprep.mubr.f32.mxu0 0.0
        %2184 = vmatmul.mubr.f32.gmra.mxu0 %v1790
        %v2185 = vpop.f32.mrf.mxu0
        %v2186 = vadd.f32 0.0, %v2185
        %v2187 = vpop.f32.mrf.mxu0
        %2188 = vmatprep.mubr.f32.mxu0 0.0
        %2189 = vmatmul.mubr.f32.gmra.mxu0 %v1791
        %v2190 = vpop.f32.mrf.mxu0
        %v2191 = vadd.f32 0.0, %v2190
        %v2192 = vpop.f32.mrf.mxu0
        %2193 = vdwg.mxu0
        %2194 = vmatprep.subr.mxu0 0.0
        %2195 = vmatpush1.msra.mxu0 %v1471
        %2196 = vmatprep.subr.mxu0 0.0
        %2197 = vmatpush1.msra.mxu0 %v1470
        %2198 = vmatprep.subr.mxu0 0.0
        %2199 = vmatpush1.msra.mxu0 %v1469
        %2200 = vmatprep.subr.mxu0 0.0
        %2201 = vmatpush1.msra.mxu0 %v1468
        %2202 = vmatprep.subr.mxu0 0.0
        %2203 = vmatpush1.msra.mxu0 %v1467
        %2204 = vmatprep.subr.mxu0 0.0
        %2205 = vmatpush1.msra.mxu0 %v1466
        %2206 = vmatprep.subr.mxu0 0.0
        %2207 = vmatpush1.msra.mxu0 %v1465
        %2208 = vmatprep.subr.mxu0 0.0
        %2209 = vmatpush1.msra.mxu0 %v1464
        %2210 = vmatprep.subr.mxu0 0.0
        %2211 = vmatpush1.msra.mxu0 %v1463
        %2212 = vmatprep.subr.mxu0 0.0
        %2213 = vmatpush1.msra.mxu0 %v1462
        %2214 = vmatprep.subr.mxu0 0.0
        %2215 = vmatpush1.msra.mxu0 %v1461
        %2216 = vmatprep.subr.mxu0 0.0
        %2217 = vmatpush1.msra.mxu0 %v1460
        %2218 = vmatprep.subr.mxu0 0.0
        %2219 = vmatpush1.msra.mxu0 %v1459
        %2220 = vmatprep.subr.mxu0 0.0
        %2221 = vmatpush1.msra.mxu0 %v1458
        %2222 = vmatprep.subr.mxu0 0.0
        %2223 = vmatpush1.msra.mxu0 %v1457
        %2224 = vmatprep.subr.mxu0 0.0
        %2225 = vmatpush1.msra.mxu0 %v1456
        %2226 = vmatprep.subr.mxu0 0.0
        %2227 = vmatpush2.msra.mxu0 0.0
        %2228 = vmatprep.subr.mxu0 0.0
        %2229 = vmatpush2.msra.mxu0 0.0
        %2230 = vmatprep.subr.mxu0 0.0
        %2231 = vmatpush2.msra.mxu0 0.0
        %2232 = vmatprep.subr.mxu0 0.0
        %2233 = vmatpush2.msra.mxu0 0.0
        %2234 = vmatprep.subr.mxu0 0.0
        %2235 = vmatpush2.msra.mxu0 0.0
        %2236 = vmatprep.subr.mxu0 0.0
        %2237 = vmatpush2.msra.mxu0 0.0
        %2238 = vmatprep.subr.mxu0 0.0
        %2239 = vmatpush2.msra.mxu0 0.0
        %2240 = vmatprep.subr.mxu0 0.0
        %2241 = vmatpush2.msra.mxu0 0.0
        %2242 = vmatprep.subr.mxu0 0.0
        %2243 = vmatpush2.msra.mxu0 0.0
        %2244 = vmatprep.subr.mxu0 0.0
        %2245 = vmatpush2.msra.mxu0 0.0
        %2246 = vmatprep.subr.mxu0 0.0
        %2247 = vmatpush2.msra.mxu0 0.0
        %2248 = vmatprep.subr.mxu0 0.0
        %2249 = vmatpush2.msra.mxu0 0.0
        %2250 = vmatprep.subr.mxu0 0.0
        %2251 = vmatpush2.msra.mxu0 0.0
        %2252 = vmatprep.subr.mxu0 0.0
        %2253 = vmatpush2.msra.mxu0 0.0
        %2254 = vmatprep.subr.mxu0 0.0
        %2255 = vmatpush2.msra.mxu0 0.0
        %2256 = vmatprep.subr.mxu0 0.0
        %2257 = vmatpush2.msra.mxu0 0.0
        %2258 = vmatprep.mubr.f32.mxu0 0.0
        %2259 = vmatmul.mubr.f32.gmra.mxu0 %v1392
        %v2260 = vpop.f32.mrf.mxu0
        %v2261 = vadd.f32 %v1876, %v2260
        %v2262 = vpop.f32.mrf.mxu0
        %2263 = vmatprep.mubr.f32.mxu0 0.0
        %2264 = vmatmul.mubr.f32.gmra.mxu0 %v1393
        %v2265 = vpop.f32.mrf.mxu0
        %v2266 = vadd.f32 %v1881, %v2265
        %v2267 = vpop.f32.mrf.mxu0
        %2268 = vmatprep.mubr.f32.mxu0 0.0
        %2269 = vmatmul.mubr.f32.gmra.mxu0 %v1394
        %v2270 = vpop.f32.mrf.mxu0
        %v2271 = vadd.f32 %v1886, %v2270
        %v2272 = vpop.f32.mrf.mxu0
        %2273 = vmatprep.mubr.f32.mxu0 0.0
        %2274 = vmatmul.mubr.f32.gmra.mxu0 %v1395
        %v2275 = vpop.f32.mrf.mxu0
        %v2276 = vadd.f32 %v1891, %v2275
        %v2277 = vpop.f32.mrf.mxu0
        %2278 = vmatprep.mubr.f32.mxu0 0.0
        %2279 = vmatmul.mubr.f32.gmra.mxu0 %v1396
        %v2280 = vpop.f32.mrf.mxu0
        %v2281 = vadd.f32 %v1896, %v2280
        %v2282 = vpop.f32.mrf.mxu0
        %2283 = vmatprep.mubr.f32.mxu0 0.0
        %2284 = vmatmul.mubr.f32.gmra.mxu0 %v1397
        %v2285 = vpop.f32.mrf.mxu0
        %v2286 = vadd.f32 %v1901, %v2285
        %v2287 = vpop.f32.mrf.mxu0
        %2288 = vmatprep.mubr.f32.mxu0 0.0
        %2289 = vmatmul.mubr.f32.gmra.mxu0 %v1398
        %v2290 = vpop.f32.mrf.mxu0
        %v2291 = vadd.f32 %v1906, %v2290
        %v2292 = vpop.f32.mrf.mxu0
        %2293 = vmatprep.mubr.f32.mxu0 0.0
        %2294 = vmatmul.mubr.f32.gmra.mxu0 %v1399
        %v2295 = vpop.f32.mrf.mxu0
        %v2296 = vadd.f32 %v1911, %v2295
        %v2297 = vpop.f32.mrf.mxu0
        %2298 = vmatprep.mubr.f32.mxu0 0.0
        %2299 = vmatmul.mubr.f32.gmra.mxu0 %v1400
        %v2300 = vpop.f32.mrf.mxu0
        %v2301 = vadd.f32 %v1916, %v2300
        %v2302 = vpop.f32.mrf.mxu0
        %2303 = vmatprep.mubr.f32.mxu0 0.0
        %2304 = vmatmul.mubr.f32.gmra.mxu0 %v1401
        %v2305 = vpop.f32.mrf.mxu0
        %v2306 = vadd.f32 %v1921, %v2305
        %v2307 = vpop.f32.mrf.mxu0
        %2308 = vmatprep.mubr.f32.mxu0 0.0
        %2309 = vmatmul.mubr.f32.gmra.mxu0 %v1402
        %v2310 = vpop.f32.mrf.mxu0
        %v2311 = vadd.f32 %v1926, %v2310
        %v2312 = vpop.f32.mrf.mxu0
        %2313 = vmatprep.mubr.f32.mxu0 0.0
        %2314 = vmatmul.mubr.f32.gmra.mxu0 %v1403
        %v2315 = vpop.f32.mrf.mxu0
        %v2316 = vadd.f32 %v1931, %v2315
        %v2317 = vpop.f32.mrf.mxu0
        %2318 = vmatprep.mubr.f32.mxu0 0.0
        %2319 = vmatmul.mubr.f32.gmra.mxu0 %v1404
        %v2320 = vpop.f32.mrf.mxu0
        %v2321 = vadd.f32 %v1936, %v2320
        %v2322 = vpop.f32.mrf.mxu0
        %2323 = vmatprep.mubr.f32.mxu0 0.0
        %2324 = vmatmul.mubr.f32.gmra.mxu0 %v1405
        %v2325 = vpop.f32.mrf.mxu0
        %v2326 = vadd.f32 %v1941, %v2325
        %v2327 = vpop.f32.mrf.mxu0
        %2328 = vmatprep.mubr.f32.mxu0 0.0
        %2329 = vmatmul.mubr.f32.gmra.mxu0 %v1406
        %v2330 = vpop.f32.mrf.mxu0
        %v2331 = vadd.f32 %v1946, %v2330
        %v2332 = vpop.f32.mrf.mxu0
        %2333 = vmatprep.mubr.f32.mxu0 0.0
        %2334 = vmatmul.mubr.f32.gmra.mxu0 %v1407
        %v2335 = vpop.f32.mrf.mxu0
        %v2336 = vadd.f32 %v1951, %v2335
        %v2337 = vpop.f32.mrf.mxu0
        %2338 = vmatprep.mubr.f32.mxu0 0.0
        %2339 = vmatmul.mubr.f32.gmra.mxu0 %v1408
        %v2340 = vpop.f32.mrf.mxu0
        %v2341 = vadd.f32 %v1956, %v2340
        %v2342 = vpop.f32.mrf.mxu0
        %2343 = vmatprep.mubr.f32.mxu0 0.0
        %2344 = vmatmul.mubr.f32.gmra.mxu0 %v1409
        %v2345 = vpop.f32.mrf.mxu0
        %v2346 = vadd.f32 %v1961, %v2345
        %v2347 = vpop.f32.mrf.mxu0
        %2348 = vmatprep.mubr.f32.mxu0 0.0
        %2349 = vmatmul.mubr.f32.gmra.mxu0 %v1410
        %v2350 = vpop.f32.mrf.mxu0
        %v2351 = vadd.f32 %v1966, %v2350
        %v2352 = vpop.f32.mrf.mxu0
        %2353 = vmatprep.mubr.f32.mxu0 0.0
        %2354 = vmatmul.mubr.f32.gmra.mxu0 %v1411
        %v2355 = vpop.f32.mrf.mxu0
        %v2356 = vadd.f32 %v1971, %v2355
        %v2357 = vpop.f32.mrf.mxu0
        %2358 = vmatprep.mubr.f32.mxu0 0.0
        %2359 = vmatmul.mubr.f32.gmra.mxu0 %v1412
        %v2360 = vpop.f32.mrf.mxu0
        %v2361 = vadd.f32 %v1976, %v2360
        %v2362 = vpop.f32.mrf.mxu0
        %2363 = vmatprep.mubr.f32.mxu0 0.0
        %2364 = vmatmul.mubr.f32.gmra.mxu0 %v1413
        %v2365 = vpop.f32.mrf.mxu0
        %v2366 = vadd.f32 %v1981, %v2365
        %v2367 = vpop.f32.mrf.mxu0
        %2368 = vmatprep.mubr.f32.mxu0 0.0
        %2369 = vmatmul.mubr.f32.gmra.mxu0 %v1414
        %v2370 = vpop.f32.mrf.mxu0
        %v2371 = vadd.f32 %v1986, %v2370
        %v2372 = vpop.f32.mrf.mxu0
        %2373 = vmatprep.mubr.f32.mxu0 0.0
        %2374 = vmatmul.mubr.f32.gmra.mxu0 %v1415
        %v2375 = vpop.f32.mrf.mxu0
        %v2376 = vadd.f32 %v1991, %v2375
        %v2377 = vpop.f32.mrf.mxu0
        %2378 = vmatprep.mubr.f32.mxu0 0.0
        %2379 = vmatmul.mubr.f32.gmra.mxu0 %v1416
        %v2380 = vpop.f32.mrf.mxu0
        %v2381 = vadd.f32 %v1996, %v2380
        %v2382 = vpop.f32.mrf.mxu0
        %2383 = vmatprep.mubr.f32.mxu0 0.0
        %2384 = vmatmul.mubr.f32.gmra.mxu0 %v1417
        %v2385 = vpop.f32.mrf.mxu0
        %v2386 = vadd.f32 %v2001, %v2385
        %v2387 = vpop.f32.mrf.mxu0
        %2388 = vmatprep.mubr.f32.mxu0 0.0
        %2389 = vmatmul.mubr.f32.gmra.mxu0 %v1418
        %v2390 = vpop.f32.mrf.mxu0
        %v2391 = vadd.f32 %v2006, %v2390
        %v2392 = vpop.f32.mrf.mxu0
        %2393 = vmatprep.mubr.f32.mxu0 0.0
        %2394 = vmatmul.mubr.f32.gmra.mxu0 %v1419
        %v2395 = vpop.f32.mrf.mxu0
        %v2396 = vadd.f32 %v2011, %v2395
        %v2397 = vpop.f32.mrf.mxu0
        %2398 = vmatprep.mubr.f32.mxu0 0.0
        %2399 = vmatmul.mubr.f32.gmra.mxu0 %v1420
        %v2400 = vpop.f32.mrf.mxu0
        %v2401 = vadd.f32 %v2016, %v2400
        %v2402 = vpop.f32.mrf.mxu0
        %2403 = vmatprep.mubr.f32.mxu0 0.0
        %2404 = vmatmul.mubr.f32.gmra.mxu0 %v1421
        %v2405 = vpop.f32.mrf.mxu0
        %v2406 = vadd.f32 %v2021, %v2405
        %v2407 = vpop.f32.mrf.mxu0
        %2408 = vmatprep.mubr.f32.mxu0 0.0
        %2409 = vmatmul.mubr.f32.gmra.mxu0 %v1422
        %v2410 = vpop.f32.mrf.mxu0
        %v2411 = vadd.f32 %v2026, %v2410
        %v2412 = vpop.f32.mrf.mxu0
        %2413 = vmatprep.mubr.f32.mxu0 0.0
        %2414 = vmatmul.mubr.f32.gmra.mxu0 %v1423
        %v2415 = vpop.f32.mrf.mxu0
        %v2416 = vadd.f32 %v2031, %v2415
        %v2417 = vpop.f32.mrf.mxu0
        %2418 = vmatprep.mubr.f32.mxu0 0.0
        %2419 = vmatmul.mubr.f32.gmra.mxu0 %v1424
        %v2420 = vpop.f32.mrf.mxu0
        %v2421 = vadd.f32 %v2036, %v2420
        %v2422 = vpop.f32.mrf.mxu0
        %2423 = vmatprep.mubr.f32.mxu0 0.0
        %2424 = vmatmul.mubr.f32.gmra.mxu0 %v1425
        %v2425 = vpop.f32.mrf.mxu0
        %v2426 = vadd.f32 %v2041, %v2425
        %v2427 = vpop.f32.mrf.mxu0
        %2428 = vmatprep.mubr.f32.mxu0 0.0
        %2429 = vmatmul.mubr.f32.gmra.mxu0 %v1426
        %v2430 = vpop.f32.mrf.mxu0
        %v2431 = vadd.f32 %v2046, %v2430
        %v2432 = vpop.f32.mrf.mxu0
        %2433 = vmatprep.mubr.f32.mxu0 0.0
        %2434 = vmatmul.mubr.f32.gmra.mxu0 %v1427
        %v2435 = vpop.f32.mrf.mxu0
        %v2436 = vadd.f32 %v2051, %v2435
        %v2437 = vpop.f32.mrf.mxu0
        %2438 = vmatprep.mubr.f32.mxu0 0.0
        %2439 = vmatmul.mubr.f32.gmra.mxu0 %v1428
        %v2440 = vpop.f32.mrf.mxu0
        %v2441 = vadd.f32 %v2056, %v2440
        %v2442 = vpop.f32.mrf.mxu0
        %2443 = vmatprep.mubr.f32.mxu0 0.0
        %2444 = vmatmul.mubr.f32.gmra.mxu0 %v1429
        %v2445 = vpop.f32.mrf.mxu0
        %v2446 = vadd.f32 %v2061, %v2445
        %v2447 = vpop.f32.mrf.mxu0
        %2448 = vmatprep.mubr.f32.mxu0 0.0
        %2449 = vmatmul.mubr.f32.gmra.mxu0 %v1430
        %v2450 = vpop.f32.mrf.mxu0
        %v2451 = vadd.f32 %v2066, %v2450
        %v2452 = vpop.f32.mrf.mxu0
        %2453 = vmatprep.mubr.f32.mxu0 0.0
        %2454 = vmatmul.mubr.f32.gmra.mxu0 %v1431
        %v2455 = vpop.f32.mrf.mxu0
        %v2456 = vadd.f32 %v2071, %v2455
        %v2457 = vpop.f32.mrf.mxu0
        %2458 = vmatprep.mubr.f32.mxu0 0.0
        %2459 = vmatmul.mubr.f32.gmra.mxu0 %v1432
        %v2460 = vpop.f32.mrf.mxu0
        %v2461 = vadd.f32 %v2076, %v2460
        %v2462 = vpop.f32.mrf.mxu0
        %2463 = vmatprep.mubr.f32.mxu0 0.0
        %2464 = vmatmul.mubr.f32.gmra.mxu0 %v1433
        %v2465 = vpop.f32.mrf.mxu0
        %v2466 = vadd.f32 %v2081, %v2465
        %v2467 = vpop.f32.mrf.mxu0
        %2468 = vmatprep.mubr.f32.mxu0 0.0
        %2469 = vmatmul.mubr.f32.gmra.mxu0 %v1434
        %v2470 = vpop.f32.mrf.mxu0
        %v2471 = vadd.f32 %v2086, %v2470
        %v2472 = vpop.f32.mrf.mxu0
        %2473 = vmatprep.mubr.f32.mxu0 0.0
        %2474 = vmatmul.mubr.f32.gmra.mxu0 %v1435
        %v2475 = vpop.f32.mrf.mxu0
        %v2476 = vadd.f32 %v2091, %v2475
        %v2477 = vpop.f32.mrf.mxu0
        %2478 = vmatprep.mubr.f32.mxu0 0.0
        %2479 = vmatmul.mubr.f32.gmra.mxu0 %v1436
        %v2480 = vpop.f32.mrf.mxu0
        %v2481 = vadd.f32 %v2096, %v2480
        %v2482 = vpop.f32.mrf.mxu0
        %2483 = vmatprep.mubr.f32.mxu0 0.0
        %2484 = vmatmul.mubr.f32.gmra.mxu0 %v1437
        %v2485 = vpop.f32.mrf.mxu0
        %v2486 = vadd.f32 %v2101, %v2485
        %v2487 = vpop.f32.mrf.mxu0
        %2488 = vmatprep.mubr.f32.mxu0 0.0
        %2489 = vmatmul.mubr.f32.gmra.mxu0 %v1438
        %v2490 = vpop.f32.mrf.mxu0
        %v2491 = vadd.f32 %v2106, %v2490
        %v2492 = vpop.f32.mrf.mxu0
        %2493 = vmatprep.mubr.f32.mxu0 0.0
        %2494 = vmatmul.mubr.f32.gmra.mxu0 %v1439
        %v2495 = vpop.f32.mrf.mxu0
        %v2496 = vadd.f32 %v2111, %v2495
        %v2497 = vpop.f32.mrf.mxu0
        %2498 = vmatprep.mubr.f32.mxu0 0.0
        %2499 = vmatmul.mubr.f32.gmra.mxu0 %v1440
        %v2500 = vpop.f32.mrf.mxu0
        %v2501 = vadd.f32 %v2116, %v2500
        %v2502 = vpop.f32.mrf.mxu0
        %2503 = vmatprep.mubr.f32.mxu0 0.0
        %2504 = vmatmul.mubr.f32.gmra.mxu0 %v1441
        %v2505 = vpop.f32.mrf.mxu0
        %v2506 = vadd.f32 %v2121, %v2505
        %v2507 = vpop.f32.mrf.mxu0
        %2508 = vmatprep.mubr.f32.mxu0 0.0
        %2509 = vmatmul.mubr.f32.gmra.mxu0 %v1442
        %v2510 = vpop.f32.mrf.mxu0
        %v2511 = vadd.f32 %v2126, %v2510
        %v2512 = vpop.f32.mrf.mxu0
        %2513 = vmatprep.mubr.f32.mxu0 0.0
        %2514 = vmatmul.mubr.f32.gmra.mxu0 %v1443
        %v2515 = vpop.f32.mrf.mxu0
        %v2516 = vadd.f32 %v2131, %v2515
        %v2517 = vpop.f32.mrf.mxu0
        %2518 = vmatprep.mubr.f32.mxu0 0.0
        %2519 = vmatmul.mubr.f32.gmra.mxu0 %v1444
        %v2520 = vpop.f32.mrf.mxu0
        %v2521 = vadd.f32 %v2136, %v2520
        %v2522 = vpop.f32.mrf.mxu0
        %2523 = vmatprep.mubr.f32.mxu0 0.0
        %2524 = vmatmul.mubr.f32.gmra.mxu0 %v1445
        %v2525 = vpop.f32.mrf.mxu0
        %v2526 = vadd.f32 %v2141, %v2525
        %v2527 = vpop.f32.mrf.mxu0
        %2528 = vmatprep.mubr.f32.mxu0 0.0
        %2529 = vmatmul.mubr.f32.gmra.mxu0 %v1446
        %v2530 = vpop.f32.mrf.mxu0
        %v2531 = vadd.f32 %v2146, %v2530
        %v2532 = vpop.f32.mrf.mxu0
        %2533 = vmatprep.mubr.f32.mxu0 0.0
        %2534 = vmatmul.mubr.f32.gmra.mxu0 %v1447
        %v2535 = vpop.f32.mrf.mxu0
        %v2536 = vadd.f32 %v2151, %v2535
        %v2537 = vpop.f32.mrf.mxu0
        %2538 = vmatprep.mubr.f32.mxu0 0.0
        %2539 = vmatmul.mubr.f32.gmra.mxu0 %v1448
        %v2540 = vpop.f32.mrf.mxu0
        %v2541 = vadd.f32 %v2156, %v2540
        %v2542 = vpop.f32.mrf.mxu0
        %2543 = vmatprep.mubr.f32.mxu0 0.0
        %2544 = vmatmul.mubr.f32.gmra.mxu0 %v1449
        %v2545 = vpop.f32.mrf.mxu0
        %v2546 = vadd.f32 %v2161, %v2545
        %v2547 = vpop.f32.mrf.mxu0
        %2548 = vmatprep.mubr.f32.mxu0 0.0
        %2549 = vmatmul.mubr.f32.gmra.mxu0 %v1450
        %v2550 = vpop.f32.mrf.mxu0
        %v2551 = vadd.f32 %v2166, %v2550
        %v2552 = vpop.f32.mrf.mxu0
        %2553 = vmatprep.mubr.f32.mxu0 0.0
        %2554 = vmatmul.mubr.f32.gmra.mxu0 %v1451
        %v2555 = vpop.f32.mrf.mxu0
        %v2556 = vadd.f32 %v2171, %v2555
        %v2557 = vpop.f32.mrf.mxu0
        %2558 = vmatprep.mubr.f32.mxu0 0.0
        %2559 = vmatmul.mubr.f32.gmra.mxu0 %v1452
        %v2560 = vpop.f32.mrf.mxu0
        %v2561 = vadd.f32 %v2176, %v2560
        %v2562 = vpop.f32.mrf.mxu0
        %2563 = vmatprep.mubr.f32.mxu0 0.0
        %2564 = vmatmul.mubr.f32.gmra.mxu0 %v1453
        %v2565 = vpop.f32.mrf.mxu0
        %v2566 = vadd.f32 %v2181, %v2565
        %v2567 = vpop.f32.mrf.mxu0
        %2568 = vmatprep.mubr.f32.mxu0 0.0
        %2569 = vmatmul.mubr.f32.gmra.mxu0 %v1454
        %v2570 = vpop.f32.mrf.mxu0
        %v2571 = vadd.f32 %v2186, %v2570
        %v2572 = vpop.f32.mrf.mxu0
        %2573 = vmatprep.mubr.f32.mxu0 0.0
        %2574 = vmatmul.mubr.f32.gmra.mxu0 %v1455
        %v2575 = vpop.f32.mrf.mxu0
        %v2576 = vadd.f32 %v2191, %v2575
        %v2577 = vpop.f32.mrf.mxu0
        %2578 = vdwg.mxu0
        %v2579 = vrot.slane %v813, 1
        %v2580 = vrot.slane %v814, 1
        %v2581 = vrot.slane %v815, 1
        %v2582 = vrot.slane %v816, 1
        %v2583 = vrot.slane %v817, 1
        %v2584 = vrot.slane %v818, 1
        %v2585 = vrot.slane %v819, 1
        %v2586 = vrot.slane %v820, 1
        %v2587 = vrot.slane %v821, 1
        %v2588 = vrot.slane %v822, 1
        %v2589 = vrot.slane %v823, 1
        %v2590 = vrot.slane %v824, 1
        %v2591 = vrot.slane %v825, 1
        %v2592 = vrot.slane %v826, 1
        %v2593 = vrot.slane %v827, 1
        %v2594 = vrot.slane %v828, 1
        %v2595 = vrot.slane %v829, 1
        %v2596 = vrot.slane %v830, 1
        %v2597 = vrot.slane %v831, 1
        %v2598 = vrot.slane %v832, 1
        %v2599 = vrot.slane %v833, 1
        %v2600 = vrot.slane %v834, 1
        %v2601 = vrot.slane %v835, 1
        %v2602 = vrot.slane %v836, 1
        %v2603 = vrot.slane %v837, 1
        %v2604 = vrot.slane %v838, 1
        %v2605 = vrot.slane %v839, 1
        %v2606 = vrot.slane %v840, 1
        %v2607 = vrot.slane %v841, 1
        %v2608 = vrot.slane %v842, 1
        %v2609 = vrot.slane %v843, 1
        %v2610 = vrot.slane %v844, 1
        %v2611 = vrot.slane %v845, 1
        %v2612 = vrot.slane %v846, 1
        %v2613 = vrot.slane %v847, 1
        %v2614 = vrot.slane %v848, 1
        %v2615 = vrot.slane %v849, 1
        %v2616 = vrot.slane %v850, 1
        %v2617 = vrot.slane %v851, 1
        %v2618 = vrot.slane %v852, 1
        %v2619 = vrot.slane %v853, 1
        %v2620 = vrot.slane %v854, 1
        %v2621 = vrot.slane %v855, 1
        %v2622 = vrot.slane %v856, 1
        %v2623 = vrot.slane %v857, 1
        %v2624 = vrot.slane %v858, 1
        %v2625 = vrot.slane %v859, 1
        %v2626 = vrot.slane %v860, 1
        %v2627 = vrot.slane %v861, 1
        %v2628 = vrot.slane %v862, 1
        %v2629 = vrot.slane %v863, 1
        %v2630 = vrot.slane %v864, 1
        %v2631 = vrot.slane %v865, 1
        %v2632 = vrot.slane %v866, 1
        %v2633 = vrot.slane %v867, 1
        %v2634 = vrot.slane %v868, 1
        %v2635 = vrot.slane %v869, 1
        %v2636 = vrot.slane %v870, 1
        %v2637 = vrot.slane %v871, 1
        %v2638 = vrot.slane %v872, 1
        %v2639 = vrot.slane %v873, 1
        %v2640 = vrot.slane %v874, 1
        %v2641 = vrot.slane %v875, 1
        %v2642 = vrot.slane %v876, 1
        %vm2643 = vcmp.lt.s32.totalorder %v1006, 7
        %v2644 = vsel %vm2643, %v2641, %v2642
        %v2645 = vsel %vm2643, %v2640, %v2641
        %v2646 = vsel %vm2643, %v2639, %v2640
        %v2647 = vsel %vm2643, %v2638, %v2639
        %v2648 = vsel %vm2643, %v2637, %v2638
        %v2649 = vsel %vm2643, %v2636, %v2637
        %v2650 = vsel %vm2643, %v2635, %v2636
        %v2651 = vsel %vm2643, %v2634, %v2635
        %v2652 = vsel %vm2643, %v2633, %v2634
        %v2653 = vsel %vm2643, %v2632, %v2633
        %v2654 = vsel %vm2643, %v2631, %v2632
        %v2655 = vsel %vm2643, %v2630, %v2631
        %v2656 = vsel %vm2643, %v2629, %v2630
        %v2657 = vsel %vm2643, %v2628, %v2629
        %v2658 = vsel %vm2643, %v2627, %v2628
        %v2659 = vsel %vm2643, %v2626, %v2627
        %v2660 = vsel %vm2643, %v2625, %v2626
        %v2661 = vsel %vm2643, %v2624, %v2625
        %v2662 = vsel %vm2643, %v2623, %v2624
        %v2663 = vsel %vm2643, %v2622, %v2623
        %v2664 = vsel %vm2643, %v2621, %v2622
        %v2665 = vsel %vm2643, %v2620, %v2621
        %v2666 = vsel %vm2643, %v2619, %v2620
        %v2667 = vsel %vm2643, %v2618, %v2619
        %v2668 = vsel %vm2643, %v2617, %v2618
        %v2669 = vsel %vm2643, %v2616, %v2617
        %v2670 = vsel %vm2643, %v2615, %v2616
        %v2671 = vsel %vm2643, %v2614, %v2615
        %v2672 = vsel %vm2643, %v2613, %v2614
        %v2673 = vsel %vm2643, %v2612, %v2613
        %v2674 = vsel %vm2643, %v2611, %v2612
        %v2675 = vsel %vm2643, %v2610, %v2611
        %v2676 = vsel %vm2643, %v2609, %v2610
        %v2677 = vsel %vm2643, %v2608, %v2609
        %v2678 = vsel %vm2643, %v2607, %v2608
        %v2679 = vsel %vm2643, %v2606, %v2607
        %v2680 = vsel %vm2643, %v2605, %v2606
        %v2681 = vsel %vm2643, %v2604, %v2605
        %v2682 = vsel %vm2643, %v2603, %v2604
        %v2683 = vsel %vm2643, %v2602, %v2603
        %v2684 = vsel %vm2643, %v2601, %v2602
        %v2685 = vsel %vm2643, %v2600, %v2601
        %v2686 = vsel %vm2643, %v2599, %v2600
        %v2687 = vsel %vm2643, %v2598, %v2599
        %v2688 = vsel %vm2643, %v2597, %v2598
        %v2689 = vsel %vm2643, %v2596, %v2597
        %v2690 = vsel %vm2643, %v2595, %v2596
        %v2691 = vsel %vm2643, %v2594, %v2595
        %v2692 = vsel %vm2643, %v2593, %v2594
        %v2693 = vsel %vm2643, %v2592, %v2593
        %v2694 = vsel %vm2643, %v2591, %v2592
        %v2695 = vsel %vm2643, %v2590, %v2591
        %v2696 = vsel %vm2643, %v2589, %v2590
        %v2697 = vsel %vm2643, %v2588, %v2589
        %v2698 = vsel %vm2643, %v2587, %v2588
        %v2699 = vsel %vm2643, %v2586, %v2587
        %v2700 = vsel %vm2643, %v2585, %v2586
        %v2701 = vsel %vm2643, %v2584, %v2585
        %v2702 = vsel %vm2643, %v2583, %v2584
        %v2703 = vsel %vm2643, %v2582, %v2583
        %v2704 = vsel %vm2643, %v2581, %v2582
        %v2705 = vsel %vm2643, %v2580, %v2581
        %v2706 = vsel %vm2643, %v2579, %v2580
        %v2707 = vsel %vm2643, %v2642, %v2579
        %2708 = vset.pattern.permute.xlu0 2
        %2709 = vperm.xlu0 %2708, %v877
        %v2710 = vpop.permute.xlu0 %2709
        %2712 = vset.pattern.permute.xlu0 2
        %2713 = vperm.xlu0 %2712, %v878
        %v2714 = vpop.permute.xlu0 %2713
        %2716 = vset.pattern.permute.xlu0 2
        %2717 = vperm.xlu0 %2716, %v879
        %v2718 = vpop.permute.xlu0 %2717
        %2720 = vset.pattern.permute.xlu0 2
        %2721 = vperm.xlu0 %2720, %v880
        %v2722 = vpop.permute.xlu0 %2721
        %2724 = vset.pattern.permute.xlu0 2
        %2725 = vperm.xlu0 %2724, %v881
        %v2726 = vpop.permute.xlu0 %2725
        %2728 = vset.pattern.permute.xlu0 2
        %2729 = vperm.xlu0 %2728, %v882
        %v2730 = vpop.permute.xlu0 %2729
        %2732 = vset.pattern.permute.xlu0 2
        %2733 = vperm.xlu0 %2732, %v883
        %v2734 = vpop.permute.xlu0 %2733
        %2736 = vset.pattern.permute.xlu0 2
        %2737 = vperm.xlu0 %2736, %v884
        %v2738 = vpop.permute.xlu0 %2737
        %2740 = vset.pattern.permute.xlu0 2
        %2741 = vperm.xlu0 %2740, %v885
        %v2742 = vpop.permute.xlu0 %2741
        %2744 = vset.pattern.permute.xlu0 2
        %2745 = vperm.xlu0 %2744, %v886
        %v2746 = vpop.permute.xlu0 %2745
        %2748 = vset.pattern.permute.xlu0 2
        %2749 = vperm.xlu0 %2748, %v887
        %v2750 = vpop.permute.xlu0 %2749
        %2752 = vset.pattern.permute.xlu0 2
        %2753 = vperm.xlu0 %2752, %v888
        %v2754 = vpop.permute.xlu0 %2753
        %2756 = vset.pattern.permute.xlu0 2
        %2757 = vperm.xlu0 %2756, %v889
        %v2758 = vpop.permute.xlu0 %2757
        %2760 = vset.pattern.permute.xlu0 2
        %2761 = vperm.xlu0 %2760, %v890
        %v2762 = vpop.permute.xlu0 %2761
        %2764 = vset.pattern.permute.xlu0 2
        %2765 = vperm.xlu0 %2764, %v891
        %v2766 = vpop.permute.xlu0 %2765
        %2768 = vset.pattern.permute.xlu0 2
        %2769 = vperm.xlu0 %2768, %v892
        %v2770 = vpop.permute.xlu0 %2769
        %2772 = vset.pattern.permute.xlu0 2
        %2773 = vperm.xlu0 %2772, %v893
        %v2774 = vpop.permute.xlu0 %2773
        %2776 = vset.pattern.permute.xlu0 2
        %2777 = vperm.xlu0 %2776, %v894
        %v2778 = vpop.permute.xlu0 %2777
        %2780 = vset.pattern.permute.xlu0 2
        %2781 = vperm.xlu0 %2780, %v895
        %v2782 = vpop.permute.xlu0 %2781
        %2784 = vset.pattern.permute.xlu0 2
        %2785 = vperm.xlu0 %2784, %v896
        %v2786 = vpop.permute.xlu0 %2785
        %2788 = vset.pattern.permute.xlu0 2
        %2789 = vperm.xlu0 %2788, %v897
        %v2790 = vpop.permute.xlu0 %2789
        %2792 = vset.pattern.permute.xlu0 2
        %2793 = vperm.xlu0 %2792, %v898
        %v2794 = vpop.permute.xlu0 %2793
        %2796 = vset.pattern.permute.xlu0 2
        %2797 = vperm.xlu0 %2796, %v899
        %v2798 = vpop.permute.xlu0 %2797
        %2800 = vset.pattern.permute.xlu0 2
        %2801 = vperm.xlu0 %2800, %v900
        %v2802 = vpop.permute.xlu0 %2801
        %2804 = vset.pattern.permute.xlu0 2
        %2805 = vperm.xlu0 %2804, %v901
        %v2806 = vpop.permute.xlu0 %2805
        %2808 = vset.pattern.permute.xlu0 2
        %2809 = vperm.xlu0 %2808, %v902
        %v2810 = vpop.permute.xlu0 %2809
        %2812 = vset.pattern.permute.xlu0 2
        %2813 = vperm.xlu0 %2812, %v903
        %v2814 = vpop.permute.xlu0 %2813
        %2816 = vset.pattern.permute.xlu0 2
        %2817 = vperm.xlu0 %2816, %v904
        %v2818 = vpop.permute.xlu0 %2817
        %2820 = vset.pattern.permute.xlu0 2
        %2821 = vperm.xlu0 %2820, %v905
        %v2822 = vpop.permute.xlu0 %2821
        %2824 = vset.pattern.permute.xlu0 2
        %2825 = vperm.xlu0 %2824, %v906
        %v2826 = vpop.permute.xlu0 %2825
        %2828 = vset.pattern.permute.xlu0 2
        %2829 = vperm.xlu0 %2828, %v907
        %v2830 = vpop.permute.xlu0 %2829
        %2832 = vset.pattern.permute.xlu0 2
        %2833 = vperm.xlu0 %2832, %v908
        %v2834 = vpop.permute.xlu0 %2833
        %2836 = vset.pattern.permute.xlu0 2
        %2837 = vperm.xlu0 %2836, %v909
        %v2838 = vpop.permute.xlu0 %2837
        %2840 = vset.pattern.permute.xlu0 2
        %2841 = vperm.xlu0 %2840, %v910
        %v2842 = vpop.permute.xlu0 %2841
        %2844 = vset.pattern.permute.xlu0 2
        %2845 = vperm.xlu0 %2844, %v911
        %v2846 = vpop.permute.xlu0 %2845
        %2848 = vset.pattern.permute.xlu0 2
        %2849 = vperm.xlu0 %2848, %v912
        %v2850 = vpop.permute.xlu0 %2849
        %2852 = vset.pattern.permute.xlu0 2
        %2853 = vperm.xlu0 %2852, %v913
        %v2854 = vpop.permute.xlu0 %2853
        %2856 = vset.pattern.permute.xlu0 2
        %2857 = vperm.xlu0 %2856, %v914
        %v2858 = vpop.permute.xlu0 %2857
        %2860 = vset.pattern.permute.xlu0 2
        %2861 = vperm.xlu0 %2860, %v915
        %v2862 = vpop.permute.xlu0 %2861
        %2864 = vset.pattern.permute.xlu0 2
        %2865 = vperm.xlu0 %2864, %v916
        %v2866 = vpop.permute.xlu0 %2865
        %2868 = vset.pattern.permute.xlu0 2
        %2869 = vperm.xlu0 %2868, %v917
        %v2870 = vpop.permute.xlu0 %2869
        %2872 = vset.pattern.permute.xlu0 2
        %2873 = vperm.xlu0 %2872, %v918
        %v2874 = vpop.permute.xlu0 %2873
        %2876 = vset.pattern.permute.xlu0 2
        %2877 = vperm.xlu0 %2876, %v919
        %v2878 = vpop.permute.xlu0 %2877
        %2880 = vset.pattern.permute.xlu0 2
        %2881 = vperm.xlu0 %2880, %v920
        %v2882 = vpop.permute.xlu0 %2881
        %2884 = vset.pattern.permute.xlu0 2
        %2885 = vperm.xlu0 %2884, %v921
        %v2886 = vpop.permute.xlu0 %2885
        %2888 = vset.pattern.permute.xlu0 2
        %2889 = vperm.xlu0 %2888, %v922
        %v2890 = vpop.permute.xlu0 %2889
        %2892 = vset.pattern.permute.xlu0 2
        %2893 = vperm.xlu0 %2892, %v923
        %v2894 = vpop.permute.xlu0 %2893
        %2896 = vset.pattern.permute.xlu0 2
        %2897 = vperm.xlu0 %2896, %v924
        %v2898 = vpop.permute.xlu0 %2897
        %2900 = vset.pattern.permute.xlu0 2
        %2901 = vperm.xlu0 %2900, %v925
        %v2902 = vpop.permute.xlu0 %2901
        %2904 = vset.pattern.permute.xlu0 2
        %2905 = vperm.xlu0 %2904, %v926
        %v2906 = vpop.permute.xlu0 %2905
        %2908 = vset.pattern.permute.xlu0 2
        %2909 = vperm.xlu0 %2908, %v927
        %v2910 = vpop.permute.xlu0 %2909
        %2912 = vset.pattern.permute.xlu0 2
        %2913 = vperm.xlu0 %2912, %v928
        %v2914 = vpop.permute.xlu0 %2913
        %2916 = vset.pattern.permute.xlu0 2
        %2917 = vperm.xlu0 %2916, %v929
        %v2918 = vpop.permute.xlu0 %2917
        %2920 = vset.pattern.permute.xlu0 2
        %2921 = vperm.xlu0 %2920, %v930
        %v2922 = vpop.permute.xlu0 %2921
        %2924 = vset.pattern.permute.xlu0 2
        %2925 = vperm.xlu0 %2924, %v931
        %v2926 = vpop.permute.xlu0 %2925
        %2928 = vset.pattern.permute.xlu0 2
        %2929 = vperm.xlu0 %2928, %v932
        %v2930 = vpop.permute.xlu0 %2929
        %2932 = vset.pattern.permute.xlu0 2
        %2933 = vperm.xlu0 %2932, %v933
        %v2934 = vpop.permute.xlu0 %2933
        %2936 = vset.pattern.permute.xlu0 2
        %2937 = vperm.xlu0 %2936, %v934
        %v2938 = vpop.permute.xlu0 %2937
        %2940 = vset.pattern.permute.xlu0 2
        %2941 = vperm.xlu0 %2940, %v935
        %v2942 = vpop.permute.xlu0 %2941
        %2944 = vset.pattern.permute.xlu0 2
        %2945 = vperm.xlu0 %2944, %v936
        %v2946 = vpop.permute.xlu0 %2945
        %2948 = vset.pattern.permute.xlu0 2
        %2949 = vperm.xlu0 %2948, %v937
        %v2950 = vpop.permute.xlu0 %2949
        %2952 = vset.pattern.permute.xlu0 2
        %2953 = vperm.xlu0 %2952, %v938
        %v2954 = vpop.permute.xlu0 %2953
        %2956 = vset.pattern.permute.xlu0 2
        %2957 = vperm.xlu0 %2956, %v939
        %v2958 = vpop.permute.xlu0 %2957
        %2960 = vset.pattern.permute.xlu0 2
        %2961 = vperm.xlu0 %2960, %v940
        %v2962 = vpop.permute.xlu0 %2961
        %v2964 = vmul.f32 %v2707, %v2710
        %v2965 = vmul.f32 %v2706, %v2714
        %v2966 = vmul.f32 %v2705, %v2718
        %v2967 = vmul.f32 %v2704, %v2722
        %v2968 = vmul.f32 %v2703, %v2726
        %v2969 = vmul.f32 %v2702, %v2730
        %v2970 = vmul.f32 %v2701, %v2734
        %v2971 = vmul.f32 %v2700, %v2738
        %v2972 = vmul.f32 %v2699, %v2742
        %v2973 = vmul.f32 %v2698, %v2746
        %v2974 = vmul.f32 %v2697, %v2750
        %v2975 = vmul.f32 %v2696, %v2754
        %v2976 = vmul.f32 %v2695, %v2758
        %v2977 = vmul.f32 %v2694, %v2762
        %v2978 = vmul.f32 %v2693, %v2766
        %v2979 = vmul.f32 %v2692, %v2770
        %v2980 = vmul.f32 %v2691, %v2774
        %v2981 = vmul.f32 %v2690, %v2778
        %v2982 = vmul.f32 %v2689, %v2782
        %v2983 = vmul.f32 %v2688, %v2786
        %v2984 = vmul.f32 %v2687, %v2790
        %v2985 = vmul.f32 %v2686, %v2794
        %v2986 = vmul.f32 %v2685, %v2798
        %v2987 = vmul.f32 %v2684, %v2802
        %v2988 = vmul.f32 %v2683, %v2806
        %v2989 = vmul.f32 %v2682, %v2810
        %v2990 = vmul.f32 %v2681, %v2814
        %v2991 = vmul.f32 %v2680, %v2818
        %v2992 = vmul.f32 %v2679, %v2822
        %v2993 = vmul.f32 %v2678, %v2826
        %v2994 = vmul.f32 %v2677, %v2830
        %v2995 = vmul.f32 %v2676, %v2834
        %v2996 = vmul.f32 %v2675, %v2838
        %v2997 = vmul.f32 %v2674, %v2842
        %v2998 = vmul.f32 %v2673, %v2846
        %v2999 = vmul.f32 %v2672, %v2850
        %v3000 = vmul.f32 %v2671, %v2854
        %v3001 = vmul.f32 %v2670, %v2858
        %v3002 = vmul.f32 %v2669, %v2862
        %v3003 = vmul.f32 %v2668, %v2866
        %v3004 = vmul.f32 %v2667, %v2870
        %v3005 = vmul.f32 %v2666, %v2874
        %v3006 = vmul.f32 %v2665, %v2878
        %v3007 = vmul.f32 %v2664, %v2882
        %v3008 = vmul.f32 %v2663, %v2886
        %v3009 = vmul.f32 %v2662, %v2890
        %v3010 = vmul.f32 %v2661, %v2894
        %v3011 = vmul.f32 %v2660, %v2898
        %v3012 = vmul.f32 %v2659, %v2902
        %v3013 = vmul.f32 %v2658, %v2906
        %v3014 = vmul.f32 %v2657, %v2910
        %v3015 = vmul.f32 %v2656, %v2914
        %v3016 = vmul.f32 %v2655, %v2918
        %v3017 = vmul.f32 %v2654, %v2922
        %v3018 = vmul.f32 %v2653, %v2926
        %v3019 = vmul.f32 %v2652, %v2930
        %v3020 = vmul.f32 %v2651, %v2934
        %v3021 = vmul.f32 %v2650, %v2938
        %v3022 = vmul.f32 %v2649, %v2942
        %v3023 = vmul.f32 %v2648, %v2946
        %v3024 = vmul.f32 %v2647, %v2950
        %v3025 = vmul.f32 %v2646, %v2954
        %v3026 = vmul.f32 %v2645, %v2958
        %v3027 = vmul.f32 %v2644, %v2962
        %s3028 = scalar_lea.vmem [#allocation5], 256
        %v3029 = vld [vmem:[%s3028] sm:$0xff]
        %v3030 = vld [vmem:[%s3028 + $0x8] sm:$0xff]
        %v3031 = vld [vmem:[%s3028 + $0x10] sm:$0xff]
        %v3032 = vld [vmem:[%s3028 + $0x18] sm:$0xff]
        %v3033 = vld [vmem:[%s3028 + $0x20] sm:$0xff]
        %v3034 = vld [vmem:[%s3028 + $0x28] sm:$0xff]
        %v3035 = vld [vmem:[%s3028 + $0x30] sm:$0xff]
        %v3036 = vld [vmem:[%s3028 + $0x38] sm:$0xff]
        %v3037 = vld [vmem:[%s3028 + $0x40] sm:$0xff]
        %v3038 = vld [vmem:[%s3028 + $0x48] sm:$0xff]
        %v3039 = vld [vmem:[%s3028 + $0x50] sm:$0xff]
        %v3040 = vld [vmem:[%s3028 + $0x58] sm:$0xff]
        %v3041 = vld [vmem:[%s3028 + $0x60] sm:$0xff]
        %v3042 = vld [vmem:[%s3028 + $0x68] sm:$0xff]
        %v3043 = vld [vmem:[%s3028 + $0x70] sm:$0xff]
        %v3044 = vld [vmem:[%s3028 + $0x78] sm:$0xff]
        %3045 = vmatprep.subr.mxu0 0.0
        %3046 = vmatpush1.msra.mxu0 %v3044
        %3047 = vmatprep.subr.mxu0 0.0
        %3048 = vmatpush1.msra.mxu0 %v3043
        %3049 = vmatprep.subr.mxu0 0.0
        %3050 = vmatpush1.msra.mxu0 %v3042
        %3051 = vmatprep.subr.mxu0 0.0
        %3052 = vmatpush1.msra.mxu0 %v3041
        %3053 = vmatprep.subr.mxu0 0.0
        %3054 = vmatpush1.msra.mxu0 %v3040
        %3055 = vmatprep.subr.mxu0 0.0
        %3056 = vmatpush1.msra.mxu0 %v3039
        %3057 = vmatprep.subr.mxu0 0.0
        %3058 = vmatpush1.msra.mxu0 %v3038
        %3059 = vmatprep.subr.mxu0 0.0
        %3060 = vmatpush1.msra.mxu0 %v3037
        %3061 = vmatprep.subr.mxu0 0.0
        %3062 = vmatpush1.msra.mxu0 %v3036
        %3063 = vmatprep.subr.mxu0 0.0
        %3064 = vmatpush1.msra.mxu0 %v3035
        %3065 = vmatprep.subr.mxu0 0.0
        %3066 = vmatpush1.msra.mxu0 %v3034
        %3067 = vmatprep.subr.mxu0 0.0
        %3068 = vmatpush1.msra.mxu0 %v3033
        %3069 = vmatprep.subr.mxu0 0.0
        %3070 = vmatpush1.msra.mxu0 %v3032
        %3071 = vmatprep.subr.mxu0 0.0
        %3072 = vmatpush1.msra.mxu0 %v3031
        %3073 = vmatprep.subr.mxu0 0.0
        %3074 = vmatpush1.msra.mxu0 %v3030
        %3075 = vmatprep.subr.mxu0 0.0
        %3076 = vmatpush1.msra.mxu0 %v3029
        %3077 = vmatprep.subr.mxu0 0.0
        %3078 = vmatpush2.msra.mxu0 0.0
        %3079 = vmatprep.subr.mxu0 0.0
        %3080 = vmatpush2.msra.mxu0 0.0
        %3081 = vmatprep.subr.mxu0 0.0
        %3082 = vmatpush2.msra.mxu0 0.0
        %3083 = vmatprep.subr.mxu0 0.0
        %3084 = vmatpush2.msra.mxu0 0.0
        %3085 = vmatprep.subr.mxu0 0.0
        %3086 = vmatpush2.msra.mxu0 0.0
        %3087 = vmatprep.subr.mxu0 0.0
        %3088 = vmatpush2.msra.mxu0 0.0
        %3089 = vmatprep.subr.mxu0 0.0
        %3090 = vmatpush2.msra.mxu0 0.0
        %3091 = vmatprep.subr.mxu0 0.0
        %3092 = vmatpush2.msra.mxu0 0.0
        %3093 = vmatprep.subr.mxu0 0.0
        %3094 = vmatpush2.msra.mxu0 0.0
        %3095 = vmatprep.subr.mxu0 0.0
        %3096 = vmatpush2.msra.mxu0 0.0
        %3097 = vmatprep.subr.mxu0 0.0
        %3098 = vmatpush2.msra.mxu0 0.0
        %3099 = vmatprep.subr.mxu0 0.0
        %3100 = vmatpush2.msra.mxu0 0.0
        %3101 = vmatprep.subr.mxu0 0.0
        %3102 = vmatpush2.msra.mxu0 0.0
        %3103 = vmatprep.subr.mxu0 0.0
        %3104 = vmatpush2.msra.mxu0 0.0
        %3105 = vmatprep.subr.mxu0 0.0
        %3106 = vmatpush2.msra.mxu0 0.0
        %3107 = vmatprep.subr.mxu0 0.0
        %3108 = vmatpush2.msra.mxu0 0.0
        %3109 = vmatprep.mubr.f32.mxu0 0.0
        %3110 = vmatmul.mubr.f32.gmra.mxu0 %v2964
        %v3111 = vpop.f32.mrf.mxu0
        %v3112 = vadd.f32 0.0, %v3111
        %v3113 = vpop.f32.mrf.mxu0
        %3114 = vmatprep.mubr.f32.mxu0 0.0
        %3115 = vmatmul.mubr.f32.gmra.mxu0 %v2965
        %v3116 = vpop.f32.mrf.mxu0
        %v3117 = vadd.f32 0.0, %v3116
        %v3118 = vpop.f32.mrf.mxu0
        %3119 = vmatprep.mubr.f32.mxu0 0.0
        %3120 = vmatmul.mubr.f32.gmra.mxu0 %v2966
        %v3121 = vpop.f32.mrf.mxu0
        %v3122 = vadd.f32 0.0, %v3121
        %v3123 = vpop.f32.mrf.mxu0
        %3124 = vmatprep.mubr.f32.mxu0 0.0
        %3125 = vmatmul.mubr.f32.gmra.mxu0 %v2967
        %v3126 = vpop.f32.mrf.mxu0
        %v3127 = vadd.f32 0.0, %v3126
        %v3128 = vpop.f32.mrf.mxu0
        %3129 = vmatprep.mubr.f32.mxu0 0.0
        %3130 = vmatmul.mubr.f32.gmra.mxu0 %v2968
        %v3131 = vpop.f32.mrf.mxu0
        %v3132 = vadd.f32 0.0, %v3131
        %v3133 = vpop.f32.mrf.mxu0
        %3134 = vmatprep.mubr.f32.mxu0 0.0
        %3135 = vmatmul.mubr.f32.gmra.mxu0 %v2969
        %v3136 = vpop.f32.mrf.mxu0
        %v3137 = vadd.f32 0.0, %v3136
        %v3138 = vpop.f32.mrf.mxu0
        %3139 = vmatprep.mubr.f32.mxu0 0.0
        %3140 = vmatmul.mubr.f32.gmra.mxu0 %v2970
        %v3141 = vpop.f32.mrf.mxu0
        %v3142 = vadd.f32 0.0, %v3141
        %v3143 = vpop.f32.mrf.mxu0
        %3144 = vmatprep.mubr.f32.mxu0 0.0
        %3145 = vmatmul.mubr.f32.gmra.mxu0 %v2971
        %v3146 = vpop.f32.mrf.mxu0
        %v3147 = vadd.f32 0.0, %v3146
        %v3148 = vpop.f32.mrf.mxu0
        %3149 = vmatprep.mubr.f32.mxu0 0.0
        %3150 = vmatmul.mubr.f32.gmra.mxu0 %v2972
        %v3151 = vpop.f32.mrf.mxu0
        %v3152 = vadd.f32 0.0, %v3151
        %v3153 = vpop.f32.mrf.mxu0
        %3154 = vmatprep.mubr.f32.mxu0 0.0
        %3155 = vmatmul.mubr.f32.gmra.mxu0 %v2973
        %v3156 = vpop.f32.mrf.mxu0
        %v3157 = vadd.f32 0.0, %v3156
        %v3158 = vpop.f32.mrf.mxu0
        %3159 = vmatprep.mubr.f32.mxu0 0.0
        %3160 = vmatmul.mubr.f32.gmra.mxu0 %v2974
        %v3161 = vpop.f32.mrf.mxu0
        %v3162 = vadd.f32 0.0, %v3161
        %v3163 = vpop.f32.mrf.mxu0
        %3164 = vmatprep.mubr.f32.mxu0 0.0
        %3165 = vmatmul.mubr.f32.gmra.mxu0 %v2975
        %v3166 = vpop.f32.mrf.mxu0
        %v3167 = vadd.f32 0.0, %v3166
        %v3168 = vpop.f32.mrf.mxu0
        %3169 = vmatprep.mubr.f32.mxu0 0.0
        %3170 = vmatmul.mubr.f32.gmra.mxu0 %v2976
        %v3171 = vpop.f32.mrf.mxu0
        %v3172 = vadd.f32 0.0, %v3171
        %v3173 = vpop.f32.mrf.mxu0
        %3174 = vmatprep.mubr.f32.mxu0 0.0
        %3175 = vmatmul.mubr.f32.gmra.mxu0 %v2977
        %v3176 = vpop.f32.mrf.mxu0
        %v3177 = vadd.f32 0.0, %v3176
        %v3178 = vpop.f32.mrf.mxu0
        %3179 = vmatprep.mubr.f32.mxu0 0.0
        %3180 = vmatmul.mubr.f32.gmra.mxu0 %v2978
        %v3181 = vpop.f32.mrf.mxu0
        %v3182 = vadd.f32 0.0, %v3181
        %v3183 = vpop.f32.mrf.mxu0
        %3184 = vmatprep.mubr.f32.mxu0 0.0
        %3185 = vmatmul.mubr.f32.gmra.mxu0 %v2979
        %v3186 = vpop.f32.mrf.mxu0
        %v3187 = vadd.f32 0.0, %v3186
        %v3188 = vpop.f32.mrf.mxu0
        %3189 = vmatprep.mubr.f32.mxu0 0.0
        %3190 = vmatmul.mubr.f32.gmra.mxu0 %v2980
        %v3191 = vpop.f32.mrf.mxu0
        %v3192 = vadd.f32 0.0, %v3191
        %v3193 = vpop.f32.mrf.mxu0
        %3194 = vmatprep.mubr.f32.mxu0 0.0
        %3195 = vmatmul.mubr.f32.gmra.mxu0 %v2981
        %v3196 = vpop.f32.mrf.mxu0
        %v3197 = vadd.f32 0.0, %v3196
        %v3198 = vpop.f32.mrf.mxu0
        %3199 = vmatprep.mubr.f32.mxu0 0.0
        %3200 = vmatmul.mubr.f32.gmra.mxu0 %v2982
        %v3201 = vpop.f32.mrf.mxu0
        %v3202 = vadd.f32 0.0, %v3201
        %v3203 = vpop.f32.mrf.mxu0
        %3204 = vmatprep.mubr.f32.mxu0 0.0
        %3205 = vmatmul.mubr.f32.gmra.mxu0 %v2983
        %v3206 = vpop.f32.mrf.mxu0
        %v3207 = vadd.f32 0.0, %v3206
        %v3208 = vpop.f32.mrf.mxu0
        %3209 = vmatprep.mubr.f32.mxu0 0.0
        %3210 = vmatmul.mubr.f32.gmra.mxu0 %v2984
        %v3211 = vpop.f32.mrf.mxu0
        %v3212 = vadd.f32 0.0, %v3211
        %v3213 = vpop.f32.mrf.mxu0
        %3214 = vmatprep.mubr.f32.mxu0 0.0
        %3215 = vmatmul.mubr.f32.gmra.mxu0 %v2985
        %v3216 = vpop.f32.mrf.mxu0
        %v3217 = vadd.f32 0.0, %v3216
        %v3218 = vpop.f32.mrf.mxu0
        %3219 = vmatprep.mubr.f32.mxu0 0.0
        %3220 = vmatmul.mubr.f32.gmra.mxu0 %v2986
        %v3221 = vpop.f32.mrf.mxu0
        %v3222 = vadd.f32 0.0, %v3221
        %v3223 = vpop.f32.mrf.mxu0
        %3224 = vmatprep.mubr.f32.mxu0 0.0
        %3225 = vmatmul.mubr.f32.gmra.mxu0 %v2987
        %v3226 = vpop.f32.mrf.mxu0
        %v3227 = vadd.f32 0.0, %v3226
        %v3228 = vpop.f32.mrf.mxu0
        %3229 = vmatprep.mubr.f32.mxu0 0.0
        %3230 = vmatmul.mubr.f32.gmra.mxu0 %v2988
        %v3231 = vpop.f32.mrf.mxu0
        %v3232 = vadd.f32 0.0, %v3231
        %v3233 = vpop.f32.mrf.mxu0
        %3234 = vmatprep.mubr.f32.mxu0 0.0
        %3235 = vmatmul.mubr.f32.gmra.mxu0 %v2989
        %v3236 = vpop.f32.mrf.mxu0
        %v3237 = vadd.f32 0.0, %v3236
        %v3238 = vpop.f32.mrf.mxu0
        %3239 = vmatprep.mubr.f32.mxu0 0.0
        %3240 = vmatmul.mubr.f32.gmra.mxu0 %v2990
        %v3241 = vpop.f32.mrf.mxu0
        %v3242 = vadd.f32 0.0, %v3241
        %v3243 = vpop.f32.mrf.mxu0
        %3244 = vmatprep.mubr.f32.mxu0 0.0
        %3245 = vmatmul.mubr.f32.gmra.mxu0 %v2991
        %v3246 = vpop.f32.mrf.mxu0
        %v3247 = vadd.f32 0.0, %v3246
        %v3248 = vpop.f32.mrf.mxu0
        %3249 = vmatprep.mubr.f32.mxu0 0.0
        %3250 = vmatmul.mubr.f32.gmra.mxu0 %v2992
        %v3251 = vpop.f32.mrf.mxu0
        %v3252 = vadd.f32 0.0, %v3251
        %v3253 = vpop.f32.mrf.mxu0
        %3254 = vmatprep.mubr.f32.mxu0 0.0
        %3255 = vmatmul.mubr.f32.gmra.mxu0 %v2993
        %v3256 = vpop.f32.mrf.mxu0
        %v3257 = vadd.f32 0.0, %v3256
        %v3258 = vpop.f32.mrf.mxu0
        %3259 = vmatprep.mubr.f32.mxu0 0.0
        %3260 = vmatmul.mubr.f32.gmra.mxu0 %v2994
        %v3261 = vpop.f32.mrf.mxu0
        %v3262 = vadd.f32 0.0, %v3261
        %v3263 = vpop.f32.mrf.mxu0
        %3264 = vmatprep.mubr.f32.mxu0 0.0
        %3265 = vmatmul.mubr.f32.gmra.mxu0 %v2995
        %v3266 = vpop.f32.mrf.mxu0
        %v3267 = vadd.f32 0.0, %v3266
        %v3268 = vpop.f32.mrf.mxu0
        %3269 = vmatprep.mubr.f32.mxu0 0.0
        %3270 = vmatmul.mubr.f32.gmra.mxu0 %v2996
        %v3271 = vpop.f32.mrf.mxu0
        %v3272 = vadd.f32 0.0, %v3271
        %v3273 = vpop.f32.mrf.mxu0
        %3274 = vmatprep.mubr.f32.mxu0 0.0
        %3275 = vmatmul.mubr.f32.gmra.mxu0 %v2997
        %v3276 = vpop.f32.mrf.mxu0
        %v3277 = vadd.f32 0.0, %v3276
        %v3278 = vpop.f32.mrf.mxu0
        %3279 = vmatprep.mubr.f32.mxu0 0.0
        %3280 = vmatmul.mubr.f32.gmra.mxu0 %v2998
        %v3281 = vpop.f32.mrf.mxu0
        %v3282 = vadd.f32 0.0, %v3281
        %v3283 = vpop.f32.mrf.mxu0
        %3284 = vmatprep.mubr.f32.mxu0 0.0
        %3285 = vmatmul.mubr.f32.gmra.mxu0 %v2999
        %v3286 = vpop.f32.mrf.mxu0
        %v3287 = vadd.f32 0.0, %v3286
        %v3288 = vpop.f32.mrf.mxu0
        %3289 = vmatprep.mubr.f32.mxu0 0.0
        %3290 = vmatmul.mubr.f32.gmra.mxu0 %v3000
        %v3291 = vpop.f32.mrf.mxu0
        %v3292 = vadd.f32 0.0, %v3291
        %v3293 = vpop.f32.mrf.mxu0
        %3294 = vmatprep.mubr.f32.mxu0 0.0
        %3295 = vmatmul.mubr.f32.gmra.mxu0 %v3001
        %v3296 = vpop.f32.mrf.mxu0
        %v3297 = vadd.f32 0.0, %v3296
        %v3298 = vpop.f32.mrf.mxu0
        %3299 = vmatprep.mubr.f32.mxu0 0.0
        %3300 = vmatmul.mubr.f32.gmra.mxu0 %v3002
        %v3301 = vpop.f32.mrf.mxu0
        %v3302 = vadd.f32 0.0, %v3301
        %v3303 = vpop.f32.mrf.mxu0
        %3304 = vmatprep.mubr.f32.mxu0 0.0
        %3305 = vmatmul.mubr.f32.gmra.mxu0 %v3003
        %v3306 = vpop.f32.mrf.mxu0
        %v3307 = vadd.f32 0.0, %v3306
        %v3308 = vpop.f32.mrf.mxu0
        %3309 = vmatprep.mubr.f32.mxu0 0.0
        %3310 = vmatmul.mubr.f32.gmra.mxu0 %v3004
        %v3311 = vpop.f32.mrf.mxu0
        %v3312 = vadd.f32 0.0, %v3311
        %v3313 = vpop.f32.mrf.mxu0
        %3314 = vmatprep.mubr.f32.mxu0 0.0
        %3315 = vmatmul.mubr.f32.gmra.mxu0 %v3005
        %v3316 = vpop.f32.mrf.mxu0
        %v3317 = vadd.f32 0.0, %v3316
        %v3318 = vpop.f32.mrf.mxu0
        %3319 = vmatprep.mubr.f32.mxu0 0.0
        %3320 = vmatmul.mubr.f32.gmra.mxu0 %v3006
        %v3321 = vpop.f32.mrf.mxu0
        %v3322 = vadd.f32 0.0, %v3321
        %v3323 = vpop.f32.mrf.mxu0
        %3324 = vmatprep.mubr.f32.mxu0 0.0
        %3325 = vmatmul.mubr.f32.gmra.mxu0 %v3007
        %v3326 = vpop.f32.mrf.mxu0
        %v3327 = vadd.f32 0.0, %v3326
        %v3328 = vpop.f32.mrf.mxu0
        %3329 = vmatprep.mubr.f32.mxu0 0.0
        %3330 = vmatmul.mubr.f32.gmra.mxu0 %v3008
        %v3331 = vpop.f32.mrf.mxu0
        %v3332 = vadd.f32 0.0, %v3331
        %v3333 = vpop.f32.mrf.mxu0
        %3334 = vmatprep.mubr.f32.mxu0 0.0
        %3335 = vmatmul.mubr.f32.gmra.mxu0 %v3009
        %v3336 = vpop.f32.mrf.mxu0
        %v3337 = vadd.f32 0.0, %v3336
        %v3338 = vpop.f32.mrf.mxu0
        %3339 = vmatprep.mubr.f32.mxu0 0.0
        %3340 = vmatmul.mubr.f32.gmra.mxu0 %v3010
        %v3341 = vpop.f32.mrf.mxu0
        %v3342 = vadd.f32 0.0, %v3341
        %v3343 = vpop.f32.mrf.mxu0
        %3344 = vmatprep.mubr.f32.mxu0 0.0
        %3345 = vmatmul.mubr.f32.gmra.mxu0 %v3011
        %v3346 = vpop.f32.mrf.mxu0
        %v3347 = vadd.f32 0.0, %v3346
        %v3348 = vpop.f32.mrf.mxu0
        %3349 = vmatprep.mubr.f32.mxu0 0.0
        %3350 = vmatmul.mubr.f32.gmra.mxu0 %v3012
        %v3351 = vpop.f32.mrf.mxu0
        %v3352 = vadd.f32 0.0, %v3351
        %v3353 = vpop.f32.mrf.mxu0
        %3354 = vmatprep.mubr.f32.mxu0 0.0
        %3355 = vmatmul.mubr.f32.gmra.mxu0 %v3013
        %v3356 = vpop.f32.mrf.mxu0
        %v3357 = vadd.f32 0.0, %v3356
        %v3358 = vpop.f32.mrf.mxu0
        %3359 = vmatprep.mubr.f32.mxu0 0.0
        %3360 = vmatmul.mubr.f32.gmra.mxu0 %v3014
        %v3361 = vpop.f32.mrf.mxu0
        %v3362 = vadd.f32 0.0, %v3361
        %v3363 = vpop.f32.mrf.mxu0
        %3364 = vmatprep.mubr.f32.mxu0 0.0
        %3365 = vmatmul.mubr.f32.gmra.mxu0 %v3015
        %v3366 = vpop.f32.mrf.mxu0
        %v3367 = vadd.f32 0.0, %v3366
        %v3368 = vpop.f32.mrf.mxu0
        %3369 = vmatprep.mubr.f32.mxu0 0.0
        %3370 = vmatmul.mubr.f32.gmra.mxu0 %v3016
        %v3371 = vpop.f32.mrf.mxu0
        %v3372 = vadd.f32 0.0, %v3371
        %v3373 = vpop.f32.mrf.mxu0
        %3374 = vmatprep.mubr.f32.mxu0 0.0
        %3375 = vmatmul.mubr.f32.gmra.mxu0 %v3017
        %v3376 = vpop.f32.mrf.mxu0
        %v3377 = vadd.f32 0.0, %v3376
        %v3378 = vpop.f32.mrf.mxu0
        %3379 = vmatprep.mubr.f32.mxu0 0.0
        %3380 = vmatmul.mubr.f32.gmra.mxu0 %v3018
        %v3381 = vpop.f32.mrf.mxu0
        %v3382 = vadd.f32 0.0, %v3381
        %v3383 = vpop.f32.mrf.mxu0
        %3384 = vmatprep.mubr.f32.mxu0 0.0
        %3385 = vmatmul.mubr.f32.gmra.mxu0 %v3019
        %v3386 = vpop.f32.mrf.mxu0
        %v3387 = vadd.f32 0.0, %v3386
        %v3388 = vpop.f32.mrf.mxu0
        %3389 = vmatprep.mubr.f32.mxu0 0.0
        %3390 = vmatmul.mubr.f32.gmra.mxu0 %v3020
        %v3391 = vpop.f32.mrf.mxu0
        %v3392 = vadd.f32 0.0, %v3391
        %v3393 = vpop.f32.mrf.mxu0
        %3394 = vmatprep.mubr.f32.mxu0 0.0
        %3395 = vmatmul.mubr.f32.gmra.mxu0 %v3021
        %v3396 = vpop.f32.mrf.mxu0
        %v3397 = vadd.f32 0.0, %v3396
        %v3398 = vpop.f32.mrf.mxu0
        %3399 = vmatprep.mubr.f32.mxu0 0.0
        %3400 = vmatmul.mubr.f32.gmra.mxu0 %v3022
        %v3401 = vpop.f32.mrf.mxu0
        %v3402 = vadd.f32 0.0, %v3401
        %v3403 = vpop.f32.mrf.mxu0
        %3404 = vmatprep.mubr.f32.mxu0 0.0
        %3405 = vmatmul.mubr.f32.gmra.mxu0 %v3023
        %v3406 = vpop.f32.mrf.mxu0
        %v3407 = vadd.f32 0.0, %v3406
        %v3408 = vpop.f32.mrf.mxu0
        %3409 = vmatprep.mubr.f32.mxu0 0.0
        %3410 = vmatmul.mubr.f32.gmra.mxu0 %v3024
        %v3411 = vpop.f32.mrf.mxu0
        %v3412 = vadd.f32 0.0, %v3411
        %v3413 = vpop.f32.mrf.mxu0
        %3414 = vmatprep.mubr.f32.mxu0 0.0
        %3415 = vmatmul.mubr.f32.gmra.mxu0 %v3025
        %v3416 = vpop.f32.mrf.mxu0
        %v3417 = vadd.f32 0.0, %v3416
        %v3418 = vpop.f32.mrf.mxu0
        %3419 = vmatprep.mubr.f32.mxu0 0.0
        %3420 = vmatmul.mubr.f32.gmra.mxu0 %v3026
        %v3421 = vpop.f32.mrf.mxu0
        %v3422 = vadd.f32 0.0, %v3421
        %v3423 = vpop.f32.mrf.mxu0
        %3424 = vmatprep.mubr.f32.mxu0 0.0
        %3425 = vmatmul.mubr.f32.gmra.mxu0 %v3027
        %v3426 = vpop.f32.mrf.mxu0
        %v3427 = vadd.f32 0.0, %v3426
        %v3428 = vpop.f32.mrf.mxu0
        %3429 = vdwg.mxu0
        %v3430 = vadd.f32 %v2261, %v3112
        %v3431 = vadd.f32 %v2266, %v3117
        %v3432 = vadd.f32 %v2271, %v3122
        %v3433 = vadd.f32 %v2276, %v3127
        %v3434 = vadd.f32 %v2281, %v3132
        %v3435 = vadd.f32 %v2286, %v3137
        %v3436 = vadd.f32 %v2291, %v3142
        %v3437 = vadd.f32 %v2296, %v3147
        %v3438 = vadd.f32 %v2301, %v3152
        %v3439 = vadd.f32 %v2306, %v3157
        %v3440 = vadd.f32 %v2311, %v3162
        %v3441 = vadd.f32 %v2316, %v3167
        %v3442 = vadd.f32 %v2321, %v3172
        %v3443 = vadd.f32 %v2326, %v3177
        %v3444 = vadd.f32 %v2331, %v3182
        %v3445 = vadd.f32 %v2336, %v3187
        %v3446 = vadd.f32 %v2341, %v3192
        %v3447 = vadd.f32 %v2346, %v3197
        %v3448 = vadd.f32 %v2351, %v3202
        %v3449 = vadd.f32 %v2356, %v3207
        %v3450 = vadd.f32 %v2361, %v3212
        %v3451 = vadd.f32 %v2366, %v3217
        %v3452 = vadd.f32 %v2371, %v3222
        %v3453 = vadd.f32 %v2376, %v3227
        %v3454 = vadd.f32 %v2381, %v3232
        %v3455 = vadd.f32 %v2386, %v3237
        %v3456 = vadd.f32 %v2391, %v3242
        %v3457 = vadd.f32 %v2396, %v3247
        %v3458 = vadd.f32 %v2401, %v3252
        %v3459 = vadd.f32 %v2406, %v3257
        %v3460 = vadd.f32 %v2411, %v3262
        %v3461 = vadd.f32 %v2416, %v3267
        %v3462 = vadd.f32 %v2421, %v3272
        %v3463 = vadd.f32 %v2426, %v3277
        %v3464 = vadd.f32 %v2431, %v3282
        %v3465 = vadd.f32 %v2436, %v3287
        %v3466 = vadd.f32 %v2441, %v3292
        %v3467 = vadd.f32 %v2446, %v3297
        %v3468 = vadd.f32 %v2451, %v3302
        %v3469 = vadd.f32 %v2456, %v3307
        %v3470 = vadd.f32 %v2461, %v3312
        %v3471 = vadd.f32 %v2466, %v3317
        %v3472 = vadd.f32 %v2471, %v3322
        %v3473 = vadd.f32 %v2476, %v3327
        %v3474 = vadd.f32 %v2481, %v3332
        %v3475 = vadd.f32 %v2486, %v3337
        %v3476 = vadd.f32 %v2491, %v3342
        %v3477 = vadd.f32 %v2496, %v3347
        %v3478 = vadd.f32 %v2501, %v3352
        %v3479 = vadd.f32 %v2506, %v3357
        %v3480 = vadd.f32 %v2511, %v3362
        %v3481 = vadd.f32 %v2516, %v3367
        %v3482 = vadd.f32 %v2521, %v3372
        %v3483 = vadd.f32 %v2526, %v3377
        %v3484 = vadd.f32 %v2531, %v3382
        %v3485 = vadd.f32 %v2536, %v3387
        %v3486 = vadd.f32 %v2541, %v3392
        %v3487 = vadd.f32 %v2546, %v3397
        %v3488 = vadd.f32 %v2551, %v3402
        %v3489 = vadd.f32 %v2556, %v3407
        %v3490 = vadd.f32 %v2561, %v3412
        %v3491 = vadd.f32 %v2566, %v3417
        %v3492 = vadd.f32 %v2571, %v3422
        %v3493 = vadd.f32 %v2576, %v3427
        %3494 = vset.pattern.permute.xlu0 3
        %3495 = vperm.xlu0 %3494, %v877
        %v3496 = vpop.permute.xlu0 %3495
        %3498 = vset.pattern.permute.xlu0 3
        %3499 = vperm.xlu0 %3498, %v878
        %v3500 = vpop.permute.xlu0 %3499
        %3502 = vset.pattern.permute.xlu0 3
        %3503 = vperm.xlu0 %3502, %v879
        %v3504 = vpop.permute.xlu0 %3503
        %3506 = vset.pattern.permute.xlu0 3
        %3507 = vperm.xlu0 %3506, %v880
        %v3508 = vpop.permute.xlu0 %3507
        %3510 = vset.pattern.permute.xlu0 3
        %3511 = vperm.xlu0 %3510, %v881
        %v3512 = vpop.permute.xlu0 %3511
        %3514 = vset.pattern.permute.xlu0 3
        %3515 = vperm.xlu0 %3514, %v882
        %v3516 = vpop.permute.xlu0 %3515
        %3518 = vset.pattern.permute.xlu0 3
        %3519 = vperm.xlu0 %3518, %v883
        %v3520 = vpop.permute.xlu0 %3519
        %3522 = vset.pattern.permute.xlu0 3
        %3523 = vperm.xlu0 %3522, %v884
        %v3524 = vpop.permute.xlu0 %3523
        %3526 = vset.pattern.permute.xlu0 3
        %3527 = vperm.xlu0 %3526, %v885
        %v3528 = vpop.permute.xlu0 %3527
        %3530 = vset.pattern.permute.xlu0 3
        %3531 = vperm.xlu0 %3530, %v886
        %v3532 = vpop.permute.xlu0 %3531
        %3534 = vset.pattern.permute.xlu0 3
        %3535 = vperm.xlu0 %3534, %v887
        %v3536 = vpop.permute.xlu0 %3535
        %3538 = vset.pattern.permute.xlu0 3
        %3539 = vperm.xlu0 %3538, %v888
        %v3540 = vpop.permute.xlu0 %3539
        %3542 = vset.pattern.permute.xlu0 3
        %3543 = vperm.xlu0 %3542, %v889
        %v3544 = vpop.permute.xlu0 %3543
        %3546 = vset.pattern.permute.xlu0 3
        %3547 = vperm.xlu0 %3546, %v890
        %v3548 = vpop.permute.xlu0 %3547
        %3550 = vset.pattern.permute.xlu0 3
        %3551 = vperm.xlu0 %3550, %v891
        %v3552 = vpop.permute.xlu0 %3551
        %3554 = vset.pattern.permute.xlu0 3
        %3555 = vperm.xlu0 %3554, %v892
        %v3556 = vpop.permute.xlu0 %3555
        %3558 = vset.pattern.permute.xlu0 3
        %3559 = vperm.xlu0 %3558, %v893
        %v3560 = vpop.permute.xlu0 %3559
        %3562 = vset.pattern.permute.xlu0 3
        %3563 = vperm.xlu0 %3562, %v894
        %v3564 = vpop.permute.xlu0 %3563
        %3566 = vset.pattern.permute.xlu0 3
        %3567 = vperm.xlu0 %3566, %v895
        %v3568 = vpop.permute.xlu0 %3567
        %3570 = vset.pattern.permute.xlu0 3
        %3571 = vperm.xlu0 %3570, %v896
        %v3572 = vpop.permute.xlu0 %3571
        %3574 = vset.pattern.permute.xlu0 3
        %3575 = vperm.xlu0 %3574, %v897
        %v3576 = vpop.permute.xlu0 %3575
        %3578 = vset.pattern.permute.xlu0 3
        %3579 = vperm.xlu0 %3578, %v898
        %v3580 = vpop.permute.xlu0 %3579
        %3582 = vset.pattern.permute.xlu0 3
        %3583 = vperm.xlu0 %3582, %v899
        %v3584 = vpop.permute.xlu0 %3583
        %3586 = vset.pattern.permute.xlu0 3
        %3587 = vperm.xlu0 %3586, %v900
        %v3588 = vpop.permute.xlu0 %3587
        %3590 = vset.pattern.permute.xlu0 3
        %3591 = vperm.xlu0 %3590, %v901
        %v3592 = vpop.permute.xlu0 %3591
        %3594 = vset.pattern.permute.xlu0 3
        %3595 = vperm.xlu0 %3594, %v902
        %v3596 = vpop.permute.xlu0 %3595
        %3598 = vset.pattern.permute.xlu0 3
        %3599 = vperm.xlu0 %3598, %v903
        %v3600 = vpop.permute.xlu0 %3599
        %3602 = vset.pattern.permute.xlu0 3
        %3603 = vperm.xlu0 %3602, %v904
        %v3604 = vpop.permute.xlu0 %3603
        %3606 = vset.pattern.permute.xlu0 3
        %3607 = vperm.xlu0 %3606, %v905
        %v3608 = vpop.permute.xlu0 %3607
        %3610 = vset.pattern.permute.xlu0 3
        %3611 = vperm.xlu0 %3610, %v906
        %v3612 = vpop.permute.xlu0 %3611
        %3614 = vset.pattern.permute.xlu0 3
        %3615 = vperm.xlu0 %3614, %v907
        %v3616 = vpop.permute.xlu0 %3615
        %3618 = vset.pattern.permute.xlu0 3
        %3619 = vperm.xlu0 %3618, %v908
        %v3620 = vpop.permute.xlu0 %3619
        %3622 = vset.pattern.permute.xlu0 3
        %3623 = vperm.xlu0 %3622, %v909
        %v3624 = vpop.permute.xlu0 %3623
        %3626 = vset.pattern.permute.xlu0 3
        %3627 = vperm.xlu0 %3626, %v910
        %v3628 = vpop.permute.xlu0 %3627
        %3630 = vset.pattern.permute.xlu0 3
        %3631 = vperm.xlu0 %3630, %v911
        %v3632 = vpop.permute.xlu0 %3631
        %3634 = vset.pattern.permute.xlu0 3
        %3635 = vperm.xlu0 %3634, %v912
        %v3636 = vpop.permute.xlu0 %3635
        %3638 = vset.pattern.permute.xlu0 3
        %3639 = vperm.xlu0 %3638, %v913
        %v3640 = vpop.permute.xlu0 %3639
        %3642 = vset.pattern.permute.xlu0 3
        %3643 = vperm.xlu0 %3642, %v914
        %v3644 = vpop.permute.xlu0 %3643
        %3646 = vset.pattern.permute.xlu0 3
        %3647 = vperm.xlu0 %3646, %v915
        %v3648 = vpop.permute.xlu0 %3647
        %3650 = vset.pattern.permute.xlu0 3
        %3651 = vperm.xlu0 %3650, %v916
        %v3652 = vpop.permute.xlu0 %3651
        %3654 = vset.pattern.permute.xlu0 3
        %3655 = vperm.xlu0 %3654, %v917
        %v3656 = vpop.permute.xlu0 %3655
        %3658 = vset.pattern.permute.xlu0 3
        %3659 = vperm.xlu0 %3658, %v918
        %v3660 = vpop.permute.xlu0 %3659
        %3662 = vset.pattern.permute.xlu0 3
        %3663 = vperm.xlu0 %3662, %v919
        %v3664 = vpop.permute.xlu0 %3663
        %3666 = vset.pattern.permute.xlu0 3
        %3667 = vperm.xlu0 %3666, %v920
        %v3668 = vpop.permute.xlu0 %3667
        %3670 = vset.pattern.permute.xlu0 3
        %3671 = vperm.xlu0 %3670, %v921
        %v3672 = vpop.permute.xlu0 %3671
        %3674 = vset.pattern.permute.xlu0 3
        %3675 = vperm.xlu0 %3674, %v922
        %v3676 = vpop.permute.xlu0 %3675
        %3678 = vset.pattern.permute.xlu0 3
        %3679 = vperm.xlu0 %3678, %v923
        %v3680 = vpop.permute.xlu0 %3679
        %3682 = vset.pattern.permute.xlu0 3
        %3683 = vperm.xlu0 %3682, %v924
        %v3684 = vpop.permute.xlu0 %3683
        %3686 = vset.pattern.permute.xlu0 3
        %3687 = vperm.xlu0 %3686, %v925
        %v3688 = vpop.permute.xlu0 %3687
        %3690 = vset.pattern.permute.xlu0 3
        %3691 = vperm.xlu0 %3690, %v926
        %v3692 = vpop.permute.xlu0 %3691
        %3694 = vset.pattern.permute.xlu0 3
        %3695 = vperm.xlu0 %3694, %v927
        %v3696 = vpop.permute.xlu0 %3695
        %3698 = vset.pattern.permute.xlu0 3
        %3699 = vperm.xlu0 %3698, %v928
        %v3700 = vpop.permute.xlu0 %3699
        %3702 = vset.pattern.permute.xlu0 3
        %3703 = vperm.xlu0 %3702, %v929
        %v3704 = vpop.permute.xlu0 %3703
        %3706 = vset.pattern.permute.xlu0 3
        %3707 = vperm.xlu0 %3706, %v930
        %v3708 = vpop.permute.xlu0 %3707
        %3710 = vset.pattern.permute.xlu0 3
        %3711 = vperm.xlu0 %3710, %v931
        %v3712 = vpop.permute.xlu0 %3711
        %3714 = vset.pattern.permute.xlu0 3
        %3715 = vperm.xlu0 %3714, %v932
        %v3716 = vpop.permute.xlu0 %3715
        %3718 = vset.pattern.permute.xlu0 3
        %3719 = vperm.xlu0 %3718, %v933
        %v3720 = vpop.permute.xlu0 %3719
        %3722 = vset.pattern.permute.xlu0 3
        %3723 = vperm.xlu0 %3722, %v934
        %v3724 = vpop.permute.xlu0 %3723
        %3726 = vset.pattern.permute.xlu0 3
        %3727 = vperm.xlu0 %3726, %v935
        %v3728 = vpop.permute.xlu0 %3727
        %3730 = vset.pattern.permute.xlu0 3
        %3731 = vperm.xlu0 %3730, %v936
        %v3732 = vpop.permute.xlu0 %3731
        %3734 = vset.pattern.permute.xlu0 3
        %3735 = vperm.xlu0 %3734, %v937
        %v3736 = vpop.permute.xlu0 %3735
        %3738 = vset.pattern.permute.xlu0 3
        %3739 = vperm.xlu0 %3738, %v938
        %v3740 = vpop.permute.xlu0 %3739
        %3742 = vset.pattern.permute.xlu0 3
        %3743 = vperm.xlu0 %3742, %v939
        %v3744 = vpop.permute.xlu0 %3743
        %3746 = vset.pattern.permute.xlu0 3
        %3747 = vperm.xlu0 %3746, %v940
        %v3748 = vpop.permute.xlu0 %3747
        %v3750 = vmul.f32 %v1071, %v3496
        %v3751 = vmul.f32 %v1070, %v3500
        %v3752 = vmul.f32 %v1069, %v3504
        %v3753 = vmul.f32 %v1068, %v3508
        %v3754 = vmul.f32 %v1067, %v3512
        %v3755 = vmul.f32 %v1066, %v3516
        %v3756 = vmul.f32 %v1065, %v3520
        %v3757 = vmul.f32 %v1064, %v3524
        %v3758 = vmul.f32 %v1063, %v3528
        %v3759 = vmul.f32 %v1062, %v3532
        %v3760 = vmul.f32 %v1061, %v3536
        %v3761 = vmul.f32 %v1060, %v3540
        %v3762 = vmul.f32 %v1059, %v3544
        %v3763 = vmul.f32 %v1058, %v3548
        %v3764 = vmul.f32 %v1057, %v3552
        %v3765 = vmul.f32 %v1056, %v3556
        %v3766 = vmul.f32 %v1055, %v3560
        %v3767 = vmul.f32 %v1054, %v3564
        %v3768 = vmul.f32 %v1053, %v3568
        %v3769 = vmul.f32 %v1052, %v3572
        %v3770 = vmul.f32 %v1051, %v3576
        %v3771 = vmul.f32 %v1050, %v3580
        %v3772 = vmul.f32 %v1049, %v3584
        %v3773 = vmul.f32 %v1048, %v3588
        %v3774 = vmul.f32 %v1047, %v3592
        %v3775 = vmul.f32 %v1046, %v3596
        %v3776 = vmul.f32 %v1045, %v3600
        %v3777 = vmul.f32 %v1044, %v3604
        %v3778 = vmul.f32 %v1043, %v3608
        %v3779 = vmul.f32 %v1042, %v3612
        %v3780 = vmul.f32 %v1041, %v3616
        %v3781 = vmul.f32 %v1040, %v3620
        %v3782 = vmul.f32 %v1039, %v3624
        %v3783 = vmul.f32 %v1038, %v3628
        %v3784 = vmul.f32 %v1037, %v3632
        %v3785 = vmul.f32 %v1036, %v3636
        %v3786 = vmul.f32 %v1035, %v3640
        %v3787 = vmul.f32 %v1034, %v3644
        %v3788 = vmul.f32 %v1033, %v3648
        %v3789 = vmul.f32 %v1032, %v3652
        %v3790 = vmul.f32 %v1031, %v3656
        %v3791 = vmul.f32 %v1030, %v3660
        %v3792 = vmul.f32 %v1029, %v3664
        %v3793 = vmul.f32 %v1028, %v3668
        %v3794 = vmul.f32 %v1027, %v3672
        %v3795 = vmul.f32 %v1026, %v3676
        %v3796 = vmul.f32 %v1025, %v3680
        %v3797 = vmul.f32 %v1024, %v3684
        %v3798 = vmul.f32 %v1023, %v3688
        %v3799 = vmul.f32 %v1022, %v3692
        %v3800 = vmul.f32 %v1021, %v3696
        %v3801 = vmul.f32 %v1020, %v3700
        %v3802 = vmul.f32 %v1019, %v3704
        %v3803 = vmul.f32 %v1018, %v3708
        %v3804 = vmul.f32 %v1017, %v3712
        %v3805 = vmul.f32 %v1016, %v3716
        %v3806 = vmul.f32 %v1015, %v3720
        %v3807 = vmul.f32 %v1014, %v3724
        %v3808 = vmul.f32 %v1013, %v3728
        %v3809 = vmul.f32 %v1012, %v3732
        %v3810 = vmul.f32 %v1011, %v3736
        %v3811 = vmul.f32 %v1010, %v3740
        %v3812 = vmul.f32 %v1009, %v3744
        %v3813 = vmul.f32 %v1008, %v3748
        %s3814 = scalar_lea.vmem [#allocation5], 384
        %v3815 = vld [vmem:[%s3814] sm:$0xff]
        %v3816 = vld [vmem:[%s3814 + $0x8] sm:$0xff]
        %v3817 = vld [vmem:[%s3814 + $0x10] sm:$0xff]
        %v3818 = vld [vmem:[%s3814 + $0x18] sm:$0xff]
        %v3819 = vld [vmem:[%s3814 + $0x20] sm:$0xff]
        %v3820 = vld [vmem:[%s3814 + $0x28] sm:$0xff]
        %v3821 = vld [vmem:[%s3814 + $0x30] sm:$0xff]
        %v3822 = vld [vmem:[%s3814 + $0x38] sm:$0xff]
        %v3823 = vld [vmem:[%s3814 + $0x40] sm:$0xff]
        %v3824 = vld [vmem:[%s3814 + $0x48] sm:$0xff]
        %v3825 = vld [vmem:[%s3814 + $0x50] sm:$0xff]
        %v3826 = vld [vmem:[%s3814 + $0x58] sm:$0xff]
        %v3827 = vld [vmem:[%s3814 + $0x60] sm:$0xff]
        %v3828 = vld [vmem:[%s3814 + $0x68] sm:$0xff]
        %v3829 = vld [vmem:[%s3814 + $0x70] sm:$0xff]
        %v3830 = vld [vmem:[%s3814 + $0x78] sm:$0xff]
        %3831 = vmatprep.subr.mxu0 0.0
        %3832 = vmatpush1.msra.mxu0 %v3830
        %3833 = vmatprep.subr.mxu0 0.0
        %3834 = vmatpush1.msra.mxu0 %v3829
        %3835 = vmatprep.subr.mxu0 0.0
        %3836 = vmatpush1.msra.mxu0 %v3828
        %3837 = vmatprep.subr.mxu0 0.0
        %3838 = vmatpush1.msra.mxu0 %v3827
        %3839 = vmatprep.subr.mxu0 0.0
        %3840 = vmatpush1.msra.mxu0 %v3826
        %3841 = vmatprep.subr.mxu0 0.0
        %3842 = vmatpush1.msra.mxu0 %v3825
        %3843 = vmatprep.subr.mxu0 0.0
        %3844 = vmatpush1.msra.mxu0 %v3824
        %3845 = vmatprep.subr.mxu0 0.0
        %3846 = vmatpush1.msra.mxu0 %v3823
        %3847 = vmatprep.subr.mxu0 0.0
        %3848 = vmatpush1.msra.mxu0 %v3822
        %3849 = vmatprep.subr.mxu0 0.0
        %3850 = vmatpush1.msra.mxu0 %v3821
        %3851 = vmatprep.subr.mxu0 0.0
        %3852 = vmatpush1.msra.mxu0 %v3820
        %3853 = vmatprep.subr.mxu0 0.0
        %3854 = vmatpush1.msra.mxu0 %v3819
        %3855 = vmatprep.subr.mxu0 0.0
        %3856 = vmatpush1.msra.mxu0 %v3818
        %3857 = vmatprep.subr.mxu0 0.0
        %3858 = vmatpush1.msra.mxu0 %v3817
        %3859 = vmatprep.subr.mxu0 0.0
        %3860 = vmatpush1.msra.mxu0 %v3816
        %3861 = vmatprep.subr.mxu0 0.0
        %3862 = vmatpush1.msra.mxu0 %v3815
        %3863 = vmatprep.subr.mxu0 0.0
        %3864 = vmatpush2.msra.mxu0 0.0
        %3865 = vmatprep.subr.mxu0 0.0
        %3866 = vmatpush2.msra.mxu0 0.0
        %3867 = vmatprep.subr.mxu0 0.0
        %3868 = vmatpush2.msra.mxu0 0.0
        %3869 = vmatprep.subr.mxu0 0.0
        %3870 = vmatpush2.msra.mxu0 0.0
        %3871 = vmatprep.subr.mxu0 0.0
        %3872 = vmatpush2.msra.mxu0 0.0
        %3873 = vmatprep.subr.mxu0 0.0
        %3874 = vmatpush2.msra.mxu0 0.0
        %3875 = vmatprep.subr.mxu0 0.0
        %3876 = vmatpush2.msra.mxu0 0.0
        %3877 = vmatprep.subr.mxu0 0.0
        %3878 = vmatpush2.msra.mxu0 0.0
        %3879 = vmatprep.subr.mxu0 0.0
        %3880 = vmatpush2.msra.mxu0 0.0
        %3881 = vmatprep.subr.mxu0 0.0
        %3882 = vmatpush2.msra.mxu0 0.0
        %3883 = vmatprep.subr.mxu0 0.0
        %3884 = vmatpush2.msra.mxu0 0.0
        %3885 = vmatprep.subr.mxu0 0.0
        %3886 = vmatpush2.msra.mxu0 0.0
        %3887 = vmatprep.subr.mxu0 0.0
        %3888 = vmatpush2.msra.mxu0 0.0
        %3889 = vmatprep.subr.mxu0 0.0
        %3890 = vmatpush2.msra.mxu0 0.0
        %3891 = vmatprep.subr.mxu0 0.0
        %3892 = vmatpush2.msra.mxu0 0.0
        %3893 = vmatprep.subr.mxu0 0.0
        %3894 = vmatpush2.msra.mxu0 0.0
        %3895 = vmatprep.mubr.f32.mxu0 0.0
        %3896 = vmatmul.mubr.f32.gmra.mxu0 %v3750
        %v3897 = vpop.f32.mrf.mxu0
        %v3898 = vadd.f32 0.0, %v3897
        %v3899 = vpop.f32.mrf.mxu0
        %3900 = vmatprep.mubr.f32.mxu0 0.0
        %3901 = vmatmul.mubr.f32.gmra.mxu0 %v3751
        %v3902 = vpop.f32.mrf.mxu0
        %v3903 = vadd.f32 0.0, %v3902
        %v3904 = vpop.f32.mrf.mxu0
        %3905 = vmatprep.mubr.f32.mxu0 0.0
        %3906 = vmatmul.mubr.f32.gmra.mxu0 %v3752
        %v3907 = vpop.f32.mrf.mxu0
        %v3908 = vadd.f32 0.0, %v3907
        %v3909 = vpop.f32.mrf.mxu0
        %3910 = vmatprep.mubr.f32.mxu0 0.0
        %3911 = vmatmul.mubr.f32.gmra.mxu0 %v3753
        %v3912 = vpop.f32.mrf.mxu0
        %v3913 = vadd.f32 0.0, %v3912
        %v3914 = vpop.f32.mrf.mxu0
        %3915 = vmatprep.mubr.f32.mxu0 0.0
        %3916 = vmatmul.mubr.f32.gmra.mxu0 %v3754
        %v3917 = vpop.f32.mrf.mxu0
        %v3918 = vadd.f32 0.0, %v3917
        %v3919 = vpop.f32.mrf.mxu0
        %3920 = vmatprep.mubr.f32.mxu0 0.0
        %3921 = vmatmul.mubr.f32.gmra.mxu0 %v3755
        %v3922 = vpop.f32.mrf.mxu0
        %v3923 = vadd.f32 0.0, %v3922
        %v3924 = vpop.f32.mrf.mxu0
        %3925 = vmatprep.mubr.f32.mxu0 0.0
        %3926 = vmatmul.mubr.f32.gmra.mxu0 %v3756
        %v3927 = vpop.f32.mrf.mxu0
        %v3928 = vadd.f32 0.0, %v3927
        %v3929 = vpop.f32.mrf.mxu0
        %3930 = vmatprep.mubr.f32.mxu0 0.0
        %3931 = vmatmul.mubr.f32.gmra.mxu0 %v3757
        %v3932 = vpop.f32.mrf.mxu0
        %v3933 = vadd.f32 0.0, %v3932
        %v3934 = vpop.f32.mrf.mxu0
        %3935 = vmatprep.mubr.f32.mxu0 0.0
        %3936 = vmatmul.mubr.f32.gmra.mxu0 %v3758
        %v3937 = vpop.f32.mrf.mxu0
        %v3938 = vadd.f32 0.0, %v3937
        %v3939 = vpop.f32.mrf.mxu0
        %3940 = vmatprep.mubr.f32.mxu0 0.0
        %3941 = vmatmul.mubr.f32.gmra.mxu0 %v3759
        %v3942 = vpop.f32.mrf.mxu0
        %v3943 = vadd.f32 0.0, %v3942
        %v3944 = vpop.f32.mrf.mxu0
        %3945 = vmatprep.mubr.f32.mxu0 0.0
        %3946 = vmatmul.mubr.f32.gmra.mxu0 %v3760
        %v3947 = vpop.f32.mrf.mxu0
        %v3948 = vadd.f32 0.0, %v3947
        %v3949 = vpop.f32.mrf.mxu0
        %3950 = vmatprep.mubr.f32.mxu0 0.0
        %3951 = vmatmul.mubr.f32.gmra.mxu0 %v3761
        %v3952 = vpop.f32.mrf.mxu0
        %v3953 = vadd.f32 0.0, %v3952
        %v3954 = vpop.f32.mrf.mxu0
        %3955 = vmatprep.mubr.f32.mxu0 0.0
        %3956 = vmatmul.mubr.f32.gmra.mxu0 %v3762
        %v3957 = vpop.f32.mrf.mxu0
        %v3958 = vadd.f32 0.0, %v3957
        %v3959 = vpop.f32.mrf.mxu0
        %3960 = vmatprep.mubr.f32.mxu0 0.0
        %3961 = vmatmul.mubr.f32.gmra.mxu0 %v3763
        %v3962 = vpop.f32.mrf.mxu0
        %v3963 = vadd.f32 0.0, %v3962
        %v3964 = vpop.f32.mrf.mxu0
        %3965 = vmatprep.mubr.f32.mxu0 0.0
        %3966 = vmatmul.mubr.f32.gmra.mxu0 %v3764
        %v3967 = vpop.f32.mrf.mxu0
        %v3968 = vadd.f32 0.0, %v3967
        %v3969 = vpop.f32.mrf.mxu0
        %3970 = vmatprep.mubr.f32.mxu0 0.0
        %3971 = vmatmul.mubr.f32.gmra.mxu0 %v3765
        %v3972 = vpop.f32.mrf.mxu0
        %v3973 = vadd.f32 0.0, %v3972
        %v3974 = vpop.f32.mrf.mxu0
        %3975 = vmatprep.mubr.f32.mxu0 0.0
        %3976 = vmatmul.mubr.f32.gmra.mxu0 %v3766
        %v3977 = vpop.f32.mrf.mxu0
        %v3978 = vadd.f32 0.0, %v3977
        %v3979 = vpop.f32.mrf.mxu0
        %3980 = vmatprep.mubr.f32.mxu0 0.0
        %3981 = vmatmul.mubr.f32.gmra.mxu0 %v3767
        %v3982 = vpop.f32.mrf.mxu0
        %v3983 = vadd.f32 0.0, %v3982
        %v3984 = vpop.f32.mrf.mxu0
        %3985 = vmatprep.mubr.f32.mxu0 0.0
        %3986 = vmatmul.mubr.f32.gmra.mxu0 %v3768
        %v3987 = vpop.f32.mrf.mxu0
        %v3988 = vadd.f32 0.0, %v3987
        %v3989 = vpop.f32.mrf.mxu0
        %3990 = vmatprep.mubr.f32.mxu0 0.0
        %3991 = vmatmul.mubr.f32.gmra.mxu0 %v3769
        %v3992 = vpop.f32.mrf.mxu0
        %v3993 = vadd.f32 0.0, %v3992
        %v3994 = vpop.f32.mrf.mxu0
        %3995 = vmatprep.mubr.f32.mxu0 0.0
        %3996 = vmatmul.mubr.f32.gmra.mxu0 %v3770
        %v3997 = vpop.f32.mrf.mxu0
        %v3998 = vadd.f32 0.0, %v3997
        %v3999 = vpop.f32.mrf.mxu0
        %4000 = vmatprep.mubr.f32.mxu0 0.0
        %4001 = vmatmul.mubr.f32.gmra.mxu0 %v3771
        %v4002 = vpop.f32.mrf.mxu0
        %v4003 = vadd.f32 0.0, %v4002
        %v4004 = vpop.f32.mrf.mxu0
        %4005 = vmatprep.mubr.f32.mxu0 0.0
        %4006 = vmatmul.mubr.f32.gmra.mxu0 %v3772
        %v4007 = vpop.f32.mrf.mxu0
        %v4008 = vadd.f32 0.0, %v4007
        %v4009 = vpop.f32.mrf.mxu0
        %4010 = vmatprep.mubr.f32.mxu0 0.0
        %4011 = vmatmul.mubr.f32.gmra.mxu0 %v3773
        %v4012 = vpop.f32.mrf.mxu0
        %v4013 = vadd.f32 0.0, %v4012
        %v4014 = vpop.f32.mrf.mxu0
        %4015 = vmatprep.mubr.f32.mxu0 0.0
        %4016 = vmatmul.mubr.f32.gmra.mxu0 %v3774
        %v4017 = vpop.f32.mrf.mxu0
        %v4018 = vadd.f32 0.0, %v4017
        %v4019 = vpop.f32.mrf.mxu0
        %4020 = vmatprep.mubr.f32.mxu0 0.0
        %4021 = vmatmul.mubr.f32.gmra.mxu0 %v3775
        %v4022 = vpop.f32.mrf.mxu0
        %v4023 = vadd.f32 0.0, %v4022
        %v4024 = vpop.f32.mrf.mxu0
        %4025 = vmatprep.mubr.f32.mxu0 0.0
        %4026 = vmatmul.mubr.f32.gmra.mxu0 %v3776
        %v4027 = vpop.f32.mrf.mxu0
        %v4028 = vadd.f32 0.0, %v4027
        %v4029 = vpop.f32.mrf.mxu0
        %4030 = vmatprep.mubr.f32.mxu0 0.0
        %4031 = vmatmul.mubr.f32.gmra.mxu0 %v3777
        %v4032 = vpop.f32.mrf.mxu0
        %v4033 = vadd.f32 0.0, %v4032
        %v4034 = vpop.f32.mrf.mxu0
        %4035 = vmatprep.mubr.f32.mxu0 0.0
        %4036 = vmatmul.mubr.f32.gmra.mxu0 %v3778
        %v4037 = vpop.f32.mrf.mxu0
        %v4038 = vadd.f32 0.0, %v4037
        %v4039 = vpop.f32.mrf.mxu0
        %4040 = vmatprep.mubr.f32.mxu0 0.0
        %4041 = vmatmul.mubr.f32.gmra.mxu0 %v3779
        %v4042 = vpop.f32.mrf.mxu0
        %v4043 = vadd.f32 0.0, %v4042
        %v4044 = vpop.f32.mrf.mxu0
        %4045 = vmatprep.mubr.f32.mxu0 0.0
        %4046 = vmatmul.mubr.f32.gmra.mxu0 %v3780
        %v4047 = vpop.f32.mrf.mxu0
        %v4048 = vadd.f32 0.0, %v4047
        %v4049 = vpop.f32.mrf.mxu0
        %4050 = vmatprep.mubr.f32.mxu0 0.0
        %4051 = vmatmul.mubr.f32.gmra.mxu0 %v3781
        %v4052 = vpop.f32.mrf.mxu0
        %v4053 = vadd.f32 0.0, %v4052
        %v4054 = vpop.f32.mrf.mxu0
        %4055 = vmatprep.mubr.f32.mxu0 0.0
        %4056 = vmatmul.mubr.f32.gmra.mxu0 %v3782
        %v4057 = vpop.f32.mrf.mxu0
        %v4058 = vadd.f32 0.0, %v4057
        %v4059 = vpop.f32.mrf.mxu0
        %4060 = vmatprep.mubr.f32.mxu0 0.0
        %4061 = vmatmul.mubr.f32.gmra.mxu0 %v3783
        %v4062 = vpop.f32.mrf.mxu0
        %v4063 = vadd.f32 0.0, %v4062
        %v4064 = vpop.f32.mrf.mxu0
        %4065 = vmatprep.mubr.f32.mxu0 0.0
        %4066 = vmatmul.mubr.f32.gmra.mxu0 %v3784
        %v4067 = vpop.f32.mrf.mxu0
        %v4068 = vadd.f32 0.0, %v4067
        %v4069 = vpop.f32.mrf.mxu0
        %4070 = vmatprep.mubr.f32.mxu0 0.0
        %4071 = vmatmul.mubr.f32.gmra.mxu0 %v3785
        %v4072 = vpop.f32.mrf.mxu0
        %v4073 = vadd.f32 0.0, %v4072
        %v4074 = vpop.f32.mrf.mxu0
        %4075 = vmatprep.mubr.f32.mxu0 0.0
        %4076 = vmatmul.mubr.f32.gmra.mxu0 %v3786
        %v4077 = vpop.f32.mrf.mxu0
        %v4078 = vadd.f32 0.0, %v4077
        %v4079 = vpop.f32.mrf.mxu0
        %4080 = vmatprep.mubr.f32.mxu0 0.0
        %4081 = vmatmul.mubr.f32.gmra.mxu0 %v3787
        %v4082 = vpop.f32.mrf.mxu0
        %v4083 = vadd.f32 0.0, %v4082
        %v4084 = vpop.f32.mrf.mxu0
        %4085 = vmatprep.mubr.f32.mxu0 0.0
        %4086 = vmatmul.mubr.f32.gmra.mxu0 %v3788
        %v4087 = vpop.f32.mrf.mxu0
        %v4088 = vadd.f32 0.0, %v4087
        %v4089 = vpop.f32.mrf.mxu0
        %4090 = vmatprep.mubr.f32.mxu0 0.0
        %4091 = vmatmul.mubr.f32.gmra.mxu0 %v3789
        %v4092 = vpop.f32.mrf.mxu0
        %v4093 = vadd.f32 0.0, %v4092
        %v4094 = vpop.f32.mrf.mxu0
        %4095 = vmatprep.mubr.f32.mxu0 0.0
        %4096 = vmatmul.mubr.f32.gmra.mxu0 %v3790
        %v4097 = vpop.f32.mrf.mxu0
        %v4098 = vadd.f32 0.0, %v4097
        %v4099 = vpop.f32.mrf.mxu0
        %4100 = vmatprep.mubr.f32.mxu0 0.0
        %4101 = vmatmul.mubr.f32.gmra.mxu0 %v3791
        %v4102 = vpop.f32.mrf.mxu0
        %v4103 = vadd.f32 0.0, %v4102
        %v4104 = vpop.f32.mrf.mxu0
        %4105 = vmatprep.mubr.f32.mxu0 0.0
        %4106 = vmatmul.mubr.f32.gmra.mxu0 %v3792
        %v4107 = vpop.f32.mrf.mxu0
        %v4108 = vadd.f32 0.0, %v4107
        %v4109 = vpop.f32.mrf.mxu0
        %4110 = vmatprep.mubr.f32.mxu0 0.0
        %4111 = vmatmul.mubr.f32.gmra.mxu0 %v3793
        %v4112 = vpop.f32.mrf.mxu0
        %v4113 = vadd.f32 0.0, %v4112
        %v4114 = vpop.f32.mrf.mxu0
        %4115 = vmatprep.mubr.f32.mxu0 0.0
        %4116 = vmatmul.mubr.f32.gmra.mxu0 %v3794
        %v4117 = vpop.f32.mrf.mxu0
        %v4118 = vadd.f32 0.0, %v4117
        %v4119 = vpop.f32.mrf.mxu0
        %4120 = vmatprep.mubr.f32.mxu0 0.0
        %4121 = vmatmul.mubr.f32.gmra.mxu0 %v3795
        %v4122 = vpop.f32.mrf.mxu0
        %v4123 = vadd.f32 0.0, %v4122
        %v4124 = vpop.f32.mrf.mxu0
        %4125 = vmatprep.mubr.f32.mxu0 0.0
        %4126 = vmatmul.mubr.f32.gmra.mxu0 %v3796
        %v4127 = vpop.f32.mrf.mxu0
        %v4128 = vadd.f32 0.0, %v4127
        %v4129 = vpop.f32.mrf.mxu0
        %4130 = vmatprep.mubr.f32.mxu0 0.0
        %4131 = vmatmul.mubr.f32.gmra.mxu0 %v3797
        %v4132 = vpop.f32.mrf.mxu0
        %v4133 = vadd.f32 0.0, %v4132
        %v4134 = vpop.f32.mrf.mxu0
        %4135 = vmatprep.mubr.f32.mxu0 0.0
        %4136 = vmatmul.mubr.f32.gmra.mxu0 %v3798
        %v4137 = vpop.f32.mrf.mxu0
        %v4138 = vadd.f32 0.0, %v4137
        %v4139 = vpop.f32.mrf.mxu0
        %4140 = vmatprep.mubr.f32.mxu0 0.0
        %4141 = vmatmul.mubr.f32.gmra.mxu0 %v3799
        %v4142 = vpop.f32.mrf.mxu0
        %v4143 = vadd.f32 0.0, %v4142
        %v4144 = vpop.f32.mrf.mxu0
        %4145 = vmatprep.mubr.f32.mxu0 0.0
        %4146 = vmatmul.mubr.f32.gmra.mxu0 %v3800
        %v4147 = vpop.f32.mrf.mxu0
        %v4148 = vadd.f32 0.0, %v4147
        %v4149 = vpop.f32.mrf.mxu0
        %4150 = vmatprep.mubr.f32.mxu0 0.0
        %4151 = vmatmul.mubr.f32.gmra.mxu0 %v3801
        %v4152 = vpop.f32.mrf.mxu0
        %v4153 = vadd.f32 0.0, %v4152
        %v4154 = vpop.f32.mrf.mxu0
        %4155 = vmatprep.mubr.f32.mxu0 0.0
        %4156 = vmatmul.mubr.f32.gmra.mxu0 %v3802
        %v4157 = vpop.f32.mrf.mxu0
        %v4158 = vadd.f32 0.0, %v4157
        %v4159 = vpop.f32.mrf.mxu0
        %4160 = vmatprep.mubr.f32.mxu0 0.0
        %4161 = vmatmul.mubr.f32.gmra.mxu0 %v3803
        %v4162 = vpop.f32.mrf.mxu0
        %v4163 = vadd.f32 0.0, %v4162
        %v4164 = vpop.f32.mrf.mxu0
        %4165 = vmatprep.mubr.f32.mxu0 0.0
        %4166 = vmatmul.mubr.f32.gmra.mxu0 %v3804
        %v4167 = vpop.f32.mrf.mxu0
        %v4168 = vadd.f32 0.0, %v4167
        %v4169 = vpop.f32.mrf.mxu0
        %4170 = vmatprep.mubr.f32.mxu0 0.0
        %4171 = vmatmul.mubr.f32.gmra.mxu0 %v3805
        %v4172 = vpop.f32.mrf.mxu0
        %v4173 = vadd.f32 0.0, %v4172
        %v4174 = vpop.f32.mrf.mxu0
        %4175 = vmatprep.mubr.f32.mxu0 0.0
        %4176 = vmatmul.mubr.f32.gmra.mxu0 %v3806
        %v4177 = vpop.f32.mrf.mxu0
        %v4178 = vadd.f32 0.0, %v4177
        %v4179 = vpop.f32.mrf.mxu0
        %4180 = vmatprep.mubr.f32.mxu0 0.0
        %4181 = vmatmul.mubr.f32.gmra.mxu0 %v3807
        %v4182 = vpop.f32.mrf.mxu0
        %v4183 = vadd.f32 0.0, %v4182
        %v4184 = vpop.f32.mrf.mxu0
        %4185 = vmatprep.mubr.f32.mxu0 0.0
        %4186 = vmatmul.mubr.f32.gmra.mxu0 %v3808
        %v4187 = vpop.f32.mrf.mxu0
        %v4188 = vadd.f32 0.0, %v4187
        %v4189 = vpop.f32.mrf.mxu0
        %4190 = vmatprep.mubr.f32.mxu0 0.0
        %4191 = vmatmul.mubr.f32.gmra.mxu0 %v3809
        %v4192 = vpop.f32.mrf.mxu0
        %v4193 = vadd.f32 0.0, %v4192
        %v4194 = vpop.f32.mrf.mxu0
        %4195 = vmatprep.mubr.f32.mxu0 0.0
        %4196 = vmatmul.mubr.f32.gmra.mxu0 %v3810
        %v4197 = vpop.f32.mrf.mxu0
        %v4198 = vadd.f32 0.0, %v4197
        %v4199 = vpop.f32.mrf.mxu0
        %4200 = vmatprep.mubr.f32.mxu0 0.0
        %4201 = vmatmul.mubr.f32.gmra.mxu0 %v3811
        %v4202 = vpop.f32.mrf.mxu0
        %v4203 = vadd.f32 0.0, %v4202
        %v4204 = vpop.f32.mrf.mxu0
        %4205 = vmatprep.mubr.f32.mxu0 0.0
        %4206 = vmatmul.mubr.f32.gmra.mxu0 %v3812
        %v4207 = vpop.f32.mrf.mxu0
        %v4208 = vadd.f32 0.0, %v4207
        %v4209 = vpop.f32.mrf.mxu0
        %4210 = vmatprep.mubr.f32.mxu0 0.0
        %4211 = vmatmul.mubr.f32.gmra.mxu0 %v3813
        %v4212 = vpop.f32.mrf.mxu0
        %v4213 = vadd.f32 0.0, %v4212
        %v4214 = vpop.f32.mrf.mxu0
        %4215 = vdwg.mxu0
        %v4216 = vadd.f32 %v3430, %v3898
        %v4217 = vadd.f32 %v3431, %v3903
        %v4218 = vadd.f32 %v3432, %v3908
        %v4219 = vadd.f32 %v3433, %v3913
        %v4220 = vadd.f32 %v3434, %v3918
        %v4221 = vadd.f32 %v3435, %v3923
        %v4222 = vadd.f32 %v3436, %v3928
        %v4223 = vadd.f32 %v3437, %v3933
        %v4224 = vadd.f32 %v3438, %v3938
        %v4225 = vadd.f32 %v3439, %v3943
        %v4226 = vadd.f32 %v3440, %v3948
        %v4227 = vadd.f32 %v3441, %v3953
        %v4228 = vadd.f32 %v3442, %v3958
        %v4229 = vadd.f32 %v3443, %v3963
        %v4230 = vadd.f32 %v3444, %v3968
        %v4231 = vadd.f32 %v3445, %v3973
        %v4232 = vadd.f32 %v3446, %v3978
        %v4233 = vadd.f32 %v3447, %v3983
        %v4234 = vadd.f32 %v3448, %v3988
        %v4235 = vadd.f32 %v3449, %v3993
        %v4236 = vadd.f32 %v3450, %v3998
        %v4237 = vadd.f32 %v3451, %v4003
        %v4238 = vadd.f32 %v3452, %v4008
        %v4239 = vadd.f32 %v3453, %v4013
        %v4240 = vadd.f32 %v3454, %v4018
        %v4241 = vadd.f32 %v3455, %v4023
        %v4242 = vadd.f32 %v3456, %v4028
        %v4243 = vadd.f32 %v3457, %v4033
        %v4244 = vadd.f32 %v3458, %v4038
        %v4245 = vadd.f32 %v3459, %v4043
        %v4246 = vadd.f32 %v3460, %v4048
        %v4247 = vadd.f32 %v3461, %v4053
        %v4248 = vadd.f32 %v3462, %v4058
        %v4249 = vadd.f32 %v3463, %v4063
        %v4250 = vadd.f32 %v3464, %v4068
        %v4251 = vadd.f32 %v3465, %v4073
        %v4252 = vadd.f32 %v3466, %v4078
        %v4253 = vadd.f32 %v3467, %v4083
        %v4254 = vadd.f32 %v3468, %v4088
        %v4255 = vadd.f32 %v3469, %v4093
        %v4256 = vadd.f32 %v3470, %v4098
        %v4257 = vadd.f32 %v3471, %v4103
        %v4258 = vadd.f32 %v3472, %v4108
        %v4259 = vadd.f32 %v3473, %v4113
        %v4260 = vadd.f32 %v3474, %v4118
        %v4261 = vadd.f32 %v3475, %v4123
        %v4262 = vadd.f32 %v3476, %v4128
        %v4263 = vadd.f32 %v3477, %v4133
        %v4264 = vadd.f32 %v3478, %v4138
        %v4265 = vadd.f32 %v3479, %v4143
        %v4266 = vadd.f32 %v3480, %v4148
        %v4267 = vadd.f32 %v3481, %v4153
        %v4268 = vadd.f32 %v3482, %v4158
        %v4269 = vadd.f32 %v3483, %v4163
        %v4270 = vadd.f32 %v3484, %v4168
        %v4271 = vadd.f32 %v3485, %v4173
        %v4272 = vadd.f32 %v3486, %v4178
        %v4273 = vadd.f32 %v3487, %v4183
        %v4274 = vadd.f32 %v3488, %v4188
        %v4275 = vadd.f32 %v3489, %v4193
        %v4276 = vadd.f32 %v3490, %v4198
        %v4277 = vadd.f32 %v3491, %v4203
        %v4278 = vadd.f32 %v3492, %v4208
        %v4279 = vadd.f32 %v3493, %v4213
        %s4280 = scalar_lea.vmem [#allocation5], 512
        %v4281 = vld [vmem:[%s4280] sm:$0xff]
        %v4282 = vld [vmem:[%s4280 + $0x8] sm:$0xff]
        %v4283 = vld [vmem:[%s4280 + $0x10] sm:$0xff]
        %v4284 = vld [vmem:[%s4280 + $0x18] sm:$0xff]
        %v4285 = vld [vmem:[%s4280 + $0x20] sm:$0xff]
        %v4286 = vld [vmem:[%s4280 + $0x28] sm:$0xff]
        %v4287 = vld [vmem:[%s4280 + $0x30] sm:$0xff]
        %v4288 = vld [vmem:[%s4280 + $0x38] sm:$0xff]
        %v4289 = vld [vmem:[%s4280 + $0x40] sm:$0xff]
        %v4290 = vld [vmem:[%s4280 + $0x48] sm:$0xff]
        %v4291 = vld [vmem:[%s4280 + $0x50] sm:$0xff]
        %v4292 = vld [vmem:[%s4280 + $0x58] sm:$0xff]
        %v4293 = vld [vmem:[%s4280 + $0x60] sm:$0xff]
        %v4294 = vld [vmem:[%s4280 + $0x68] sm:$0xff]
        %v4295 = vld [vmem:[%s4280 + $0x70] sm:$0xff]
        %v4296 = vld [vmem:[%s4280 + $0x78] sm:$0xff]
        %4297 = vmatprep.subr.mxu0 0.0
        %4298 = vmatpush1.msra.mxu0 %v4296
        %4299 = vmatprep.subr.mxu0 0.0
        %4300 = vmatpush1.msra.mxu0 %v4295
        %4301 = vmatprep.subr.mxu0 0.0
        %4302 = vmatpush1.msra.mxu0 %v4294
        %4303 = vmatprep.subr.mxu0 0.0
        %4304 = vmatpush1.msra.mxu0 %v4293
        %4305 = vmatprep.subr.mxu0 0.0
        %4306 = vmatpush1.msra.mxu0 %v4292
        %4307 = vmatprep.subr.mxu0 0.0
        %4308 = vmatpush1.msra.mxu0 %v4291
        %4309 = vmatprep.subr.mxu0 0.0
        %4310 = vmatpush1.msra.mxu0 %v4290
        %4311 = vmatprep.subr.mxu0 0.0
        %4312 = vmatpush1.msra.mxu0 %v4289
        %4313 = vmatprep.subr.mxu0 0.0
        %4314 = vmatpush1.msra.mxu0 %v4288
        %4315 = vmatprep.subr.mxu0 0.0
        %4316 = vmatpush1.msra.mxu0 %v4287
        %4317 = vmatprep.subr.mxu0 0.0
        %4318 = vmatpush1.msra.mxu0 %v4286
        %4319 = vmatprep.subr.mxu0 0.0
        %4320 = vmatpush1.msra.mxu0 %v4285
        %4321 = vmatprep.subr.mxu0 0.0
        %4322 = vmatpush1.msra.mxu0 %v4284
        %4323 = vmatprep.subr.mxu0 0.0
        %4324 = vmatpush1.msra.mxu0 %v4283
        %4325 = vmatprep.subr.mxu0 0.0
        %4326 = vmatpush1.msra.mxu0 %v4282
        %4327 = vmatprep.subr.mxu0 0.0
        %4328 = vmatpush1.msra.mxu0 %v4281
        %4329 = vmatprep.subr.mxu0 0.0
        %4330 = vmatpush2.msra.mxu0 0.0
        %4331 = vmatprep.subr.mxu0 0.0
        %4332 = vmatpush2.msra.mxu0 0.0
        %4333 = vmatprep.subr.mxu0 0.0
        %4334 = vmatpush2.msra.mxu0 0.0
        %4335 = vmatprep.subr.mxu0 0.0
        %4336 = vmatpush2.msra.mxu0 0.0
        %4337 = vmatprep.subr.mxu0 0.0
        %4338 = vmatpush2.msra.mxu0 0.0
        %4339 = vmatprep.subr.mxu0 0.0
        %4340 = vmatpush2.msra.mxu0 0.0
        %4341 = vmatprep.subr.mxu0 0.0
        %4342 = vmatpush2.msra.mxu0 0.0
        %4343 = vmatprep.subr.mxu0 0.0
        %4344 = vmatpush2.msra.mxu0 0.0
        %4345 = vmatprep.subr.mxu0 0.0
        %4346 = vmatpush2.msra.mxu0 0.0
        %4347 = vmatprep.subr.mxu0 0.0
        %4348 = vmatpush2.msra.mxu0 0.0
        %4349 = vmatprep.subr.mxu0 0.0
        %4350 = vmatpush2.msra.mxu0 0.0
        %4351 = vmatprep.subr.mxu0 0.0
        %4352 = vmatpush2.msra.mxu0 0.0
        %4353 = vmatprep.subr.mxu0 0.0
        %4354 = vmatpush2.msra.mxu0 0.0
        %4355 = vmatprep.subr.mxu0 0.0
        %4356 = vmatpush2.msra.mxu0 0.0
        %4357 = vmatprep.subr.mxu0 0.0
        %4358 = vmatpush2.msra.mxu0 0.0
        %4359 = vmatprep.subr.mxu0 0.0
        %4360 = vmatpush2.msra.mxu0 0.0
        %4361 = vmatprep.mubr.f32.mxu0 0.0
        %4362 = vmatmul.mubr.f32.gmra.mxu0 %v813
        %v4363 = vpop.f32.mrf.mxu0
        %v4364 = vadd.f32 0.0, %v4363
        %v4365 = vpop.f32.mrf.mxu0
        %4366 = vmatprep.mubr.f32.mxu0 0.0
        %4367 = vmatmul.mubr.f32.gmra.mxu0 %v814
        %v4368 = vpop.f32.mrf.mxu0
        %v4369 = vadd.f32 0.0, %v4368
        %v4370 = vpop.f32.mrf.mxu0
        %4371 = vmatprep.mubr.f32.mxu0 0.0
        %4372 = vmatmul.mubr.f32.gmra.mxu0 %v815
        %v4373 = vpop.f32.mrf.mxu0
        %v4374 = vadd.f32 0.0, %v4373
        %v4375 = vpop.f32.mrf.mxu0
        %4376 = vmatprep.mubr.f32.mxu0 0.0
        %4377 = vmatmul.mubr.f32.gmra.mxu0 %v816
        %v4378 = vpop.f32.mrf.mxu0
        %v4379 = vadd.f32 0.0, %v4378
        %v4380 = vpop.f32.mrf.mxu0
        %4381 = vmatprep.mubr.f32.mxu0 0.0
        %4382 = vmatmul.mubr.f32.gmra.mxu0 %v817
        %v4383 = vpop.f32.mrf.mxu0
        %v4384 = vadd.f32 0.0, %v4383
        %v4385 = vpop.f32.mrf.mxu0
        %4386 = vmatprep.mubr.f32.mxu0 0.0
        %4387 = vmatmul.mubr.f32.gmra.mxu0 %v818
        %v4388 = vpop.f32.mrf.mxu0
        %v4389 = vadd.f32 0.0, %v4388
        %v4390 = vpop.f32.mrf.mxu0
        %4391 = vmatprep.mubr.f32.mxu0 0.0
        %4392 = vmatmul.mubr.f32.gmra.mxu0 %v819
        %v4393 = vpop.f32.mrf.mxu0
        %v4394 = vadd.f32 0.0, %v4393
        %v4395 = vpop.f32.mrf.mxu0
        %4396 = vmatprep.mubr.f32.mxu0 0.0
        %4397 = vmatmul.mubr.f32.gmra.mxu0 %v820
        %v4398 = vpop.f32.mrf.mxu0
        %v4399 = vadd.f32 0.0, %v4398
        %v4400 = vpop.f32.mrf.mxu0
        %4401 = vmatprep.mubr.f32.mxu0 0.0
        %4402 = vmatmul.mubr.f32.gmra.mxu0 %v821
        %v4403 = vpop.f32.mrf.mxu0
        %v4404 = vadd.f32 0.0, %v4403
        %v4405 = vpop.f32.mrf.mxu0
        %4406 = vmatprep.mubr.f32.mxu0 0.0
        %4407 = vmatmul.mubr.f32.gmra.mxu0 %v822
        %v4408 = vpop.f32.mrf.mxu0
        %v4409 = vadd.f32 0.0, %v4408
        %v4410 = vpop.f32.mrf.mxu0
        %4411 = vmatprep.mubr.f32.mxu0 0.0
        %4412 = vmatmul.mubr.f32.gmra.mxu0 %v823
        %v4413 = vpop.f32.mrf.mxu0
        %v4414 = vadd.f32 0.0, %v4413
        %v4415 = vpop.f32.mrf.mxu0
        %4416 = vmatprep.mubr.f32.mxu0 0.0
        %4417 = vmatmul.mubr.f32.gmra.mxu0 %v824
        %v4418 = vpop.f32.mrf.mxu0
        %v4419 = vadd.f32 0.0, %v4418
        %v4420 = vpop.f32.mrf.mxu0
        %4421 = vmatprep.mubr.f32.mxu0 0.0
        %4422 = vmatmul.mubr.f32.gmra.mxu0 %v825
        %v4423 = vpop.f32.mrf.mxu0
        %v4424 = vadd.f32 0.0, %v4423
        %v4425 = vpop.f32.mrf.mxu0
        %4426 = vmatprep.mubr.f32.mxu0 0.0
        %4427 = vmatmul.mubr.f32.gmra.mxu0 %v826
        %v4428 = vpop.f32.mrf.mxu0
        %v4429 = vadd.f32 0.0, %v4428
        %v4430 = vpop.f32.mrf.mxu0
        %4431 = vmatprep.mubr.f32.mxu0 0.0
        %4432 = vmatmul.mubr.f32.gmra.mxu0 %v827
        %v4433 = vpop.f32.mrf.mxu0
        %v4434 = vadd.f32 0.0, %v4433
        %v4435 = vpop.f32.mrf.mxu0
        %4436 = vmatprep.mubr.f32.mxu0 0.0
        %4437 = vmatmul.mubr.f32.gmra.mxu0 %v828
        %v4438 = vpop.f32.mrf.mxu0
        %v4439 = vadd.f32 0.0, %v4438
        %v4440 = vpop.f32.mrf.mxu0
        %4441 = vmatprep.mubr.f32.mxu0 0.0
        %4442 = vmatmul.mubr.f32.gmra.mxu0 %v829
        %v4443 = vpop.f32.mrf.mxu0
        %v4444 = vadd.f32 0.0, %v4443
        %v4445 = vpop.f32.mrf.mxu0
        %4446 = vmatprep.mubr.f32.mxu0 0.0
        %4447 = vmatmul.mubr.f32.gmra.mxu0 %v830
        %v4448 = vpop.f32.mrf.mxu0
        %v4449 = vadd.f32 0.0, %v4448
        %v4450 = vpop.f32.mrf.mxu0
        %4451 = vmatprep.mubr.f32.mxu0 0.0
        %4452 = vmatmul.mubr.f32.gmra.mxu0 %v831
        %v4453 = vpop.f32.mrf.mxu0
        %v4454 = vadd.f32 0.0, %v4453
        %v4455 = vpop.f32.mrf.mxu0
        %4456 = vmatprep.mubr.f32.mxu0 0.0
        %4457 = vmatmul.mubr.f32.gmra.mxu0 %v832
        %v4458 = vpop.f32.mrf.mxu0
        %v4459 = vadd.f32 0.0, %v4458
        %v4460 = vpop.f32.mrf.mxu0
        %4461 = vmatprep.mubr.f32.mxu0 0.0
        %4462 = vmatmul.mubr.f32.gmra.mxu0 %v833
        %v4463 = vpop.f32.mrf.mxu0
        %v4464 = vadd.f32 0.0, %v4463
        %v4465 = vpop.f32.mrf.mxu0
        %4466 = vmatprep.mubr.f32.mxu0 0.0
        %4467 = vmatmul.mubr.f32.gmra.mxu0 %v834
        %v4468 = vpop.f32.mrf.mxu0
        %v4469 = vadd.f32 0.0, %v4468
        %v4470 = vpop.f32.mrf.mxu0
        %4471 = vmatprep.mubr.f32.mxu0 0.0
        %4472 = vmatmul.mubr.f32.gmra.mxu0 %v835
        %v4473 = vpop.f32.mrf.mxu0
        %v4474 = vadd.f32 0.0, %v4473
        %v4475 = vpop.f32.mrf.mxu0
        %4476 = vmatprep.mubr.f32.mxu0 0.0
        %4477 = vmatmul.mubr.f32.gmra.mxu0 %v836
        %v4478 = vpop.f32.mrf.mxu0
        %v4479 = vadd.f32 0.0, %v4478
        %v4480 = vpop.f32.mrf.mxu0
        %4481 = vmatprep.mubr.f32.mxu0 0.0
        %4482 = vmatmul.mubr.f32.gmra.mxu0 %v837
        %v4483 = vpop.f32.mrf.mxu0
        %v4484 = vadd.f32 0.0, %v4483
        %v4485 = vpop.f32.mrf.mxu0
        %4486 = vmatprep.mubr.f32.mxu0 0.0
        %4487 = vmatmul.mubr.f32.gmra.mxu0 %v838
        %v4488 = vpop.f32.mrf.mxu0
        %v4489 = vadd.f32 0.0, %v4488
        %v4490 = vpop.f32.mrf.mxu0
        %4491 = vmatprep.mubr.f32.mxu0 0.0
        %4492 = vmatmul.mubr.f32.gmra.mxu0 %v839
        %v4493 = vpop.f32.mrf.mxu0
        %v4494 = vadd.f32 0.0, %v4493
        %v4495 = vpop.f32.mrf.mxu0
        %4496 = vmatprep.mubr.f32.mxu0 0.0
        %4497 = vmatmul.mubr.f32.gmra.mxu0 %v840
        %v4498 = vpop.f32.mrf.mxu0
        %v4499 = vadd.f32 0.0, %v4498
        %v4500 = vpop.f32.mrf.mxu0
        %4501 = vmatprep.mubr.f32.mxu0 0.0
        %4502 = vmatmul.mubr.f32.gmra.mxu0 %v841
        %v4503 = vpop.f32.mrf.mxu0
        %v4504 = vadd.f32 0.0, %v4503
        %v4505 = vpop.f32.mrf.mxu0
        %4506 = vmatprep.mubr.f32.mxu0 0.0
        %4507 = vmatmul.mubr.f32.gmra.mxu0 %v842
        %v4508 = vpop.f32.mrf.mxu0
        %v4509 = vadd.f32 0.0, %v4508
        %v4510 = vpop.f32.mrf.mxu0
        %4511 = vmatprep.mubr.f32.mxu0 0.0
        %4512 = vmatmul.mubr.f32.gmra.mxu0 %v843
        %v4513 = vpop.f32.mrf.mxu0
        %v4514 = vadd.f32 0.0, %v4513
        %v4515 = vpop.f32.mrf.mxu0
        %4516 = vmatprep.mubr.f32.mxu0 0.0
        %4517 = vmatmul.mubr.f32.gmra.mxu0 %v844
        %v4518 = vpop.f32.mrf.mxu0
        %v4519 = vadd.f32 0.0, %v4518
        %v4520 = vpop.f32.mrf.mxu0
        %4521 = vmatprep.mubr.f32.mxu0 0.0
        %4522 = vmatmul.mubr.f32.gmra.mxu0 %v845
        %v4523 = vpop.f32.mrf.mxu0
        %v4524 = vadd.f32 0.0, %v4523
        %v4525 = vpop.f32.mrf.mxu0
        %4526 = vmatprep.mubr.f32.mxu0 0.0
        %4527 = vmatmul.mubr.f32.gmra.mxu0 %v846
        %v4528 = vpop.f32.mrf.mxu0
        %v4529 = vadd.f32 0.0, %v4528
        %v4530 = vpop.f32.mrf.mxu0
        %4531 = vmatprep.mubr.f32.mxu0 0.0
        %4532 = vmatmul.mubr.f32.gmra.mxu0 %v847
        %v4533 = vpop.f32.mrf.mxu0
        %v4534 = vadd.f32 0.0, %v4533
        %v4535 = vpop.f32.mrf.mxu0
        %4536 = vmatprep.mubr.f32.mxu0 0.0
        %4537 = vmatmul.mubr.f32.gmra.mxu0 %v848
        %v4538 = vpop.f32.mrf.mxu0
        %v4539 = vadd.f32 0.0, %v4538
        %v4540 = vpop.f32.mrf.mxu0
        %4541 = vmatprep.mubr.f32.mxu0 0.0
        %4542 = vmatmul.mubr.f32.gmra.mxu0 %v849
        %v4543 = vpop.f32.mrf.mxu0
        %v4544 = vadd.f32 0.0, %v4543
        %v4545 = vpop.f32.mrf.mxu0
        %4546 = vmatprep.mubr.f32.mxu0 0.0
        %4547 = vmatmul.mubr.f32.gmra.mxu0 %v850
        %v4548 = vpop.f32.mrf.mxu0
        %v4549 = vadd.f32 0.0, %v4548
        %v4550 = vpop.f32.mrf.mxu0
        %4551 = vmatprep.mubr.f32.mxu0 0.0
        %4552 = vmatmul.mubr.f32.gmra.mxu0 %v851
        %v4553 = vpop.f32.mrf.mxu0
        %v4554 = vadd.f32 0.0, %v4553
        %v4555 = vpop.f32.mrf.mxu0
        %4556 = vmatprep.mubr.f32.mxu0 0.0
        %4557 = vmatmul.mubr.f32.gmra.mxu0 %v852
        %v4558 = vpop.f32.mrf.mxu0
        %v4559 = vadd.f32 0.0, %v4558
        %v4560 = vpop.f32.mrf.mxu0
        %4561 = vmatprep.mubr.f32.mxu0 0.0
        %4562 = vmatmul.mubr.f32.gmra.mxu0 %v853
        %v4563 = vpop.f32.mrf.mxu0
        %v4564 = vadd.f32 0.0, %v4563
        %v4565 = vpop.f32.mrf.mxu0
        %4566 = vmatprep.mubr.f32.mxu0 0.0
        %4567 = vmatmul.mubr.f32.gmra.mxu0 %v854
        %v4568 = vpop.f32.mrf.mxu0
        %v4569 = vadd.f32 0.0, %v4568
        %v4570 = vpop.f32.mrf.mxu0
        %4571 = vmatprep.mubr.f32.mxu0 0.0
        %4572 = vmatmul.mubr.f32.gmra.mxu0 %v855
        %v4573 = vpop.f32.mrf.mxu0
        %v4574 = vadd.f32 0.0, %v4573
        %v4575 = vpop.f32.mrf.mxu0
        %4576 = vmatprep.mubr.f32.mxu0 0.0
        %4577 = vmatmul.mubr.f32.gmra.mxu0 %v856
        %v4578 = vpop.f32.mrf.mxu0
        %v4579 = vadd.f32 0.0, %v4578
        %v4580 = vpop.f32.mrf.mxu0
        %4581 = vmatprep.mubr.f32.mxu0 0.0
        %4582 = vmatmul.mubr.f32.gmra.mxu0 %v857
        %v4583 = vpop.f32.mrf.mxu0
        %v4584 = vadd.f32 0.0, %v4583
        %v4585 = vpop.f32.mrf.mxu0
        %4586 = vmatprep.mubr.f32.mxu0 0.0
        %4587 = vmatmul.mubr.f32.gmra.mxu0 %v858
        %v4588 = vpop.f32.mrf.mxu0
        %v4589 = vadd.f32 0.0, %v4588
        %v4590 = vpop.f32.mrf.mxu0
        %4591 = vmatprep.mubr.f32.mxu0 0.0
        %4592 = vmatmul.mubr.f32.gmra.mxu0 %v859
        %v4593 = vpop.f32.mrf.mxu0
        %v4594 = vadd.f32 0.0, %v4593
        %v4595 = vpop.f32.mrf.mxu0
        %4596 = vmatprep.mubr.f32.mxu0 0.0
        %4597 = vmatmul.mubr.f32.gmra.mxu0 %v860
        %v4598 = vpop.f32.mrf.mxu0
        %v4599 = vadd.f32 0.0, %v4598
        %v4600 = vpop.f32.mrf.mxu0
        %4601 = vmatprep.mubr.f32.mxu0 0.0
        %4602 = vmatmul.mubr.f32.gmra.mxu0 %v861
        %v4603 = vpop.f32.mrf.mxu0
        %v4604 = vadd.f32 0.0, %v4603
        %v4605 = vpop.f32.mrf.mxu0
        %4606 = vmatprep.mubr.f32.mxu0 0.0
        %4607 = vmatmul.mubr.f32.gmra.mxu0 %v862
        %v4608 = vpop.f32.mrf.mxu0
        %v4609 = vadd.f32 0.0, %v4608
        %v4610 = vpop.f32.mrf.mxu0
        %4611 = vmatprep.mubr.f32.mxu0 0.0
        %4612 = vmatmul.mubr.f32.gmra.mxu0 %v863
        %v4613 = vpop.f32.mrf.mxu0
        %v4614 = vadd.f32 0.0, %v4613
        %v4615 = vpop.f32.mrf.mxu0
        %4616 = vmatprep.mubr.f32.mxu0 0.0
        %4617 = vmatmul.mubr.f32.gmra.mxu0 %v864
        %v4618 = vpop.f32.mrf.mxu0
        %v4619 = vadd.f32 0.0, %v4618
        %v4620 = vpop.f32.mrf.mxu0
        %4621 = vmatprep.mubr.f32.mxu0 0.0
        %4622 = vmatmul.mubr.f32.gmra.mxu0 %v865
        %v4623 = vpop.f32.mrf.mxu0
        %v4624 = vadd.f32 0.0, %v4623
        %v4625 = vpop.f32.mrf.mxu0
        %4626 = vmatprep.mubr.f32.mxu0 0.0
        %4627 = vmatmul.mubr.f32.gmra.mxu0 %v866
        %v4628 = vpop.f32.mrf.mxu0
        %v4629 = vadd.f32 0.0, %v4628
        %v4630 = vpop.f32.mrf.mxu0
        %4631 = vmatprep.mubr.f32.mxu0 0.0
        %4632 = vmatmul.mubr.f32.gmra.mxu0 %v867
        %v4633 = vpop.f32.mrf.mxu0
        %v4634 = vadd.f32 0.0, %v4633
        %v4635 = vpop.f32.mrf.mxu0
        %4636 = vmatprep.mubr.f32.mxu0 0.0
        %4637 = vmatmul.mubr.f32.gmra.mxu0 %v868
        %v4638 = vpop.f32.mrf.mxu0
        %v4639 = vadd.f32 0.0, %v4638
        %v4640 = vpop.f32.mrf.mxu0
        %4641 = vmatprep.mubr.f32.mxu0 0.0
        %4642 = vmatmul.mubr.f32.gmra.mxu0 %v869
        %v4643 = vpop.f32.mrf.mxu0
        %v4644 = vadd.f32 0.0, %v4643
        %v4645 = vpop.f32.mrf.mxu0
        %4646 = vmatprep.mubr.f32.mxu0 0.0
        %4647 = vmatmul.mubr.f32.gmra.mxu0 %v870
        %v4648 = vpop.f32.mrf.mxu0
        %v4649 = vadd.f32 0.0, %v4648
        %v4650 = vpop.f32.mrf.mxu0
        %4651 = vmatprep.mubr.f32.mxu0 0.0
        %4652 = vmatmul.mubr.f32.gmra.mxu0 %v871
        %v4653 = vpop.f32.mrf.mxu0
        %v4654 = vadd.f32 0.0, %v4653
        %v4655 = vpop.f32.mrf.mxu0
        %4656 = vmatprep.mubr.f32.mxu0 0.0
        %4657 = vmatmul.mubr.f32.gmra.mxu0 %v872
        %v4658 = vpop.f32.mrf.mxu0
        %v4659 = vadd.f32 0.0, %v4658
        %v4660 = vpop.f32.mrf.mxu0
        %4661 = vmatprep.mubr.f32.mxu0 0.0
        %4662 = vmatmul.mubr.f32.gmra.mxu0 %v873
        %v4663 = vpop.f32.mrf.mxu0
        %v4664 = vadd.f32 0.0, %v4663
        %v4665 = vpop.f32.mrf.mxu0
        %4666 = vmatprep.mubr.f32.mxu0 0.0
        %4667 = vmatmul.mubr.f32.gmra.mxu0 %v874
        %v4668 = vpop.f32.mrf.mxu0
        %v4669 = vadd.f32 0.0, %v4668
        %v4670 = vpop.f32.mrf.mxu0
        %4671 = vmatprep.mubr.f32.mxu0 0.0
        %4672 = vmatmul.mubr.f32.gmra.mxu0 %v875
        %v4673 = vpop.f32.mrf.mxu0
        %v4674 = vadd.f32 0.0, %v4673
        %v4675 = vpop.f32.mrf.mxu0
        %4676 = vmatprep.mubr.f32.mxu0 0.0
        %4677 = vmatmul.mubr.f32.gmra.mxu0 %v876
        %v4678 = vpop.f32.mrf.mxu0
        %v4679 = vadd.f32 0.0, %v4678
        %v4680 = vpop.f32.mrf.mxu0
        %4681 = vdwg.mxu0
        %v4682 = vadd.f32 %v4216, %v4364
        %v4683 = vadd.f32 %v4217, %v4369
        %v4684 = vadd.f32 %v4218, %v4374
        %v4685 = vadd.f32 %v4219, %v4379
        %v4686 = vadd.f32 %v4220, %v4384
        %v4687 = vadd.f32 %v4221, %v4389
        %v4688 = vadd.f32 %v4222, %v4394
        %v4689 = vadd.f32 %v4223, %v4399
        %v4690 = vadd.f32 %v4224, %v4404
        %v4691 = vadd.f32 %v4225, %v4409
        %v4692 = vadd.f32 %v4226, %v4414
        %v4693 = vadd.f32 %v4227, %v4419
        %v4694 = vadd.f32 %v4228, %v4424
        %v4695 = vadd.f32 %v4229, %v4429
        %v4696 = vadd.f32 %v4230, %v4434
        %v4697 = vadd.f32 %v4231, %v4439
        %v4698 = vadd.f32 %v4232, %v4444
        %v4699 = vadd.f32 %v4233, %v4449
        %v4700 = vadd.f32 %v4234, %v4454
        %v4701 = vadd.f32 %v4235, %v4459
        %v4702 = vadd.f32 %v4236, %v4464
        %v4703 = vadd.f32 %v4237, %v4469
        %v4704 = vadd.f32 %v4238, %v4474
        %v4705 = vadd.f32 %v4239, %v4479
        %v4706 = vadd.f32 %v4240, %v4484
        %v4707 = vadd.f32 %v4241, %v4489
        %v4708 = vadd.f32 %v4242, %v4494
        %v4709 = vadd.f32 %v4243, %v4499
        %v4710 = vadd.f32 %v4244, %v4504
        %v4711 = vadd.f32 %v4245, %v4509
        %v4712 = vadd.f32 %v4246, %v4514
        %v4713 = vadd.f32 %v4247, %v4519
        %v4714 = vadd.f32 %v4248, %v4524
        %v4715 = vadd.f32 %v4249, %v4529
        %v4716 = vadd.f32 %v4250, %v4534
        %v4717 = vadd.f32 %v4251, %v4539
        %v4718 = vadd.f32 %v4252, %v4544
        %v4719 = vadd.f32 %v4253, %v4549
        %v4720 = vadd.f32 %v4254, %v4554
        %v4721 = vadd.f32 %v4255, %v4559
        %v4722 = vadd.f32 %v4256, %v4564
        %v4723 = vadd.f32 %v4257, %v4569
        %v4724 = vadd.f32 %v4258, %v4574
        %v4725 = vadd.f32 %v4259, %v4579
        %v4726 = vadd.f32 %v4260, %v4584
        %v4727 = vadd.f32 %v4261, %v4589
        %v4728 = vadd.f32 %v4262, %v4594
        %v4729 = vadd.f32 %v4263, %v4599
        %v4730 = vadd.f32 %v4264, %v4604
        %v4731 = vadd.f32 %v4265, %v4609
        %v4732 = vadd.f32 %v4266, %v4614
        %v4733 = vadd.f32 %v4267, %v4619
        %v4734 = vadd.f32 %v4268, %v4624
        %v4735 = vadd.f32 %v4269, %v4629
        %v4736 = vadd.f32 %v4270, %v4634
        %v4737 = vadd.f32 %v4271, %v4639
        %v4738 = vadd.f32 %v4272, %v4644
        %v4739 = vadd.f32 %v4273, %v4649
        %v4740 = vadd.f32 %v4274, %v4654
        %v4741 = vadd.f32 %v4275, %v4659
        %v4742 = vadd.f32 %v4276, %v4664
        %v4743 = vadd.f32 %v4277, %v4669
        %v4744 = vadd.f32 %v4278, %v4674
        %v4745 = vadd.f32 %v4279, %v4679
        %4746 = vset.pattern.permute.xlu0 5
        %4747 = vperm.xlu0 %4746, %v877
        %v4748 = vpop.permute.xlu0 %4747
        %4750 = vset.pattern.permute.xlu0 5
        %4751 = vperm.xlu0 %4750, %v878
        %v4752 = vpop.permute.xlu0 %4751
        %4754 = vset.pattern.permute.xlu0 5
        %4755 = vperm.xlu0 %4754, %v879
        %v4756 = vpop.permute.xlu0 %4755
        %4758 = vset.pattern.permute.xlu0 5
        %4759 = vperm.xlu0 %4758, %v880
        %v4760 = vpop.permute.xlu0 %4759
        %4762 = vset.pattern.permute.xlu0 5
        %4763 = vperm.xlu0 %4762, %v881
        %v4764 = vpop.permute.xlu0 %4763
        %4766 = vset.pattern.permute.xlu0 5
        %4767 = vperm.xlu0 %4766, %v882
        %v4768 = vpop.permute.xlu0 %4767
        %4770 = vset.pattern.permute.xlu0 5
        %4771 = vperm.xlu0 %4770, %v883
        %v4772 = vpop.permute.xlu0 %4771
        %4774 = vset.pattern.permute.xlu0 5
        %4775 = vperm.xlu0 %4774, %v884
        %v4776 = vpop.permute.xlu0 %4775
        %4778 = vset.pattern.permute.xlu0 5
        %4779 = vperm.xlu0 %4778, %v885
        %v4780 = vpop.permute.xlu0 %4779
        %4782 = vset.pattern.permute.xlu0 5
        %4783 = vperm.xlu0 %4782, %v886
        %v4784 = vpop.permute.xlu0 %4783
        %4786 = vset.pattern.permute.xlu0 5
        %4787 = vperm.xlu0 %4786, %v887
        %v4788 = vpop.permute.xlu0 %4787
        %4790 = vset.pattern.permute.xlu0 5
        %4791 = vperm.xlu0 %4790, %v888
        %v4792 = vpop.permute.xlu0 %4791
        %4794 = vset.pattern.permute.xlu0 5
        %4795 = vperm.xlu0 %4794, %v889
        %v4796 = vpop.permute.xlu0 %4795
        %4798 = vset.pattern.permute.xlu0 5
        %4799 = vperm.xlu0 %4798, %v890
        %v4800 = vpop.permute.xlu0 %4799
        %4802 = vset.pattern.permute.xlu0 5
        %4803 = vperm.xlu0 %4802, %v891
        %v4804 = vpop.permute.xlu0 %4803
        %4806 = vset.pattern.permute.xlu0 5
        %4807 = vperm.xlu0 %4806, %v892
        %v4808 = vpop.permute.xlu0 %4807
        %4810 = vset.pattern.permute.xlu0 5
        %4811 = vperm.xlu0 %4810, %v893
        %v4812 = vpop.permute.xlu0 %4811
        %4814 = vset.pattern.permute.xlu0 5
        %4815 = vperm.xlu0 %4814, %v894
        %v4816 = vpop.permute.xlu0 %4815
        %4818 = vset.pattern.permute.xlu0 5
        %4819 = vperm.xlu0 %4818, %v895
        %v4820 = vpop.permute.xlu0 %4819
        %4822 = vset.pattern.permute.xlu0 5
        %4823 = vperm.xlu0 %4822, %v896
        %v4824 = vpop.permute.xlu0 %4823
        %4826 = vset.pattern.permute.xlu0 5
        %4827 = vperm.xlu0 %4826, %v897
        %v4828 = vpop.permute.xlu0 %4827
        %4830 = vset.pattern.permute.xlu0 5
        %4831 = vperm.xlu0 %4830, %v898
        %v4832 = vpop.permute.xlu0 %4831
        %4834 = vset.pattern.permute.xlu0 5
        %4835 = vperm.xlu0 %4834, %v899
        %v4836 = vpop.permute.xlu0 %4835
        %4838 = vset.pattern.permute.xlu0 5
        %4839 = vperm.xlu0 %4838, %v900
        %v4840 = vpop.permute.xlu0 %4839
        %4842 = vset.pattern.permute.xlu0 5
        %4843 = vperm.xlu0 %4842, %v901
        %v4844 = vpop.permute.xlu0 %4843
        %4846 = vset.pattern.permute.xlu0 5
        %4847 = vperm.xlu0 %4846, %v902
        %v4848 = vpop.permute.xlu0 %4847
        %4850 = vset.pattern.permute.xlu0 5
        %4851 = vperm.xlu0 %4850, %v903
        %v4852 = vpop.permute.xlu0 %4851
        %4854 = vset.pattern.permute.xlu0 5
        %4855 = vperm.xlu0 %4854, %v904
        %v4856 = vpop.permute.xlu0 %4855
        %4858 = vset.pattern.permute.xlu0 5
        %4859 = vperm.xlu0 %4858, %v905
        %v4860 = vpop.permute.xlu0 %4859
        %4862 = vset.pattern.permute.xlu0 5
        %4863 = vperm.xlu0 %4862, %v906
        %v4864 = vpop.permute.xlu0 %4863
        %4866 = vset.pattern.permute.xlu0 5
        %4867 = vperm.xlu0 %4866, %v907
        %v4868 = vpop.permute.xlu0 %4867
        %4870 = vset.pattern.permute.xlu0 5
        %4871 = vperm.xlu0 %4870, %v908
        %v4872 = vpop.permute.xlu0 %4871
        %4874 = vset.pattern.permute.xlu0 5
        %4875 = vperm.xlu0 %4874, %v909
        %v4876 = vpop.permute.xlu0 %4875
        %4878 = vset.pattern.permute.xlu0 5
        %4879 = vperm.xlu0 %4878, %v910
        %v4880 = vpop.permute.xlu0 %4879
        %4882 = vset.pattern.permute.xlu0 5
        %4883 = vperm.xlu0 %4882, %v911
        %v4884 = vpop.permute.xlu0 %4883
        %4886 = vset.pattern.permute.xlu0 5
        %4887 = vperm.xlu0 %4886, %v912
        %v4888 = vpop.permute.xlu0 %4887
        %4890 = vset.pattern.permute.xlu0 5
        %4891 = vperm.xlu0 %4890, %v913
        %v4892 = vpop.permute.xlu0 %4891
        %4894 = vset.pattern.permute.xlu0 5
        %4895 = vperm.xlu0 %4894, %v914
        %v4896 = vpop.permute.xlu0 %4895
        %4898 = vset.pattern.permute.xlu0 5
        %4899 = vperm.xlu0 %4898, %v915
        %v4900 = vpop.permute.xlu0 %4899
        %4902 = vset.pattern.permute.xlu0 5
        %4903 = vperm.xlu0 %4902, %v916
        %v4904 = vpop.permute.xlu0 %4903
        %4906 = vset.pattern.permute.xlu0 5
        %4907 = vperm.xlu0 %4906, %v917
        %v4908 = vpop.permute.xlu0 %4907
        %4910 = vset.pattern.permute.xlu0 5
        %4911 = vperm.xlu0 %4910, %v918
        %v4912 = vpop.permute.xlu0 %4911
        %4914 = vset.pattern.permute.xlu0 5
        %4915 = vperm.xlu0 %4914, %v919
        %v4916 = vpop.permute.xlu0 %4915
        %4918 = vset.pattern.permute.xlu0 5
        %4919 = vperm.xlu0 %4918, %v920
        %v4920 = vpop.permute.xlu0 %4919
        %4922 = vset.pattern.permute.xlu0 5
        %4923 = vperm.xlu0 %4922, %v921
        %v4924 = vpop.permute.xlu0 %4923
        %4926 = vset.pattern.permute.xlu0 5
        %4927 = vperm.xlu0 %4926, %v922
        %v4928 = vpop.permute.xlu0 %4927
        %4930 = vset.pattern.permute.xlu0 5
        %4931 = vperm.xlu0 %4930, %v923
        %v4932 = vpop.permute.xlu0 %4931
        %4934 = vset.pattern.permute.xlu0 5
        %4935 = vperm.xlu0 %4934, %v924
        %v4936 = vpop.permute.xlu0 %4935
        %4938 = vset.pattern.permute.xlu0 5
        %4939 = vperm.xlu0 %4938, %v925
        %v4940 = vpop.permute.xlu0 %4939
        %4942 = vset.pattern.permute.xlu0 5
        %4943 = vperm.xlu0 %4942, %v926
        %v4944 = vpop.permute.xlu0 %4943
        %4946 = vset.pattern.permute.xlu0 5
        %4947 = vperm.xlu0 %4946, %v927
        %v4948 = vpop.permute.xlu0 %4947
        %4950 = vset.pattern.permute.xlu0 5
        %4951 = vperm.xlu0 %4950, %v928
        %v4952 = vpop.permute.xlu0 %4951
        %4954 = vset.pattern.permute.xlu0 5
        %4955 = vperm.xlu0 %4954, %v929
        %v4956 = vpop.permute.xlu0 %4955
        %4958 = vset.pattern.permute.xlu0 5
        %4959 = vperm.xlu0 %4958, %v930
        %v4960 = vpop.permute.xlu0 %4959
        %4962 = vset.pattern.permute.xlu0 5
        %4963 = vperm.xlu0 %4962, %v931
        %v4964 = vpop.permute.xlu0 %4963
        %4966 = vset.pattern.permute.xlu0 5
        %4967 = vperm.xlu0 %4966, %v932
        %v4968 = vpop.permute.xlu0 %4967
        %4970 = vset.pattern.permute.xlu0 5
        %4971 = vperm.xlu0 %4970, %v933
        %v4972 = vpop.permute.xlu0 %4971
        %4974 = vset.pattern.permute.xlu0 5
        %4975 = vperm.xlu0 %4974, %v934
        %v4976 = vpop.permute.xlu0 %4975
        %4978 = vset.pattern.permute.xlu0 5
        %4979 = vperm.xlu0 %4978, %v935
        %v4980 = vpop.permute.xlu0 %4979
        %4982 = vset.pattern.permute.xlu0 5
        %4983 = vperm.xlu0 %4982, %v936
        %v4984 = vpop.permute.xlu0 %4983
        %4986 = vset.pattern.permute.xlu0 5
        %4987 = vperm.xlu0 %4986, %v937
        %v4988 = vpop.permute.xlu0 %4987
        %4990 = vset.pattern.permute.xlu0 5
        %4991 = vperm.xlu0 %4990, %v938
        %v4992 = vpop.permute.xlu0 %4991
        %4994 = vset.pattern.permute.xlu0 5
        %4995 = vperm.xlu0 %4994, %v939
        %v4996 = vpop.permute.xlu0 %4995
        %4998 = vset.pattern.permute.xlu0 5
        %4999 = vperm.xlu0 %4998, %v940
        %v5000 = vpop.permute.xlu0 %4999
        %v5002 = vmul.f32 %v2706, %v4748
        %v5003 = vmul.f32 %v2705, %v4752
        %v5004 = vmul.f32 %v2704, %v4756
        %v5005 = vmul.f32 %v2703, %v4760
        %v5006 = vmul.f32 %v2702, %v4764
        %v5007 = vmul.f32 %v2701, %v4768
        %v5008 = vmul.f32 %v2700, %v4772
        %v5009 = vmul.f32 %v2699, %v4776
        %v5010 = vmul.f32 %v2698, %v4780
        %v5011 = vmul.f32 %v2697, %v4784
        %v5012 = vmul.f32 %v2696, %v4788
        %v5013 = vmul.f32 %v2695, %v4792
        %v5014 = vmul.f32 %v2694, %v4796
        %v5015 = vmul.f32 %v2693, %v4800
        %v5016 = vmul.f32 %v2692, %v4804
        %v5017 = vmul.f32 %v2691, %v4808
        %v5018 = vmul.f32 %v2690, %v4812
        %v5019 = vmul.f32 %v2689, %v4816
        %v5020 = vmul.f32 %v2688, %v4820
        %v5021 = vmul.f32 %v2687, %v4824
        %v5022 = vmul.f32 %v2686, %v4828
        %v5023 = vmul.f32 %v2685, %v4832
        %v5024 = vmul.f32 %v2684, %v4836
        %v5025 = vmul.f32 %v2683, %v4840
        %v5026 = vmul.f32 %v2682, %v4844
        %v5027 = vmul.f32 %v2681, %v4848
        %v5028 = vmul.f32 %v2680, %v4852
        %v5029 = vmul.f32 %v2679, %v4856
        %v5030 = vmul.f32 %v2678, %v4860
        %v5031 = vmul.f32 %v2677, %v4864
        %v5032 = vmul.f32 %v2676, %v4868
        %v5033 = vmul.f32 %v2675, %v4872
        %v5034 = vmul.f32 %v2674, %v4876
        %v5035 = vmul.f32 %v2673, %v4880
        %v5036 = vmul.f32 %v2672, %v4884
        %v5037 = vmul.f32 %v2671, %v4888
        %v5038 = vmul.f32 %v2670, %v4892
        %v5039 = vmul.f32 %v2669, %v4896
        %v5040 = vmul.f32 %v2668, %v4900
        %v5041 = vmul.f32 %v2667, %v4904
        %v5042 = vmul.f32 %v2666, %v4908
        %v5043 = vmul.f32 %v2665, %v4912
        %v5044 = vmul.f32 %v2664, %v4916
        %v5045 = vmul.f32 %v2663, %v4920
        %v5046 = vmul.f32 %v2662, %v4924
        %v5047 = vmul.f32 %v2661, %v4928
        %v5048 = vmul.f32 %v2660, %v4932
        %v5049 = vmul.f32 %v2659, %v4936
        %v5050 = vmul.f32 %v2658, %v4940
        %v5051 = vmul.f32 %v2657, %v4944
        %v5052 = vmul.f32 %v2656, %v4948
        %v5053 = vmul.f32 %v2655, %v4952
        %v5054 = vmul.f32 %v2654, %v4956
        %v5055 = vmul.f32 %v2653, %v4960
        %v5056 = vmul.f32 %v2652, %v4964
        %v5057 = vmul.f32 %v2651, %v4968
        %v5058 = vmul.f32 %v2650, %v4972
        %v5059 = vmul.f32 %v2649, %v4976
        %v5060 = vmul.f32 %v2648, %v4980
        %v5061 = vmul.f32 %v2647, %v4984
        %v5062 = vmul.f32 %v2646, %v4988
        %v5063 = vmul.f32 %v2645, %v4992
        %v5064 = vmul.f32 %v2644, %v4996
        %v5065 = vmul.f32 %v2707, %v5000
        %s5066 = scalar_lea.vmem [#allocation5], 640
        %v5067 = vld [vmem:[%s5066] sm:$0xff]
        %v5068 = vld [vmem:[%s5066 + $0x8] sm:$0xff]
        %v5069 = vld [vmem:[%s5066 + $0x10] sm:$0xff]
        %v5070 = vld [vmem:[%s5066 + $0x18] sm:$0xff]
        %v5071 = vld [vmem:[%s5066 + $0x20] sm:$0xff]
        %v5072 = vld [vmem:[%s5066 + $0x28] sm:$0xff]
        %v5073 = vld [vmem:[%s5066 + $0x30] sm:$0xff]
        %v5074 = vld [vmem:[%s5066 + $0x38] sm:$0xff]
        %v5075 = vld [vmem:[%s5066 + $0x40] sm:$0xff]
        %v5076 = vld [vmem:[%s5066 + $0x48] sm:$0xff]
        %v5077 = vld [vmem:[%s5066 + $0x50] sm:$0xff]
        %v5078 = vld [vmem:[%s5066 + $0x58] sm:$0xff]
        %v5079 = vld [vmem:[%s5066 + $0x60] sm:$0xff]
        %v5080 = vld [vmem:[%s5066 + $0x68] sm:$0xff]
        %v5081 = vld [vmem:[%s5066 + $0x70] sm:$0xff]
        %v5082 = vld [vmem:[%s5066 + $0x78] sm:$0xff]
        %5083 = vmatprep.subr.mxu0 0.0
        %5084 = vmatpush1.msra.mxu0 %v5082
        %5085 = vmatprep.subr.mxu0 0.0
        %5086 = vmatpush1.msra.mxu0 %v5081
        %5087 = vmatprep.subr.mxu0 0.0
        %5088 = vmatpush1.msra.mxu0 %v5080
        %5089 = vmatprep.subr.mxu0 0.0
        %5090 = vmatpush1.msra.mxu0 %v5079
        %5091 = vmatprep.subr.mxu0 0.0
        %5092 = vmatpush1.msra.mxu0 %v5078
        %5093 = vmatprep.subr.mxu0 0.0
        %5094 = vmatpush1.msra.mxu0 %v5077
        %5095 = vmatprep.subr.mxu0 0.0
        %5096 = vmatpush1.msra.mxu0 %v5076
        %5097 = vmatprep.subr.mxu0 0.0
        %5098 = vmatpush1.msra.mxu0 %v5075
        %5099 = vmatprep.subr.mxu0 0.0
        %5100 = vmatpush1.msra.mxu0 %v5074
        %5101 = vmatprep.subr.mxu0 0.0
        %5102 = vmatpush1.msra.mxu0 %v5073
        %5103 = vmatprep.subr.mxu0 0.0
        %5104 = vmatpush1.msra.mxu0 %v5072
        %5105 = vmatprep.subr.mxu0 0.0
        %5106 = vmatpush1.msra.mxu0 %v5071
        %5107 = vmatprep.subr.mxu0 0.0
        %5108 = vmatpush1.msra.mxu0 %v5070
        %5109 = vmatprep.subr.mxu0 0.0
        %5110 = vmatpush1.msra.mxu0 %v5069
        %5111 = vmatprep.subr.mxu0 0.0
        %5112 = vmatpush1.msra.mxu0 %v5068
        %5113 = vmatprep.subr.mxu0 0.0
        %5114 = vmatpush1.msra.mxu0 %v5067
        %5115 = vmatprep.subr.mxu0 0.0
        %5116 = vmatpush2.msra.mxu0 0.0
        %5117 = vmatprep.subr.mxu0 0.0
        %5118 = vmatpush2.msra.mxu0 0.0
        %5119 = vmatprep.subr.mxu0 0.0
        %5120 = vmatpush2.msra.mxu0 0.0
        %5121 = vmatprep.subr.mxu0 0.0
        %5122 = vmatpush2.msra.mxu0 0.0
        %5123 = vmatprep.subr.mxu0 0.0
        %5124 = vmatpush2.msra.mxu0 0.0
        %5125 = vmatprep.subr.mxu0 0.0
        %5126 = vmatpush2.msra.mxu0 0.0
        %5127 = vmatprep.subr.mxu0 0.0
        %5128 = vmatpush2.msra.mxu0 0.0
        %5129 = vmatprep.subr.mxu0 0.0
        %5130 = vmatpush2.msra.mxu0 0.0
        %5131 = vmatprep.subr.mxu0 0.0
        %5132 = vmatpush2.msra.mxu0 0.0
        %5133 = vmatprep.subr.mxu0 0.0
        %5134 = vmatpush2.msra.mxu0 0.0
        %5135 = vmatprep.subr.mxu0 0.0
        %5136 = vmatpush2.msra.mxu0 0.0
        %5137 = vmatprep.subr.mxu0 0.0
        %5138 = vmatpush2.msra.mxu0 0.0
        %5139 = vmatprep.subr.mxu0 0.0
        %5140 = vmatpush2.msra.mxu0 0.0
        %5141 = vmatprep.subr.mxu0 0.0
        %5142 = vmatpush2.msra.mxu0 0.0
        %5143 = vmatprep.subr.mxu0 0.0
        %5144 = vmatpush2.msra.mxu0 0.0
        %5145 = vmatprep.subr.mxu0 0.0
        %5146 = vmatpush2.msra.mxu0 0.0
        %5147 = vmatprep.mubr.f32.mxu0 0.0
        %5148 = vmatmul.mubr.f32.gmra.mxu0 %v5002
        %v5149 = vpop.f32.mrf.mxu0
        %v5150 = vadd.f32 0.0, %v5149
        %v5151 = vpop.f32.mrf.mxu0
        %5152 = vmatprep.mubr.f32.mxu0 0.0
        %5153 = vmatmul.mubr.f32.gmra.mxu0 %v5003
        %v5154 = vpop.f32.mrf.mxu0
        %v5155 = vadd.f32 0.0, %v5154
        %v5156 = vpop.f32.mrf.mxu0
        %5157 = vmatprep.mubr.f32.mxu0 0.0
        %5158 = vmatmul.mubr.f32.gmra.mxu0 %v5004
        %v5159 = vpop.f32.mrf.mxu0
        %v5160 = vadd.f32 0.0, %v5159
        %v5161 = vpop.f32.mrf.mxu0
        %5162 = vmatprep.mubr.f32.mxu0 0.0
        %5163 = vmatmul.mubr.f32.gmra.mxu0 %v5005
        %v5164 = vpop.f32.mrf.mxu0
        %v5165 = vadd.f32 0.0, %v5164
        %v5166 = vpop.f32.mrf.mxu0
        %5167 = vmatprep.mubr.f32.mxu0 0.0
        %5168 = vmatmul.mubr.f32.gmra.mxu0 %v5006
        %v5169 = vpop.f32.mrf.mxu0
        %v5170 = vadd.f32 0.0, %v5169
        %v5171 = vpop.f32.mrf.mxu0
        %5172 = vmatprep.mubr.f32.mxu0 0.0
        %5173 = vmatmul.mubr.f32.gmra.mxu0 %v5007
        %v5174 = vpop.f32.mrf.mxu0
        %v5175 = vadd.f32 0.0, %v5174
        %v5176 = vpop.f32.mrf.mxu0
        %5177 = vmatprep.mubr.f32.mxu0 0.0
        %5178 = vmatmul.mubr.f32.gmra.mxu0 %v5008
        %v5179 = vpop.f32.mrf.mxu0
        %v5180 = vadd.f32 0.0, %v5179
        %v5181 = vpop.f32.mrf.mxu0
        %5182 = vmatprep.mubr.f32.mxu0 0.0
        %5183 = vmatmul.mubr.f32.gmra.mxu0 %v5009
        %v5184 = vpop.f32.mrf.mxu0
        %v5185 = vadd.f32 0.0, %v5184
        %v5186 = vpop.f32.mrf.mxu0
        %5187 = vmatprep.mubr.f32.mxu0 0.0
        %5188 = vmatmul.mubr.f32.gmra.mxu0 %v5010
        %v5189 = vpop.f32.mrf.mxu0
        %v5190 = vadd.f32 0.0, %v5189
        %v5191 = vpop.f32.mrf.mxu0
        %5192 = vmatprep.mubr.f32.mxu0 0.0
        %5193 = vmatmul.mubr.f32.gmra.mxu0 %v5011
        %v5194 = vpop.f32.mrf.mxu0
        %v5195 = vadd.f32 0.0, %v5194
        %v5196 = vpop.f32.mrf.mxu0
        %5197 = vmatprep.mubr.f32.mxu0 0.0
        %5198 = vmatmul.mubr.f32.gmra.mxu0 %v5012
        %v5199 = vpop.f32.mrf.mxu0
        %v5200 = vadd.f32 0.0, %v5199
        %v5201 = vpop.f32.mrf.mxu0
        %5202 = vmatprep.mubr.f32.mxu0 0.0
        %5203 = vmatmul.mubr.f32.gmra.mxu0 %v5013
        %v5204 = vpop.f32.mrf.mxu0
        %v5205 = vadd.f32 0.0, %v5204
        %v5206 = vpop.f32.mrf.mxu0
        %5207 = vmatprep.mubr.f32.mxu0 0.0
        %5208 = vmatmul.mubr.f32.gmra.mxu0 %v5014
        %v5209 = vpop.f32.mrf.mxu0
        %v5210 = vadd.f32 0.0, %v5209
        %v5211 = vpop.f32.mrf.mxu0
        %5212 = vmatprep.mubr.f32.mxu0 0.0
        %5213 = vmatmul.mubr.f32.gmra.mxu0 %v5015
        %v5214 = vpop.f32.mrf.mxu0
        %v5215 = vadd.f32 0.0, %v5214
        %v5216 = vpop.f32.mrf.mxu0
        %5217 = vmatprep.mubr.f32.mxu0 0.0
        %5218 = vmatmul.mubr.f32.gmra.mxu0 %v5016
        %v5219 = vpop.f32.mrf.mxu0
        %v5220 = vadd.f32 0.0, %v5219
        %v5221 = vpop.f32.mrf.mxu0
        %5222 = vmatprep.mubr.f32.mxu0 0.0
        %5223 = vmatmul.mubr.f32.gmra.mxu0 %v5017
        %v5224 = vpop.f32.mrf.mxu0
        %v5225 = vadd.f32 0.0, %v5224
        %v5226 = vpop.f32.mrf.mxu0
        %5227 = vmatprep.mubr.f32.mxu0 0.0
        %5228 = vmatmul.mubr.f32.gmra.mxu0 %v5018
        %v5229 = vpop.f32.mrf.mxu0
        %v5230 = vadd.f32 0.0, %v5229
        %v5231 = vpop.f32.mrf.mxu0
        %5232 = vmatprep.mubr.f32.mxu0 0.0
        %5233 = vmatmul.mubr.f32.gmra.mxu0 %v5019
        %v5234 = vpop.f32.mrf.mxu0
        %v5235 = vadd.f32 0.0, %v5234
        %v5236 = vpop.f32.mrf.mxu0
        %5237 = vmatprep.mubr.f32.mxu0 0.0
        %5238 = vmatmul.mubr.f32.gmra.mxu0 %v5020
        %v5239 = vpop.f32.mrf.mxu0
        %v5240 = vadd.f32 0.0, %v5239
        %v5241 = vpop.f32.mrf.mxu0
        %5242 = vmatprep.mubr.f32.mxu0 0.0
        %5243 = vmatmul.mubr.f32.gmra.mxu0 %v5021
        %v5244 = vpop.f32.mrf.mxu0
        %v5245 = vadd.f32 0.0, %v5244
        %v5246 = vpop.f32.mrf.mxu0
        %5247 = vmatprep.mubr.f32.mxu0 0.0
        %5248 = vmatmul.mubr.f32.gmra.mxu0 %v5022
        %v5249 = vpop.f32.mrf.mxu0
        %v5250 = vadd.f32 0.0, %v5249
        %v5251 = vpop.f32.mrf.mxu0
        %5252 = vmatprep.mubr.f32.mxu0 0.0
        %5253 = vmatmul.mubr.f32.gmra.mxu0 %v5023
        %v5254 = vpop.f32.mrf.mxu0
        %v5255 = vadd.f32 0.0, %v5254
        %v5256 = vpop.f32.mrf.mxu0
        %5257 = vmatprep.mubr.f32.mxu0 0.0
        %5258 = vmatmul.mubr.f32.gmra.mxu0 %v5024
        %v5259 = vpop.f32.mrf.mxu0
        %v5260 = vadd.f32 0.0, %v5259
        %v5261 = vpop.f32.mrf.mxu0
        %5262 = vmatprep.mubr.f32.mxu0 0.0
        %5263 = vmatmul.mubr.f32.gmra.mxu0 %v5025
        %v5264 = vpop.f32.mrf.mxu0
        %v5265 = vadd.f32 0.0, %v5264
        %v5266 = vpop.f32.mrf.mxu0
        %5267 = vmatprep.mubr.f32.mxu0 0.0
        %5268 = vmatmul.mubr.f32.gmra.mxu0 %v5026
        %v5269 = vpop.f32.mrf.mxu0
        %v5270 = vadd.f32 0.0, %v5269
        %v5271 = vpop.f32.mrf.mxu0
        %5272 = vmatprep.mubr.f32.mxu0 0.0
        %5273 = vmatmul.mubr.f32.gmra.mxu0 %v5027
        %v5274 = vpop.f32.mrf.mxu0
        %v5275 = vadd.f32 0.0, %v5274
        %v5276 = vpop.f32.mrf.mxu0
        %5277 = vmatprep.mubr.f32.mxu0 0.0
        %5278 = vmatmul.mubr.f32.gmra.mxu0 %v5028
        %v5279 = vpop.f32.mrf.mxu0
        %v5280 = vadd.f32 0.0, %v5279
        %v5281 = vpop.f32.mrf.mxu0
        %5282 = vmatprep.mubr.f32.mxu0 0.0
        %5283 = vmatmul.mubr.f32.gmra.mxu0 %v5029
        %v5284 = vpop.f32.mrf.mxu0
        %v5285 = vadd.f32 0.0, %v5284
        %v5286 = vpop.f32.mrf.mxu0
        %5287 = vmatprep.mubr.f32.mxu0 0.0
        %5288 = vmatmul.mubr.f32.gmra.mxu0 %v5030
        %v5289 = vpop.f32.mrf.mxu0
        %v5290 = vadd.f32 0.0, %v5289
        %v5291 = vpop.f32.mrf.mxu0
        %5292 = vmatprep.mubr.f32.mxu0 0.0
        %5293 = vmatmul.mubr.f32.gmra.mxu0 %v5031
        %v5294 = vpop.f32.mrf.mxu0
        %v5295 = vadd.f32 0.0, %v5294
        %v5296 = vpop.f32.mrf.mxu0
        %5297 = vmatprep.mubr.f32.mxu0 0.0
        %5298 = vmatmul.mubr.f32.gmra.mxu0 %v5032
        %v5299 = vpop.f32.mrf.mxu0
        %v5300 = vadd.f32 0.0, %v5299
        %v5301 = vpop.f32.mrf.mxu0
        %5302 = vmatprep.mubr.f32.mxu0 0.0
        %5303 = vmatmul.mubr.f32.gmra.mxu0 %v5033
        %v5304 = vpop.f32.mrf.mxu0
        %v5305 = vadd.f32 0.0, %v5304
        %v5306 = vpop.f32.mrf.mxu0
        %5307 = vmatprep.mubr.f32.mxu0 0.0
        %5308 = vmatmul.mubr.f32.gmra.mxu0 %v5034
        %v5309 = vpop.f32.mrf.mxu0
        %v5310 = vadd.f32 0.0, %v5309
        %v5311 = vpop.f32.mrf.mxu0
        %5312 = vmatprep.mubr.f32.mxu0 0.0
        %5313 = vmatmul.mubr.f32.gmra.mxu0 %v5035
        %v5314 = vpop.f32.mrf.mxu0
        %v5315 = vadd.f32 0.0, %v5314
        %v5316 = vpop.f32.mrf.mxu0
        %5317 = vmatprep.mubr.f32.mxu0 0.0
        %5318 = vmatmul.mubr.f32.gmra.mxu0 %v5036
        %v5319 = vpop.f32.mrf.mxu0
        %v5320 = vadd.f32 0.0, %v5319
        %v5321 = vpop.f32.mrf.mxu0
        %5322 = vmatprep.mubr.f32.mxu0 0.0
        %5323 = vmatmul.mubr.f32.gmra.mxu0 %v5037
        %v5324 = vpop.f32.mrf.mxu0
        %v5325 = vadd.f32 0.0, %v5324
        %v5326 = vpop.f32.mrf.mxu0
        %5327 = vmatprep.mubr.f32.mxu0 0.0
        %5328 = vmatmul.mubr.f32.gmra.mxu0 %v5038
        %v5329 = vpop.f32.mrf.mxu0
        %v5330 = vadd.f32 0.0, %v5329
        %v5331 = vpop.f32.mrf.mxu0
        %5332 = vmatprep.mubr.f32.mxu0 0.0
        %5333 = vmatmul.mubr.f32.gmra.mxu0 %v5039
        %v5334 = vpop.f32.mrf.mxu0
        %v5335 = vadd.f32 0.0, %v5334
        %v5336 = vpop.f32.mrf.mxu0
        %5337 = vmatprep.mubr.f32.mxu0 0.0
        %5338 = vmatmul.mubr.f32.gmra.mxu0 %v5040
        %v5339 = vpop.f32.mrf.mxu0
        %v5340 = vadd.f32 0.0, %v5339
        %v5341 = vpop.f32.mrf.mxu0
        %5342 = vmatprep.mubr.f32.mxu0 0.0
        %5343 = vmatmul.mubr.f32.gmra.mxu0 %v5041
        %v5344 = vpop.f32.mrf.mxu0
        %v5345 = vadd.f32 0.0, %v5344
        %v5346 = vpop.f32.mrf.mxu0
        %5347 = vmatprep.mubr.f32.mxu0 0.0
        %5348 = vmatmul.mubr.f32.gmra.mxu0 %v5042
        %v5349 = vpop.f32.mrf.mxu0
        %v5350 = vadd.f32 0.0, %v5349
        %v5351 = vpop.f32.mrf.mxu0
        %5352 = vmatprep.mubr.f32.mxu0 0.0
        %5353 = vmatmul.mubr.f32.gmra.mxu0 %v5043
        %v5354 = vpop.f32.mrf.mxu0
        %v5355 = vadd.f32 0.0, %v5354
        %v5356 = vpop.f32.mrf.mxu0
        %5357 = vmatprep.mubr.f32.mxu0 0.0
        %5358 = vmatmul.mubr.f32.gmra.mxu0 %v5044
        %v5359 = vpop.f32.mrf.mxu0
        %v5360 = vadd.f32 0.0, %v5359
        %v5361 = vpop.f32.mrf.mxu0
        %5362 = vmatprep.mubr.f32.mxu0 0.0
        %5363 = vmatmul.mubr.f32.gmra.mxu0 %v5045
        %v5364 = vpop.f32.mrf.mxu0
        %v5365 = vadd.f32 0.0, %v5364
        %v5366 = vpop.f32.mrf.mxu0
        %5367 = vmatprep.mubr.f32.mxu0 0.0
        %5368 = vmatmul.mubr.f32.gmra.mxu0 %v5046
        %v5369 = vpop.f32.mrf.mxu0
        %v5370 = vadd.f32 0.0, %v5369
        %v5371 = vpop.f32.mrf.mxu0
        %5372 = vmatprep.mubr.f32.mxu0 0.0
        %5373 = vmatmul.mubr.f32.gmra.mxu0 %v5047
        %v5374 = vpop.f32.mrf.mxu0
        %v5375 = vadd.f32 0.0, %v5374
        %v5376 = vpop.f32.mrf.mxu0
        %5377 = vmatprep.mubr.f32.mxu0 0.0
        %5378 = vmatmul.mubr.f32.gmra.mxu0 %v5048
        %v5379 = vpop.f32.mrf.mxu0
        %v5380 = vadd.f32 0.0, %v5379
        %v5381 = vpop.f32.mrf.mxu0
        %5382 = vmatprep.mubr.f32.mxu0 0.0
        %5383 = vmatmul.mubr.f32.gmra.mxu0 %v5049
        %v5384 = vpop.f32.mrf.mxu0
        %v5385 = vadd.f32 0.0, %v5384
        %v5386 = vpop.f32.mrf.mxu0
        %5387 = vmatprep.mubr.f32.mxu0 0.0
        %5388 = vmatmul.mubr.f32.gmra.mxu0 %v5050
        %v5389 = vpop.f32.mrf.mxu0
        %v5390 = vadd.f32 0.0, %v5389
        %v5391 = vpop.f32.mrf.mxu0
        %5392 = vmatprep.mubr.f32.mxu0 0.0
        %5393 = vmatmul.mubr.f32.gmra.mxu0 %v5051
        %v5394 = vpop.f32.mrf.mxu0
        %v5395 = vadd.f32 0.0, %v5394
        %v5396 = vpop.f32.mrf.mxu0
        %5397 = vmatprep.mubr.f32.mxu0 0.0
        %5398 = vmatmul.mubr.f32.gmra.mxu0 %v5052
        %v5399 = vpop.f32.mrf.mxu0
        %v5400 = vadd.f32 0.0, %v5399
        %v5401 = vpop.f32.mrf.mxu0
        %5402 = vmatprep.mubr.f32.mxu0 0.0
        %5403 = vmatmul.mubr.f32.gmra.mxu0 %v5053
        %v5404 = vpop.f32.mrf.mxu0
        %v5405 = vadd.f32 0.0, %v5404
        %v5406 = vpop.f32.mrf.mxu0
        %5407 = vmatprep.mubr.f32.mxu0 0.0
        %5408 = vmatmul.mubr.f32.gmra.mxu0 %v5054
        %v5409 = vpop.f32.mrf.mxu0
        %v5410 = vadd.f32 0.0, %v5409
        %v5411 = vpop.f32.mrf.mxu0
        %5412 = vmatprep.mubr.f32.mxu0 0.0
        %5413 = vmatmul.mubr.f32.gmra.mxu0 %v5055
        %v5414 = vpop.f32.mrf.mxu0
        %v5415 = vadd.f32 0.0, %v5414
        %v5416 = vpop.f32.mrf.mxu0
        %5417 = vmatprep.mubr.f32.mxu0 0.0
        %5418 = vmatmul.mubr.f32.gmra.mxu0 %v5056
        %v5419 = vpop.f32.mrf.mxu0
        %v5420 = vadd.f32 0.0, %v5419
        %v5421 = vpop.f32.mrf.mxu0
        %5422 = vmatprep.mubr.f32.mxu0 0.0
        %5423 = vmatmul.mubr.f32.gmra.mxu0 %v5057
        %v5424 = vpop.f32.mrf.mxu0
        %v5425 = vadd.f32 0.0, %v5424
        %v5426 = vpop.f32.mrf.mxu0
        %5427 = vmatprep.mubr.f32.mxu0 0.0
        %5428 = vmatmul.mubr.f32.gmra.mxu0 %v5058
        %v5429 = vpop.f32.mrf.mxu0
        %v5430 = vadd.f32 0.0, %v5429
        %v5431 = vpop.f32.mrf.mxu0
        %5432 = vmatprep.mubr.f32.mxu0 0.0
        %5433 = vmatmul.mubr.f32.gmra.mxu0 %v5059
        %v5434 = vpop.f32.mrf.mxu0
        %v5435 = vadd.f32 0.0, %v5434
        %v5436 = vpop.f32.mrf.mxu0
        %5437 = vmatprep.mubr.f32.mxu0 0.0
        %5438 = vmatmul.mubr.f32.gmra.mxu0 %v5060
        %v5439 = vpop.f32.mrf.mxu0
        %v5440 = vadd.f32 0.0, %v5439
        %v5441 = vpop.f32.mrf.mxu0
        %5442 = vmatprep.mubr.f32.mxu0 0.0
        %5443 = vmatmul.mubr.f32.gmra.mxu0 %v5061
        %v5444 = vpop.f32.mrf.mxu0
        %v5445 = vadd.f32 0.0, %v5444
        %v5446 = vpop.f32.mrf.mxu0
        %5447 = vmatprep.mubr.f32.mxu0 0.0
        %5448 = vmatmul.mubr.f32.gmra.mxu0 %v5062
        %v5449 = vpop.f32.mrf.mxu0
        %v5450 = vadd.f32 0.0, %v5449
        %v5451 = vpop.f32.mrf.mxu0
        %5452 = vmatprep.mubr.f32.mxu0 0.0
        %5453 = vmatmul.mubr.f32.gmra.mxu0 %v5063
        %v5454 = vpop.f32.mrf.mxu0
        %v5455 = vadd.f32 0.0, %v5454
        %v5456 = vpop.f32.mrf.mxu0
        %5457 = vmatprep.mubr.f32.mxu0 0.0
        %5458 = vmatmul.mubr.f32.gmra.mxu0 %v5064
        %v5459 = vpop.f32.mrf.mxu0
        %v5460 = vadd.f32 0.0, %v5459
        %v5461 = vpop.f32.mrf.mxu0
        %5462 = vmatprep.mubr.f32.mxu0 0.0
        %5463 = vmatmul.mubr.f32.gmra.mxu0 %v5065
        %v5464 = vpop.f32.mrf.mxu0
        %v5465 = vadd.f32 0.0, %v5464
        %v5466 = vpop.f32.mrf.mxu0
        %5467 = vdwg.mxu0
        %v5468 = vadd.f32 %v4682, %v5150
        %v5469 = vadd.f32 %v4683, %v5155
        %v5470 = vadd.f32 %v4684, %v5160
        %v5471 = vadd.f32 %v4685, %v5165
        %v5472 = vadd.f32 %v4686, %v5170
        %v5473 = vadd.f32 %v4687, %v5175
        %v5474 = vadd.f32 %v4688, %v5180
        %v5475 = vadd.f32 %v4689, %v5185
        %v5476 = vadd.f32 %v4690, %v5190
        %v5477 = vadd.f32 %v4691, %v5195
        %v5478 = vadd.f32 %v4692, %v5200
        %v5479 = vadd.f32 %v4693, %v5205
        %v5480 = vadd.f32 %v4694, %v5210
        %v5481 = vadd.f32 %v4695, %v5215
        %v5482 = vadd.f32 %v4696, %v5220
        %v5483 = vadd.f32 %v4697, %v5225
        %v5484 = vadd.f32 %v4698, %v5230
        %v5485 = vadd.f32 %v4699, %v5235
        %v5486 = vadd.f32 %v4700, %v5240
        %v5487 = vadd.f32 %v4701, %v5245
        %v5488 = vadd.f32 %v4702, %v5250
        %v5489 = vadd.f32 %v4703, %v5255
        %v5490 = vadd.f32 %v4704, %v5260
        %v5491 = vadd.f32 %v4705, %v5265
        %v5492 = vadd.f32 %v4706, %v5270
        %v5493 = vadd.f32 %v4707, %v5275
        %v5494 = vadd.f32 %v4708, %v5280
        %v5495 = vadd.f32 %v4709, %v5285
        %v5496 = vadd.f32 %v4710, %v5290
        %v5497 = vadd.f32 %v4711, %v5295
        %v5498 = vadd.f32 %v4712, %v5300
        %v5499 = vadd.f32 %v4713, %v5305
        %v5500 = vadd.f32 %v4714, %v5310
        %v5501 = vadd.f32 %v4715, %v5315
        %v5502 = vadd.f32 %v4716, %v5320
        %v5503 = vadd.f32 %v4717, %v5325
        %v5504 = vadd.f32 %v4718, %v5330
        %v5505 = vadd.f32 %v4719, %v5335
        %v5506 = vadd.f32 %v4720, %v5340
        %v5507 = vadd.f32 %v4721, %v5345
        %v5508 = vadd.f32 %v4722, %v5350
        %v5509 = vadd.f32 %v4723, %v5355
        %v5510 = vadd.f32 %v4724, %v5360
        %v5511 = vadd.f32 %v4725, %v5365
        %v5512 = vadd.f32 %v4726, %v5370
        %v5513 = vadd.f32 %v4727, %v5375
        %v5514 = vadd.f32 %v4728, %v5380
        %v5515 = vadd.f32 %v4729, %v5385
        %v5516 = vadd.f32 %v4730, %v5390
        %v5517 = vadd.f32 %v4731, %v5395
        %v5518 = vadd.f32 %v4732, %v5400
        %v5519 = vadd.f32 %v4733, %v5405
        %v5520 = vadd.f32 %v4734, %v5410
        %v5521 = vadd.f32 %v4735, %v5415
        %v5522 = vadd.f32 %v4736, %v5420
        %v5523 = vadd.f32 %v4737, %v5425
        %v5524 = vadd.f32 %v4738, %v5430
        %v5525 = vadd.f32 %v4739, %v5435
        %v5526 = vadd.f32 %v4740, %v5440
        %v5527 = vadd.f32 %v4741, %v5445
        %v5528 = vadd.f32 %v4742, %v5450
        %v5529 = vadd.f32 %v4743, %v5455
        %v5530 = vadd.f32 %v4744, %v5460
        %v5531 = vadd.f32 %v4745, %v5465
        %5532 = vset.pattern.permute.xlu0 6
        %5533 = vperm.xlu0 %5532, %v877
        %v5534 = vpop.permute.xlu0 %5533
        %5536 = vset.pattern.permute.xlu0 6
        %5537 = vperm.xlu0 %5536, %v878
        %v5538 = vpop.permute.xlu0 %5537
        %5540 = vset.pattern.permute.xlu0 6
        %5541 = vperm.xlu0 %5540, %v879
        %v5542 = vpop.permute.xlu0 %5541
        %5544 = vset.pattern.permute.xlu0 6
        %5545 = vperm.xlu0 %5544, %v880
        %v5546 = vpop.permute.xlu0 %5545
        %5548 = vset.pattern.permute.xlu0 6
        %5549 = vperm.xlu0 %5548, %v881
        %v5550 = vpop.permute.xlu0 %5549
        %5552 = vset.pattern.permute.xlu0 6
        %5553 = vperm.xlu0 %5552, %v882
        %v5554 = vpop.permute.xlu0 %5553
        %5556 = vset.pattern.permute.xlu0 6
        %5557 = vperm.xlu0 %5556, %v883
        %v5558 = vpop.permute.xlu0 %5557
        %5560 = vset.pattern.permute.xlu0 6
        %5561 = vperm.xlu0 %5560, %v884
        %v5562 = vpop.permute.xlu0 %5561
        %5564 = vset.pattern.permute.xlu0 6
        %5565 = vperm.xlu0 %5564, %v885
        %v5566 = vpop.permute.xlu0 %5565
        %5568 = vset.pattern.permute.xlu0 6
        %5569 = vperm.xlu0 %5568, %v886
        %v5570 = vpop.permute.xlu0 %5569
        %5572 = vset.pattern.permute.xlu0 6
        %5573 = vperm.xlu0 %5572, %v887
        %v5574 = vpop.permute.xlu0 %5573
        %5576 = vset.pattern.permute.xlu0 6
        %5577 = vperm.xlu0 %5576, %v888
        %v5578 = vpop.permute.xlu0 %5577
        %5580 = vset.pattern.permute.xlu0 6
        %5581 = vperm.xlu0 %5580, %v889
        %v5582 = vpop.permute.xlu0 %5581
        %5584 = vset.pattern.permute.xlu0 6
        %5585 = vperm.xlu0 %5584, %v890
        %v5586 = vpop.permute.xlu0 %5585
        %5588 = vset.pattern.permute.xlu0 6
        %5589 = vperm.xlu0 %5588, %v891
        %v5590 = vpop.permute.xlu0 %5589
        %5592 = vset.pattern.permute.xlu0 6
        %5593 = vperm.xlu0 %5592, %v892
        %v5594 = vpop.permute.xlu0 %5593
        %5596 = vset.pattern.permute.xlu0 6
        %5597 = vperm.xlu0 %5596, %v893
        %v5598 = vpop.permute.xlu0 %5597
        %5600 = vset.pattern.permute.xlu0 6
        %5601 = vperm.xlu0 %5600, %v894
        %v5602 = vpop.permute.xlu0 %5601
        %5604 = vset.pattern.permute.xlu0 6
        %5605 = vperm.xlu0 %5604, %v895
        %v5606 = vpop.permute.xlu0 %5605
        %5608 = vset.pattern.permute.xlu0 6
        %5609 = vperm.xlu0 %5608, %v896
        %v5610 = vpop.permute.xlu0 %5609
        %5612 = vset.pattern.permute.xlu0 6
        %5613 = vperm.xlu0 %5612, %v897
        %v5614 = vpop.permute.xlu0 %5613
        %5616 = vset.pattern.permute.xlu0 6
        %5617 = vperm.xlu0 %5616, %v898
        %v5618 = vpop.permute.xlu0 %5617
        %5620 = vset.pattern.permute.xlu0 6
        %5621 = vperm.xlu0 %5620, %v899
        %v5622 = vpop.permute.xlu0 %5621
        %5624 = vset.pattern.permute.xlu0 6
        %5625 = vperm.xlu0 %5624, %v900
        %v5626 = vpop.permute.xlu0 %5625
        %5628 = vset.pattern.permute.xlu0 6
        %5629 = vperm.xlu0 %5628, %v901
        %v5630 = vpop.permute.xlu0 %5629
        %5632 = vset.pattern.permute.xlu0 6
        %5633 = vperm.xlu0 %5632, %v902
        %v5634 = vpop.permute.xlu0 %5633
        %5636 = vset.pattern.permute.xlu0 6
        %5637 = vperm.xlu0 %5636, %v903
        %v5638 = vpop.permute.xlu0 %5637
        %5640 = vset.pattern.permute.xlu0 6
        %5641 = vperm.xlu0 %5640, %v904
        %v5642 = vpop.permute.xlu0 %5641
        %5644 = vset.pattern.permute.xlu0 6
        %5645 = vperm.xlu0 %5644, %v905
        %v5646 = vpop.permute.xlu0 %5645
        %5648 = vset.pattern.permute.xlu0 6
        %5649 = vperm.xlu0 %5648, %v906
        %v5650 = vpop.permute.xlu0 %5649
        %5652 = vset.pattern.permute.xlu0 6
        %5653 = vperm.xlu0 %5652, %v907
        %v5654 = vpop.permute.xlu0 %5653
        %5656 = vset.pattern.permute.xlu0 6
        %5657 = vperm.xlu0 %5656, %v908
        %v5658 = vpop.permute.xlu0 %5657
        %5660 = vset.pattern.permute.xlu0 6
        %5661 = vperm.xlu0 %5660, %v909
        %v5662 = vpop.permute.xlu0 %5661
        %5664 = vset.pattern.permute.xlu0 6
        %5665 = vperm.xlu0 %5664, %v910
        %v5666 = vpop.permute.xlu0 %5665
        %5668 = vset.pattern.permute.xlu0 6
        %5669 = vperm.xlu0 %5668, %v911
        %v5670 = vpop.permute.xlu0 %5669
        %5672 = vset.pattern.permute.xlu0 6
        %5673 = vperm.xlu0 %5672, %v912
        %v5674 = vpop.permute.xlu0 %5673
        %5676 = vset.pattern.permute.xlu0 6
        %5677 = vperm.xlu0 %5676, %v913
        %v5678 = vpop.permute.xlu0 %5677
        %5680 = vset.pattern.permute.xlu0 6
        %5681 = vperm.xlu0 %5680, %v914
        %v5682 = vpop.permute.xlu0 %5681
        %5684 = vset.pattern.permute.xlu0 6
        %5685 = vperm.xlu0 %5684, %v915
        %v5686 = vpop.permute.xlu0 %5685
        %5688 = vset.pattern.permute.xlu0 6
        %5689 = vperm.xlu0 %5688, %v916
        %v5690 = vpop.permute.xlu0 %5689
        %5692 = vset.pattern.permute.xlu0 6
        %5693 = vperm.xlu0 %5692, %v917
        %v5694 = vpop.permute.xlu0 %5693
        %5696 = vset.pattern.permute.xlu0 6
        %5697 = vperm.xlu0 %5696, %v918
        %v5698 = vpop.permute.xlu0 %5697
        %5700 = vset.pattern.permute.xlu0 6
        %5701 = vperm.xlu0 %5700, %v919
        %v5702 = vpop.permute.xlu0 %5701
        %5704 = vset.pattern.permute.xlu0 6
        %5705 = vperm.xlu0 %5704, %v920
        %v5706 = vpop.permute.xlu0 %5705
        %5708 = vset.pattern.permute.xlu0 6
        %5709 = vperm.xlu0 %5708, %v921
        %v5710 = vpop.permute.xlu0 %5709
        %5712 = vset.pattern.permute.xlu0 6
        %5713 = vperm.xlu0 %5712, %v922
        %v5714 = vpop.permute.xlu0 %5713
        %5716 = vset.pattern.permute.xlu0 6
        %5717 = vperm.xlu0 %5716, %v923
        %v5718 = vpop.permute.xlu0 %5717
        %5720 = vset.pattern.permute.xlu0 6
        %5721 = vperm.xlu0 %5720, %v924
        %v5722 = vpop.permute.xlu0 %5721
        %5724 = vset.pattern.permute.xlu0 6
        %5725 = vperm.xlu0 %5724, %v925
        %v5726 = vpop.permute.xlu0 %5725
        %5728 = vset.pattern.permute.xlu0 6
        %5729 = vperm.xlu0 %5728, %v926
        %v5730 = vpop.permute.xlu0 %5729
        %5732 = vset.pattern.permute.xlu0 6
        %5733 = vperm.xlu0 %5732, %v927
        %v5734 = vpop.permute.xlu0 %5733
        %5736 = vset.pattern.permute.xlu0 6
        %5737 = vperm.xlu0 %5736, %v928
        %v5738 = vpop.permute.xlu0 %5737
        %5740 = vset.pattern.permute.xlu0 6
        %5741 = vperm.xlu0 %5740, %v929
        %v5742 = vpop.permute.xlu0 %5741
        %5744 = vset.pattern.permute.xlu0 6
        %5745 = vperm.xlu0 %5744, %v930
        %v5746 = vpop.permute.xlu0 %5745
        %5748 = vset.pattern.permute.xlu0 6
        %5749 = vperm.xlu0 %5748, %v931
        %v5750 = vpop.permute.xlu0 %5749
        %5752 = vset.pattern.permute.xlu0 6
        %5753 = vperm.xlu0 %5752, %v932
        %v5754 = vpop.permute.xlu0 %5753
        %5756 = vset.pattern.permute.xlu0 6
        %5757 = vperm.xlu0 %5756, %v933
        %v5758 = vpop.permute.xlu0 %5757
        %5760 = vset.pattern.permute.xlu0 6
        %5761 = vperm.xlu0 %5760, %v934
        %v5762 = vpop.permute.xlu0 %5761
        %5764 = vset.pattern.permute.xlu0 6
        %5765 = vperm.xlu0 %5764, %v935
        %v5766 = vpop.permute.xlu0 %5765
        %5768 = vset.pattern.permute.xlu0 6
        %5769 = vperm.xlu0 %5768, %v936
        %v5770 = vpop.permute.xlu0 %5769
        %5772 = vset.pattern.permute.xlu0 6
        %5773 = vperm.xlu0 %5772, %v937
        %v5774 = vpop.permute.xlu0 %5773
        %5776 = vset.pattern.permute.xlu0 6
        %5777 = vperm.xlu0 %5776, %v938
        %v5778 = vpop.permute.xlu0 %5777
        %5780 = vset.pattern.permute.xlu0 6
        %5781 = vperm.xlu0 %5780, %v939
        %v5782 = vpop.permute.xlu0 %5781
        %5784 = vset.pattern.permute.xlu0 6
        %5785 = vperm.xlu0 %5784, %v940
        %v5786 = vpop.permute.xlu0 %5785
        %v5788 = vmul.f32 %v1070, %v5534
        %v5789 = vmul.f32 %v1069, %v5538
        %v5790 = vmul.f32 %v1068, %v5542
        %v5791 = vmul.f32 %v1067, %v5546
        %v5792 = vmul.f32 %v1066, %v5550
        %v5793 = vmul.f32 %v1065, %v5554
        %v5794 = vmul.f32 %v1064, %v5558
        %v5795 = vmul.f32 %v1063, %v5562
        %v5796 = vmul.f32 %v1062, %v5566
        %v5797 = vmul.f32 %v1061, %v5570
        %v5798 = vmul.f32 %v1060, %v5574
        %v5799 = vmul.f32 %v1059, %v5578
        %v5800 = vmul.f32 %v1058, %v5582
        %v5801 = vmul.f32 %v1057, %v5586
        %v5802 = vmul.f32 %v1056, %v5590
        %v5803 = vmul.f32 %v1055, %v5594
        %v5804 = vmul.f32 %v1054, %v5598
        %v5805 = vmul.f32 %v1053, %v5602
        %v5806 = vmul.f32 %v1052, %v5606
        %v5807 = vmul.f32 %v1051, %v5610
        %v5808 = vmul.f32 %v1050, %v5614
        %v5809 = vmul.f32 %v1049, %v5618
        %v5810 = vmul.f32 %v1048, %v5622
        %v5811 = vmul.f32 %v1047, %v5626
        %v5812 = vmul.f32 %v1046, %v5630
        %v5813 = vmul.f32 %v1045, %v5634
        %v5814 = vmul.f32 %v1044, %v5638
        %v5815 = vmul.f32 %v1043, %v5642
        %v5816 = vmul.f32 %v1042, %v5646
        %v5817 = vmul.f32 %v1041, %v5650
        %v5818 = vmul.f32 %v1040, %v5654
        %v5819 = vmul.f32 %v1039, %v5658
        %v5820 = vmul.f32 %v1038, %v5662
        %v5821 = vmul.f32 %v1037, %v5666
        %v5822 = vmul.f32 %v1036, %v5670
        %v5823 = vmul.f32 %v1035, %v5674
        %v5824 = vmul.f32 %v1034, %v5678
        %v5825 = vmul.f32 %v1033, %v5682
        %v5826 = vmul.f32 %v1032, %v5686
        %v5827 = vmul.f32 %v1031, %v5690
        %v5828 = vmul.f32 %v1030, %v5694
        %v5829 = vmul.f32 %v1029, %v5698
        %v5830 = vmul.f32 %v1028, %v5702
        %v5831 = vmul.f32 %v1027, %v5706
        %v5832 = vmul.f32 %v1026, %v5710
        %v5833 = vmul.f32 %v1025, %v5714
        %v5834 = vmul.f32 %v1024, %v5718
        %v5835 = vmul.f32 %v1023, %v5722
        %v5836 = vmul.f32 %v1022, %v5726
        %v5837 = vmul.f32 %v1021, %v5730
        %v5838 = vmul.f32 %v1020, %v5734
        %v5839 = vmul.f32 %v1019, %v5738
        %v5840 = vmul.f32 %v1018, %v5742
        %v5841 = vmul.f32 %v1017, %v5746
        %v5842 = vmul.f32 %v1016, %v5750
        %v5843 = vmul.f32 %v1015, %v5754
        %v5844 = vmul.f32 %v1014, %v5758
        %v5845 = vmul.f32 %v1013, %v5762
        %v5846 = vmul.f32 %v1012, %v5766
        %v5847 = vmul.f32 %v1011, %v5770
        %v5848 = vmul.f32 %v1010, %v5774
        %v5849 = vmul.f32 %v1009, %v5778
        %v5850 = vmul.f32 %v1008, %v5782
        %v5851 = vmul.f32 %v1071, %v5786
        %s5852 = scalar_lea.vmem [#allocation5], 768
        %v5853 = vld [vmem:[%s5852] sm:$0xff]
        %v5854 = vld [vmem:[%s5852 + $0x8] sm:$0xff]
        %v5855 = vld [vmem:[%s5852 + $0x10] sm:$0xff]
        %v5856 = vld [vmem:[%s5852 + $0x18] sm:$0xff]
        %v5857 = vld [vmem:[%s5852 + $0x20] sm:$0xff]
        %v5858 = vld [vmem:[%s5852 + $0x28] sm:$0xff]
        %v5859 = vld [vmem:[%s5852 + $0x30] sm:$0xff]
        %v5860 = vld [vmem:[%s5852 + $0x38] sm:$0xff]
        %v5861 = vld [vmem:[%s5852 + $0x40] sm:$0xff]
        %v5862 = vld [vmem:[%s5852 + $0x48] sm:$0xff]
        %v5863 = vld [vmem:[%s5852 + $0x50] sm:$0xff]
        %v5864 = vld [vmem:[%s5852 + $0x58] sm:$0xff]
        %v5865 = vld [vmem:[%s5852 + $0x60] sm:$0xff]
        %v5866 = vld [vmem:[%s5852 + $0x68] sm:$0xff]
        %v5867 = vld [vmem:[%s5852 + $0x70] sm:$0xff]
        %v5868 = vld [vmem:[%s5852 + $0x78] sm:$0xff]
        %5869 = vmatprep.subr.mxu0 0.0
        %5870 = vmatpush1.msra.mxu0 %v5868
        %5871 = vmatprep.subr.mxu0 0.0
        %5872 = vmatpush1.msra.mxu0 %v5867
        %5873 = vmatprep.subr.mxu0 0.0
        %5874 = vmatpush1.msra.mxu0 %v5866
        %5875 = vmatprep.subr.mxu0 0.0
        %5876 = vmatpush1.msra.mxu0 %v5865
        %5877 = vmatprep.subr.mxu0 0.0
        %5878 = vmatpush1.msra.mxu0 %v5864
        %5879 = vmatprep.subr.mxu0 0.0
        %5880 = vmatpush1.msra.mxu0 %v5863
        %5881 = vmatprep.subr.mxu0 0.0
        %5882 = vmatpush1.msra.mxu0 %v5862
        %5883 = vmatprep.subr.mxu0 0.0
        %5884 = vmatpush1.msra.mxu0 %v5861
        %5885 = vmatprep.subr.mxu0 0.0
        %5886 = vmatpush1.msra.mxu0 %v5860
        %5887 = vmatprep.subr.mxu0 0.0
        %5888 = vmatpush1.msra.mxu0 %v5859
        %5889 = vmatprep.subr.mxu0 0.0
        %5890 = vmatpush1.msra.mxu0 %v5858
        %5891 = vmatprep.subr.mxu0 0.0
        %5892 = vmatpush1.msra.mxu0 %v5857
        %5893 = vmatprep.subr.mxu0 0.0
        %5894 = vmatpush1.msra.mxu0 %v5856
        %5895 = vmatprep.subr.mxu0 0.0
        %5896 = vmatpush1.msra.mxu0 %v5855
        %5897 = vmatprep.subr.mxu0 0.0
        %5898 = vmatpush1.msra.mxu0 %v5854
        %5899 = vmatprep.subr.mxu0 0.0
        %5900 = vmatpush1.msra.mxu0 %v5853
        %5901 = vmatprep.subr.mxu0 0.0
        %5902 = vmatpush2.msra.mxu0 0.0
        %5903 = vmatprep.subr.mxu0 0.0
        %5904 = vmatpush2.msra.mxu0 0.0
        %5905 = vmatprep.subr.mxu0 0.0
        %5906 = vmatpush2.msra.mxu0 0.0
        %5907 = vmatprep.subr.mxu0 0.0
        %5908 = vmatpush2.msra.mxu0 0.0
        %5909 = vmatprep.subr.mxu0 0.0
        %5910 = vmatpush2.msra.mxu0 0.0
        %5911 = vmatprep.subr.mxu0 0.0
        %5912 = vmatpush2.msra.mxu0 0.0
        %5913 = vmatprep.subr.mxu0 0.0
        %5914 = vmatpush2.msra.mxu0 0.0
        %5915 = vmatprep.subr.mxu0 0.0
        %5916 = vmatpush2.msra.mxu0 0.0
        %5917 = vmatprep.subr.mxu0 0.0
        %5918 = vmatpush2.msra.mxu0 0.0
        %5919 = vmatprep.subr.mxu0 0.0
        %5920 = vmatpush2.msra.mxu0 0.0
        %5921 = vmatprep.subr.mxu0 0.0
        %5922 = vmatpush2.msra.mxu0 0.0
        %5923 = vmatprep.subr.mxu0 0.0
        %5924 = vmatpush2.msra.mxu0 0.0
        %5925 = vmatprep.subr.mxu0 0.0
        %5926 = vmatpush2.msra.mxu0 0.0
        %5927 = vmatprep.subr.mxu0 0.0
        %5928 = vmatpush2.msra.mxu0 0.0
        %5929 = vmatprep.subr.mxu0 0.0
        %5930 = vmatpush2.msra.mxu0 0.0
        %5931 = vmatprep.subr.mxu0 0.0
        %5932 = vmatpush2.msra.mxu0 0.0
        %5933 = vmatprep.mubr.f32.mxu0 0.0
        %5934 = vmatmul.mubr.f32.gmra.mxu0 %v5788
        %v5935 = vpop.f32.mrf.mxu0
        %v5936 = vadd.f32 0.0, %v5935
        %v5937 = vpop.f32.mrf.mxu0
        %5938 = vmatprep.mubr.f32.mxu0 0.0
        %5939 = vmatmul.mubr.f32.gmra.mxu0 %v5789
        %v5940 = vpop.f32.mrf.mxu0
        %v5941 = vadd.f32 0.0, %v5940
        %v5942 = vpop.f32.mrf.mxu0
        %5943 = vmatprep.mubr.f32.mxu0 0.0
        %5944 = vmatmul.mubr.f32.gmra.mxu0 %v5790
        %v5945 = vpop.f32.mrf.mxu0
        %v5946 = vadd.f32 0.0, %v5945
        %v5947 = vpop.f32.mrf.mxu0
        %5948 = vmatprep.mubr.f32.mxu0 0.0
        %5949 = vmatmul.mubr.f32.gmra.mxu0 %v5791
        %v5950 = vpop.f32.mrf.mxu0
        %v5951 = vadd.f32 0.0, %v5950
        %v5952 = vpop.f32.mrf.mxu0
        %5953 = vmatprep.mubr.f32.mxu0 0.0
        %5954 = vmatmul.mubr.f32.gmra.mxu0 %v5792
        %v5955 = vpop.f32.mrf.mxu0
        %v5956 = vadd.f32 0.0, %v5955
        %v5957 = vpop.f32.mrf.mxu0
        %5958 = vmatprep.mubr.f32.mxu0 0.0
        %5959 = vmatmul.mubr.f32.gmra.mxu0 %v5793
        %v5960 = vpop.f32.mrf.mxu0
        %v5961 = vadd.f32 0.0, %v5960
        %v5962 = vpop.f32.mrf.mxu0
        %5963 = vmatprep.mubr.f32.mxu0 0.0
        %5964 = vmatmul.mubr.f32.gmra.mxu0 %v5794
        %v5965 = vpop.f32.mrf.mxu0
        %v5966 = vadd.f32 0.0, %v5965
        %v5967 = vpop.f32.mrf.mxu0
        %5968 = vmatprep.mubr.f32.mxu0 0.0
        %5969 = vmatmul.mubr.f32.gmra.mxu0 %v5795
        %v5970 = vpop.f32.mrf.mxu0
        %v5971 = vadd.f32 0.0, %v5970
        %v5972 = vpop.f32.mrf.mxu0
        %5973 = vmatprep.mubr.f32.mxu0 0.0
        %5974 = vmatmul.mubr.f32.gmra.mxu0 %v5796
        %v5975 = vpop.f32.mrf.mxu0
        %v5976 = vadd.f32 0.0, %v5975
        %v5977 = vpop.f32.mrf.mxu0
        %5978 = vmatprep.mubr.f32.mxu0 0.0
        %5979 = vmatmul.mubr.f32.gmra.mxu0 %v5797
        %v5980 = vpop.f32.mrf.mxu0
        %v5981 = vadd.f32 0.0, %v5980
        %v5982 = vpop.f32.mrf.mxu0
        %5983 = vmatprep.mubr.f32.mxu0 0.0
        %5984 = vmatmul.mubr.f32.gmra.mxu0 %v5798
        %v5985 = vpop.f32.mrf.mxu0
        %v5986 = vadd.f32 0.0, %v5985
        %v5987 = vpop.f32.mrf.mxu0
        %5988 = vmatprep.mubr.f32.mxu0 0.0
        %5989 = vmatmul.mubr.f32.gmra.mxu0 %v5799
        %v5990 = vpop.f32.mrf.mxu0
        %v5991 = vadd.f32 0.0, %v5990
        %v5992 = vpop.f32.mrf.mxu0
        %5993 = vmatprep.mubr.f32.mxu0 0.0
        %5994 = vmatmul.mubr.f32.gmra.mxu0 %v5800
        %v5995 = vpop.f32.mrf.mxu0
        %v5996 = vadd.f32 0.0, %v5995
        %v5997 = vpop.f32.mrf.mxu0
        %5998 = vmatprep.mubr.f32.mxu0 0.0
        %5999 = vmatmul.mubr.f32.gmra.mxu0 %v5801
        %v6000 = vpop.f32.mrf.mxu0
        %v6001 = vadd.f32 0.0, %v6000
        %v6002 = vpop.f32.mrf.mxu0
        %6003 = vmatprep.mubr.f32.mxu0 0.0
        %6004 = vmatmul.mubr.f32.gmra.mxu0 %v5802
        %v6005 = vpop.f32.mrf.mxu0
        %v6006 = vadd.f32 0.0, %v6005
        %v6007 = vpop.f32.mrf.mxu0
        %6008 = vmatprep.mubr.f32.mxu0 0.0
        %6009 = vmatmul.mubr.f32.gmra.mxu0 %v5803
        %v6010 = vpop.f32.mrf.mxu0
        %v6011 = vadd.f32 0.0, %v6010
        %v6012 = vpop.f32.mrf.mxu0
        %6013 = vmatprep.mubr.f32.mxu0 0.0
        %6014 = vmatmul.mubr.f32.gmra.mxu0 %v5804
        %v6015 = vpop.f32.mrf.mxu0
        %v6016 = vadd.f32 0.0, %v6015
        %v6017 = vpop.f32.mrf.mxu0
        %6018 = vmatprep.mubr.f32.mxu0 0.0
        %6019 = vmatmul.mubr.f32.gmra.mxu0 %v5805
        %v6020 = vpop.f32.mrf.mxu0
        %v6021 = vadd.f32 0.0, %v6020
        %v6022 = vpop.f32.mrf.mxu0
        %6023 = vmatprep.mubr.f32.mxu0 0.0
        %6024 = vmatmul.mubr.f32.gmra.mxu0 %v5806
        %v6025 = vpop.f32.mrf.mxu0
        %v6026 = vadd.f32 0.0, %v6025
        %v6027 = vpop.f32.mrf.mxu0
        %6028 = vmatprep.mubr.f32.mxu0 0.0
        %6029 = vmatmul.mubr.f32.gmra.mxu0 %v5807
        %v6030 = vpop.f32.mrf.mxu0
        %v6031 = vadd.f32 0.0, %v6030
        %v6032 = vpop.f32.mrf.mxu0
        %6033 = vmatprep.mubr.f32.mxu0 0.0
        %6034 = vmatmul.mubr.f32.gmra.mxu0 %v5808
        %v6035 = vpop.f32.mrf.mxu0
        %v6036 = vadd.f32 0.0, %v6035
        %v6037 = vpop.f32.mrf.mxu0
        %6038 = vmatprep.mubr.f32.mxu0 0.0
        %6039 = vmatmul.mubr.f32.gmra.mxu0 %v5809
        %v6040 = vpop.f32.mrf.mxu0
        %v6041 = vadd.f32 0.0, %v6040
        %v6042 = vpop.f32.mrf.mxu0
        %6043 = vmatprep.mubr.f32.mxu0 0.0
        %6044 = vmatmul.mubr.f32.gmra.mxu0 %v5810
        %v6045 = vpop.f32.mrf.mxu0
        %v6046 = vadd.f32 0.0, %v6045
        %v6047 = vpop.f32.mrf.mxu0
        %6048 = vmatprep.mubr.f32.mxu0 0.0
        %6049 = vmatmul.mubr.f32.gmra.mxu0 %v5811
        %v6050 = vpop.f32.mrf.mxu0
        %v6051 = vadd.f32 0.0, %v6050
        %v6052 = vpop.f32.mrf.mxu0
        %6053 = vmatprep.mubr.f32.mxu0 0.0
        %6054 = vmatmul.mubr.f32.gmra.mxu0 %v5812
        %v6055 = vpop.f32.mrf.mxu0
        %v6056 = vadd.f32 0.0, %v6055
        %v6057 = vpop.f32.mrf.mxu0
        %6058 = vmatprep.mubr.f32.mxu0 0.0
        %6059 = vmatmul.mubr.f32.gmra.mxu0 %v5813
        %v6060 = vpop.f32.mrf.mxu0
        %v6061 = vadd.f32 0.0, %v6060
        %v6062 = vpop.f32.mrf.mxu0
        %6063 = vmatprep.mubr.f32.mxu0 0.0
        %6064 = vmatmul.mubr.f32.gmra.mxu0 %v5814
        %v6065 = vpop.f32.mrf.mxu0
        %v6066 = vadd.f32 0.0, %v6065
        %v6067 = vpop.f32.mrf.mxu0
        %6068 = vmatprep.mubr.f32.mxu0 0.0
        %6069 = vmatmul.mubr.f32.gmra.mxu0 %v5815
        %v6070 = vpop.f32.mrf.mxu0
        %v6071 = vadd.f32 0.0, %v6070
        %v6072 = vpop.f32.mrf.mxu0
        %6073 = vmatprep.mubr.f32.mxu0 0.0
        %6074 = vmatmul.mubr.f32.gmra.mxu0 %v5816
        %v6075 = vpop.f32.mrf.mxu0
        %v6076 = vadd.f32 0.0, %v6075
        %v6077 = vpop.f32.mrf.mxu0
        %6078 = vmatprep.mubr.f32.mxu0 0.0
        %6079 = vmatmul.mubr.f32.gmra.mxu0 %v5817
        %v6080 = vpop.f32.mrf.mxu0
        %v6081 = vadd.f32 0.0, %v6080
        %v6082 = vpop.f32.mrf.mxu0
        %6083 = vmatprep.mubr.f32.mxu0 0.0
        %6084 = vmatmul.mubr.f32.gmra.mxu0 %v5818
        %v6085 = vpop.f32.mrf.mxu0
        %v6086 = vadd.f32 0.0, %v6085
        %v6087 = vpop.f32.mrf.mxu0
        %6088 = vmatprep.mubr.f32.mxu0 0.0
        %6089 = vmatmul.mubr.f32.gmra.mxu0 %v5819
        %v6090 = vpop.f32.mrf.mxu0
        %v6091 = vadd.f32 0.0, %v6090
        %v6092 = vpop.f32.mrf.mxu0
        %6093 = vmatprep.mubr.f32.mxu0 0.0
        %6094 = vmatmul.mubr.f32.gmra.mxu0 %v5820
        %v6095 = vpop.f32.mrf.mxu0
        %v6096 = vadd.f32 0.0, %v6095
        %v6097 = vpop.f32.mrf.mxu0
        %6098 = vmatprep.mubr.f32.mxu0 0.0
        %6099 = vmatmul.mubr.f32.gmra.mxu0 %v5821
        %v6100 = vpop.f32.mrf.mxu0
        %v6101 = vadd.f32 0.0, %v6100
        %v6102 = vpop.f32.mrf.mxu0
        %6103 = vmatprep.mubr.f32.mxu0 0.0
        %6104 = vmatmul.mubr.f32.gmra.mxu0 %v5822
        %v6105 = vpop.f32.mrf.mxu0
        %v6106 = vadd.f32 0.0, %v6105
        %v6107 = vpop.f32.mrf.mxu0
        %6108 = vmatprep.mubr.f32.mxu0 0.0
        %6109 = vmatmul.mubr.f32.gmra.mxu0 %v5823
        %v6110 = vpop.f32.mrf.mxu0
        %v6111 = vadd.f32 0.0, %v6110
        %v6112 = vpop.f32.mrf.mxu0
        %6113 = vmatprep.mubr.f32.mxu0 0.0
        %6114 = vmatmul.mubr.f32.gmra.mxu0 %v5824
        %v6115 = vpop.f32.mrf.mxu0
        %v6116 = vadd.f32 0.0, %v6115
        %v6117 = vpop.f32.mrf.mxu0
        %6118 = vmatprep.mubr.f32.mxu0 0.0
        %6119 = vmatmul.mubr.f32.gmra.mxu0 %v5825
        %v6120 = vpop.f32.mrf.mxu0
        %v6121 = vadd.f32 0.0, %v6120
        %v6122 = vpop.f32.mrf.mxu0
        %6123 = vmatprep.mubr.f32.mxu0 0.0
        %6124 = vmatmul.mubr.f32.gmra.mxu0 %v5826
        %v6125 = vpop.f32.mrf.mxu0
        %v6126 = vadd.f32 0.0, %v6125
        %v6127 = vpop.f32.mrf.mxu0
        %6128 = vmatprep.mubr.f32.mxu0 0.0
        %6129 = vmatmul.mubr.f32.gmra.mxu0 %v5827
        %v6130 = vpop.f32.mrf.mxu0
        %v6131 = vadd.f32 0.0, %v6130
        %v6132 = vpop.f32.mrf.mxu0
        %6133 = vmatprep.mubr.f32.mxu0 0.0
        %6134 = vmatmul.mubr.f32.gmra.mxu0 %v5828
        %v6135 = vpop.f32.mrf.mxu0
        %v6136 = vadd.f32 0.0, %v6135
        %v6137 = vpop.f32.mrf.mxu0
        %6138 = vmatprep.mubr.f32.mxu0 0.0
        %6139 = vmatmul.mubr.f32.gmra.mxu0 %v5829
        %v6140 = vpop.f32.mrf.mxu0
        %v6141 = vadd.f32 0.0, %v6140
        %v6142 = vpop.f32.mrf.mxu0
        %6143 = vmatprep.mubr.f32.mxu0 0.0
        %6144 = vmatmul.mubr.f32.gmra.mxu0 %v5830
        %v6145 = vpop.f32.mrf.mxu0
        %v6146 = vadd.f32 0.0, %v6145
        %v6147 = vpop.f32.mrf.mxu0
        %6148 = vmatprep.mubr.f32.mxu0 0.0
        %6149 = vmatmul.mubr.f32.gmra.mxu0 %v5831
        %v6150 = vpop.f32.mrf.mxu0
        %v6151 = vadd.f32 0.0, %v6150
        %v6152 = vpop.f32.mrf.mxu0
        %6153 = vmatprep.mubr.f32.mxu0 0.0
        %6154 = vmatmul.mubr.f32.gmra.mxu0 %v5832
        %v6155 = vpop.f32.mrf.mxu0
        %v6156 = vadd.f32 0.0, %v6155
        %v6157 = vpop.f32.mrf.mxu0
        %6158 = vmatprep.mubr.f32.mxu0 0.0
        %6159 = vmatmul.mubr.f32.gmra.mxu0 %v5833
        %v6160 = vpop.f32.mrf.mxu0
        %v6161 = vadd.f32 0.0, %v6160
        %v6162 = vpop.f32.mrf.mxu0
        %6163 = vmatprep.mubr.f32.mxu0 0.0
        %6164 = vmatmul.mubr.f32.gmra.mxu0 %v5834
        %v6165 = vpop.f32.mrf.mxu0
        %v6166 = vadd.f32 0.0, %v6165
        %v6167 = vpop.f32.mrf.mxu0
        %6168 = vmatprep.mubr.f32.mxu0 0.0
        %6169 = vmatmul.mubr.f32.gmra.mxu0 %v5835
        %v6170 = vpop.f32.mrf.mxu0
        %v6171 = vadd.f32 0.0, %v6170
        %v6172 = vpop.f32.mrf.mxu0
        %6173 = vmatprep.mubr.f32.mxu0 0.0
        %6174 = vmatmul.mubr.f32.gmra.mxu0 %v5836
        %v6175 = vpop.f32.mrf.mxu0
        %v6176 = vadd.f32 0.0, %v6175
        %v6177 = vpop.f32.mrf.mxu0
        %6178 = vmatprep.mubr.f32.mxu0 0.0
        %6179 = vmatmul.mubr.f32.gmra.mxu0 %v5837
        %v6180 = vpop.f32.mrf.mxu0
        %v6181 = vadd.f32 0.0, %v6180
        %v6182 = vpop.f32.mrf.mxu0
        %6183 = vmatprep.mubr.f32.mxu0 0.0
        %6184 = vmatmul.mubr.f32.gmra.mxu0 %v5838
        %v6185 = vpop.f32.mrf.mxu0
        %v6186 = vadd.f32 0.0, %v6185
        %v6187 = vpop.f32.mrf.mxu0
        %6188 = vmatprep.mubr.f32.mxu0 0.0
        %6189 = vmatmul.mubr.f32.gmra.mxu0 %v5839
        %v6190 = vpop.f32.mrf.mxu0
        %v6191 = vadd.f32 0.0, %v6190
        %v6192 = vpop.f32.mrf.mxu0
        %6193 = vmatprep.mubr.f32.mxu0 0.0
        %6194 = vmatmul.mubr.f32.gmra.mxu0 %v5840
        %v6195 = vpop.f32.mrf.mxu0
        %v6196 = vadd.f32 0.0, %v6195
        %v6197 = vpop.f32.mrf.mxu0
        %6198 = vmatprep.mubr.f32.mxu0 0.0
        %6199 = vmatmul.mubr.f32.gmra.mxu0 %v5841
        %v6200 = vpop.f32.mrf.mxu0
        %v6201 = vadd.f32 0.0, %v6200
        %v6202 = vpop.f32.mrf.mxu0
        %6203 = vmatprep.mubr.f32.mxu0 0.0
        %6204 = vmatmul.mubr.f32.gmra.mxu0 %v5842
        %v6205 = vpop.f32.mrf.mxu0
        %v6206 = vadd.f32 0.0, %v6205
        %v6207 = vpop.f32.mrf.mxu0
        %6208 = vmatprep.mubr.f32.mxu0 0.0
        %6209 = vmatmul.mubr.f32.gmra.mxu0 %v5843
        %v6210 = vpop.f32.mrf.mxu0
        %v6211 = vadd.f32 0.0, %v6210
        %v6212 = vpop.f32.mrf.mxu0
        %6213 = vmatprep.mubr.f32.mxu0 0.0
        %6214 = vmatmul.mubr.f32.gmra.mxu0 %v5844
        %v6215 = vpop.f32.mrf.mxu0
        %v6216 = vadd.f32 0.0, %v6215
        %v6217 = vpop.f32.mrf.mxu0
        %6218 = vmatprep.mubr.f32.mxu0 0.0
        %6219 = vmatmul.mubr.f32.gmra.mxu0 %v5845
        %v6220 = vpop.f32.mrf.mxu0
        %v6221 = vadd.f32 0.0, %v6220
        %v6222 = vpop.f32.mrf.mxu0
        %6223 = vmatprep.mubr.f32.mxu0 0.0
        %6224 = vmatmul.mubr.f32.gmra.mxu0 %v5846
        %v6225 = vpop.f32.mrf.mxu0
        %v6226 = vadd.f32 0.0, %v6225
        %v6227 = vpop.f32.mrf.mxu0
        %6228 = vmatprep.mubr.f32.mxu0 0.0
        %6229 = vmatmul.mubr.f32.gmra.mxu0 %v5847
        %v6230 = vpop.f32.mrf.mxu0
        %v6231 = vadd.f32 0.0, %v6230
        %v6232 = vpop.f32.mrf.mxu0
        %6233 = vmatprep.mubr.f32.mxu0 0.0
        %6234 = vmatmul.mubr.f32.gmra.mxu0 %v5848
        %v6235 = vpop.f32.mrf.mxu0
        %v6236 = vadd.f32 0.0, %v6235
        %v6237 = vpop.f32.mrf.mxu0
        %6238 = vmatprep.mubr.f32.mxu0 0.0
        %6239 = vmatmul.mubr.f32.gmra.mxu0 %v5849
        %v6240 = vpop.f32.mrf.mxu0
        %v6241 = vadd.f32 0.0, %v6240
        %v6242 = vpop.f32.mrf.mxu0
        %6243 = vmatprep.mubr.f32.mxu0 0.0
        %6244 = vmatmul.mubr.f32.gmra.mxu0 %v5850
        %v6245 = vpop.f32.mrf.mxu0
        %v6246 = vadd.f32 0.0, %v6245
        %v6247 = vpop.f32.mrf.mxu0
        %6248 = vmatprep.mubr.f32.mxu0 0.0
        %6249 = vmatmul.mubr.f32.gmra.mxu0 %v5851
        %v6250 = vpop.f32.mrf.mxu0
        %v6251 = vadd.f32 0.0, %v6250
        %v6252 = vpop.f32.mrf.mxu0
        %6253 = vdwg.mxu0
        %v6254 = vadd.f32 %v5468, %v5936
        %v6255 = vadd.f32 %v5469, %v5941
        %v6256 = vadd.f32 %v5470, %v5946
        %v6257 = vadd.f32 %v5471, %v5951
        %v6258 = vadd.f32 %v5472, %v5956
        %v6259 = vadd.f32 %v5473, %v5961
        %v6260 = vadd.f32 %v5474, %v5966
        %v6261 = vadd.f32 %v5475, %v5971
        %v6262 = vadd.f32 %v5476, %v5976
        %v6263 = vadd.f32 %v5477, %v5981
        %v6264 = vadd.f32 %v5478, %v5986
        %v6265 = vadd.f32 %v5479, %v5991
        %v6266 = vadd.f32 %v5480, %v5996
        %v6267 = vadd.f32 %v5481, %v6001
        %v6268 = vadd.f32 %v5482, %v6006
        %v6269 = vadd.f32 %v5483, %v6011
        %v6270 = vadd.f32 %v5484, %v6016
        %v6271 = vadd.f32 %v5485, %v6021
        %v6272 = vadd.f32 %v5486, %v6026
        %v6273 = vadd.f32 %v5487, %v6031
        %v6274 = vadd.f32 %v5488, %v6036
        %v6275 = vadd.f32 %v5489, %v6041
        %v6276 = vadd.f32 %v5490, %v6046
        %v6277 = vadd.f32 %v5491, %v6051
        %v6278 = vadd.f32 %v5492, %v6056
        %v6279 = vadd.f32 %v5493, %v6061
        %v6280 = vadd.f32 %v5494, %v6066
        %v6281 = vadd.f32 %v5495, %v6071
        %v6282 = vadd.f32 %v5496, %v6076
        %v6283 = vadd.f32 %v5497, %v6081
        %v6284 = vadd.f32 %v5498, %v6086
        %v6285 = vadd.f32 %v5499, %v6091
        %v6286 = vadd.f32 %v5500, %v6096
        %v6287 = vadd.f32 %v5501, %v6101
        %v6288 = vadd.f32 %v5502, %v6106
        %v6289 = vadd.f32 %v5503, %v6111
        %v6290 = vadd.f32 %v5504, %v6116
        %v6291 = vadd.f32 %v5505, %v6121
        %v6292 = vadd.f32 %v5506, %v6126
        %v6293 = vadd.f32 %v5507, %v6131
        %v6294 = vadd.f32 %v5508, %v6136
        %v6295 = vadd.f32 %v5509, %v6141
        %v6296 = vadd.f32 %v5510, %v6146
        %v6297 = vadd.f32 %v5511, %v6151
        %v6298 = vadd.f32 %v5512, %v6156
        %v6299 = vadd.f32 %v5513, %v6161
        %v6300 = vadd.f32 %v5514, %v6166
        %v6301 = vadd.f32 %v5515, %v6171
        %v6302 = vadd.f32 %v5516, %v6176
        %v6303 = vadd.f32 %v5517, %v6181
        %v6304 = vadd.f32 %v5518, %v6186
        %v6305 = vadd.f32 %v5519, %v6191
        %v6306 = vadd.f32 %v5520, %v6196
        %v6307 = vadd.f32 %v5521, %v6201
        %v6308 = vadd.f32 %v5522, %v6206
        %v6309 = vadd.f32 %v5523, %v6211
        %v6310 = vadd.f32 %v5524, %v6216
        %v6311 = vadd.f32 %v5525, %v6221
        %v6312 = vadd.f32 %v5526, %v6226
        %v6313 = vadd.f32 %v5527, %v6231
        %v6314 = vadd.f32 %v5528, %v6236
        %v6315 = vadd.f32 %v5529, %v6241
        %v6316 = vadd.f32 %v5530, %v6246
        %v6317 = vadd.f32 %v5531, %v6251
        %6318 = vset.pattern.permute.xlu0 7
        %6319 = vperm.xlu0 %6318, %v877
        %v6320 = vpop.permute.xlu0 %6319
        %6322 = vset.pattern.permute.xlu0 7
        %6323 = vperm.xlu0 %6322, %v878
        %v6324 = vpop.permute.xlu0 %6323
        %6326 = vset.pattern.permute.xlu0 7
        %6327 = vperm.xlu0 %6326, %v879
        %v6328 = vpop.permute.xlu0 %6327
        %6330 = vset.pattern.permute.xlu0 7
        %6331 = vperm.xlu0 %6330, %v880
        %v6332 = vpop.permute.xlu0 %6331
        %6334 = vset.pattern.permute.xlu0 7
        %6335 = vperm.xlu0 %6334, %v881
        %v6336 = vpop.permute.xlu0 %6335
        %6338 = vset.pattern.permute.xlu0 7
        %6339 = vperm.xlu0 %6338, %v882
        %v6340 = vpop.permute.xlu0 %6339
        %6342 = vset.pattern.permute.xlu0 7
        %6343 = vperm.xlu0 %6342, %v883
        %v6344 = vpop.permute.xlu0 %6343
        %6346 = vset.pattern.permute.xlu0 7
        %6347 = vperm.xlu0 %6346, %v884
        %v6348 = vpop.permute.xlu0 %6347
        %6350 = vset.pattern.permute.xlu0 7
        %6351 = vperm.xlu0 %6350, %v885
        %v6352 = vpop.permute.xlu0 %6351
        %6354 = vset.pattern.permute.xlu0 7
        %6355 = vperm.xlu0 %6354, %v886
        %v6356 = vpop.permute.xlu0 %6355
        %6358 = vset.pattern.permute.xlu0 7
        %6359 = vperm.xlu0 %6358, %v887
        %v6360 = vpop.permute.xlu0 %6359
        %6362 = vset.pattern.permute.xlu0 7
        %6363 = vperm.xlu0 %6362, %v888
        %v6364 = vpop.permute.xlu0 %6363
        %6366 = vset.pattern.permute.xlu0 7
        %6367 = vperm.xlu0 %6366, %v889
        %v6368 = vpop.permute.xlu0 %6367
        %6370 = vset.pattern.permute.xlu0 7
        %6371 = vperm.xlu0 %6370, %v890
        %v6372 = vpop.permute.xlu0 %6371
        %6374 = vset.pattern.permute.xlu0 7
        %6375 = vperm.xlu0 %6374, %v891
        %v6376 = vpop.permute.xlu0 %6375
        %6378 = vset.pattern.permute.xlu0 7
        %6379 = vperm.xlu0 %6378, %v892
        %v6380 = vpop.permute.xlu0 %6379
        %6382 = vset.pattern.permute.xlu0 7
        %6383 = vperm.xlu0 %6382, %v893
        %v6384 = vpop.permute.xlu0 %6383
        %6386 = vset.pattern.permute.xlu0 7
        %6387 = vperm.xlu0 %6386, %v894
        %v6388 = vpop.permute.xlu0 %6387
        %6390 = vset.pattern.permute.xlu0 7
        %6391 = vperm.xlu0 %6390, %v895
        %v6392 = vpop.permute.xlu0 %6391
        %6394 = vset.pattern.permute.xlu0 7
        %6395 = vperm.xlu0 %6394, %v896
        %v6396 = vpop.permute.xlu0 %6395
        %6398 = vset.pattern.permute.xlu0 7
        %6399 = vperm.xlu0 %6398, %v897
        %v6400 = vpop.permute.xlu0 %6399
        %6402 = vset.pattern.permute.xlu0 7
        %6403 = vperm.xlu0 %6402, %v898
        %v6404 = vpop.permute.xlu0 %6403
        %6406 = vset.pattern.permute.xlu0 7
        %6407 = vperm.xlu0 %6406, %v899
        %v6408 = vpop.permute.xlu0 %6407
        %6410 = vset.pattern.permute.xlu0 7
        %6411 = vperm.xlu0 %6410, %v900
        %v6412 = vpop.permute.xlu0 %6411
        %6414 = vset.pattern.permute.xlu0 7
        %6415 = vperm.xlu0 %6414, %v901
        %v6416 = vpop.permute.xlu0 %6415
        %6418 = vset.pattern.permute.xlu0 7
        %6419 = vperm.xlu0 %6418, %v902
        %v6420 = vpop.permute.xlu0 %6419
        %6422 = vset.pattern.permute.xlu0 7
        %6423 = vperm.xlu0 %6422, %v903
        %v6424 = vpop.permute.xlu0 %6423
        %6426 = vset.pattern.permute.xlu0 7
        %6427 = vperm.xlu0 %6426, %v904
        %v6428 = vpop.permute.xlu0 %6427
        %6430 = vset.pattern.permute.xlu0 7
        %6431 = vperm.xlu0 %6430, %v905
        %v6432 = vpop.permute.xlu0 %6431
        %6434 = vset.pattern.permute.xlu0 7
        %6435 = vperm.xlu0 %6434, %v906
        %v6436 = vpop.permute.xlu0 %6435
        %6438 = vset.pattern.permute.xlu0 7
        %6439 = vperm.xlu0 %6438, %v907
        %v6440 = vpop.permute.xlu0 %6439
        %6442 = vset.pattern.permute.xlu0 7
        %6443 = vperm.xlu0 %6442, %v908
        %v6444 = vpop.permute.xlu0 %6443
        %6446 = vset.pattern.permute.xlu0 7
        %6447 = vperm.xlu0 %6446, %v909
        %v6448 = vpop.permute.xlu0 %6447
        %6450 = vset.pattern.permute.xlu0 7
        %6451 = vperm.xlu0 %6450, %v910
        %v6452 = vpop.permute.xlu0 %6451
        %6454 = vset.pattern.permute.xlu0 7
        %6455 = vperm.xlu0 %6454, %v911
        %v6456 = vpop.permute.xlu0 %6455
        %6458 = vset.pattern.permute.xlu0 7
        %6459 = vperm.xlu0 %6458, %v912
        %v6460 = vpop.permute.xlu0 %6459
        %6462 = vset.pattern.permute.xlu0 7
        %6463 = vperm.xlu0 %6462, %v913
        %v6464 = vpop.permute.xlu0 %6463
        %6466 = vset.pattern.permute.xlu0 7
        %6467 = vperm.xlu0 %6466, %v914
        %v6468 = vpop.permute.xlu0 %6467
        %6470 = vset.pattern.permute.xlu0 7
        %6471 = vperm.xlu0 %6470, %v915
        %v6472 = vpop.permute.xlu0 %6471
        %6474 = vset.pattern.permute.xlu0 7
        %6475 = vperm.xlu0 %6474, %v916
        %v6476 = vpop.permute.xlu0 %6475
        %6478 = vset.pattern.permute.xlu0 7
        %6479 = vperm.xlu0 %6478, %v917
        %v6480 = vpop.permute.xlu0 %6479
        %6482 = vset.pattern.permute.xlu0 7
        %6483 = vperm.xlu0 %6482, %v918
        %v6484 = vpop.permute.xlu0 %6483
        %6486 = vset.pattern.permute.xlu0 7
        %6487 = vperm.xlu0 %6486, %v919
        %v6488 = vpop.permute.xlu0 %6487
        %6490 = vset.pattern.permute.xlu0 7
        %6491 = vperm.xlu0 %6490, %v920
        %v6492 = vpop.permute.xlu0 %6491
        %6494 = vset.pattern.permute.xlu0 7
        %6495 = vperm.xlu0 %6494, %v921
        %v6496 = vpop.permute.xlu0 %6495
        %6498 = vset.pattern.permute.xlu0 7
        %6499 = vperm.xlu0 %6498, %v922
        %v6500 = vpop.permute.xlu0 %6499
        %6502 = vset.pattern.permute.xlu0 7
        %6503 = vperm.xlu0 %6502, %v923
        %v6504 = vpop.permute.xlu0 %6503
        %6506 = vset.pattern.permute.xlu0 7
        %6507 = vperm.xlu0 %6506, %v924
        %v6508 = vpop.permute.xlu0 %6507
        %6510 = vset.pattern.permute.xlu0 7
        %6511 = vperm.xlu0 %6510, %v925
        %v6512 = vpop.permute.xlu0 %6511
        %6514 = vset.pattern.permute.xlu0 7
        %6515 = vperm.xlu0 %6514, %v926
        %v6516 = vpop.permute.xlu0 %6515
        %6518 = vset.pattern.permute.xlu0 7
        %6519 = vperm.xlu0 %6518, %v927
        %v6520 = vpop.permute.xlu0 %6519
        %6522 = vset.pattern.permute.xlu0 7
        %6523 = vperm.xlu0 %6522, %v928
        %v6524 = vpop.permute.xlu0 %6523
        %6526 = vset.pattern.permute.xlu0 7
        %6527 = vperm.xlu0 %6526, %v929
        %v6528 = vpop.permute.xlu0 %6527
        %6530 = vset.pattern.permute.xlu0 7
        %6531 = vperm.xlu0 %6530, %v930
        %v6532 = vpop.permute.xlu0 %6531
        %6534 = vset.pattern.permute.xlu0 7
        %6535 = vperm.xlu0 %6534, %v931
        %v6536 = vpop.permute.xlu0 %6535
        %6538 = vset.pattern.permute.xlu0 7
        %6539 = vperm.xlu0 %6538, %v932
        %v6540 = vpop.permute.xlu0 %6539
        %6542 = vset.pattern.permute.xlu0 7
        %6543 = vperm.xlu0 %6542, %v933
        %v6544 = vpop.permute.xlu0 %6543
        %6546 = vset.pattern.permute.xlu0 7
        %6547 = vperm.xlu0 %6546, %v934
        %v6548 = vpop.permute.xlu0 %6547
        %6550 = vset.pattern.permute.xlu0 7
        %6551 = vperm.xlu0 %6550, %v935
        %v6552 = vpop.permute.xlu0 %6551
        %6554 = vset.pattern.permute.xlu0 7
        %6555 = vperm.xlu0 %6554, %v936
        %v6556 = vpop.permute.xlu0 %6555
        %6558 = vset.pattern.permute.xlu0 7
        %6559 = vperm.xlu0 %6558, %v937
        %v6560 = vpop.permute.xlu0 %6559
        %6562 = vset.pattern.permute.xlu0 7
        %6563 = vperm.xlu0 %6562, %v938
        %v6564 = vpop.permute.xlu0 %6563
        %6566 = vset.pattern.permute.xlu0 7
        %6567 = vperm.xlu0 %6566, %v939
        %v6568 = vpop.permute.xlu0 %6567
        %6570 = vset.pattern.permute.xlu0 7
        %6571 = vperm.xlu0 %6570, %v940
        %v6572 = vpop.permute.xlu0 %6571
        %v6574 = vmul.f32 %v814, %v6320
        %v6575 = vmul.f32 %v815, %v6324
        %v6576 = vmul.f32 %v816, %v6328
        %v6577 = vmul.f32 %v817, %v6332
        %v6578 = vmul.f32 %v818, %v6336
        %v6579 = vmul.f32 %v819, %v6340
        %v6580 = vmul.f32 %v820, %v6344
        %v6581 = vmul.f32 %v821, %v6348
        %v6582 = vmul.f32 %v822, %v6352
        %v6583 = vmul.f32 %v823, %v6356
        %v6584 = vmul.f32 %v824, %v6360
        %v6585 = vmul.f32 %v825, %v6364
        %v6586 = vmul.f32 %v826, %v6368
        %v6587 = vmul.f32 %v827, %v6372
        %v6588 = vmul.f32 %v828, %v6376
        %v6589 = vmul.f32 %v829, %v6380
        %v6590 = vmul.f32 %v830, %v6384
        %v6591 = vmul.f32 %v831, %v6388
        %v6592 = vmul.f32 %v832, %v6392
        %v6593 = vmul.f32 %v833, %v6396
        %v6594 = vmul.f32 %v834, %v6400
        %v6595 = vmul.f32 %v835, %v6404
        %v6596 = vmul.f32 %v836, %v6408
        %v6597 = vmul.f32 %v837, %v6412
        %v6598 = vmul.f32 %v838, %v6416
        %v6599 = vmul.f32 %v839, %v6420
        %v6600 = vmul.f32 %v840, %v6424
        %v6601 = vmul.f32 %v841, %v6428
        %v6602 = vmul.f32 %v842, %v6432
        %v6603 = vmul.f32 %v843, %v6436
        %v6604 = vmul.f32 %v844, %v6440
        %v6605 = vmul.f32 %v845, %v6444
        %v6606 = vmul.f32 %v846, %v6448
        %v6607 = vmul.f32 %v847, %v6452
        %v6608 = vmul.f32 %v848, %v6456
        %v6609 = vmul.f32 %v849, %v6460
        %v6610 = vmul.f32 %v850, %v6464
        %v6611 = vmul.f32 %v851, %v6468
        %v6612 = vmul.f32 %v852, %v6472
        %v6613 = vmul.f32 %v853, %v6476
        %v6614 = vmul.f32 %v854, %v6480
        %v6615 = vmul.f32 %v855, %v6484
        %v6616 = vmul.f32 %v856, %v6488
        %v6617 = vmul.f32 %v857, %v6492
        %v6618 = vmul.f32 %v858, %v6496
        %v6619 = vmul.f32 %v859, %v6500
        %v6620 = vmul.f32 %v860, %v6504
        %v6621 = vmul.f32 %v861, %v6508
        %v6622 = vmul.f32 %v862, %v6512
        %v6623 = vmul.f32 %v863, %v6516
        %v6624 = vmul.f32 %v864, %v6520
        %v6625 = vmul.f32 %v865, %v6524
        %v6626 = vmul.f32 %v866, %v6528
        %v6627 = vmul.f32 %v867, %v6532
        %v6628 = vmul.f32 %v868, %v6536
        %v6629 = vmul.f32 %v869, %v6540
        %v6630 = vmul.f32 %v870, %v6544
        %v6631 = vmul.f32 %v871, %v6548
        %v6632 = vmul.f32 %v872, %v6552
        %v6633 = vmul.f32 %v873, %v6556
        %v6634 = vmul.f32 %v874, %v6560
        %v6635 = vmul.f32 %v875, %v6564
        %v6636 = vmul.f32 %v876, %v6568
        %v6637 = vmul.f32 %v813, %v6572
        %s6638 = scalar_lea.vmem [#allocation5], 896
        %v6639 = vld [vmem:[%s6638] sm:$0xff]
        %v6640 = vld [vmem:[%s6638 + $0x8] sm:$0xff]
        %v6641 = vld [vmem:[%s6638 + $0x10] sm:$0xff]
        %v6642 = vld [vmem:[%s6638 + $0x18] sm:$0xff]
        %v6643 = vld [vmem:[%s6638 + $0x20] sm:$0xff]
        %v6644 = vld [vmem:[%s6638 + $0x28] sm:$0xff]
        %v6645 = vld [vmem:[%s6638 + $0x30] sm:$0xff]
        %v6646 = vld [vmem:[%s6638 + $0x38] sm:$0xff]
        %v6647 = vld [vmem:[%s6638 + $0x40] sm:$0xff]
        %v6648 = vld [vmem:[%s6638 + $0x48] sm:$0xff]
        %v6649 = vld [vmem:[%s6638 + $0x50] sm:$0xff]
        %v6650 = vld [vmem:[%s6638 + $0x58] sm:$0xff]
        %v6651 = vld [vmem:[%s6638 + $0x60] sm:$0xff]
        %v6652 = vld [vmem:[%s6638 + $0x68] sm:$0xff]
        %v6653 = vld [vmem:[%s6638 + $0x70] sm:$0xff]
        %v6654 = vld [vmem:[%s6638 + $0x78] sm:$0xff]
        %6655 = vmatprep.subr.mxu0 0.0
        %6656 = vmatpush1.msra.mxu0 %v6654
        %6657 = vmatprep.subr.mxu0 0.0
        %6658 = vmatpush1.msra.mxu0 %v6653
        %6659 = vmatprep.subr.mxu0 0.0
        %6660 = vmatpush1.msra.mxu0 %v6652
        %6661 = vmatprep.subr.mxu0 0.0
        %6662 = vmatpush1.msra.mxu0 %v6651
        %6663 = vmatprep.subr.mxu0 0.0
        %6664 = vmatpush1.msra.mxu0 %v6650
        %6665 = vmatprep.subr.mxu0 0.0
        %6666 = vmatpush1.msra.mxu0 %v6649
        %6667 = vmatprep.subr.mxu0 0.0
        %6668 = vmatpush1.msra.mxu0 %v6648
        %6669 = vmatprep.subr.mxu0 0.0
        %6670 = vmatpush1.msra.mxu0 %v6647
        %6671 = vmatprep.subr.mxu0 0.0
        %6672 = vmatpush1.msra.mxu0 %v6646
        %6673 = vmatprep.subr.mxu0 0.0
        %6674 = vmatpush1.msra.mxu0 %v6645
        %6675 = vmatprep.subr.mxu0 0.0
        %6676 = vmatpush1.msra.mxu0 %v6644
        %6677 = vmatprep.subr.mxu0 0.0
        %6678 = vmatpush1.msra.mxu0 %v6643
        %6679 = vmatprep.subr.mxu0 0.0
        %6680 = vmatpush1.msra.mxu0 %v6642
        %6681 = vmatprep.subr.mxu0 0.0
        %6682 = vmatpush1.msra.mxu0 %v6641
        %6683 = vmatprep.subr.mxu0 0.0
        %6684 = vmatpush1.msra.mxu0 %v6640
        %6685 = vmatprep.subr.mxu0 0.0
        %6686 = vmatpush1.msra.mxu0 %v6639
        %6687 = vmatprep.subr.mxu0 0.0
        %6688 = vmatpush2.msra.mxu0 0.0
        %6689 = vmatprep.subr.mxu0 0.0
        %6690 = vmatpush2.msra.mxu0 0.0
        %6691 = vmatprep.subr.mxu0 0.0
        %6692 = vmatpush2.msra.mxu0 0.0
        %6693 = vmatprep.subr.mxu0 0.0
        %6694 = vmatpush2.msra.mxu0 0.0
        %6695 = vmatprep.subr.mxu0 0.0
        %6696 = vmatpush2.msra.mxu0 0.0
        %6697 = vmatprep.subr.mxu0 0.0
        %6698 = vmatpush2.msra.mxu0 0.0
        %6699 = vmatprep.subr.mxu0 0.0
        %6700 = vmatpush2.msra.mxu0 0.0
        %6701 = vmatprep.subr.mxu0 0.0
        %6702 = vmatpush2.msra.mxu0 0.0
        %6703 = vmatprep.subr.mxu0 0.0
        %6704 = vmatpush2.msra.mxu0 0.0
        %6705 = vmatprep.subr.mxu0 0.0
        %6706 = vmatpush2.msra.mxu0 0.0
        %6707 = vmatprep.subr.mxu0 0.0
        %6708 = vmatpush2.msra.mxu0 0.0
        %6709 = vmatprep.subr.mxu0 0.0
        %6710 = vmatpush2.msra.mxu0 0.0
        %6711 = vmatprep.subr.mxu0 0.0
        %6712 = vmatpush2.msra.mxu0 0.0
        %6713 = vmatprep.subr.mxu0 0.0
        %6714 = vmatpush2.msra.mxu0 0.0
        %6715 = vmatprep.subr.mxu0 0.0
        %6716 = vmatpush2.msra.mxu0 0.0
        %6717 = vmatprep.subr.mxu0 0.0
        %6718 = vmatpush2.msra.mxu0 0.0
        %6719 = vmatprep.mubr.f32.mxu0 0.0
        %6720 = vmatmul.mubr.f32.gmra.mxu0 %v6574
        %v6721 = vpop.f32.mrf.mxu0
        %v6722 = vadd.f32 0.0, %v6721
        %v6723 = vpop.f32.mrf.mxu0
        %6724 = vmatprep.mubr.f32.mxu0 0.0
        %6725 = vmatmul.mubr.f32.gmra.mxu0 %v6575
        %v6726 = vpop.f32.mrf.mxu0
        %v6727 = vadd.f32 0.0, %v6726
        %v6728 = vpop.f32.mrf.mxu0
        %6729 = vmatprep.mubr.f32.mxu0 0.0
        %6730 = vmatmul.mubr.f32.gmra.mxu0 %v6576
        %v6731 = vpop.f32.mrf.mxu0
        %v6732 = vadd.f32 0.0, %v6731
        %v6733 = vpop.f32.mrf.mxu0
        %6734 = vmatprep.mubr.f32.mxu0 0.0
        %6735 = vmatmul.mubr.f32.gmra.mxu0 %v6577
        %v6736 = vpop.f32.mrf.mxu0
        %v6737 = vadd.f32 0.0, %v6736
        %v6738 = vpop.f32.mrf.mxu0
        %6739 = vmatprep.mubr.f32.mxu0 0.0
        %6740 = vmatmul.mubr.f32.gmra.mxu0 %v6578
        %v6741 = vpop.f32.mrf.mxu0
        %v6742 = vadd.f32 0.0, %v6741
        %v6743 = vpop.f32.mrf.mxu0
        %6744 = vmatprep.mubr.f32.mxu0 0.0
        %6745 = vmatmul.mubr.f32.gmra.mxu0 %v6579
        %v6746 = vpop.f32.mrf.mxu0
        %v6747 = vadd.f32 0.0, %v6746
        %v6748 = vpop.f32.mrf.mxu0
        %6749 = vmatprep.mubr.f32.mxu0 0.0
        %6750 = vmatmul.mubr.f32.gmra.mxu0 %v6580
        %v6751 = vpop.f32.mrf.mxu0
        %v6752 = vadd.f32 0.0, %v6751
        %v6753 = vpop.f32.mrf.mxu0
        %6754 = vmatprep.mubr.f32.mxu0 0.0
        %6755 = vmatmul.mubr.f32.gmra.mxu0 %v6581
        %v6756 = vpop.f32.mrf.mxu0
        %v6757 = vadd.f32 0.0, %v6756
        %v6758 = vpop.f32.mrf.mxu0
        %6759 = vmatprep.mubr.f32.mxu0 0.0
        %6760 = vmatmul.mubr.f32.gmra.mxu0 %v6582
        %v6761 = vpop.f32.mrf.mxu0
        %v6762 = vadd.f32 0.0, %v6761
        %v6763 = vpop.f32.mrf.mxu0
        %6764 = vmatprep.mubr.f32.mxu0 0.0
        %6765 = vmatmul.mubr.f32.gmra.mxu0 %v6583
        %v6766 = vpop.f32.mrf.mxu0
        %v6767 = vadd.f32 0.0, %v6766
        %v6768 = vpop.f32.mrf.mxu0
        %6769 = vmatprep.mubr.f32.mxu0 0.0
        %6770 = vmatmul.mubr.f32.gmra.mxu0 %v6584
        %v6771 = vpop.f32.mrf.mxu0
        %v6772 = vadd.f32 0.0, %v6771
        %v6773 = vpop.f32.mrf.mxu0
        %6774 = vmatprep.mubr.f32.mxu0 0.0
        %6775 = vmatmul.mubr.f32.gmra.mxu0 %v6585
        %v6776 = vpop.f32.mrf.mxu0
        %v6777 = vadd.f32 0.0, %v6776
        %v6778 = vpop.f32.mrf.mxu0
        %6779 = vmatprep.mubr.f32.mxu0 0.0
        %6780 = vmatmul.mubr.f32.gmra.mxu0 %v6586
        %v6781 = vpop.f32.mrf.mxu0
        %v6782 = vadd.f32 0.0, %v6781
        %v6783 = vpop.f32.mrf.mxu0
        %6784 = vmatprep.mubr.f32.mxu0 0.0
        %6785 = vmatmul.mubr.f32.gmra.mxu0 %v6587
        %v6786 = vpop.f32.mrf.mxu0
        %v6787 = vadd.f32 0.0, %v6786
        %v6788 = vpop.f32.mrf.mxu0
        %6789 = vmatprep.mubr.f32.mxu0 0.0
        %6790 = vmatmul.mubr.f32.gmra.mxu0 %v6588
        %v6791 = vpop.f32.mrf.mxu0
        %v6792 = vadd.f32 0.0, %v6791
        %v6793 = vpop.f32.mrf.mxu0
        %6794 = vmatprep.mubr.f32.mxu0 0.0
        %6795 = vmatmul.mubr.f32.gmra.mxu0 %v6589
        %v6796 = vpop.f32.mrf.mxu0
        %v6797 = vadd.f32 0.0, %v6796
        %v6798 = vpop.f32.mrf.mxu0
        %6799 = vmatprep.mubr.f32.mxu0 0.0
        %6800 = vmatmul.mubr.f32.gmra.mxu0 %v6590
        %v6801 = vpop.f32.mrf.mxu0
        %v6802 = vadd.f32 0.0, %v6801
        %v6803 = vpop.f32.mrf.mxu0
        %6804 = vmatprep.mubr.f32.mxu0 0.0
        %6805 = vmatmul.mubr.f32.gmra.mxu0 %v6591
        %v6806 = vpop.f32.mrf.mxu0
        %v6807 = vadd.f32 0.0, %v6806
        %v6808 = vpop.f32.mrf.mxu0
        %6809 = vmatprep.mubr.f32.mxu0 0.0
        %6810 = vmatmul.mubr.f32.gmra.mxu0 %v6592
        %v6811 = vpop.f32.mrf.mxu0
        %v6812 = vadd.f32 0.0, %v6811
        %v6813 = vpop.f32.mrf.mxu0
        %6814 = vmatprep.mubr.f32.mxu0 0.0
        %6815 = vmatmul.mubr.f32.gmra.mxu0 %v6593
        %v6816 = vpop.f32.mrf.mxu0
        %v6817 = vadd.f32 0.0, %v6816
        %v6818 = vpop.f32.mrf.mxu0
        %6819 = vmatprep.mubr.f32.mxu0 0.0
        %6820 = vmatmul.mubr.f32.gmra.mxu0 %v6594
        %v6821 = vpop.f32.mrf.mxu0
        %v6822 = vadd.f32 0.0, %v6821
        %v6823 = vpop.f32.mrf.mxu0
        %6824 = vmatprep.mubr.f32.mxu0 0.0
        %6825 = vmatmul.mubr.f32.gmra.mxu0 %v6595
        %v6826 = vpop.f32.mrf.mxu0
        %v6827 = vadd.f32 0.0, %v6826
        %v6828 = vpop.f32.mrf.mxu0
        %6829 = vmatprep.mubr.f32.mxu0 0.0
        %6830 = vmatmul.mubr.f32.gmra.mxu0 %v6596
        %v6831 = vpop.f32.mrf.mxu0
        %v6832 = vadd.f32 0.0, %v6831
        %v6833 = vpop.f32.mrf.mxu0
        %6834 = vmatprep.mubr.f32.mxu0 0.0
        %6835 = vmatmul.mubr.f32.gmra.mxu0 %v6597
        %v6836 = vpop.f32.mrf.mxu0
        %v6837 = vadd.f32 0.0, %v6836
        %v6838 = vpop.f32.mrf.mxu0
        %6839 = vmatprep.mubr.f32.mxu0 0.0
        %6840 = vmatmul.mubr.f32.gmra.mxu0 %v6598
        %v6841 = vpop.f32.mrf.mxu0
        %v6842 = vadd.f32 0.0, %v6841
        %v6843 = vpop.f32.mrf.mxu0
        %6844 = vmatprep.mubr.f32.mxu0 0.0
        %6845 = vmatmul.mubr.f32.gmra.mxu0 %v6599
        %v6846 = vpop.f32.mrf.mxu0
        %v6847 = vadd.f32 0.0, %v6846
        %v6848 = vpop.f32.mrf.mxu0
        %6849 = vmatprep.mubr.f32.mxu0 0.0
        %6850 = vmatmul.mubr.f32.gmra.mxu0 %v6600
        %v6851 = vpop.f32.mrf.mxu0
        %v6852 = vadd.f32 0.0, %v6851
        %v6853 = vpop.f32.mrf.mxu0
        %6854 = vmatprep.mubr.f32.mxu0 0.0
        %6855 = vmatmul.mubr.f32.gmra.mxu0 %v6601
        %v6856 = vpop.f32.mrf.mxu0
        %v6857 = vadd.f32 0.0, %v6856
        %v6858 = vpop.f32.mrf.mxu0
        %6859 = vmatprep.mubr.f32.mxu0 0.0
        %6860 = vmatmul.mubr.f32.gmra.mxu0 %v6602
        %v6861 = vpop.f32.mrf.mxu0
        %v6862 = vadd.f32 0.0, %v6861
        %v6863 = vpop.f32.mrf.mxu0
        %6864 = vmatprep.mubr.f32.mxu0 0.0
        %6865 = vmatmul.mubr.f32.gmra.mxu0 %v6603
        %v6866 = vpop.f32.mrf.mxu0
        %v6867 = vadd.f32 0.0, %v6866
        %v6868 = vpop.f32.mrf.mxu0
        %6869 = vmatprep.mubr.f32.mxu0 0.0
        %6870 = vmatmul.mubr.f32.gmra.mxu0 %v6604
        %v6871 = vpop.f32.mrf.mxu0
        %v6872 = vadd.f32 0.0, %v6871
        %v6873 = vpop.f32.mrf.mxu0
        %6874 = vmatprep.mubr.f32.mxu0 0.0
        %6875 = vmatmul.mubr.f32.gmra.mxu0 %v6605
        %v6876 = vpop.f32.mrf.mxu0
        %v6877 = vadd.f32 0.0, %v6876
        %v6878 = vpop.f32.mrf.mxu0
        %6879 = vmatprep.mubr.f32.mxu0 0.0
        %6880 = vmatmul.mubr.f32.gmra.mxu0 %v6606
        %v6881 = vpop.f32.mrf.mxu0
        %v6882 = vadd.f32 0.0, %v6881
        %v6883 = vpop.f32.mrf.mxu0
        %6884 = vmatprep.mubr.f32.mxu0 0.0
        %6885 = vmatmul.mubr.f32.gmra.mxu0 %v6607
        %v6886 = vpop.f32.mrf.mxu0
        %v6887 = vadd.f32 0.0, %v6886
        %v6888 = vpop.f32.mrf.mxu0
        %6889 = vmatprep.mubr.f32.mxu0 0.0
        %6890 = vmatmul.mubr.f32.gmra.mxu0 %v6608
        %v6891 = vpop.f32.mrf.mxu0
        %v6892 = vadd.f32 0.0, %v6891
        %v6893 = vpop.f32.mrf.mxu0
        %6894 = vmatprep.mubr.f32.mxu0 0.0
        %6895 = vmatmul.mubr.f32.gmra.mxu0 %v6609
        %v6896 = vpop.f32.mrf.mxu0
        %v6897 = vadd.f32 0.0, %v6896
        %v6898 = vpop.f32.mrf.mxu0
        %6899 = vmatprep.mubr.f32.mxu0 0.0
        %6900 = vmatmul.mubr.f32.gmra.mxu0 %v6610
        %v6901 = vpop.f32.mrf.mxu0
        %v6902 = vadd.f32 0.0, %v6901
        %v6903 = vpop.f32.mrf.mxu0
        %6904 = vmatprep.mubr.f32.mxu0 0.0
        %6905 = vmatmul.mubr.f32.gmra.mxu0 %v6611
        %v6906 = vpop.f32.mrf.mxu0
        %v6907 = vadd.f32 0.0, %v6906
        %v6908 = vpop.f32.mrf.mxu0
        %6909 = vmatprep.mubr.f32.mxu0 0.0
        %6910 = vmatmul.mubr.f32.gmra.mxu0 %v6612
        %v6911 = vpop.f32.mrf.mxu0
        %v6912 = vadd.f32 0.0, %v6911
        %v6913 = vpop.f32.mrf.mxu0
        %6914 = vmatprep.mubr.f32.mxu0 0.0
        %6915 = vmatmul.mubr.f32.gmra.mxu0 %v6613
        %v6916 = vpop.f32.mrf.mxu0
        %v6917 = vadd.f32 0.0, %v6916
        %v6918 = vpop.f32.mrf.mxu0
        %6919 = vmatprep.mubr.f32.mxu0 0.0
        %6920 = vmatmul.mubr.f32.gmra.mxu0 %v6614
        %v6921 = vpop.f32.mrf.mxu0
        %v6922 = vadd.f32 0.0, %v6921
        %v6923 = vpop.f32.mrf.mxu0
        %6924 = vmatprep.mubr.f32.mxu0 0.0
        %6925 = vmatmul.mubr.f32.gmra.mxu0 %v6615
        %v6926 = vpop.f32.mrf.mxu0
        %v6927 = vadd.f32 0.0, %v6926
        %v6928 = vpop.f32.mrf.mxu0
        %6929 = vmatprep.mubr.f32.mxu0 0.0
        %6930 = vmatmul.mubr.f32.gmra.mxu0 %v6616
        %v6931 = vpop.f32.mrf.mxu0
        %v6932 = vadd.f32 0.0, %v6931
        %v6933 = vpop.f32.mrf.mxu0
        %6934 = vmatprep.mubr.f32.mxu0 0.0
        %6935 = vmatmul.mubr.f32.gmra.mxu0 %v6617
        %v6936 = vpop.f32.mrf.mxu0
        %v6937 = vadd.f32 0.0, %v6936
        %v6938 = vpop.f32.mrf.mxu0
        %6939 = vmatprep.mubr.f32.mxu0 0.0
        %6940 = vmatmul.mubr.f32.gmra.mxu0 %v6618
        %v6941 = vpop.f32.mrf.mxu0
        %v6942 = vadd.f32 0.0, %v6941
        %v6943 = vpop.f32.mrf.mxu0
        %6944 = vmatprep.mubr.f32.mxu0 0.0
        %6945 = vmatmul.mubr.f32.gmra.mxu0 %v6619
        %v6946 = vpop.f32.mrf.mxu0
        %v6947 = vadd.f32 0.0, %v6946
        %v6948 = vpop.f32.mrf.mxu0
        %6949 = vmatprep.mubr.f32.mxu0 0.0
        %6950 = vmatmul.mubr.f32.gmra.mxu0 %v6620
        %v6951 = vpop.f32.mrf.mxu0
        %v6952 = vadd.f32 0.0, %v6951
        %v6953 = vpop.f32.mrf.mxu0
        %6954 = vmatprep.mubr.f32.mxu0 0.0
        %6955 = vmatmul.mubr.f32.gmra.mxu0 %v6621
        %v6956 = vpop.f32.mrf.mxu0
        %v6957 = vadd.f32 0.0, %v6956
        %v6958 = vpop.f32.mrf.mxu0
        %6959 = vmatprep.mubr.f32.mxu0 0.0
        %6960 = vmatmul.mubr.f32.gmra.mxu0 %v6622
        %v6961 = vpop.f32.mrf.mxu0
        %v6962 = vadd.f32 0.0, %v6961
        %v6963 = vpop.f32.mrf.mxu0
        %6964 = vmatprep.mubr.f32.mxu0 0.0
        %6965 = vmatmul.mubr.f32.gmra.mxu0 %v6623
        %v6966 = vpop.f32.mrf.mxu0
        %v6967 = vadd.f32 0.0, %v6966
        %v6968 = vpop.f32.mrf.mxu0
        %6969 = vmatprep.mubr.f32.mxu0 0.0
        %6970 = vmatmul.mubr.f32.gmra.mxu0 %v6624
        %v6971 = vpop.f32.mrf.mxu0
        %v6972 = vadd.f32 0.0, %v6971
        %v6973 = vpop.f32.mrf.mxu0
        %6974 = vmatprep.mubr.f32.mxu0 0.0
        %6975 = vmatmul.mubr.f32.gmra.mxu0 %v6625
        %v6976 = vpop.f32.mrf.mxu0
        %v6977 = vadd.f32 0.0, %v6976
        %v6978 = vpop.f32.mrf.mxu0
        %6979 = vmatprep.mubr.f32.mxu0 0.0
        %6980 = vmatmul.mubr.f32.gmra.mxu0 %v6626
        %v6981 = vpop.f32.mrf.mxu0
        %v6982 = vadd.f32 0.0, %v6981
        %v6983 = vpop.f32.mrf.mxu0
        %6984 = vmatprep.mubr.f32.mxu0 0.0
        %6985 = vmatmul.mubr.f32.gmra.mxu0 %v6627
        %v6986 = vpop.f32.mrf.mxu0
        %v6987 = vadd.f32 0.0, %v6986
        %v6988 = vpop.f32.mrf.mxu0
        %6989 = vmatprep.mubr.f32.mxu0 0.0
        %6990 = vmatmul.mubr.f32.gmra.mxu0 %v6628
        %v6991 = vpop.f32.mrf.mxu0
        %v6992 = vadd.f32 0.0, %v6991
        %v6993 = vpop.f32.mrf.mxu0
        %6994 = vmatprep.mubr.f32.mxu0 0.0
        %6995 = vmatmul.mubr.f32.gmra.mxu0 %v6629
        %v6996 = vpop.f32.mrf.mxu0
        %v6997 = vadd.f32 0.0, %v6996
        %v6998 = vpop.f32.mrf.mxu0
        %6999 = vmatprep.mubr.f32.mxu0 0.0
        %7000 = vmatmul.mubr.f32.gmra.mxu0 %v6630
        %v7001 = vpop.f32.mrf.mxu0
        %v7002 = vadd.f32 0.0, %v7001
        %v7003 = vpop.f32.mrf.mxu0
        %7004 = vmatprep.mubr.f32.mxu0 0.0
        %7005 = vmatmul.mubr.f32.gmra.mxu0 %v6631
        %v7006 = vpop.f32.mrf.mxu0
        %v7007 = vadd.f32 0.0, %v7006
        %v7008 = vpop.f32.mrf.mxu0
        %7009 = vmatprep.mubr.f32.mxu0 0.0
        %7010 = vmatmul.mubr.f32.gmra.mxu0 %v6632
        %v7011 = vpop.f32.mrf.mxu0
        %v7012 = vadd.f32 0.0, %v7011
        %v7013 = vpop.f32.mrf.mxu0
        %7014 = vmatprep.mubr.f32.mxu0 0.0
        %7015 = vmatmul.mubr.f32.gmra.mxu0 %v6633
        %v7016 = vpop.f32.mrf.mxu0
        %v7017 = vadd.f32 0.0, %v7016
        %v7018 = vpop.f32.mrf.mxu0
        %7019 = vmatprep.mubr.f32.mxu0 0.0
        %7020 = vmatmul.mubr.f32.gmra.mxu0 %v6634
        %v7021 = vpop.f32.mrf.mxu0
        %v7022 = vadd.f32 0.0, %v7021
        %v7023 = vpop.f32.mrf.mxu0
        %7024 = vmatprep.mubr.f32.mxu0 0.0
        %7025 = vmatmul.mubr.f32.gmra.mxu0 %v6635
        %v7026 = vpop.f32.mrf.mxu0
        %v7027 = vadd.f32 0.0, %v7026
        %v7028 = vpop.f32.mrf.mxu0
        %7029 = vmatprep.mubr.f32.mxu0 0.0
        %7030 = vmatmul.mubr.f32.gmra.mxu0 %v6636
        %v7031 = vpop.f32.mrf.mxu0
        %v7032 = vadd.f32 0.0, %v7031
        %v7033 = vpop.f32.mrf.mxu0
        %7034 = vmatprep.mubr.f32.mxu0 0.0
        %7035 = vmatmul.mubr.f32.gmra.mxu0 %v6637
        %v7036 = vpop.f32.mrf.mxu0
        %v7037 = vadd.f32 0.0, %v7036
        %v7038 = vpop.f32.mrf.mxu0
        %7039 = vdwg.mxu0
        %v7040 = vadd.f32 %v6254, %v6722
        %v7041 = vadd.f32 %v6255, %v6727
        %v7042 = vadd.f32 %v6256, %v6732
        %v7043 = vadd.f32 %v6257, %v6737
        %v7044 = vadd.f32 %v6258, %v6742
        %v7045 = vadd.f32 %v6259, %v6747
        %v7046 = vadd.f32 %v6260, %v6752
        %v7047 = vadd.f32 %v6261, %v6757
        %v7048 = vadd.f32 %v6262, %v6762
        %v7049 = vadd.f32 %v6263, %v6767
        %v7050 = vadd.f32 %v6264, %v6772
        %v7051 = vadd.f32 %v6265, %v6777
        %v7052 = vadd.f32 %v6266, %v6782
        %v7053 = vadd.f32 %v6267, %v6787
        %v7054 = vadd.f32 %v6268, %v6792
        %v7055 = vadd.f32 %v6269, %v6797
        %v7056 = vadd.f32 %v6270, %v6802
        %v7057 = vadd.f32 %v6271, %v6807
        %v7058 = vadd.f32 %v6272, %v6812
        %v7059 = vadd.f32 %v6273, %v6817
        %v7060 = vadd.f32 %v6274, %v6822
        %v7061 = vadd.f32 %v6275, %v6827
        %v7062 = vadd.f32 %v6276, %v6832
        %v7063 = vadd.f32 %v6277, %v6837
        %v7064 = vadd.f32 %v6278, %v6842
        %v7065 = vadd.f32 %v6279, %v6847
        %v7066 = vadd.f32 %v6280, %v6852
        %v7067 = vadd.f32 %v6281, %v6857
        %v7068 = vadd.f32 %v6282, %v6862
        %v7069 = vadd.f32 %v6283, %v6867
        %v7070 = vadd.f32 %v6284, %v6872
        %v7071 = vadd.f32 %v6285, %v6877
        %v7072 = vadd.f32 %v6286, %v6882
        %v7073 = vadd.f32 %v6287, %v6887
        %v7074 = vadd.f32 %v6288, %v6892
        %v7075 = vadd.f32 %v6289, %v6897
        %v7076 = vadd.f32 %v6290, %v6902
        %v7077 = vadd.f32 %v6291, %v6907
        %v7078 = vadd.f32 %v6292, %v6912
        %v7079 = vadd.f32 %v6293, %v6917
        %v7080 = vadd.f32 %v6294, %v6922
        %v7081 = vadd.f32 %v6295, %v6927
        %v7082 = vadd.f32 %v6296, %v6932
        %v7083 = vadd.f32 %v6297, %v6937
        %v7084 = vadd.f32 %v6298, %v6942
        %v7085 = vadd.f32 %v6299, %v6947
        %v7086 = vadd.f32 %v6300, %v6952
        %v7087 = vadd.f32 %v6301, %v6957
        %v7088 = vadd.f32 %v6302, %v6962
        %v7089 = vadd.f32 %v6303, %v6967
        %v7090 = vadd.f32 %v6304, %v6972
        %v7091 = vadd.f32 %v6305, %v6977
        %v7092 = vadd.f32 %v6306, %v6982
        %v7093 = vadd.f32 %v6307, %v6987
        %v7094 = vadd.f32 %v6308, %v6992
        %v7095 = vadd.f32 %v6309, %v6997
        %v7096 = vadd.f32 %v6310, %v7002
        %v7097 = vadd.f32 %v6311, %v7007
        %v7098 = vadd.f32 %v6312, %v7012
        %v7099 = vadd.f32 %v6313, %v7017
        %v7100 = vadd.f32 %v6314, %v7022
        %v7101 = vadd.f32 %v6315, %v7027
        %v7102 = vadd.f32 %v6316, %v7032
        %v7103 = vadd.f32 %v6317, %v7037
        %7104 = vset.pattern.permute.xlu0 8
        %7105 = vperm.xlu0 %7104, %v877
        %v7106 = vpop.permute.xlu0 %7105
        %7108 = vset.pattern.permute.xlu0 8
        %7109 = vperm.xlu0 %7108, %v878
        %v7110 = vpop.permute.xlu0 %7109
        %7112 = vset.pattern.permute.xlu0 8
        %7113 = vperm.xlu0 %7112, %v879
        %v7114 = vpop.permute.xlu0 %7113
        %7116 = vset.pattern.permute.xlu0 8
        %7117 = vperm.xlu0 %7116, %v880
        %v7118 = vpop.permute.xlu0 %7117
        %7120 = vset.pattern.permute.xlu0 8
        %7121 = vperm.xlu0 %7120, %v881
        %v7122 = vpop.permute.xlu0 %7121
        %7124 = vset.pattern.permute.xlu0 8
        %7125 = vperm.xlu0 %7124, %v882
        %v7126 = vpop.permute.xlu0 %7125
        %7128 = vset.pattern.permute.xlu0 8
        %7129 = vperm.xlu0 %7128, %v883
        %v7130 = vpop.permute.xlu0 %7129
        %7132 = vset.pattern.permute.xlu0 8
        %7133 = vperm.xlu0 %7132, %v884
        %v7134 = vpop.permute.xlu0 %7133
        %7136 = vset.pattern.permute.xlu0 8
        %7137 = vperm.xlu0 %7136, %v885
        %v7138 = vpop.permute.xlu0 %7137
        %7140 = vset.pattern.permute.xlu0 8
        %7141 = vperm.xlu0 %7140, %v886
        %v7142 = vpop.permute.xlu0 %7141
        %7144 = vset.pattern.permute.xlu0 8
        %7145 = vperm.xlu0 %7144, %v887
        %v7146 = vpop.permute.xlu0 %7145
        %7148 = vset.pattern.permute.xlu0 8
        %7149 = vperm.xlu0 %7148, %v888
        %v7150 = vpop.permute.xlu0 %7149
        %7152 = vset.pattern.permute.xlu0 8
        %7153 = vperm.xlu0 %7152, %v889
        %v7154 = vpop.permute.xlu0 %7153
        %7156 = vset.pattern.permute.xlu0 8
        %7157 = vperm.xlu0 %7156, %v890
        %v7158 = vpop.permute.xlu0 %7157
        %7160 = vset.pattern.permute.xlu0 8
        %7161 = vperm.xlu0 %7160, %v891
        %v7162 = vpop.permute.xlu0 %7161
        %7164 = vset.pattern.permute.xlu0 8
        %7165 = vperm.xlu0 %7164, %v892
        %v7166 = vpop.permute.xlu0 %7165
        %7168 = vset.pattern.permute.xlu0 8
        %7169 = vperm.xlu0 %7168, %v893
        %v7170 = vpop.permute.xlu0 %7169
        %7172 = vset.pattern.permute.xlu0 8
        %7173 = vperm.xlu0 %7172, %v894
        %v7174 = vpop.permute.xlu0 %7173
        %7176 = vset.pattern.permute.xlu0 8
        %7177 = vperm.xlu0 %7176, %v895
        %v7178 = vpop.permute.xlu0 %7177
        %7180 = vset.pattern.permute.xlu0 8
        %7181 = vperm.xlu0 %7180, %v896
        %v7182 = vpop.permute.xlu0 %7181
        %7184 = vset.pattern.permute.xlu0 8
        %7185 = vperm.xlu0 %7184, %v897
        %v7186 = vpop.permute.xlu0 %7185
        %7188 = vset.pattern.permute.xlu0 8
        %7189 = vperm.xlu0 %7188, %v898
        %v7190 = vpop.permute.xlu0 %7189
        %7192 = vset.pattern.permute.xlu0 8
        %7193 = vperm.xlu0 %7192, %v899
        %v7194 = vpop.permute.xlu0 %7193
        %7196 = vset.pattern.permute.xlu0 8
        %7197 = vperm.xlu0 %7196, %v900
        %v7198 = vpop.permute.xlu0 %7197
        %7200 = vset.pattern.permute.xlu0 8
        %7201 = vperm.xlu0 %7200, %v901
        %v7202 = vpop.permute.xlu0 %7201
        %7204 = vset.pattern.permute.xlu0 8
        %7205 = vperm.xlu0 %7204, %v902
        %v7206 = vpop.permute.xlu0 %7205
        %7208 = vset.pattern.permute.xlu0 8
        %7209 = vperm.xlu0 %7208, %v903
        %v7210 = vpop.permute.xlu0 %7209
        %7212 = vset.pattern.permute.xlu0 8
        %7213 = vperm.xlu0 %7212, %v904
        %v7214 = vpop.permute.xlu0 %7213
        %7216 = vset.pattern.permute.xlu0 8
        %7217 = vperm.xlu0 %7216, %v905
        %v7218 = vpop.permute.xlu0 %7217
        %7220 = vset.pattern.permute.xlu0 8
        %7221 = vperm.xlu0 %7220, %v906
        %v7222 = vpop.permute.xlu0 %7221
        %7224 = vset.pattern.permute.xlu0 8
        %7225 = vperm.xlu0 %7224, %v907
        %v7226 = vpop.permute.xlu0 %7225
        %7228 = vset.pattern.permute.xlu0 8
        %7229 = vperm.xlu0 %7228, %v908
        %v7230 = vpop.permute.xlu0 %7229
        %7232 = vset.pattern.permute.xlu0 8
        %7233 = vperm.xlu0 %7232, %v909
        %v7234 = vpop.permute.xlu0 %7233
        %7236 = vset.pattern.permute.xlu0 8
        %7237 = vperm.xlu0 %7236, %v910
        %v7238 = vpop.permute.xlu0 %7237
        %7240 = vset.pattern.permute.xlu0 8
        %7241 = vperm.xlu0 %7240, %v911
        %v7242 = vpop.permute.xlu0 %7241
        %7244 = vset.pattern.permute.xlu0 8
        %7245 = vperm.xlu0 %7244, %v912
        %v7246 = vpop.permute.xlu0 %7245
        %7248 = vset.pattern.permute.xlu0 8
        %7249 = vperm.xlu0 %7248, %v913
        %v7250 = vpop.permute.xlu0 %7249
        %7252 = vset.pattern.permute.xlu0 8
        %7253 = vperm.xlu0 %7252, %v914
        %v7254 = vpop.permute.xlu0 %7253
        %7256 = vset.pattern.permute.xlu0 8
        %7257 = vperm.xlu0 %7256, %v915
        %v7258 = vpop.permute.xlu0 %7257
        %7260 = vset.pattern.permute.xlu0 8
        %7261 = vperm.xlu0 %7260, %v916
        %v7262 = vpop.permute.xlu0 %7261
        %7264 = vset.pattern.permute.xlu0 8
        %7265 = vperm.xlu0 %7264, %v917
        %v7266 = vpop.permute.xlu0 %7265
        %7268 = vset.pattern.permute.xlu0 8
        %7269 = vperm.xlu0 %7268, %v918
        %v7270 = vpop.permute.xlu0 %7269
        %7272 = vset.pattern.permute.xlu0 8
        %7273 = vperm.xlu0 %7272, %v919
        %v7274 = vpop.permute.xlu0 %7273
        %7276 = vset.pattern.permute.xlu0 8
        %7277 = vperm.xlu0 %7276, %v920
        %v7278 = vpop.permute.xlu0 %7277
        %7280 = vset.pattern.permute.xlu0 8
        %7281 = vperm.xlu0 %7280, %v921
        %v7282 = vpop.permute.xlu0 %7281
        %7284 = vset.pattern.permute.xlu0 8
        %7285 = vperm.xlu0 %7284, %v922
        %v7286 = vpop.permute.xlu0 %7285
        %7288 = vset.pattern.permute.xlu0 8
        %7289 = vperm.xlu0 %7288, %v923
        %v7290 = vpop.permute.xlu0 %7289
        %7292 = vset.pattern.permute.xlu0 8
        %7293 = vperm.xlu0 %7292, %v924
        %v7294 = vpop.permute.xlu0 %7293
        %7296 = vset.pattern.permute.xlu0 8
        %7297 = vperm.xlu0 %7296, %v925
        %v7298 = vpop.permute.xlu0 %7297
        %7300 = vset.pattern.permute.xlu0 8
        %7301 = vperm.xlu0 %7300, %v926
        %v7302 = vpop.permute.xlu0 %7301
        %7304 = vset.pattern.permute.xlu0 8
        %7305 = vperm.xlu0 %7304, %v927
        %v7306 = vpop.permute.xlu0 %7305
        %7308 = vset.pattern.permute.xlu0 8
        %7309 = vperm.xlu0 %7308, %v928
        %v7310 = vpop.permute.xlu0 %7309
        %7312 = vset.pattern.permute.xlu0 8
        %7313 = vperm.xlu0 %7312, %v929
        %v7314 = vpop.permute.xlu0 %7313
        %7316 = vset.pattern.permute.xlu0 8
        %7317 = vperm.xlu0 %7316, %v930
        %v7318 = vpop.permute.xlu0 %7317
        %7320 = vset.pattern.permute.xlu0 8
        %7321 = vperm.xlu0 %7320, %v931
        %v7322 = vpop.permute.xlu0 %7321
        %7324 = vset.pattern.permute.xlu0 8
        %7325 = vperm.xlu0 %7324, %v932
        %v7326 = vpop.permute.xlu0 %7325
        %7328 = vset.pattern.permute.xlu0 8
        %7329 = vperm.xlu0 %7328, %v933
        %v7330 = vpop.permute.xlu0 %7329
        %7332 = vset.pattern.permute.xlu0 8
        %7333 = vperm.xlu0 %7332, %v934
        %v7334 = vpop.permute.xlu0 %7333
        %7336 = vset.pattern.permute.xlu0 8
        %7337 = vperm.xlu0 %7336, %v935
        %v7338 = vpop.permute.xlu0 %7337
        %7340 = vset.pattern.permute.xlu0 8
        %7341 = vperm.xlu0 %7340, %v936
        %v7342 = vpop.permute.xlu0 %7341
        %7344 = vset.pattern.permute.xlu0 8
        %7345 = vperm.xlu0 %7344, %v937
        %v7346 = vpop.permute.xlu0 %7345
        %7348 = vset.pattern.permute.xlu0 8
        %7349 = vperm.xlu0 %7348, %v938
        %v7350 = vpop.permute.xlu0 %7349
        %7352 = vset.pattern.permute.xlu0 8
        %7353 = vperm.xlu0 %7352, %v939
        %v7354 = vpop.permute.xlu0 %7353
        %7356 = vset.pattern.permute.xlu0 8
        %7357 = vperm.xlu0 %7356, %v940
        %v7358 = vpop.permute.xlu0 %7357
        %v7360 = vmul.f32 %v2705, %v7106
        %v7361 = vmul.f32 %v2704, %v7110
        %v7362 = vmul.f32 %v2703, %v7114
        %v7363 = vmul.f32 %v2702, %v7118
        %v7364 = vmul.f32 %v2701, %v7122
        %v7365 = vmul.f32 %v2700, %v7126
        %v7366 = vmul.f32 %v2699, %v7130
        %v7367 = vmul.f32 %v2698, %v7134
        %v7368 = vmul.f32 %v2697, %v7138
        %v7369 = vmul.f32 %v2696, %v7142
        %v7370 = vmul.f32 %v2695, %v7146
        %v7371 = vmul.f32 %v2694, %v7150
        %v7372 = vmul.f32 %v2693, %v7154
        %v7373 = vmul.f32 %v2692, %v7158
        %v7374 = vmul.f32 %v2691, %v7162
        %v7375 = vmul.f32 %v2690, %v7166
        %v7376 = vmul.f32 %v2689, %v7170
        %v7377 = vmul.f32 %v2688, %v7174
        %v7378 = vmul.f32 %v2687, %v7178
        %v7379 = vmul.f32 %v2686, %v7182
        %v7380 = vmul.f32 %v2685, %v7186
        %v7381 = vmul.f32 %v2684, %v7190
        %v7382 = vmul.f32 %v2683, %v7194
        %v7383 = vmul.f32 %v2682, %v7198
        %v7384 = vmul.f32 %v2681, %v7202
        %v7385 = vmul.f32 %v2680, %v7206
        %v7386 = vmul.f32 %v2679, %v7210
        %v7387 = vmul.f32 %v2678, %v7214
        %v7388 = vmul.f32 %v2677, %v7218
        %v7389 = vmul.f32 %v2676, %v7222
        %v7390 = vmul.f32 %v2675, %v7226
        %v7391 = vmul.f32 %v2674, %v7230
        %v7392 = vmul.f32 %v2673, %v7234
        %v7393 = vmul.f32 %v2672, %v7238
        %v7394 = vmul.f32 %v2671, %v7242
        %v7395 = vmul.f32 %v2670, %v7246
        %v7396 = vmul.f32 %v2669, %v7250
        %v7397 = vmul.f32 %v2668, %v7254
        %v7398 = vmul.f32 %v2667, %v7258
        %v7399 = vmul.f32 %v2666, %v7262
        %v7400 = vmul.f32 %v2665, %v7266
        %v7401 = vmul.f32 %v2664, %v7270
        %v7402 = vmul.f32 %v2663, %v7274
        %v7403 = vmul.f32 %v2662, %v7278
        %v7404 = vmul.f32 %v2661, %v7282
        %v7405 = vmul.f32 %v2660, %v7286
        %v7406 = vmul.f32 %v2659, %v7290
        %v7407 = vmul.f32 %v2658, %v7294
        %v7408 = vmul.f32 %v2657, %v7298
        %v7409 = vmul.f32 %v2656, %v7302
        %v7410 = vmul.f32 %v2655, %v7306
        %v7411 = vmul.f32 %v2654, %v7310
        %v7412 = vmul.f32 %v2653, %v7314
        %v7413 = vmul.f32 %v2652, %v7318
        %v7414 = vmul.f32 %v2651, %v7322
        %v7415 = vmul.f32 %v2650, %v7326
        %v7416 = vmul.f32 %v2649, %v7330
        %v7417 = vmul.f32 %v2648, %v7334
        %v7418 = vmul.f32 %v2647, %v7338
        %v7419 = vmul.f32 %v2646, %v7342
        %v7420 = vmul.f32 %v2645, %v7346
        %v7421 = vmul.f32 %v2644, %v7350
        %v7422 = vmul.f32 %v2707, %v7354
        %v7423 = vmul.f32 %v2706, %v7358
        %s7424 = scalar_lea.vmem [#allocation5], 1024
        %v7425 = vld [vmem:[%s7424] sm:$0xff]
        %v7426 = vld [vmem:[%s7424 + $0x8] sm:$0xff]
        %v7427 = vld [vmem:[%s7424 + $0x10] sm:$0xff]
        %v7428 = vld [vmem:[%s7424 + $0x18] sm:$0xff]
        %v7429 = vld [vmem:[%s7424 + $0x20] sm:$0xff]
        %v7430 = vld [vmem:[%s7424 + $0x28] sm:$0xff]
        %v7431 = vld [vmem:[%s7424 + $0x30] sm:$0xff]
        %v7432 = vld [vmem:[%s7424 + $0x38] sm:$0xff]
        %v7433 = vld [vmem:[%s7424 + $0x40] sm:$0xff]
        %v7434 = vld [vmem:[%s7424 + $0x48] sm:$0xff]
        %v7435 = vld [vmem:[%s7424 + $0x50] sm:$0xff]
        %v7436 = vld [vmem:[%s7424 + $0x58] sm:$0xff]
        %v7437 = vld [vmem:[%s7424 + $0x60] sm:$0xff]
        %v7438 = vld [vmem:[%s7424 + $0x68] sm:$0xff]
        %v7439 = vld [vmem:[%s7424 + $0x70] sm:$0xff]
        %v7440 = vld [vmem:[%s7424 + $0x78] sm:$0xff]
        %7441 = vmatprep.subr.mxu0 0.0
        %7442 = vmatpush1.msra.mxu0 %v7440
        %7443 = vmatprep.subr.mxu0 0.0
        %7444 = vmatpush1.msra.mxu0 %v7439
        %7445 = vmatprep.subr.mxu0 0.0
        %7446 = vmatpush1.msra.mxu0 %v7438
        %7447 = vmatprep.subr.mxu0 0.0
        %7448 = vmatpush1.msra.mxu0 %v7437
        %7449 = vmatprep.subr.mxu0 0.0
        %7450 = vmatpush1.msra.mxu0 %v7436
        %7451 = vmatprep.subr.mxu0 0.0
        %7452 = vmatpush1.msra.mxu0 %v7435
        %7453 = vmatprep.subr.mxu0 0.0
        %7454 = vmatpush1.msra.mxu0 %v7434
        %7455 = vmatprep.subr.mxu0 0.0
        %7456 = vmatpush1.msra.mxu0 %v7433
        %7457 = vmatprep.subr.mxu0 0.0
        %7458 = vmatpush1.msra.mxu0 %v7432
        %7459 = vmatprep.subr.mxu0 0.0
        %7460 = vmatpush1.msra.mxu0 %v7431
        %7461 = vmatprep.subr.mxu0 0.0
        %7462 = vmatpush1.msra.mxu0 %v7430
        %7463 = vmatprep.subr.mxu0 0.0
        %7464 = vmatpush1.msra.mxu0 %v7429
        %7465 = vmatprep.subr.mxu0 0.0
        %7466 = vmatpush1.msra.mxu0 %v7428
        %7467 = vmatprep.subr.mxu0 0.0
        %7468 = vmatpush1.msra.mxu0 %v7427
        %7469 = vmatprep.subr.mxu0 0.0
        %7470 = vmatpush1.msra.mxu0 %v7426
        %7471 = vmatprep.subr.mxu0 0.0
        %7472 = vmatpush1.msra.mxu0 %v7425
        %7473 = vmatprep.subr.mxu0 0.0
        %7474 = vmatpush2.msra.mxu0 0.0
        %7475 = vmatprep.subr.mxu0 0.0
        %7476 = vmatpush2.msra.mxu0 0.0
        %7477 = vmatprep.subr.mxu0 0.0
        %7478 = vmatpush2.msra.mxu0 0.0
        %7479 = vmatprep.subr.mxu0 0.0
        %7480 = vmatpush2.msra.mxu0 0.0
        %7481 = vmatprep.subr.mxu0 0.0
        %7482 = vmatpush2.msra.mxu0 0.0
        %7483 = vmatprep.subr.mxu0 0.0
        %7484 = vmatpush2.msra.mxu0 0.0
        %7485 = vmatprep.subr.mxu0 0.0
        %7486 = vmatpush2.msra.mxu0 0.0
        %7487 = vmatprep.subr.mxu0 0.0
        %7488 = vmatpush2.msra.mxu0 0.0
        %7489 = vmatprep.subr.mxu0 0.0
        %7490 = vmatpush2.msra.mxu0 0.0
        %7491 = vmatprep.subr.mxu0 0.0
        %7492 = vmatpush2.msra.mxu0 0.0
        %7493 = vmatprep.subr.mxu0 0.0
        %7494 = vmatpush2.msra.mxu0 0.0
        %7495 = vmatprep.subr.mxu0 0.0
        %7496 = vmatpush2.msra.mxu0 0.0
        %7497 = vmatprep.subr.mxu0 0.0
        %7498 = vmatpush2.msra.mxu0 0.0
        %7499 = vmatprep.subr.mxu0 0.0
        %7500 = vmatpush2.msra.mxu0 0.0
        %7501 = vmatprep.subr.mxu0 0.0
        %7502 = vmatpush2.msra.mxu0 0.0
        %7503 = vmatprep.subr.mxu0 0.0
        %7504 = vmatpush2.msra.mxu0 0.0
        %7505 = vmatprep.mubr.f32.mxu0 0.0
        %7506 = vmatmul.mubr.f32.gmra.mxu0 %v7360
        %v7507 = vpop.f32.mrf.mxu0
        %v7508 = vadd.f32 0.0, %v7507
        %v7509 = vpop.f32.mrf.mxu0
        %7510 = vmatprep.mubr.f32.mxu0 0.0
        %7511 = vmatmul.mubr.f32.gmra.mxu0 %v7361
        %v7512 = vpop.f32.mrf.mxu0
        %v7513 = vadd.f32 0.0, %v7512
        %v7514 = vpop.f32.mrf.mxu0
        %7515 = vmatprep.mubr.f32.mxu0 0.0
        %7516 = vmatmul.mubr.f32.gmra.mxu0 %v7362
        %v7517 = vpop.f32.mrf.mxu0
        %v7518 = vadd.f32 0.0, %v7517
        %v7519 = vpop.f32.mrf.mxu0
        %7520 = vmatprep.mubr.f32.mxu0 0.0
        %7521 = vmatmul.mubr.f32.gmra.mxu0 %v7363
        %v7522 = vpop.f32.mrf.mxu0
        %v7523 = vadd.f32 0.0, %v7522
        %v7524 = vpop.f32.mrf.mxu0
        %7525 = vmatprep.mubr.f32.mxu0 0.0
        %7526 = vmatmul.mubr.f32.gmra.mxu0 %v7364
        %v7527 = vpop.f32.mrf.mxu0
        %v7528 = vadd.f32 0.0, %v7527
        %v7529 = vpop.f32.mrf.mxu0
        %7530 = vmatprep.mubr.f32.mxu0 0.0
        %7531 = vmatmul.mubr.f32.gmra.mxu0 %v7365
        %v7532 = vpop.f32.mrf.mxu0
        %v7533 = vadd.f32 0.0, %v7532
        %v7534 = vpop.f32.mrf.mxu0
        %7535 = vmatprep.mubr.f32.mxu0 0.0
        %7536 = vmatmul.mubr.f32.gmra.mxu0 %v7366
        %v7537 = vpop.f32.mrf.mxu0
        %v7538 = vadd.f32 0.0, %v7537
        %v7539 = vpop.f32.mrf.mxu0
        %7540 = vmatprep.mubr.f32.mxu0 0.0
        %7541 = vmatmul.mubr.f32.gmra.mxu0 %v7367
        %v7542 = vpop.f32.mrf.mxu0
        %v7543 = vadd.f32 0.0, %v7542
        %v7544 = vpop.f32.mrf.mxu0
        %7545 = vmatprep.mubr.f32.mxu0 0.0
        %7546 = vmatmul.mubr.f32.gmra.mxu0 %v7368
        %v7547 = vpop.f32.mrf.mxu0
        %v7548 = vadd.f32 0.0, %v7547
        %v7549 = vpop.f32.mrf.mxu0
        %7550 = vmatprep.mubr.f32.mxu0 0.0
        %7551 = vmatmul.mubr.f32.gmra.mxu0 %v7369
        %v7552 = vpop.f32.mrf.mxu0
        %v7553 = vadd.f32 0.0, %v7552
        %v7554 = vpop.f32.mrf.mxu0
        %7555 = vmatprep.mubr.f32.mxu0 0.0
        %7556 = vmatmul.mubr.f32.gmra.mxu0 %v7370
        %v7557 = vpop.f32.mrf.mxu0
        %v7558 = vadd.f32 0.0, %v7557
        %v7559 = vpop.f32.mrf.mxu0
        %7560 = vmatprep.mubr.f32.mxu0 0.0
        %7561 = vmatmul.mubr.f32.gmra.mxu0 %v7371
        %v7562 = vpop.f32.mrf.mxu0
        %v7563 = vadd.f32 0.0, %v7562
        %v7564 = vpop.f32.mrf.mxu0
        %7565 = vmatprep.mubr.f32.mxu0 0.0
        %7566 = vmatmul.mubr.f32.gmra.mxu0 %v7372
        %v7567 = vpop.f32.mrf.mxu0
        %v7568 = vadd.f32 0.0, %v7567
        %v7569 = vpop.f32.mrf.mxu0
        %7570 = vmatprep.mubr.f32.mxu0 0.0
        %7571 = vmatmul.mubr.f32.gmra.mxu0 %v7373
        %v7572 = vpop.f32.mrf.mxu0
        %v7573 = vadd.f32 0.0, %v7572
        %v7574 = vpop.f32.mrf.mxu0
        %7575 = vmatprep.mubr.f32.mxu0 0.0
        %7576 = vmatmul.mubr.f32.gmra.mxu0 %v7374
        %v7577 = vpop.f32.mrf.mxu0
        %v7578 = vadd.f32 0.0, %v7577
        %v7579 = vpop.f32.mrf.mxu0
        %7580 = vmatprep.mubr.f32.mxu0 0.0
        %7581 = vmatmul.mubr.f32.gmra.mxu0 %v7375
        %v7582 = vpop.f32.mrf.mxu0
        %v7583 = vadd.f32 0.0, %v7582
        %v7584 = vpop.f32.mrf.mxu0
        %7585 = vmatprep.mubr.f32.mxu0 0.0
        %7586 = vmatmul.mubr.f32.gmra.mxu0 %v7376
        %v7587 = vpop.f32.mrf.mxu0
        %v7588 = vadd.f32 0.0, %v7587
        %v7589 = vpop.f32.mrf.mxu0
        %7590 = vmatprep.mubr.f32.mxu0 0.0
        %7591 = vmatmul.mubr.f32.gmra.mxu0 %v7377
        %v7592 = vpop.f32.mrf.mxu0
        %v7593 = vadd.f32 0.0, %v7592
        %v7594 = vpop.f32.mrf.mxu0
        %7595 = vmatprep.mubr.f32.mxu0 0.0
        %7596 = vmatmul.mubr.f32.gmra.mxu0 %v7378
        %v7597 = vpop.f32.mrf.mxu0
        %v7598 = vadd.f32 0.0, %v7597
        %v7599 = vpop.f32.mrf.mxu0
        %7600 = vmatprep.mubr.f32.mxu0 0.0
        %7601 = vmatmul.mubr.f32.gmra.mxu0 %v7379
        %v7602 = vpop.f32.mrf.mxu0
        %v7603 = vadd.f32 0.0, %v7602
        %v7604 = vpop.f32.mrf.mxu0
        %7605 = vmatprep.mubr.f32.mxu0 0.0
        %7606 = vmatmul.mubr.f32.gmra.mxu0 %v7380
        %v7607 = vpop.f32.mrf.mxu0
        %v7608 = vadd.f32 0.0, %v7607
        %v7609 = vpop.f32.mrf.mxu0
        %7610 = vmatprep.mubr.f32.mxu0 0.0
        %7611 = vmatmul.mubr.f32.gmra.mxu0 %v7381
        %v7612 = vpop.f32.mrf.mxu0
        %v7613 = vadd.f32 0.0, %v7612
        %v7614 = vpop.f32.mrf.mxu0
        %7615 = vmatprep.mubr.f32.mxu0 0.0
        %7616 = vmatmul.mubr.f32.gmra.mxu0 %v7382
        %v7617 = vpop.f32.mrf.mxu0
        %v7618 = vadd.f32 0.0, %v7617
        %v7619 = vpop.f32.mrf.mxu0
        %7620 = vmatprep.mubr.f32.mxu0 0.0
        %7621 = vmatmul.mubr.f32.gmra.mxu0 %v7383
        %v7622 = vpop.f32.mrf.mxu0
        %v7623 = vadd.f32 0.0, %v7622
        %v7624 = vpop.f32.mrf.mxu0
        %7625 = vmatprep.mubr.f32.mxu0 0.0
        %7626 = vmatmul.mubr.f32.gmra.mxu0 %v7384
        %v7627 = vpop.f32.mrf.mxu0
        %v7628 = vadd.f32 0.0, %v7627
        %v7629 = vpop.f32.mrf.mxu0
        %7630 = vmatprep.mubr.f32.mxu0 0.0
        %7631 = vmatmul.mubr.f32.gmra.mxu0 %v7385
        %v7632 = vpop.f32.mrf.mxu0
        %v7633 = vadd.f32 0.0, %v7632
        %v7634 = vpop.f32.mrf.mxu0
        %7635 = vmatprep.mubr.f32.mxu0 0.0
        %7636 = vmatmul.mubr.f32.gmra.mxu0 %v7386
        %v7637 = vpop.f32.mrf.mxu0
        %v7638 = vadd.f32 0.0, %v7637
        %v7639 = vpop.f32.mrf.mxu0
        %7640 = vmatprep.mubr.f32.mxu0 0.0
        %7641 = vmatmul.mubr.f32.gmra.mxu0 %v7387
        %v7642 = vpop.f32.mrf.mxu0
        %v7643 = vadd.f32 0.0, %v7642
        %v7644 = vpop.f32.mrf.mxu0
        %7645 = vmatprep.mubr.f32.mxu0 0.0
        %7646 = vmatmul.mubr.f32.gmra.mxu0 %v7388
        %v7647 = vpop.f32.mrf.mxu0
        %v7648 = vadd.f32 0.0, %v7647
        %v7649 = vpop.f32.mrf.mxu0
        %7650 = vmatprep.mubr.f32.mxu0 0.0
        %7651 = vmatmul.mubr.f32.gmra.mxu0 %v7389
        %v7652 = vpop.f32.mrf.mxu0
        %v7653 = vadd.f32 0.0, %v7652
        %v7654 = vpop.f32.mrf.mxu0
        %7655 = vmatprep.mubr.f32.mxu0 0.0
        %7656 = vmatmul.mubr.f32.gmra.mxu0 %v7390
        %v7657 = vpop.f32.mrf.mxu0
        %v7658 = vadd.f32 0.0, %v7657
        %v7659 = vpop.f32.mrf.mxu0
        %7660 = vmatprep.mubr.f32.mxu0 0.0
        %7661 = vmatmul.mubr.f32.gmra.mxu0 %v7391
        %v7662 = vpop.f32.mrf.mxu0
        %v7663 = vadd.f32 0.0, %v7662
        %v7664 = vpop.f32.mrf.mxu0
        %7665 = vmatprep.mubr.f32.mxu0 0.0
        %7666 = vmatmul.mubr.f32.gmra.mxu0 %v7392
        %v7667 = vpop.f32.mrf.mxu0
        %v7668 = vadd.f32 0.0, %v7667
        %v7669 = vpop.f32.mrf.mxu0
        %7670 = vmatprep.mubr.f32.mxu0 0.0
        %7671 = vmatmul.mubr.f32.gmra.mxu0 %v7393
        %v7672 = vpop.f32.mrf.mxu0
        %v7673 = vadd.f32 0.0, %v7672
        %v7674 = vpop.f32.mrf.mxu0
        %7675 = vmatprep.mubr.f32.mxu0 0.0
        %7676 = vmatmul.mubr.f32.gmra.mxu0 %v7394
        %v7677 = vpop.f32.mrf.mxu0
        %v7678 = vadd.f32 0.0, %v7677
        %v7679 = vpop.f32.mrf.mxu0
        %7680 = vmatprep.mubr.f32.mxu0 0.0
        %7681 = vmatmul.mubr.f32.gmra.mxu0 %v7395
        %v7682 = vpop.f32.mrf.mxu0
        %v7683 = vadd.f32 0.0, %v7682
        %v7684 = vpop.f32.mrf.mxu0
        %7685 = vmatprep.mubr.f32.mxu0 0.0
        %7686 = vmatmul.mubr.f32.gmra.mxu0 %v7396
        %v7687 = vpop.f32.mrf.mxu0
        %v7688 = vadd.f32 0.0, %v7687
        %v7689 = vpop.f32.mrf.mxu0
        %7690 = vmatprep.mubr.f32.mxu0 0.0
        %7691 = vmatmul.mubr.f32.gmra.mxu0 %v7397
        %v7692 = vpop.f32.mrf.mxu0
        %v7693 = vadd.f32 0.0, %v7692
        %v7694 = vpop.f32.mrf.mxu0
        %7695 = vmatprep.mubr.f32.mxu0 0.0
        %7696 = vmatmul.mubr.f32.gmra.mxu0 %v7398
        %v7697 = vpop.f32.mrf.mxu0
        %v7698 = vadd.f32 0.0, %v7697
        %v7699 = vpop.f32.mrf.mxu0
        %7700 = vmatprep.mubr.f32.mxu0 0.0
        %7701 = vmatmul.mubr.f32.gmra.mxu0 %v7399
        %v7702 = vpop.f32.mrf.mxu0
        %v7703 = vadd.f32 0.0, %v7702
        %v7704 = vpop.f32.mrf.mxu0
        %7705 = vmatprep.mubr.f32.mxu0 0.0
        %7706 = vmatmul.mubr.f32.gmra.mxu0 %v7400
        %v7707 = vpop.f32.mrf.mxu0
        %v7708 = vadd.f32 0.0, %v7707
        %v7709 = vpop.f32.mrf.mxu0
        %7710 = vmatprep.mubr.f32.mxu0 0.0
        %7711 = vmatmul.mubr.f32.gmra.mxu0 %v7401
        %v7712 = vpop.f32.mrf.mxu0
        %v7713 = vadd.f32 0.0, %v7712
        %v7714 = vpop.f32.mrf.mxu0
        %7715 = vmatprep.mubr.f32.mxu0 0.0
        %7716 = vmatmul.mubr.f32.gmra.mxu0 %v7402
        %v7717 = vpop.f32.mrf.mxu0
        %v7718 = vadd.f32 0.0, %v7717
        %v7719 = vpop.f32.mrf.mxu0
        %7720 = vmatprep.mubr.f32.mxu0 0.0
        %7721 = vmatmul.mubr.f32.gmra.mxu0 %v7403
        %v7722 = vpop.f32.mrf.mxu0
        %v7723 = vadd.f32 0.0, %v7722
        %v7724 = vpop.f32.mrf.mxu0
        %7725 = vmatprep.mubr.f32.mxu0 0.0
        %7726 = vmatmul.mubr.f32.gmra.mxu0 %v7404
        %v7727 = vpop.f32.mrf.mxu0
        %v7728 = vadd.f32 0.0, %v7727
        %v7729 = vpop.f32.mrf.mxu0
        %7730 = vmatprep.mubr.f32.mxu0 0.0
        %7731 = vmatmul.mubr.f32.gmra.mxu0 %v7405
        %v7732 = vpop.f32.mrf.mxu0
        %v7733 = vadd.f32 0.0, %v7732
        %v7734 = vpop.f32.mrf.mxu0
        %7735 = vmatprep.mubr.f32.mxu0 0.0
        %7736 = vmatmul.mubr.f32.gmra.mxu0 %v7406
        %v7737 = vpop.f32.mrf.mxu0
        %v7738 = vadd.f32 0.0, %v7737
        %v7739 = vpop.f32.mrf.mxu0
        %7740 = vmatprep.mubr.f32.mxu0 0.0
        %7741 = vmatmul.mubr.f32.gmra.mxu0 %v7407
        %v7742 = vpop.f32.mrf.mxu0
        %v7743 = vadd.f32 0.0, %v7742
        %v7744 = vpop.f32.mrf.mxu0
        %7745 = vmatprep.mubr.f32.mxu0 0.0
        %7746 = vmatmul.mubr.f32.gmra.mxu0 %v7408
        %v7747 = vpop.f32.mrf.mxu0
        %v7748 = vadd.f32 0.0, %v7747
        %v7749 = vpop.f32.mrf.mxu0
        %7750 = vmatprep.mubr.f32.mxu0 0.0
        %7751 = vmatmul.mubr.f32.gmra.mxu0 %v7409
        %v7752 = vpop.f32.mrf.mxu0
        %v7753 = vadd.f32 0.0, %v7752
        %v7754 = vpop.f32.mrf.mxu0
        %7755 = vmatprep.mubr.f32.mxu0 0.0
        %7756 = vmatmul.mubr.f32.gmra.mxu0 %v7410
        %v7757 = vpop.f32.mrf.mxu0
        %v7758 = vadd.f32 0.0, %v7757
        %v7759 = vpop.f32.mrf.mxu0
        %7760 = vmatprep.mubr.f32.mxu0 0.0
        %7761 = vmatmul.mubr.f32.gmra.mxu0 %v7411
        %v7762 = vpop.f32.mrf.mxu0
        %v7763 = vadd.f32 0.0, %v7762
        %v7764 = vpop.f32.mrf.mxu0
        %7765 = vmatprep.mubr.f32.mxu0 0.0
        %7766 = vmatmul.mubr.f32.gmra.mxu0 %v7412
        %v7767 = vpop.f32.mrf.mxu0
        %v7768 = vadd.f32 0.0, %v7767
        %v7769 = vpop.f32.mrf.mxu0
        %7770 = vmatprep.mubr.f32.mxu0 0.0
        %7771 = vmatmul.mubr.f32.gmra.mxu0 %v7413
        %v7772 = vpop.f32.mrf.mxu0
        %v7773 = vadd.f32 0.0, %v7772
        %v7774 = vpop.f32.mrf.mxu0
        %7775 = vmatprep.mubr.f32.mxu0 0.0
        %7776 = vmatmul.mubr.f32.gmra.mxu0 %v7414
        %v7777 = vpop.f32.mrf.mxu0
        %v7778 = vadd.f32 0.0, %v7777
        %v7779 = vpop.f32.mrf.mxu0
        %7780 = vmatprep.mubr.f32.mxu0 0.0
        %7781 = vmatmul.mubr.f32.gmra.mxu0 %v7415
        %v7782 = vpop.f32.mrf.mxu0
        %v7783 = vadd.f32 0.0, %v7782
        %v7784 = vpop.f32.mrf.mxu0
        %7785 = vmatprep.mubr.f32.mxu0 0.0
        %7786 = vmatmul.mubr.f32.gmra.mxu0 %v7416
        %v7787 = vpop.f32.mrf.mxu0
        %v7788 = vadd.f32 0.0, %v7787
        %v7789 = vpop.f32.mrf.mxu0
        %7790 = vmatprep.mubr.f32.mxu0 0.0
        %7791 = vmatmul.mubr.f32.gmra.mxu0 %v7417
        %v7792 = vpop.f32.mrf.mxu0
        %v7793 = vadd.f32 0.0, %v7792
        %v7794 = vpop.f32.mrf.mxu0
        %7795 = vmatprep.mubr.f32.mxu0 0.0
        %7796 = vmatmul.mubr.f32.gmra.mxu0 %v7418
        %v7797 = vpop.f32.mrf.mxu0
        %v7798 = vadd.f32 0.0, %v7797
        %v7799 = vpop.f32.mrf.mxu0
        %7800 = vmatprep.mubr.f32.mxu0 0.0
        %7801 = vmatmul.mubr.f32.gmra.mxu0 %v7419
        %v7802 = vpop.f32.mrf.mxu0
        %v7803 = vadd.f32 0.0, %v7802
        %v7804 = vpop.f32.mrf.mxu0
        %7805 = vmatprep.mubr.f32.mxu0 0.0
        %7806 = vmatmul.mubr.f32.gmra.mxu0 %v7420
        %v7807 = vpop.f32.mrf.mxu0
        %v7808 = vadd.f32 0.0, %v7807
        %v7809 = vpop.f32.mrf.mxu0
        %7810 = vmatprep.mubr.f32.mxu0 0.0
        %7811 = vmatmul.mubr.f32.gmra.mxu0 %v7421
        %v7812 = vpop.f32.mrf.mxu0
        %v7813 = vadd.f32 0.0, %v7812
        %v7814 = vpop.f32.mrf.mxu0
        %7815 = vmatprep.mubr.f32.mxu0 0.0
        %7816 = vmatmul.mubr.f32.gmra.mxu0 %v7422
        %v7817 = vpop.f32.mrf.mxu0
        %v7818 = vadd.f32 0.0, %v7817
        %v7819 = vpop.f32.mrf.mxu0
        %7820 = vmatprep.mubr.f32.mxu0 0.0
        %7821 = vmatmul.mubr.f32.gmra.mxu0 %v7423
        %v7822 = vpop.f32.mrf.mxu0
        %v7823 = vadd.f32 0.0, %v7822
        %v7824 = vpop.f32.mrf.mxu0
        %7825 = vdwg.mxu0
        %v7826 = vadd.f32 %v7040, %v7508
        %v7827 = vadd.f32 %v7041, %v7513
        %v7828 = vadd.f32 %v7042, %v7518
        %v7829 = vadd.f32 %v7043, %v7523
        %v7830 = vadd.f32 %v7044, %v7528
        %v7831 = vadd.f32 %v7045, %v7533
        %v7832 = vadd.f32 %v7046, %v7538
        %v7833 = vadd.f32 %v7047, %v7543
        %v7834 = vadd.f32 %v7048, %v7548
        %v7835 = vadd.f32 %v7049, %v7553
        %v7836 = vadd.f32 %v7050, %v7558
        %v7837 = vadd.f32 %v7051, %v7563
        %v7838 = vadd.f32 %v7052, %v7568
        %v7839 = vadd.f32 %v7053, %v7573
        %v7840 = vadd.f32 %v7054, %v7578
        %v7841 = vadd.f32 %v7055, %v7583
        %v7842 = vadd.f32 %v7056, %v7588
        %v7843 = vadd.f32 %v7057, %v7593
        %v7844 = vadd.f32 %v7058, %v7598
        %v7845 = vadd.f32 %v7059, %v7603
        %v7846 = vadd.f32 %v7060, %v7608
        %v7847 = vadd.f32 %v7061, %v7613
        %v7848 = vadd.f32 %v7062, %v7618
        %v7849 = vadd.f32 %v7063, %v7623
        %v7850 = vadd.f32 %v7064, %v7628
        %v7851 = vadd.f32 %v7065, %v7633
        %v7852 = vadd.f32 %v7066, %v7638
        %v7853 = vadd.f32 %v7067, %v7643
        %v7854 = vadd.f32 %v7068, %v7648
        %v7855 = vadd.f32 %v7069, %v7653
        %v7856 = vadd.f32 %v7070, %v7658
        %v7857 = vadd.f32 %v7071, %v7663
        %v7858 = vadd.f32 %v7072, %v7668
        %v7859 = vadd.f32 %v7073, %v7673
        %v7860 = vadd.f32 %v7074, %v7678
        %v7861 = vadd.f32 %v7075, %v7683
        %v7862 = vadd.f32 %v7076, %v7688
        %v7863 = vadd.f32 %v7077, %v7693
        %v7864 = vadd.f32 %v7078, %v7698
        %v7865 = vadd.f32 %v7079, %v7703
        %v7866 = vadd.f32 %v7080, %v7708
        %v7867 = vadd.f32 %v7081, %v7713
        %v7868 = vadd.f32 %v7082, %v7718
        %v7869 = vadd.f32 %v7083, %v7723
        %v7870 = vadd.f32 %v7084, %v7728
        %v7871 = vadd.f32 %v7085, %v7733
        %v7872 = vadd.f32 %v7086, %v7738
        %v7873 = vadd.f32 %v7087, %v7743
        %v7874 = vadd.f32 %v7088, %v7748
        %v7875 = vadd.f32 %v7089, %v7753
        %v7876 = vadd.f32 %v7090, %v7758
        %v7877 = vadd.f32 %v7091, %v7763
        %v7878 = vadd.f32 %v7092, %v7768
        %v7879 = vadd.f32 %v7093, %v7773
        %v7880 = vadd.f32 %v7094, %v7778
        %v7881 = vadd.f32 %v7095, %v7783
        %v7882 = vadd.f32 %v7096, %v7788
        %v7883 = vadd.f32 %v7097, %v7793
        %v7884 = vadd.f32 %v7098, %v7798
        %v7885 = vadd.f32 %v7099, %v7803
        %v7886 = vadd.f32 %v7100, %v7808
        %v7887 = vadd.f32 %v7101, %v7813
        %v7888 = vadd.f32 %v7102, %v7818
        %v7889 = vadd.f32 %v7103, %v7823
        %v7890 = vld [vmem:[%s5] sm:$0x1]
        %v7892 = vlaneseq
        %v7893 = vshrl.u32 %v7892, 7
        %v7894 = vsub.s32 0, %v7893
        %v7895 = vrot.slane %v7890, %v7894
        %v7897 = vadd.f32 %v7826, %v7895
        %v7898 = vadd.f32 %v7827, %v7895
        %v7899 = vadd.f32 %v7828, %v7895
        %v7900 = vadd.f32 %v7829, %v7895
        %v7901 = vadd.f32 %v7830, %v7895
        %v7902 = vadd.f32 %v7831, %v7895
        %v7903 = vadd.f32 %v7832, %v7895
        %v7904 = vadd.f32 %v7833, %v7895
        %v7905 = vadd.f32 %v7834, %v7895
        %v7906 = vadd.f32 %v7835, %v7895
        %v7907 = vadd.f32 %v7836, %v7895
        %v7908 = vadd.f32 %v7837, %v7895
        %v7909 = vadd.f32 %v7838, %v7895
        %v7910 = vadd.f32 %v7839, %v7895
        %v7911 = vadd.f32 %v7840, %v7895
        %v7912 = vadd.f32 %v7841, %v7895
        %v7913 = vadd.f32 %v7842, %v7895
        %v7914 = vadd.f32 %v7843, %v7895
        %v7915 = vadd.f32 %v7844, %v7895
        %v7916 = vadd.f32 %v7845, %v7895
        %v7917 = vadd.f32 %v7846, %v7895
        %v7918 = vadd.f32 %v7847, %v7895
        %v7919 = vadd.f32 %v7848, %v7895
        %v7920 = vadd.f32 %v7849, %v7895
        %v7921 = vadd.f32 %v7850, %v7895
        %v7922 = vadd.f32 %v7851, %v7895
        %v7923 = vadd.f32 %v7852, %v7895
        %v7924 = vadd.f32 %v7853, %v7895
        %v7925 = vadd.f32 %v7854, %v7895
        %v7926 = vadd.f32 %v7855, %v7895
        %v7927 = vadd.f32 %v7856, %v7895
        %v7928 = vadd.f32 %v7857, %v7895
        %v7929 = vadd.f32 %v7858, %v7895
        %v7930 = vadd.f32 %v7859, %v7895
        %v7931 = vadd.f32 %v7860, %v7895
        %v7932 = vadd.f32 %v7861, %v7895
        %v7933 = vadd.f32 %v7862, %v7895
        %v7934 = vadd.f32 %v7863, %v7895
        %v7935 = vadd.f32 %v7864, %v7895
        %v7936 = vadd.f32 %v7865, %v7895
        %v7937 = vadd.f32 %v7866, %v7895
        %v7938 = vadd.f32 %v7867, %v7895
        %v7939 = vadd.f32 %v7868, %v7895
        %v7940 = vadd.f32 %v7869, %v7895
        %v7941 = vadd.f32 %v7870, %v7895
        %v7942 = vadd.f32 %v7871, %v7895
        %v7943 = vadd.f32 %v7872, %v7895
        %v7944 = vadd.f32 %v7873, %v7895
        %v7945 = vadd.f32 %v7874, %v7895
        %v7946 = vadd.f32 %v7875, %v7895
        %v7947 = vadd.f32 %v7876, %v7895
        %v7948 = vadd.f32 %v7877, %v7895
        %v7949 = vadd.f32 %v7878, %v7895
        %v7950 = vadd.f32 %v7879, %v7895
        %v7951 = vadd.f32 %v7880, %v7895
        %v7952 = vadd.f32 %v7881, %v7895
        %v7953 = vadd.f32 %v7882, %v7895
        %v7954 = vadd.f32 %v7883, %v7895
        %v7955 = vadd.f32 %v7884, %v7895
        %v7956 = vadd.f32 %v7885, %v7895
        %v7957 = vadd.f32 %v7886, %v7895
        %v7958 = vadd.f32 %v7887, %v7895
        %v7959 = vadd.f32 %v7888, %v7895
        %v7960 = vadd.f32 %v7889, %v7895
        %v7961 = vmax.f32 %v7897, 0.0
        %v7962 = vmax.f32 %v7898, 0.0
        %v7963 = vmax.f32 %v7899, 0.0
        %v7964 = vmax.f32 %v7900, 0.0
        %v7965 = vmax.f32 %v7901, 0.0
        %v7966 = vmax.f32 %v7902, 0.0
        %v7967 = vmax.f32 %v7903, 0.0
        %v7968 = vmax.f32 %v7904, 0.0
        %v7969 = vmax.f32 %v7905, 0.0
        %v7970 = vmax.f32 %v7906, 0.0
        %v7971 = vmax.f32 %v7907, 0.0
        %v7972 = vmax.f32 %v7908, 0.0
        %v7973 = vmax.f32 %v7909, 0.0
        %v7974 = vmax.f32 %v7910, 0.0
        %v7975 = vmax.f32 %v7911, 0.0
        %v7976 = vmax.f32 %v7912, 0.0
        %v7977 = vmax.f32 %v7913, 0.0
        %v7978 = vmax.f32 %v7914, 0.0
        %v7979 = vmax.f32 %v7915, 0.0
        %v7980 = vmax.f32 %v7916, 0.0
        %v7981 = vmax.f32 %v7917, 0.0
        %v7982 = vmax.f32 %v7918, 0.0
        %v7983 = vmax.f32 %v7919, 0.0
        %v7984 = vmax.f32 %v7920, 0.0
        %v7985 = vmax.f32 %v7921, 0.0
        %v7986 = vmax.f32 %v7922, 0.0
        %v7987 = vmax.f32 %v7923, 0.0
        %v7988 = vmax.f32 %v7924, 0.0
        %v7989 = vmax.f32 %v7925, 0.0
        %v7990 = vmax.f32 %v7926, 0.0
        %v7991 = vmax.f32 %v7927, 0.0
        %v7992 = vmax.f32 %v7928, 0.0
        %v7993 = vmax.f32 %v7929, 0.0
        %v7994 = vmax.f32 %v7930, 0.0
        %v7995 = vmax.f32 %v7931, 0.0
        %v7996 = vmax.f32 %v7932, 0.0
        %v7997 = vmax.f32 %v7933, 0.0
        %v7998 = vmax.f32 %v7934, 0.0
        %v7999 = vmax.f32 %v7935, 0.0
        %v8000 = vmax.f32 %v7936, 0.0
        %v8001 = vmax.f32 %v7937, 0.0
        %v8002 = vmax.f32 %v7938, 0.0
        %v8003 = vmax.f32 %v7939, 0.0
        %v8004 = vmax.f32 %v7940, 0.0
        %v8005 = vmax.f32 %v7941, 0.0
        %v8006 = vmax.f32 %v7942, 0.0
        %v8007 = vmax.f32 %v7943, 0.0
        %v8008 = vmax.f32 %v7944, 0.0
        %v8009 = vmax.f32 %v7945, 0.0
        %v8010 = vmax.f32 %v7946, 0.0
        %v8011 = vmax.f32 %v7947, 0.0
        %v8012 = vmax.f32 %v7948, 0.0
        %v8013 = vmax.f32 %v7949, 0.0
        %v8014 = vmax.f32 %v7950, 0.0
        %v8015 = vmax.f32 %v7951, 0.0
        %v8016 = vmax.f32 %v7952, 0.0
        %v8017 = vmax.f32 %v7953, 0.0
        %v8018 = vmax.f32 %v7954, 0.0
        %v8019 = vmax.f32 %v7955, 0.0
        %v8020 = vmax.f32 %v7956, 0.0
        %v8021 = vmax.f32 %v7957, 0.0
        %v8022 = vmax.f32 %v7958, 0.0
        %v8023 = vmax.f32 %v7959, 0.0
        %v8024 = vmax.f32 %v7960, 0.0
        %v8025 = vld [vmem:[%s6] sm:$0xff]
        %v8026 = vld [vmem:[%s6 + $0x8] sm:$0xff]
        %v8027 = vld [vmem:[%s6 + $0x10] sm:$0xff]
        %v8028 = vld [vmem:[%s6 + $0x18] sm:$0xff]
        %v8029 = vld [vmem:[%s6 + $0x20] sm:$0xff]
        %v8030 = vld [vmem:[%s6 + $0x28] sm:$0xff]
        %v8031 = vld [vmem:[%s6 + $0x30] sm:$0xff]
        %v8032 = vld [vmem:[%s6 + $0x38] sm:$0xff]
        %v8033 = vld [vmem:[%s6 + $0x40] sm:$0xff]
        %v8034 = vld [vmem:[%s6 + $0x48] sm:$0xff]
        %v8035 = vld [vmem:[%s6 + $0x50] sm:$0xff]
        %v8036 = vld [vmem:[%s6 + $0x58] sm:$0xff]
        %v8037 = vld [vmem:[%s6 + $0x60] sm:$0xff]
        %v8038 = vld [vmem:[%s6 + $0x68] sm:$0xff]
        %v8039 = vld [vmem:[%s6 + $0x70] sm:$0xff]
        %v8040 = vld [vmem:[%s6 + $0x78] sm:$0xff]
        %v8041 = vld [vmem:[%s7] sm:$0x1]
        %v8043 = vlaneseq
        %v8044 = vshrl.u32 %v8043, 7
        %v8045 = vsub.s32 0, %v8044
        %v8046 = vrot.slane %v8041, %v8045
        %8048 = vmatprep.subr.mxu0 0.0
        %8049 = vmatpush1.msra.mxu0 %v8040
        %8050 = vmatprep.subr.mxu0 0.0
        %8051 = vmatpush1.msra.mxu0 %v8039
        %8052 = vmatprep.subr.mxu0 0.0
        %8053 = vmatpush1.msra.mxu0 %v8038
        %8054 = vmatprep.subr.mxu0 0.0
        %8055 = vmatpush1.msra.mxu0 %v8037
        %8056 = vmatprep.subr.mxu0 0.0
        %8057 = vmatpush1.msra.mxu0 %v8036
        %8058 = vmatprep.subr.mxu0 0.0
        %8059 = vmatpush1.msra.mxu0 %v8035
        %8060 = vmatprep.subr.mxu0 0.0
        %8061 = vmatpush1.msra.mxu0 %v8034
        %8062 = vmatprep.subr.mxu0 0.0
        %8063 = vmatpush1.msra.mxu0 %v8033
        %8064 = vmatprep.subr.mxu0 0.0
        %8065 = vmatpush1.msra.mxu0 %v8032
        %8066 = vmatprep.subr.mxu0 0.0
        %8067 = vmatpush1.msra.mxu0 %v8031
        %8068 = vmatprep.subr.mxu0 0.0
        %8069 = vmatpush1.msra.mxu0 %v8030
        %8070 = vmatprep.subr.mxu0 0.0
        %8071 = vmatpush1.msra.mxu0 %v8029
        %8072 = vmatprep.subr.mxu0 0.0
        %8073 = vmatpush1.msra.mxu0 %v8028
        %8074 = vmatprep.subr.mxu0 0.0
        %8075 = vmatpush1.msra.mxu0 %v8027
        %8076 = vmatprep.subr.mxu0 0.0
        %8077 = vmatpush1.msra.mxu0 %v8026
        %8078 = vmatprep.subr.mxu0 0.0
        %8079 = vmatpush1.msra.mxu0 %v8025
        %8080 = vmatprep.subr.mxu0 0.0
        %8081 = vmatpush2.msra.mxu0 0.0
        %8082 = vmatprep.subr.mxu0 0.0
        %8083 = vmatpush2.msra.mxu0 0.0
        %8084 = vmatprep.subr.mxu0 0.0
        %8085 = vmatpush2.msra.mxu0 0.0
        %8086 = vmatprep.subr.mxu0 0.0
        %8087 = vmatpush2.msra.mxu0 0.0
        %8088 = vmatprep.subr.mxu0 0.0
        %8089 = vmatpush2.msra.mxu0 0.0
        %8090 = vmatprep.subr.mxu0 0.0
        %8091 = vmatpush2.msra.mxu0 0.0
        %8092 = vmatprep.subr.mxu0 0.0
        %8093 = vmatpush2.msra.mxu0 0.0
        %8094 = vmatprep.subr.mxu0 0.0
        %8095 = vmatpush2.msra.mxu0 0.0
        %8096 = vmatprep.subr.mxu0 0.0
        %8097 = vmatpush2.msra.mxu0 0.0
        %8098 = vmatprep.subr.mxu0 0.0
        %8099 = vmatpush2.msra.mxu0 0.0
        %8100 = vmatprep.subr.mxu0 0.0
        %8101 = vmatpush2.msra.mxu0 0.0
        %8102 = vmatprep.subr.mxu0 0.0
        %8103 = vmatpush2.msra.mxu0 0.0
        %8104 = vmatprep.subr.mxu0 0.0
        %8105 = vmatpush2.msra.mxu0 0.0
        %8106 = vmatprep.subr.mxu0 0.0
        %8107 = vmatpush2.msra.mxu0 0.0
        %8108 = vmatprep.subr.mxu0 0.0
        %8109 = vmatpush2.msra.mxu0 0.0
        %8110 = vmatprep.subr.mxu0 0.0
        %8111 = vmatpush2.msra.mxu0 0.0
        %8112 = vmatprep.mubr.f32.mxu0 0.0
        %8113 = vmatmul.mubr.f32.gmra.mxu0 %v7961
        %v8114 = vpop.f32.mrf.mxu0
        %v8115 = vadd.f32 %v8046, %v8114
        %v8116 = vpop.f32.mrf.mxu0
        %8117 = vmatprep.mubr.f32.mxu0 0.0
        %8118 = vmatmul.mubr.f32.gmra.mxu0 %v7962
        %v8119 = vpop.f32.mrf.mxu0
        %v8120 = vadd.f32 %v8046, %v8119
        %v8121 = vpop.f32.mrf.mxu0
        %8122 = vmatprep.mubr.f32.mxu0 0.0
        %8123 = vmatmul.mubr.f32.gmra.mxu0 %v7963
        %v8124 = vpop.f32.mrf.mxu0
        %v8125 = vadd.f32 %v8046, %v8124
        %v8126 = vpop.f32.mrf.mxu0
        %8127 = vmatprep.mubr.f32.mxu0 0.0
        %8128 = vmatmul.mubr.f32.gmra.mxu0 %v7964
        %v8129 = vpop.f32.mrf.mxu0
        %v8130 = vadd.f32 %v8046, %v8129
        %v8131 = vpop.f32.mrf.mxu0
        %8132 = vmatprep.mubr.f32.mxu0 0.0
        %8133 = vmatmul.mubr.f32.gmra.mxu0 %v7965
        %v8134 = vpop.f32.mrf.mxu0
        %v8135 = vadd.f32 %v8046, %v8134
        %v8136 = vpop.f32.mrf.mxu0
        %8137 = vmatprep.mubr.f32.mxu0 0.0
        %8138 = vmatmul.mubr.f32.gmra.mxu0 %v7966
        %v8139 = vpop.f32.mrf.mxu0
        %v8140 = vadd.f32 %v8046, %v8139
        %v8141 = vpop.f32.mrf.mxu0
        %8142 = vmatprep.mubr.f32.mxu0 0.0
        %8143 = vmatmul.mubr.f32.gmra.mxu0 %v7967
        %v8144 = vpop.f32.mrf.mxu0
        %v8145 = vadd.f32 %v8046, %v8144
        %v8146 = vpop.f32.mrf.mxu0
        %8147 = vmatprep.mubr.f32.mxu0 0.0
        %8148 = vmatmul.mubr.f32.gmra.mxu0 %v7968
        %v8149 = vpop.f32.mrf.mxu0
        %v8150 = vadd.f32 %v8046, %v8149
        %v8151 = vpop.f32.mrf.mxu0
        %8152 = vmatprep.mubr.f32.mxu0 0.0
        %8153 = vmatmul.mubr.f32.gmra.mxu0 %v7969
        %v8154 = vpop.f32.mrf.mxu0
        %v8155 = vadd.f32 %v8046, %v8154
        %v8156 = vpop.f32.mrf.mxu0
        %8157 = vmatprep.mubr.f32.mxu0 0.0
        %8158 = vmatmul.mubr.f32.gmra.mxu0 %v7970
        %v8159 = vpop.f32.mrf.mxu0
        %v8160 = vadd.f32 %v8046, %v8159
        %v8161 = vpop.f32.mrf.mxu0
        %8162 = vmatprep.mubr.f32.mxu0 0.0
        %8163 = vmatmul.mubr.f32.gmra.mxu0 %v7971
        %v8164 = vpop.f32.mrf.mxu0
        %v8165 = vadd.f32 %v8046, %v8164
        %v8166 = vpop.f32.mrf.mxu0
        %8167 = vmatprep.mubr.f32.mxu0 0.0
        %8168 = vmatmul.mubr.f32.gmra.mxu0 %v7972
        %v8169 = vpop.f32.mrf.mxu0
        %v8170 = vadd.f32 %v8046, %v8169
        %v8171 = vpop.f32.mrf.mxu0
        %8172 = vmatprep.mubr.f32.mxu0 0.0
        %8173 = vmatmul.mubr.f32.gmra.mxu0 %v7973
        %v8174 = vpop.f32.mrf.mxu0
        %v8175 = vadd.f32 %v8046, %v8174
        %v8176 = vpop.f32.mrf.mxu0
        %8177 = vmatprep.mubr.f32.mxu0 0.0
        %8178 = vmatmul.mubr.f32.gmra.mxu0 %v7974
        %v8179 = vpop.f32.mrf.mxu0
        %v8180 = vadd.f32 %v8046, %v8179
        %v8181 = vpop.f32.mrf.mxu0
        %8182 = vmatprep.mubr.f32.mxu0 0.0
        %8183 = vmatmul.mubr.f32.gmra.mxu0 %v7975
        %v8184 = vpop.f32.mrf.mxu0
        %v8185 = vadd.f32 %v8046, %v8184
        %v8186 = vpop.f32.mrf.mxu0
        %8187 = vmatprep.mubr.f32.mxu0 0.0
        %8188 = vmatmul.mubr.f32.gmra.mxu0 %v7976
        %v8189 = vpop.f32.mrf.mxu0
        %v8190 = vadd.f32 %v8046, %v8189
        %v8191 = vpop.f32.mrf.mxu0
        %8192 = vmatprep.mubr.f32.mxu0 0.0
        %8193 = vmatmul.mubr.f32.gmra.mxu0 %v7977
        %v8194 = vpop.f32.mrf.mxu0
        %v8195 = vadd.f32 %v8046, %v8194
        %v8196 = vpop.f32.mrf.mxu0
        %8197 = vmatprep.mubr.f32.mxu0 0.0
        %8198 = vmatmul.mubr.f32.gmra.mxu0 %v7978
        %v8199 = vpop.f32.mrf.mxu0
        %v8200 = vadd.f32 %v8046, %v8199
        %v8201 = vpop.f32.mrf.mxu0
        %8202 = vmatprep.mubr.f32.mxu0 0.0
        %8203 = vmatmul.mubr.f32.gmra.mxu0 %v7979
        %v8204 = vpop.f32.mrf.mxu0
        %v8205 = vadd.f32 %v8046, %v8204
        %v8206 = vpop.f32.mrf.mxu0
        %8207 = vmatprep.mubr.f32.mxu0 0.0
        %8208 = vmatmul.mubr.f32.gmra.mxu0 %v7980
        %v8209 = vpop.f32.mrf.mxu0
        %v8210 = vadd.f32 %v8046, %v8209
        %v8211 = vpop.f32.mrf.mxu0
        %8212 = vmatprep.mubr.f32.mxu0 0.0
        %8213 = vmatmul.mubr.f32.gmra.mxu0 %v7981
        %v8214 = vpop.f32.mrf.mxu0
        %v8215 = vadd.f32 %v8046, %v8214
        %v8216 = vpop.f32.mrf.mxu0
        %8217 = vmatprep.mubr.f32.mxu0 0.0
        %8218 = vmatmul.mubr.f32.gmra.mxu0 %v7982
        %v8219 = vpop.f32.mrf.mxu0
        %v8220 = vadd.f32 %v8046, %v8219
        %v8221 = vpop.f32.mrf.mxu0
        %8222 = vmatprep.mubr.f32.mxu0 0.0
        %8223 = vmatmul.mubr.f32.gmra.mxu0 %v7983
        %v8224 = vpop.f32.mrf.mxu0
        %v8225 = vadd.f32 %v8046, %v8224
        %v8226 = vpop.f32.mrf.mxu0
        %8227 = vmatprep.mubr.f32.mxu0 0.0
        %8228 = vmatmul.mubr.f32.gmra.mxu0 %v7984
        %v8229 = vpop.f32.mrf.mxu0
        %v8230 = vadd.f32 %v8046, %v8229
        %v8231 = vpop.f32.mrf.mxu0
        %8232 = vmatprep.mubr.f32.mxu0 0.0
        %8233 = vmatmul.mubr.f32.gmra.mxu0 %v7985
        %v8234 = vpop.f32.mrf.mxu0
        %v8235 = vadd.f32 %v8046, %v8234
        %v8236 = vpop.f32.mrf.mxu0
        %8237 = vmatprep.mubr.f32.mxu0 0.0
        %8238 = vmatmul.mubr.f32.gmra.mxu0 %v7986
        %v8239 = vpop.f32.mrf.mxu0
        %v8240 = vadd.f32 %v8046, %v8239
        %v8241 = vpop.f32.mrf.mxu0
        %8242 = vmatprep.mubr.f32.mxu0 0.0
        %8243 = vmatmul.mubr.f32.gmra.mxu0 %v7987
        %v8244 = vpop.f32.mrf.mxu0
        %v8245 = vadd.f32 %v8046, %v8244
        %v8246 = vpop.f32.mrf.mxu0
        %8247 = vmatprep.mubr.f32.mxu0 0.0
        %8248 = vmatmul.mubr.f32.gmra.mxu0 %v7988
        %v8249 = vpop.f32.mrf.mxu0
        %v8250 = vadd.f32 %v8046, %v8249
        %v8251 = vpop.f32.mrf.mxu0
        %8252 = vmatprep.mubr.f32.mxu0 0.0
        %8253 = vmatmul.mubr.f32.gmra.mxu0 %v7989
        %v8254 = vpop.f32.mrf.mxu0
        %v8255 = vadd.f32 %v8046, %v8254
        %v8256 = vpop.f32.mrf.mxu0
        %8257 = vmatprep.mubr.f32.mxu0 0.0
        %8258 = vmatmul.mubr.f32.gmra.mxu0 %v7990
        %v8259 = vpop.f32.mrf.mxu0
        %v8260 = vadd.f32 %v8046, %v8259
        %v8261 = vpop.f32.mrf.mxu0
        %8262 = vmatprep.mubr.f32.mxu0 0.0
        %8263 = vmatmul.mubr.f32.gmra.mxu0 %v7991
        %v8264 = vpop.f32.mrf.mxu0
        %v8265 = vadd.f32 %v8046, %v8264
        %v8266 = vpop.f32.mrf.mxu0
        %8267 = vmatprep.mubr.f32.mxu0 0.0
        %8268 = vmatmul.mubr.f32.gmra.mxu0 %v7992
        %v8269 = vpop.f32.mrf.mxu0
        %v8270 = vadd.f32 %v8046, %v8269
        %v8271 = vpop.f32.mrf.mxu0
        %8272 = vmatprep.mubr.f32.mxu0 0.0
        %8273 = vmatmul.mubr.f32.gmra.mxu0 %v7993
        %v8274 = vpop.f32.mrf.mxu0
        %v8275 = vadd.f32 %v8046, %v8274
        %v8276 = vpop.f32.mrf.mxu0
        %8277 = vmatprep.mubr.f32.mxu0 0.0
        %8278 = vmatmul.mubr.f32.gmra.mxu0 %v7994
        %v8279 = vpop.f32.mrf.mxu0
        %v8280 = vadd.f32 %v8046, %v8279
        %v8281 = vpop.f32.mrf.mxu0
        %8282 = vmatprep.mubr.f32.mxu0 0.0
        %8283 = vmatmul.mubr.f32.gmra.mxu0 %v7995
        %v8284 = vpop.f32.mrf.mxu0
        %v8285 = vadd.f32 %v8046, %v8284
        %v8286 = vpop.f32.mrf.mxu0
        %8287 = vmatprep.mubr.f32.mxu0 0.0
        %8288 = vmatmul.mubr.f32.gmra.mxu0 %v7996
        %v8289 = vpop.f32.mrf.mxu0
        %v8290 = vadd.f32 %v8046, %v8289
        %v8291 = vpop.f32.mrf.mxu0
        %8292 = vmatprep.mubr.f32.mxu0 0.0
        %8293 = vmatmul.mubr.f32.gmra.mxu0 %v7997
        %v8294 = vpop.f32.mrf.mxu0
        %v8295 = vadd.f32 %v8046, %v8294
        %v8296 = vpop.f32.mrf.mxu0
        %8297 = vmatprep.mubr.f32.mxu0 0.0
        %8298 = vmatmul.mubr.f32.gmra.mxu0 %v7998
        %v8299 = vpop.f32.mrf.mxu0
        %v8300 = vadd.f32 %v8046, %v8299
        %v8301 = vpop.f32.mrf.mxu0
        %8302 = vmatprep.mubr.f32.mxu0 0.0
        %8303 = vmatmul.mubr.f32.gmra.mxu0 %v7999
        %v8304 = vpop.f32.mrf.mxu0
        %v8305 = vadd.f32 %v8046, %v8304
        %v8306 = vpop.f32.mrf.mxu0
        %8307 = vmatprep.mubr.f32.mxu0 0.0
        %8308 = vmatmul.mubr.f32.gmra.mxu0 %v8000
        %v8309 = vpop.f32.mrf.mxu0
        %v8310 = vadd.f32 %v8046, %v8309
        %v8311 = vpop.f32.mrf.mxu0
        %8312 = vmatprep.mubr.f32.mxu0 0.0
        %8313 = vmatmul.mubr.f32.gmra.mxu0 %v8001
        %v8314 = vpop.f32.mrf.mxu0
        %v8315 = vadd.f32 %v8046, %v8314
        %v8316 = vpop.f32.mrf.mxu0
        %8317 = vmatprep.mubr.f32.mxu0 0.0
        %8318 = vmatmul.mubr.f32.gmra.mxu0 %v8002
        %v8319 = vpop.f32.mrf.mxu0
        %v8320 = vadd.f32 %v8046, %v8319
        %v8321 = vpop.f32.mrf.mxu0
        %8322 = vmatprep.mubr.f32.mxu0 0.0
        %8323 = vmatmul.mubr.f32.gmra.mxu0 %v8003
        %v8324 = vpop.f32.mrf.mxu0
        %v8325 = vadd.f32 %v8046, %v8324
        %v8326 = vpop.f32.mrf.mxu0
        %8327 = vmatprep.mubr.f32.mxu0 0.0
        %8328 = vmatmul.mubr.f32.gmra.mxu0 %v8004
        %v8329 = vpop.f32.mrf.mxu0
        %v8330 = vadd.f32 %v8046, %v8329
        %v8331 = vpop.f32.mrf.mxu0
        %8332 = vmatprep.mubr.f32.mxu0 0.0
        %8333 = vmatmul.mubr.f32.gmra.mxu0 %v8005
        %v8334 = vpop.f32.mrf.mxu0
        %v8335 = vadd.f32 %v8046, %v8334
        %v8336 = vpop.f32.mrf.mxu0
        %8337 = vmatprep.mubr.f32.mxu0 0.0
        %8338 = vmatmul.mubr.f32.gmra.mxu0 %v8006
        %v8339 = vpop.f32.mrf.mxu0
        %v8340 = vadd.f32 %v8046, %v8339
        %v8341 = vpop.f32.mrf.mxu0
        %8342 = vmatprep.mubr.f32.mxu0 0.0
        %8343 = vmatmul.mubr.f32.gmra.mxu0 %v8007
        %v8344 = vpop.f32.mrf.mxu0
        %v8345 = vadd.f32 %v8046, %v8344
        %v8346 = vpop.f32.mrf.mxu0
        %8347 = vmatprep.mubr.f32.mxu0 0.0
        %8348 = vmatmul.mubr.f32.gmra.mxu0 %v8008
        %v8349 = vpop.f32.mrf.mxu0
        %v8350 = vadd.f32 %v8046, %v8349
        %v8351 = vpop.f32.mrf.mxu0
        %8352 = vmatprep.mubr.f32.mxu0 0.0
        %8353 = vmatmul.mubr.f32.gmra.mxu0 %v8009
        %v8354 = vpop.f32.mrf.mxu0
        %v8355 = vadd.f32 %v8046, %v8354
        %v8356 = vpop.f32.mrf.mxu0
        %8357 = vmatprep.mubr.f32.mxu0 0.0
        %8358 = vmatmul.mubr.f32.gmra.mxu0 %v8010
        %v8359 = vpop.f32.mrf.mxu0
        %v8360 = vadd.f32 %v8046, %v8359
        %v8361 = vpop.f32.mrf.mxu0
        %8362 = vmatprep.mubr.f32.mxu0 0.0
        %8363 = vmatmul.mubr.f32.gmra.mxu0 %v8011
        %v8364 = vpop.f32.mrf.mxu0
        %v8365 = vadd.f32 %v8046, %v8364
        %v8366 = vpop.f32.mrf.mxu0
        %8367 = vmatprep.mubr.f32.mxu0 0.0
        %8368 = vmatmul.mubr.f32.gmra.mxu0 %v8012
        %v8369 = vpop.f32.mrf.mxu0
        %v8370 = vadd.f32 %v8046, %v8369
        %v8371 = vpop.f32.mrf.mxu0
        %8372 = vmatprep.mubr.f32.mxu0 0.0
        %8373 = vmatmul.mubr.f32.gmra.mxu0 %v8013
        %v8374 = vpop.f32.mrf.mxu0
        %v8375 = vadd.f32 %v8046, %v8374
        %v8376 = vpop.f32.mrf.mxu0
        %8377 = vmatprep.mubr.f32.mxu0 0.0
        %8378 = vmatmul.mubr.f32.gmra.mxu0 %v8014
        %v8379 = vpop.f32.mrf.mxu0
        %v8380 = vadd.f32 %v8046, %v8379
        %v8381 = vpop.f32.mrf.mxu0
        %8382 = vmatprep.mubr.f32.mxu0 0.0
        %8383 = vmatmul.mubr.f32.gmra.mxu0 %v8015
        %v8384 = vpop.f32.mrf.mxu0
        %v8385 = vadd.f32 %v8046, %v8384
        %v8386 = vpop.f32.mrf.mxu0
        %8387 = vmatprep.mubr.f32.mxu0 0.0
        %8388 = vmatmul.mubr.f32.gmra.mxu0 %v8016
        %v8389 = vpop.f32.mrf.mxu0
        %v8390 = vadd.f32 %v8046, %v8389
        %v8391 = vpop.f32.mrf.mxu0
        %8392 = vmatprep.mubr.f32.mxu0 0.0
        %8393 = vmatmul.mubr.f32.gmra.mxu0 %v8017
        %v8394 = vpop.f32.mrf.mxu0
        %v8395 = vadd.f32 %v8046, %v8394
        %v8396 = vpop.f32.mrf.mxu0
        %8397 = vmatprep.mubr.f32.mxu0 0.0
        %8398 = vmatmul.mubr.f32.gmra.mxu0 %v8018
        %v8399 = vpop.f32.mrf.mxu0
        %v8400 = vadd.f32 %v8046, %v8399
        %v8401 = vpop.f32.mrf.mxu0
        %8402 = vmatprep.mubr.f32.mxu0 0.0
        %8403 = vmatmul.mubr.f32.gmra.mxu0 %v8019
        %v8404 = vpop.f32.mrf.mxu0
        %v8405 = vadd.f32 %v8046, %v8404
        %v8406 = vpop.f32.mrf.mxu0
        %8407 = vmatprep.mubr.f32.mxu0 0.0
        %8408 = vmatmul.mubr.f32.gmra.mxu0 %v8020
        %v8409 = vpop.f32.mrf.mxu0
        %v8410 = vadd.f32 %v8046, %v8409
        %v8411 = vpop.f32.mrf.mxu0
        %8412 = vmatprep.mubr.f32.mxu0 0.0
        %8413 = vmatmul.mubr.f32.gmra.mxu0 %v8021
        %v8414 = vpop.f32.mrf.mxu0
        %v8415 = vadd.f32 %v8046, %v8414
        %v8416 = vpop.f32.mrf.mxu0
        %8417 = vmatprep.mubr.f32.mxu0 0.0
        %8418 = vmatmul.mubr.f32.gmra.mxu0 %v8022
        %v8419 = vpop.f32.mrf.mxu0
        %v8420 = vadd.f32 %v8046, %v8419
        %v8421 = vpop.f32.mrf.mxu0
        %8422 = vmatprep.mubr.f32.mxu0 0.0
        %8423 = vmatmul.mubr.f32.gmra.mxu0 %v8023
        %v8424 = vpop.f32.mrf.mxu0
        %v8425 = vadd.f32 %v8046, %v8424
        %v8426 = vpop.f32.mrf.mxu0
        %8427 = vmatprep.mubr.f32.mxu0 0.0
        %8428 = vmatmul.mubr.f32.gmra.mxu0 %v8024
        %v8429 = vpop.f32.mrf.mxu0
        %v8430 = vadd.f32 %v8046, %v8429
        %v8431 = vpop.f32.mrf.mxu0
        %8432 = vdwg.mxu0
        %v8433 = vadd.f32 %v8115, %v341
        %v8434 = vadd.f32 %v8120, %v342
        %v8435 = vadd.f32 %v8125, %v343
        %v8436 = vadd.f32 %v8130, %v344
        %v8437 = vadd.f32 %v8135, %v345
        %v8438 = vadd.f32 %v8140, %v346
        %v8439 = vadd.f32 %v8145, %v347
        %v8440 = vadd.f32 %v8150, %v348
        %v8441 = vadd.f32 %v8155, %v349
        %v8442 = vadd.f32 %v8160, %v350
        %v8443 = vadd.f32 %v8165, %v351
        %v8444 = vadd.f32 %v8170, %v352
        %v8445 = vadd.f32 %v8175, %v353
        %v8446 = vadd.f32 %v8180, %v354
        %v8447 = vadd.f32 %v8185, %v355
        %v8448 = vadd.f32 %v8190, %v356
        %v8449 = vadd.f32 %v8195, %v357
        %v8450 = vadd.f32 %v8200, %v358
        %v8451 = vadd.f32 %v8205, %v359
        %v8452 = vadd.f32 %v8210, %v360
        %v8453 = vadd.f32 %v8215, %v361
        %v8454 = vadd.f32 %v8220, %v362
        %v8455 = vadd.f32 %v8225, %v363
        %v8456 = vadd.f32 %v8230, %v364
        %v8457 = vadd.f32 %v8235, %v365
        %v8458 = vadd.f32 %v8240, %v366
        %v8459 = vadd.f32 %v8245, %v367
        %v8460 = vadd.f32 %v8250, %v368
        %v8461 = vadd.f32 %v8255, %v369
        %v8462 = vadd.f32 %v8260, %v370
        %v8463 = vadd.f32 %v8265, %v371
        %v8464 = vadd.f32 %v8270, %v372
        %v8465 = vadd.f32 %v8275, %v373
        %v8466 = vadd.f32 %v8280, %v374
        %v8467 = vadd.f32 %v8285, %v375
        %v8468 = vadd.f32 %v8290, %v376
        %v8469 = vadd.f32 %v8295, %v377
        %v8470 = vadd.f32 %v8300, %v378
        %v8471 = vadd.f32 %v8305, %v379
        %v8472 = vadd.f32 %v8310, %v380
        %v8473 = vadd.f32 %v8315, %v381
        %v8474 = vadd.f32 %v8320, %v382
        %v8475 = vadd.f32 %v8325, %v383
        %v8476 = vadd.f32 %v8330, %v384
        %v8477 = vadd.f32 %v8335, %v385
        %v8478 = vadd.f32 %v8340, %v386
        %v8479 = vadd.f32 %v8345, %v387
        %v8480 = vadd.f32 %v8350, %v388
        %v8481 = vadd.f32 %v8355, %v389
        %v8482 = vadd.f32 %v8360, %v390
        %v8483 = vadd.f32 %v8365, %v391
        %v8484 = vadd.f32 %v8370, %v392
        %v8485 = vadd.f32 %v8375, %v393
        %v8486 = vadd.f32 %v8380, %v394
        %v8487 = vadd.f32 %v8385, %v395
        %v8488 = vadd.f32 %v8390, %v396
        %v8489 = vadd.f32 %v8395, %v397
        %v8490 = vadd.f32 %v8400, %v398
        %v8491 = vadd.f32 %v8405, %v399
        %v8492 = vadd.f32 %v8410, %v400
        %v8493 = vadd.f32 %v8415, %v401
        %v8494 = vadd.f32 %v8420, %v402
        %v8495 = vadd.f32 %v8425, %v403
        %v8496 = vadd.f32 %v8430, %v404
        %v8497 = vmax.f32 %v8433, 0.0
        %v8498 = vmax.f32 %v8434, 0.0
        %v8499 = vmax.f32 %v8435, 0.0
        %v8500 = vmax.f32 %v8436, 0.0
        %v8501 = vmax.f32 %v8437, 0.0
        %v8502 = vmax.f32 %v8438, 0.0
        %v8503 = vmax.f32 %v8439, 0.0
        %v8504 = vmax.f32 %v8440, 0.0
        %v8505 = vmax.f32 %v8441, 0.0
        %v8506 = vmax.f32 %v8442, 0.0
        %v8507 = vmax.f32 %v8443, 0.0
        %v8508 = vmax.f32 %v8444, 0.0
        %v8509 = vmax.f32 %v8445, 0.0
        %v8510 = vmax.f32 %v8446, 0.0
        %v8511 = vmax.f32 %v8447, 0.0
        %v8512 = vmax.f32 %v8448, 0.0
        %v8513 = vmax.f32 %v8449, 0.0
        %v8514 = vmax.f32 %v8450, 0.0
        %v8515 = vmax.f32 %v8451, 0.0
        %v8516 = vmax.f32 %v8452, 0.0
        %v8517 = vmax.f32 %v8453, 0.0
        %v8518 = vmax.f32 %v8454, 0.0
        %v8519 = vmax.f32 %v8455, 0.0
        %v8520 = vmax.f32 %v8456, 0.0
        %v8521 = vmax.f32 %v8457, 0.0
        %v8522 = vmax.f32 %v8458, 0.0
        %v8523 = vmax.f32 %v8459, 0.0
        %v8524 = vmax.f32 %v8460, 0.0
        %v8525 = vmax.f32 %v8461, 0.0
        %v8526 = vmax.f32 %v8462, 0.0
        %v8527 = vmax.f32 %v8463, 0.0
        %v8528 = vmax.f32 %v8464, 0.0
        %v8529 = vmax.f32 %v8465, 0.0
        %v8530 = vmax.f32 %v8466, 0.0
        %v8531 = vmax.f32 %v8467, 0.0
        %v8532 = vmax.f32 %v8468, 0.0
        %v8533 = vmax.f32 %v8469, 0.0
        %v8534 = vmax.f32 %v8470, 0.0
        %v8535 = vmax.f32 %v8471, 0.0
        %v8536 = vmax.f32 %v8472, 0.0
        %v8537 = vmax.f32 %v8473, 0.0
        %v8538 = vmax.f32 %v8474, 0.0
        %v8539 = vmax.f32 %v8475, 0.0
        %v8540 = vmax.f32 %v8476, 0.0
        %v8541 = vmax.f32 %v8477, 0.0
        %v8542 = vmax.f32 %v8478, 0.0
        %v8543 = vmax.f32 %v8479, 0.0
        %v8544 = vmax.f32 %v8480, 0.0
        %v8545 = vmax.f32 %v8481, 0.0
        %v8546 = vmax.f32 %v8482, 0.0
        %v8547 = vmax.f32 %v8483, 0.0
        %v8548 = vmax.f32 %v8484, 0.0
        %v8549 = vmax.f32 %v8485, 0.0
        %v8550 = vmax.f32 %v8486, 0.0
        %v8551 = vmax.f32 %v8487, 0.0
        %v8552 = vmax.f32 %v8488, 0.0
        %v8553 = vmax.f32 %v8489, 0.0
        %v8554 = vmax.f32 %v8490, 0.0
        %v8555 = vmax.f32 %v8491, 0.0
        %v8556 = vmax.f32 %v8492, 0.0
        %v8557 = vmax.f32 %v8493, 0.0
        %v8558 = vmax.f32 %v8494, 0.0
        %v8559 = vmax.f32 %v8495, 0.0
        %v8560 = vmax.f32 %v8496, 0.0
        %8561 = vst [vmem:[%s338] sm:$0xff] %v8497
        %8562 = vst [vmem:[%s338 + $0x8] sm:$0xff] %v8498
        %8563 = vst [vmem:[%s338 + $0x10] sm:$0xff] %v8499
        %8564 = vst [vmem:[%s338 + $0x18] sm:$0xff] %v8500
        %8565 = vst [vmem:[%s338 + $0x20] sm:$0xff] %v8501
        %8566 = vst [vmem:[%s338 + $0x28] sm:$0xff] %v8502
        %8567 = vst [vmem:[%s338 + $0x30] sm:$0xff] %v8503
        %8568 = vst [vmem:[%s338 + $0x38] sm:$0xff] %v8504
        %8569 = vst [vmem:[%s338 + $0x40] sm:$0xff] %v8505
        %8570 = vst [vmem:[%s338 + $0x48] sm:$0xff] %v8506
        %8571 = vst [vmem:[%s338 + $0x50] sm:$0xff] %v8507
        %8572 = vst [vmem:[%s338 + $0x58] sm:$0xff] %v8508
        %8573 = vst [vmem:[%s338 + $0x60] sm:$0xff] %v8509
        %8574 = vst [vmem:[%s338 + $0x68] sm:$0xff] %v8510
        %8575 = vst [vmem:[%s338 + $0x70] sm:$0xff] %v8511
        %8576 = vst [vmem:[%s338 + $0x78] sm:$0xff] %v8512
        %8577 = vst [vmem:[%s338 + $0x80] sm:$0xff] %v8513
        %8578 = vst [vmem:[%s338 + $0x88] sm:$0xff] %v8514
        %8579 = vst [vmem:[%s338 + $0x90] sm:$0xff] %v8515
        %8580 = vst [vmem:[%s338 + $0x98] sm:$0xff] %v8516
        %8581 = vst [vmem:[%s338 + $0xa0] sm:$0xff] %v8517
        %8582 = vst [vmem:[%s338 + $0xa8] sm:$0xff] %v8518
        %8583 = vst [vmem:[%s338 + $0xb0] sm:$0xff] %v8519
        %8584 = vst [vmem:[%s338 + $0xb8] sm:$0xff] %v8520
        %8585 = vst [vmem:[%s338 + $0xc0] sm:$0xff] %v8521
        %8586 = vst [vmem:[%s338 + $0xc8] sm:$0xff] %v8522
        %8587 = vst [vmem:[%s338 + $0xd0] sm:$0xff] %v8523
        %8588 = vst [vmem:[%s338 + $0xd8] sm:$0xff] %v8524
        %8589 = vst [vmem:[%s338 + $0xe0] sm:$0xff] %v8525
        %8590 = vst [vmem:[%s338 + $0xe8] sm:$0xff] %v8526
        %8591 = vst [vmem:[%s338 + $0xf0] sm:$0xff] %v8527
        %8592 = vst [vmem:[%s338 + $0xf8] sm:$0xff] %v8528
        %8593 = vst [vmem:[%s338 + $0x100] sm:$0xff] %v8529
        %8594 = vst [vmem:[%s338 + $0x108] sm:$0xff] %v8530
        %8595 = vst [vmem:[%s338 + $0x110] sm:$0xff] %v8531
        %8596 = vst [vmem:[%s338 + $0x118] sm:$0xff] %v8532
        %8597 = vst [vmem:[%s338 + $0x120] sm:$0xff] %v8533
        %8598 = vst [vmem:[%s338 + $0x128] sm:$0xff] %v8534
        %8599 = vst [vmem:[%s338 + $0x130] sm:$0xff] %v8535
        %8600 = vst [vmem:[%s338 + $0x138] sm:$0xff] %v8536
        %8601 = vst [vmem:[%s338 + $0x140] sm:$0xff] %v8537
        %8602 = vst [vmem:[%s338 + $0x148] sm:$0xff] %v8538
        %8603 = vst [vmem:[%s338 + $0x150] sm:$0xff] %v8539
        %8604 = vst [vmem:[%s338 + $0x158] sm:$0xff] %v8540
        %8605 = vst [vmem:[%s338 + $0x160] sm:$0xff] %v8541
        %8606 = vst [vmem:[%s338 + $0x168] sm:$0xff] %v8542
        %8607 = vst [vmem:[%s338 + $0x170] sm:$0xff] %v8543
        %8608 = vst [vmem:[%s338 + $0x178] sm:$0xff] %v8544
        %8609 = vst [vmem:[%s338 + $0x180] sm:$0xff] %v8545
        %8610 = vst [vmem:[%s338 + $0x188] sm:$0xff] %v8546
        %8611 = vst [vmem:[%s338 + $0x190] sm:$0xff] %v8547
        %8612 = vst [vmem:[%s338 + $0x198] sm:$0xff] %v8548
        %8613 = vst [vmem:[%s338 + $0x1a0] sm:$0xff] %v8549
        %8614 = vst [vmem:[%s338 + $0x1a8] sm:$0xff] %v8550
        %8615 = vst [vmem:[%s338 + $0x1b0] sm:$0xff] %v8551
        %8616 = vst [vmem:[%s338 + $0x1b8] sm:$0xff] %v8552
        %8617 = vst [vmem:[%s338 + $0x1c0] sm:$0xff] %v8553
        %8618 = vst [vmem:[%s338 + $0x1c8] sm:$0xff] %v8554
        %8619 = vst [vmem:[%s338 + $0x1d0] sm:$0xff] %v8555
        %8620 = vst [vmem:[%s338 + $0x1d8] sm:$0xff] %v8556
        %8621 = vst [vmem:[%s338 + $0x1e0] sm:$0xff] %v8557
        %8622 = vst [vmem:[%s338 + $0x1e8] sm:$0xff] %v8558
        %8623 = vst [vmem:[%s338 + $0x1f0] sm:$0xff] %v8559
        %8624 = vst [vmem:[%s338 + $0x1f8] sm:$0xff] %v8560
        %s8625 = sand.u32 %s207, 1
        %s8626 = scalar_lea.sflag [#allocation4], %s8625
        %s8627 = sand.u32 %s207, 1
        %s8628 = smul.addr %s8627, 512
        %s8629 = scalar_lea.vmem [#allocation7], %s8628
        // Predicated region
        $region61: #{tpu_custom_call.1} parent=51 // pred_check
          %p8630 = pneg %p217
        $region62: #{tpu_custom_call.1} parent=51 // pred_check_branch
          %8632 = sbr.rel (%p8630) target = $region64
        $region63: #{tpu_custom_call.1} parent=51 // pred_region
          %s8633 = smul.u32 64, %s26
          %s8635 = ssub.s32 8192, 8192
          %8636 = vsyncadd %s8626, %s8635
          %s8637 = smul.addr %s8633, 128
          %s8638 = scalar_lea.hbm %s8, %s8637
          %s8639 = sshll.u32 %s8629, 4
          %s8640 = int_to_ptr.vmem [resolvable:$true] %s8639
          %8645 = dma.vmem_to_hbm [thread:$0]  %s8640, 8192, %s8638, %s8626, 128, 128, 8
        $region64: #{tpu_custom_call.1} parent=51 // pred_fallthru
          _
      $region52: #{tpu_custom_call.1} parent=5 // pred_fallthru
        _
      %p8646 = scmp.le.s32.totalorder 2, %s21
      // Predicated region
      $region65: #{tpu_custom_call.1} parent=5 // pred_check
        %p8647 = pneg %p8646
      $region66: #{tpu_custom_call.1} parent=5 // pred_check_branch
        %8649 = sbr.rel (%p8647) target = $region68
      $region67: #{tpu_custom_call.1} parent=5 // pred_region
        %s8650 = ssub.s32 %s21, 2
        // Predicated region
        $region69: #{tpu_custom_call.1} parent=67 // pred_check
          %p8651 = pneg %p223
        $region70: #{tpu_custom_call.1} parent=67 // pred_check_branch
          %8653 = sbr.rel (%p8651) target = $region72
        $region71: #{tpu_custom_call.1} parent=67 // pred_region
          %s8654 = sand.u32 %s208, 1
          %s8655 = scalar_lea.sflag [#allocation4], %s8654
          %s8656 = sand.u32 %s208, 1
          %s8657 = smul.addr %s8656, 512
          %s8658 = scalar_lea.vmem [#allocation7], %s8657
          %8659 = dma.done %s8655, 8192
        $region72: #{tpu_custom_call.1} parent=67 // pred_fallthru
          _
      $region68: #{tpu_custom_call.1} parent=5 // pred_fallthru
        _
    $region6: #{tpu_custom_call.1} parent=1 // loop_footer
      %s25 = sadd.s32 1, %s21
    $region7: #{tpu_custom_call.1} parent=1 // loop_footer_branch
      %20 = sbr.rel target = $region3
    $region8: #{tpu_custom_call.1} parent=1 // loop_exit
      _
    %8660 = vsyncpa [#allocation3], 1
    %s8661 = scalar_lea.sflag [#allocation3], 1
    %8662 = vsyncpa %s8661, 1
    %8663 = vsyncpa [#allocation6], 1
    %8664 = vsyncpa [#allocation4], 1
    %s8665 = scalar_lea.sflag [#allocation4], 1
    %8666 = vsyncpa %s8665, 1

</llo_original>
